<compile_context>
chip_gen: v6e
topology: v6e:2x2x1
jax: 0.10.0
libtpu: 0.0.40
codegen_flags: <defaults>
</compile_context>

<pallas_src>
import jax
import jax.numpy as jnp
from jax import lax
from jax.experimental import pallas as pl
from jax.experimental.pallas import tpu as pltpu

_MXU_DTYPE = jnp.bfloat16   # MXU operand dtype (accumulation is always f32)


def _eeg_meta_kernel(x_ref, m_ref,
                     w1_ref, b1_ref, w2_ref, b2_ref,
                     wm_ref, bm_ref,
                     wf1e_ref, wf1m_ref, bf1_ref,
                     wf2_ref, bf2_ref,
                     out_ref):
    f32 = jnp.float32
    cdt = _MXU_DTYPE

    xp = x_ref[...].astype(f32)             # (TB, T+6, C) channels-last, halo pre-padded
    TB, Tp, C = xp.shape
    T = Tp - 6
    T2, T4 = T // 2, T // 4

    # ---- Conv1d(C -> 32, k=7, pad=3): im2col (lane concat of 7 taps) + 1 matmul ----
    xc = jnp.concatenate([xp[:, k:k + T, :] for k in range(7)], axis=-1)     # (TB, T, 7C)
    h1 = jnp.dot(xc.reshape(TB * T, 7 * C).astype(cdt), w1_ref[...],
                 preferred_element_type=f32)                                 # (TB*T, 32)
    h1 = jnp.maximum(h1 + b1_ref[...], 0.0).reshape(TB, T, 32)

    # ---- MaxPool1d(2) over time ----
    h1 = h1.reshape(TB, T2, 2, 32)
    h1 = jnp.maximum(h1[:, :, 0, :], h1[:, :, 1, :])                         # (TB, T2, 32)

    # ---- Conv1d(32 -> 64, k=5, pad=2): zero halo + im2col + 1 matmul (K=160) ----
    zh = jnp.zeros((TB, 2, 32), f32)
    h1p = jnp.concatenate([zh, h1, zh], axis=1)                              # (TB, T2+4, 32)
    xc2 = jnp.concatenate([h1p[:, k:k + T2, :] for k in range(5)], axis=-1)  # (TB, T2, 160)
    h2 = jnp.dot(xc2.reshape(TB * T2, 5 * 32).astype(cdt), w2_ref[...],
                 preferred_element_type=f32)                                 # (TB*T2, 64)
    h2 = jnp.maximum(h2 + b2_ref[...], 0.0).reshape(TB, T2, 64)

    # ---- MaxPool1d(2) over time ----
    h2 = h2.reshape(TB, T4, 2, 64)
    h2 = jnp.maximum(h2[:, :, 0, :], h2[:, :, 1, :])                         # (TB, T4, 64)

    # ---- meta stream: Linear(M -> 32) + ReLU (Dropout = identity at inference) ----
    mh = jnp.maximum(
        jnp.dot(m_ref[...], wm_ref[...], preferred_element_type=f32)
        + bm_ref[...], 0.0)                                                  # (TB, 32)

    # ---- fusion Linear(64*T4 + 32 -> 64): time-major flatten, two matmuls ----
    eeg_flat = h2.reshape(TB, T4 * 64)
    f1 = (jnp.dot(eeg_flat.astype(cdt), wf1e_ref[...], preferred_element_type=f32)
          + jnp.dot(mh.astype(cdt), wf1m_ref[...], preferred_element_type=f32)
          + bf1_ref[...])
    f1 = jnp.maximum(f1, 0.0)                                                # (TB, 64)

    # ---- fusion Linear(64 -> 1) + Sigmoid ----
    logit = jnp.dot(f1.astype(cdt), wf2_ref[...],
                    preferred_element_type=f32) + bf2_ref[...]
    out_ref[...] = (1.0 / (1.0 + jnp.exp(-logit))).astype(out_ref.dtype)


def _per_row_vmem_bytes(T, C, M):
    """Rough live-intermediate bytes per batch row inside the kernel."""
    T2, T4 = T // 2, T // 4
    return ((T + 6) * C * (2 * 2 + 4)          # x tile (bf16, double-buffered) + f32 upcast
            + T * 7 * C * (4 + 2)              # conv1 im2col (f32 + bf16 copy)
            + T * 32 * 4                       # h1
            + (T2 + 4) * 32 * 4                # halo-padded h1
            + T2 * 160 * (4 + 2)               # conv2 im2col
            + T2 * 64 * 4                      # h2
            + T4 * 64 * (4 + 2)                # flattened features
            + M * (2 * 2 + 4))                 # meta tile


def _weight_vmem_bytes(C, M, L):
    n_bf16 = 7 * C * 32 + 160 * 64 + M * 32 + L * 64 * 64 + 32 * 64 + 64
    n_f32 = 32 + 64 + 32 + 64 + 1
    return 2 * (2 * n_bf16 + 4 * n_f32)        # worst case: double-buffered weights


def _pick_tb(B, T, C, M):
    """Largest batch tile (multiple of 8, <= 128) that fits a VMEM budget,
    keeping at least two grid steps when the batch allows it (megacore)."""
    if B <= 8:
        return B
    budget = 24 << 20
    tb_mem = max(8, (budget // max(_per_row_vmem_bytes(T, C, M), 1)) // 8 * 8)
    tb_steps = max(8, (B // 2) // 8 * 8)
    return int(max(8, min(128, tb_mem, tb_steps)))


def eeg_meta_net_forward(x_eeg, x_meta, params):
    """x_eeg: (B, C, T); x_meta: (B, M); params: torch-layout weights."""
    B, C, T = x_eeg.shape
    M = x_meta.shape[1]
    assert T % 4 == 0, "window_samples must be divisible by 4"
    L = T // 4
    cdt = _MXU_DTYPE
    f32 = jnp.float32

    # ---- batch tiling: pad ragged batches up to a multiple of the tile ----
    TB = _pick_tb(B, T, C, M)
    B_pad = ((B + TB - 1) // TB) * TB
    if B_pad != B:
        x_eeg = jnp.pad(x_eeg, ((0, B_pad - B), (0, 0), (0, 0)))
        x_meta = jnp.pad(x_meta, ((0, B_pad - B), (0, 0)))
    num_tiles = B_pad // TB

    # ---- layout plumbing (lane-dense channels-last, conv1 halo pre-padded) ----
    # transpose+pad fuse into one XLA relayout of x; all tap / flatten
    # reorderings are folded into the (tiny) weights below.
    x_cl = jnp.pad(jnp.transpose(x_eeg, (0, 2, 1)),
                   ((0, 0), (3, 3), (0, 0))).astype(cdt)         # (B_pad, T+6, C)
    x_m = x_meta.astype(cdt)                                     # (B_pad, M)

    w1 = jnp.transpose(params['w_conv1'], (2, 1, 0)).reshape(7 * C, 32).astype(cdt)
    b1 = params['b_conv1'].reshape(1, 32).astype(f32)
    w2 = jnp.transpose(params['w_conv2'], (2, 1, 0)).reshape(5 * 32, 64).astype(cdt)
    b2 = params['b_conv2'].reshape(1, 64).astype(f32)
    wm = params['w_meta'].T.astype(cdt)                          # (M, 32)
    bm = params['b_meta'].reshape(1, 32).astype(f32)
    wf1_t = params['w_fuse1'].T                                  # (64*L + 32, 64)
    # torch Flatten is channel-major (row c*L + t); re-permute to the kernel's
    # time-major flatten (row t*64 + c).
    wf1e = (wf1_t[:64 * L].reshape(64, L, 64)
            .transpose(1, 0, 2).reshape(L * 64, 64).astype(cdt))
    wf1m = wf1_t[64 * L:].astype(cdt)                            # (32, 64)
    bf1 = params['b_fuse1'].reshape(1, 64).astype(f32)
    wf2 = params['w_fuse2'].T.astype(cdt)                        # (64, 1)
    bf2 = params['b_fuse2'].reshape(1, 1).astype(f32)

    weights = (w1, b1, w2, b2, wm, bm, wf1e, wf1m, bf1, wf2, bf2)

    vmem_limit = int(min(64 << 20,
                         max(16 << 20,
                             2 * (TB * _per_row_vmem_bytes(T, C, M)
                                  + _weight_vmem_bytes(C, M, L)))))

    def call(single_buffer_weights):
        def wspec(arr):
            ndim = arr.ndim
            imap = lambda i, _n=ndim: (0,) * _n
            if single_buffer_weights:
                # Constant blocks never change -> no need to double-buffer them.
                return pl.BlockSpec(arr.shape, imap, pipeline_mode=pl.Buffered(1))
            return pl.BlockSpec(arr.shape, imap)

        in_specs = [
            pl.BlockSpec((TB, T + 6, C), lambda i: (i, 0, 0)),   # EEG tile
            pl.BlockSpec((TB, M), lambda i: (i, 0)),             # meta tile
        ] + [wspec(w) for w in weights]

        return pl.pallas_call(
            _eeg_meta_kernel,
            out_shape=jax.ShapeDtypeStruct((B_pad, 1), jnp.float32),
            grid_spec=pltpu.PrefetchScalarGridSpec(
                num_scalar_prefetch=0,
                grid=(num_tiles,),
                in_specs=in_specs,
                out_specs=pl.BlockSpec((TB, 1), lambda i: (i, 0)),
            ),
            compiler_params=pltpu.CompilerParams(
                dimension_semantics=("parallel",),
                vmem_limit_bytes=vmem_limit,
            ),
        )(x_cl, x_m, *weights)

    try:
        out = jax.block_until_ready(call(single_buffer_weights=True))
    except Exception:
        # pipeline_mode / Buffered(1) unsupported on this JAX -> default buffering.
        out = call(single_buffer_weights=False)

    return out[:B]


def _ref_forward(x_eeg, x_meta, p):
    """Pure-JAX reference mirroring the PyTorch module exactly (f32)."""
    dn = ('NCH', 'OIH', 'NCH')
    h = lax.conv_general_dilated(x_eeg, p['w_conv1'], (1,), [(3, 3)],
                                 dimension_numbers=dn)
    h = jnp.maximum(h + p['b_conv1'][None, :, None], 0.0)
    B, _, T = h.shape
    h = h.reshape(B, 32, T // 2, 2).max(axis=-1)
    h = lax.conv_general_dilated(h, p['w_conv2'], (1,), [(2, 2)],
                                 dimension_numbers=dn)
    h = jnp.maximum(h + p['b_conv2'][None, :, None], 0.0)
    h = h.reshape(B, 64, T // 4, 2).max(axis=-1)
    eeg_flat = h.reshape(B, 64 * (T // 4))                       # channel-major Flatten
    mh = jnp.maximum(x_meta @ p['w_meta'].T + p['b_meta'], 0.0)
    z = jnp.concatenate([eeg_flat, mh], axis=1)
    f = jnp.maximum(z @ p['w_fuse1'].T + p['b_fuse1'], 0.0)
    return 1.0 / (1.0 + jnp.exp(-(f @ p['w_fuse2'].T + p['b_fuse2'])))


if __name__ == "__main__":
    # Small-but-representative shapes: batch=12 (exercises batch padding and a
    # 2-step 'parallel' grid), channels=4, window=16 samples, meta_dim=8.
    B, C, T, M = 12, 4, 16, 8
    L = T // 4

    key = jax.random.PRNGKey(0)
    ks = jax.random.split(key, 12)
    x_eeg = jax.random.normal(ks[0], (B, C, T), jnp.float32)
    x_meta = jax.random.normal(ks[1], (B, M), jnp.float32)
    params = {
        'w_conv1': 0.2 * jax.random.normal(ks[2], (32, C, 7), jnp.float32),
        'b_conv1': 0.1 * jax.random.normal(ks[3], (32,), jnp.float32),
        'w_conv2': 0.1 * jax.random.normal(ks[4], (64, 32, 5), jnp.float32),
        'b_conv2': 0.1 * jax.random.normal(ks[5], (64,), jnp.float32),
        'w_meta': 0.2 * jax.random.normal(ks[6], (32, M), jnp.float32),
        'b_meta': 0.1 * jax.random.normal(ks[7], (32,), jnp.float32),
        'w_fuse1': 0.05 * jax.random.normal(ks[8], (64, 64 * L + 32), jnp.float32),
        'b_fuse1': 0.1 * jax.random.normal(ks[9], (64,), jnp.float32),
        'w_fuse2': 0.1 * jax.random.normal(ks[10], (1, 64), jnp.float32),
        'b_fuse2': 0.1 * jax.random.normal(ks[11], (1,), jnp.float32),
    }

    out = eeg_meta_net_forward(x_eeg, x_meta, params)
    out = jax.block_until_ready(out)

    ref = _ref_forward(x_eeg, x_meta, params)
    assert out.shape == (B, 1), out.shape
    # bf16 MXU operands with f32 accumulation vs f32 reference.
    assert jnp.allclose(out, ref, rtol=2e-2, atol=2e-2), (out, ref)

    print("KERNEL_OK")
</pallas_src>

<mosaic_0001>
module attributes {stable_mosaic.version = 11 : i64} {
  func.func @_eeg_meta_kernel(%arg0: i32, %arg1: memref<8x22x4xbf16, #tpu.memory_space<vmem>>, %arg2: memref<8x8xbf16, #tpu.memory_space<vmem>>, %arg3: memref<28x32xbf16, #tpu.memory_space<vmem>>, %arg4: memref<1x32xf32, #tpu.memory_space<vmem>>, %arg5: memref<160x64xbf16, #tpu.memory_space<vmem>>, %arg6: memref<1x64xf32, #tpu.memory_space<vmem>>, %arg7: memref<8x32xbf16, #tpu.memory_space<vmem>>, %arg8: memref<1x32xf32, #tpu.memory_space<vmem>>, %arg9: memref<256x64xbf16, #tpu.memory_space<vmem>>, %arg10: memref<32x64xbf16, #tpu.memory_space<vmem>>, %arg11: memref<1x64xf32, #tpu.memory_space<vmem>>, %arg12: memref<64x1xbf16, #tpu.memory_space<vmem>>, %arg13: memref<1x1xf32, #tpu.memory_space<vmem>>, %arg14: memref<8x1xf32, #tpu.memory_space<vmem>>) attributes {dimension_semantics = [#tpu.dimension_semantics<parallel>], iteration_bounds = array<i64: 2>, scalar_prefetch = 0 : i64, scratch_operands = 0 : i64, tpu.core_type = #tpu.core_type<tc>, window_params = [{transform_indices = @transform_0, window_bounds = array<i64: 8, 22, 4>}, {transform_indices = @transform_1, window_bounds = array<i64: 8, 8>}, {pipeline_mode = #tpu.pipeline_mode<synchronous>, transform_indices = @transform_2, window_bounds = array<i64: 28, 32>}, {pipeline_mode = #tpu.pipeline_mode<synchronous>, transform_indices = @transform_3, window_bounds = array<i64: 1, 32>}, {pipeline_mode = #tpu.pipeline_mode<synchronous>, transform_indices = @transform_4, window_bounds = array<i64: 160, 64>}, {pipeline_mode = #tpu.pipeline_mode<synchronous>, transform_indices = @transform_5, window_bounds = array<i64: 1, 64>}, {pipeline_mode = #tpu.pipeline_mode<synchronous>, transform_indices = @transform_6, window_bounds = array<i64: 8, 32>}, {pipeline_mode = #tpu.pipeline_mode<synchronous>, transform_indices = @transform_7, window_bounds = array<i64: 1, 32>}, {pipeline_mode = #tpu.pipeline_mode<synchronous>, transform_indices = @transform_8, window_bounds = array<i64: 256, 64>}, {pipeline_mode = #tpu.pipeline_mode<synchronous>, transform_indices = @transform_9, window_bounds = array<i64: 32, 64>}, {pipeline_mode = #tpu.pipeline_mode<synchronous>, transform_indices = @transform_10, window_bounds = array<i64: 1, 64>}, {pipeline_mode = #tpu.pipeline_mode<synchronous>, transform_indices = @transform_11, window_bounds = array<i64: 64, 1>}, {pipeline_mode = #tpu.pipeline_mode<synchronous>, transform_indices = @transform_12, window_bounds = array<i64: 1, 1>}, {transform_indices = @transform_13, window_bounds = array<i64: 8, 1>}]} {
    %c0 = arith.constant 0 : index
    %c0_0 = arith.constant 0 : index
    %c0_1 = arith.constant 0 : index
    %0 = vector.load %arg1[%c0, %c0_0, %c0_1] : memref<8x22x4xbf16, #tpu.memory_space<vmem>>, vector<8x22x4xbf16>
    %1 = arith.extf %0 : vector<8x22x4xbf16> to vector<8x22x4xf32>
    %2 = vector.extract_strided_slice %1 {offsets = [0, 0, 0], sizes = [8, 16, 4], strides = [1, 1, 1]} : vector<8x22x4xf32> to vector<8x16x4xf32>
    %3 = vector.extract_strided_slice %1 {offsets = [0, 1, 0], sizes = [8, 16, 4], strides = [1, 1, 1]} : vector<8x22x4xf32> to vector<8x16x4xf32>
    %4 = vector.extract_strided_slice %1 {offsets = [0, 2, 0], sizes = [8, 16, 4], strides = [1, 1, 1]} : vector<8x22x4xf32> to vector<8x16x4xf32>
    %5 = vector.extract_strided_slice %1 {offsets = [0, 3, 0], sizes = [8, 16, 4], strides = [1, 1, 1]} : vector<8x22x4xf32> to vector<8x16x4xf32>
    %6 = vector.extract_strided_slice %1 {offsets = [0, 4, 0], sizes = [8, 16, 4], strides = [1, 1, 1]} : vector<8x22x4xf32> to vector<8x16x4xf32>
    %7 = vector.extract_strided_slice %1 {offsets = [0, 5, 0], sizes = [8, 16, 4], strides = [1, 1, 1]} : vector<8x22x4xf32> to vector<8x16x4xf32>
    %8 = vector.extract_strided_slice %1 {offsets = [0, 6, 0], sizes = [8, 16, 4], strides = [1, 1, 1]} : vector<8x22x4xf32> to vector<8x16x4xf32>
    %9 = tpu.concatenate %2, %3, %4, %5, %6, %7, %8 in 2 : vector<8x16x4xf32>, vector<8x16x4xf32>, vector<8x16x4xf32>, vector<8x16x4xf32>, vector<8x16x4xf32>, vector<8x16x4xf32>, vector<8x16x4xf32> -> vector<8x16x28xf32>
    %10 = vector.shape_cast %9 : vector<8x16x28xf32> to vector<128x28xf32>
    %11 = arith.truncf %10 : vector<128x28xf32> to vector<128x28xbf16>
    %c0_2 = arith.constant 0 : index
    %c0_3 = arith.constant 0 : index
    %12 = vector.load %arg3[%c0_2, %c0_3] : memref<28x32xbf16, #tpu.memory_space<vmem>>, vector<28x32xbf16>
    %cst = arith.constant dense<0.000000e+00> : vector<128x32xf32>
    %13 = tpu.matmul %11, %12, %cst {dimension_numbers = #tpu.dot_dimension_numbers<[1], [0], [0], [1], [0, 0, 1, 1], [], []>} : vector<128x28xbf16>, vector<28x32xbf16>, vector<128x32xf32> -> vector<128x32xf32>
    %c0_4 = arith.constant 0 : index
    %c0_5 = arith.constant 0 : index
    %14 = vector.load %arg4[%c0_4, %c0_5] : memref<1x32xf32, #tpu.memory_space<vmem>>, vector<1x32xf32>
    %15 = vector.broadcast %14 : vector<1x32xf32> to vector<128x32xf32>
    %16 = arith.addf %13, %15 : vector<128x32xf32>
    %cst_6 = arith.constant 0.000000e+00 : f32
    %17 = vector.broadcast %cst_6 : f32 to vector<128x32xf32>
    %18 = arith.maximumf %16, %17 : vector<128x32xf32>
    %19 = vector.shape_cast %18 : vector<128x32xf32> to vector<8x16x32xf32>
    %20 = vector.shape_cast %19 : vector<8x16x32xf32> to vector<8x8x2x32xf32>
    %21 = vector.extract_strided_slice %20 {offsets = [0, 0, 0, 0], sizes = [8, 8, 1, 32], strides = [1, 1, 1, 1]} : vector<8x8x2x32xf32> to vector<8x8x1x32xf32>
    %22 = vector.shape_cast %21 : vector<8x8x1x32xf32> to vector<8x8x32xf32>
    %23 = vector.extract_strided_slice %20 {offsets = [0, 0, 1, 0], sizes = [8, 8, 1, 32], strides = [1, 1, 1, 1]} : vector<8x8x2x32xf32> to vector<8x8x1x32xf32>
    %24 = vector.shape_cast %23 : vector<8x8x1x32xf32> to vector<8x8x32xf32>
    %25 = arith.maximumf %22, %24 : vector<8x8x32xf32>
    %cst_7 = arith.constant 0.000000e+00 : f32
    %26 = vector.broadcast %cst_7 : f32 to vector<8x2x32xf32>
    %27 = tpu.concatenate %26, %25, %26 in 1 : vector<8x2x32xf32>, vector<8x8x32xf32>, vector<8x2x32xf32> -> vector<8x12x32xf32>
    %28 = vector.extract_strided_slice %27 {offsets = [0, 0, 0], sizes = [8, 8, 32], strides = [1, 1, 1]} : vector<8x12x32xf32> to vector<8x8x32xf32>
    %29 = vector.extract_strided_slice %27 {offsets = [0, 1, 0], sizes = [8, 8, 32], strides = [1, 1, 1]} : vector<8x12x32xf32> to vector<8x8x32xf32>
    %30 = vector.extract_strided_slice %27 {offsets = [0, 2, 0], sizes = [8, 8, 32], strides = [1, 1, 1]} : vector<8x12x32xf32> to vector<8x8x32xf32>
    %31 = vector.extract_strided_slice %27 {offsets = [0, 3, 0], sizes = [8, 8, 32], strides = [1, 1, 1]} : vector<8x12x32xf32> to vector<8x8x32xf32>
    %32 = vector.extract_strided_slice %27 {offsets = [0, 4, 0], sizes = [8, 8, 32], strides = [1, 1, 1]} : vector<8x12x32xf32> to vector<8x8x32xf32>
    %33 = tpu.concatenate %28, %29, %30, %31, %32 in 2 : vector<8x8x32xf32>, vector<8x8x32xf32>, vector<8x8x32xf32>, vector<8x8x32xf32>, vector<8x8x32xf32> -> vector<8x8x160xf32>
    %34 = vector.shape_cast %33 : vector<8x8x160xf32> to vector<64x160xf32>
    %35 = arith.truncf %34 : vector<64x160xf32> to vector<64x160xbf16>
    %c0_8 = arith.constant 0 : index
    %c0_9 = arith.constant 0 : index
    %36 = vector.load %arg5[%c0_8, %c0_9] : memref<160x64xbf16, #tpu.memory_space<vmem>>, vector<160x64xbf16>
    %cst_10 = arith.constant dense<0.000000e+00> : vector<64x64xf32>
    %37 = tpu.matmul %35, %36, %cst_10 {dimension_numbers = #tpu.dot_dimension_numbers<[1], [0], [0], [1], [0, 0, 1, 1], [], []>} : vector<64x160xbf16>, vector<160x64xbf16>, vector<64x64xf32> -> vector<64x64xf32>
    %c0_11 = arith.constant 0 : index
    %c0_12 = arith.constant 0 : index
    %38 = vector.load %arg6[%c0_11, %c0_12] : memref<1x64xf32, #tpu.memory_space<vmem>>, vector<1x64xf32>
    %39 = vector.broadcast %38 : vector<1x64xf32> to vector<64x64xf32>
    %40 = arith.addf %37, %39 : vector<64x64xf32>
    %cst_13 = arith.constant 0.000000e+00 : f32
    %41 = vector.broadcast %cst_13 : f32 to vector<64x64xf32>
    %42 = arith.maximumf %40, %41 : vector<64x64xf32>
    %43 = vector.shape_cast %42 : vector<64x64xf32> to vector<8x8x64xf32>
    %44 = vector.shape_cast %43 : vector<8x8x64xf32> to vector<8x4x2x64xf32>
    %45 = vector.extract_strided_slice %44 {offsets = [0, 0, 0, 0], sizes = [8, 4, 1, 64], strides = [1, 1, 1, 1]} : vector<8x4x2x64xf32> to vector<8x4x1x64xf32>
    %46 = vector.shape_cast %45 : vector<8x4x1x64xf32> to vector<8x4x64xf32>
    %47 = vector.extract_strided_slice %44 {offsets = [0, 0, 1, 0], sizes = [8, 4, 1, 64], strides = [1, 1, 1, 1]} : vector<8x4x2x64xf32> to vector<8x4x1x64xf32>
    %48 = vector.shape_cast %47 : vector<8x4x1x64xf32> to vector<8x4x64xf32>
    %49 = arith.maximumf %46, %48 : vector<8x4x64xf32>
    %c0_14 = arith.constant 0 : index
    %c0_15 = arith.constant 0 : index
    %50 = vector.load %arg2[%c0_14, %c0_15] : memref<8x8xbf16, #tpu.memory_space<vmem>>, vector<8x8xbf16>
    %c0_16 = arith.constant 0 : index
    %c0_17 = arith.constant 0 : index
    %51 = vector.load %arg7[%c0_16, %c0_17] : memref<8x32xbf16, #tpu.memory_space<vmem>>, vector<8x32xbf16>
    %cst_18 = arith.constant dense<0.000000e+00> : vector<8x32xf32>
    %52 = tpu.matmul %50, %51, %cst_18 {dimension_numbers = #tpu.dot_dimension_numbers<[1], [0], [0], [1], [0, 0, 1, 1], [], []>} : vector<8x8xbf16>, vector<8x32xbf16>, vector<8x32xf32> -> vector<8x32xf32>
    %c0_19 = arith.constant 0 : index
    %c0_20 = arith.constant 0 : index
    %53 = vector.load %arg8[%c0_19, %c0_20] : memref<1x32xf32, #tpu.memory_space<vmem>>, vector<1x32xf32>
    %54 = vector.broadcast %53 : vector<1x32xf32> to vector<8x32xf32>
    %55 = arith.addf %52, %54 : vector<8x32xf32>
    %cst_21 = arith.constant 0.000000e+00 : f32
    %56 = vector.broadcast %cst_21 : f32 to vector<8x32xf32>
    %57 = arith.maximumf %55, %56 : vector<8x32xf32>
    %58 = vector.shape_cast %49 : vector<8x4x64xf32> to vector<8x256xf32>
    %59 = arith.truncf %58 : vector<8x256xf32> to vector<8x256xbf16>
    %c0_22 = arith.constant 0 : index
    %c0_23 = arith.constant 0 : index
    %60 = vector.load %arg9[%c0_22, %c0_23] : memref<256x64xbf16, #tpu.memory_space<vmem>>, vector<256x64xbf16>
    %cst_24 = arith.constant dense<0.000000e+00> : vector<8x64xf32>
    %61 = tpu.matmul %59, %60, %cst_24 {dimension_numbers = #tpu.dot_dimension_numbers<[1], [0], [0], [1], [0, 0, 1, 1], [], []>} : vector<8x256xbf16>, vector<256x64xbf16>, vector<8x64xf32> -> vector<8x64xf32>
    %62 = arith.truncf %57 : vector<8x32xf32> to vector<8x32xbf16>
    %c0_25 = arith.constant 0 : index
    %c0_26 = arith.constant 0 : index
    %63 = vector.load %arg10[%c0_25, %c0_26] : memref<32x64xbf16, #tpu.memory_space<vmem>>, vector<32x64xbf16>
    %cst_27 = arith.constant dense<0.000000e+00> : vector<8x64xf32>
    %64 = tpu.matmul %62, %63, %cst_27 {dimension_numbers = #tpu.dot_dimension_numbers<[1], [0], [0], [1], [0, 0, 1, 1], [], []>} : vector<8x32xbf16>, vector<32x64xbf16>, vector<8x64xf32> -> vector<8x64xf32>
    %65 = arith.addf %61, %64 : vector<8x64xf32>
    %c0_28 = arith.constant 0 : index
    %c0_29 = arith.constant 0 : index
    %66 = vector.load %arg11[%c0_28, %c0_29] : memref<1x64xf32, #tpu.memory_space<vmem>>, vector<1x64xf32>
    %67 = vector.broadcast %66 : vector<1x64xf32> to vector<8x64xf32>
    %68 = arith.addf %65, %67 : vector<8x64xf32>
    %cst_30 = arith.constant 0.000000e+00 : f32
    %69 = vector.broadcast %cst_30 : f32 to vector<8x64xf32>
    %70 = arith.maximumf %68, %69 : vector<8x64xf32>
    %71 = arith.truncf %70 : vector<8x64xf32> to vector<8x64xbf16>
    %c0_31 = arith.constant 0 : index
    %c0_32 = arith.constant 0 : index
    %72 = vector.load %arg12[%c0_31, %c0_32] : memref<64x1xbf16, #tpu.memory_space<vmem>>, vector<64x1xbf16>
    %cst_33 = arith.constant dense<0.000000e+00> : vector<8x1xf32>
    %73 = tpu.matmul %71, %72, %cst_33 {dimension_numbers = #tpu.dot_dimension_numbers<[1], [0], [0], [1], [0, 0, 1, 1], [], []>} : vector<8x64xbf16>, vector<64x1xbf16>, vector<8x1xf32> -> vector<8x1xf32>
    %c0_34 = arith.constant 0 : index
    %c0_35 = arith.constant 0 : index
    %74 = vector.load %arg13[%c0_34, %c0_35] : memref<1x1xf32, #tpu.memory_space<vmem>>, vector<1x1xf32>
    %75 = vector.broadcast %74 : vector<1x1xf32> to vector<8x1xf32>
    %76 = arith.addf %73, %75 : vector<8x1xf32>
    %cst_36 = arith.constant 0.000000e+00 : f32
    %77 = vector.broadcast %cst_36 : f32 to vector<8x1xf32>
    %78 = arith.subf %77, %76 : vector<8x1xf32>
    %79 = math.exp %78 : vector<8x1xf32>
    %cst_37 = arith.constant 1.000000e+00 : f32
    %80 = vector.broadcast %cst_37 : f32 to vector<8x1xf32>
    %81 = arith.addf %80, %79 : vector<8x1xf32>
    %cst_38 = arith.constant 1.000000e+00 : f32
    %82 = vector.broadcast %cst_38 : f32 to vector<8x1xf32>
    %83 = arith.divf %82, %81 : vector<8x1xf32>
    %c0_39 = arith.constant 0 : index
    %c0_40 = arith.constant 0 : index
    %84 = vector.load %arg14[%c0_39, %c0_40] : memref<8x1xf32, #tpu.memory_space<vmem>>, vector<8x1xf32>
    tpu.vector_store %arg14[%c0_39, %c0_40], %83 {strides = array<i32>} : memref<8x1xf32, #tpu.memory_space<vmem>>, vector<8x1xf32>,
    return
  }
  func.func @transform_0(%arg0: i32) -> (i32, i32, i32) {
    %c0_i32 = arith.constant 0 : i32
    %c0_i32_0 = arith.constant 0 : i32
    %c0_i32_1 = arith.constant 0 : i32
    return %arg0, %c0_i32, %c0_i32_0 : i32, i32, i32
  }
  func.func @transform_1(%arg0: i32) -> (i32, i32) {
    %c0_i32 = arith.constant 0 : i32
    %c0_i32_0 = arith.constant 0 : i32
    return %arg0, %c0_i32 : i32, i32
  }
  func.func @transform_2(%arg0: i32) -> (i32, i32) {
    %c0_i32 = arith.constant 0 : i32
    %c0_i32_0 = arith.constant 0 : i32
    %c0_i32_1 = arith.constant 0 : i32
    return %c0_i32, %c0_i32_0 : i32, i32
  }
  func.func @transform_3(%arg0: i32) -> (i32, i32) {
    %c0_i32 = arith.constant 0 : i32
    %c0_i32_0 = arith.constant 0 : i32
    %c0_i32_1 = arith.constant 0 : i32
    return %c0_i32, %c0_i32_0 : i32, i32
  }
  func.func @transform_4(%arg0: i32) -> (i32, i32) {
    %c0_i32 = arith.constant 0 : i32
    %c0_i32_0 = arith.constant 0 : i32
    %c0_i32_1 = arith.constant 0 : i32
    return %c0_i32, %c0_i32_0 : i32, i32
  }
  func.func @transform_5(%arg0: i32) -> (i32, i32) {
    %c0_i32 = arith.constant 0 : i32
    %c0_i32_0 = arith.constant 0 : i32
    %c0_i32_1 = arith.constant 0 : i32
    return %c0_i32, %c0_i32_0 : i32, i32
  }
  func.func @transform_6(%arg0: i32) -> (i32, i32) {
    %c0_i32 = arith.constant 0 : i32
    %c0_i32_0 = arith.constant 0 : i32
    %c0_i32_1 = arith.constant 0 : i32
    return %c0_i32, %c0_i32_0 : i32, i32
  }
  func.func @transform_7(%arg0: i32) -> (i32, i32) {
    %c0_i32 = arith.constant 0 : i32
    %c0_i32_0 = arith.constant 0 : i32
    %c0_i32_1 = arith.constant 0 : i32
    return %c0_i32, %c0_i32_0 : i32, i32
  }
  func.func @transform_8(%arg0: i32) -> (i32, i32) {
    %c0_i32 = arith.constant 0 : i32
    %c0_i32_0 = arith.constant 0 : i32
    %c0_i32_1 = arith.constant 0 : i32
    return %c0_i32, %c0_i32_0 : i32, i32
  }
  func.func @transform_9(%arg0: i32) -> (i32, i32) {
    %c0_i32 = arith.constant 0 : i32
    %c0_i32_0 = arith.constant 0 : i32
    %c0_i32_1 = arith.constant 0 : i32
    return %c0_i32, %c0_i32_0 : i32, i32
  }
  func.func @transform_10(%arg0: i32) -> (i32, i32) {
    %c0_i32 = arith.constant 0 : i32
    %c0_i32_0 = arith.constant 0 : i32
    %c0_i32_1 = arith.constant 0 : i32
    return %c0_i32, %c0_i32_0 : i32, i32
  }
  func.func @transform_11(%arg0: i32) -> (i32, i32) {
    %c0_i32 = arith.constant 0 : i32
    %c0_i32_0 = arith.constant 0 : i32
    %c0_i32_1 = arith.constant 0 : i32
    return %c0_i32, %c0_i32_0 : i32, i32
  }
  func.func @transform_12(%arg0: i32) -> (i32, i32) {
    %c0_i32 = arith.constant 0 : i32
    %c0_i32_0 = arith.constant 0 : i32
    %c0_i32_1 = arith.constant 0 : i32
    return %c0_i32, %c0_i32_0 : i32, i32
  }
  func.func @transform_13(%arg0: i32) -> (i32, i32) {
    %c0_i32 = arith.constant 0 : i32
    %c0_i32_0 = arith.constant 0 : i32
    return %arg0, %c0_i32 : i32, i32
  }
}

module attributes {stable_mosaic.version = 11 : i64} {
  func.func @_eeg_meta_kernel(%arg0: i32, %arg1: memref<8x22x4xbf16, #tpu.memory_space<vmem>>, %arg2: memref<8x8xbf16, #tpu.memory_space<vmem>>, %arg3: memref<28x32xbf16, #tpu.memory_space<vmem>>, %arg4: memref<1x32xf32, #tpu.memory_space<vmem>>, %arg5: memref<160x64xbf16, #tpu.memory_space<vmem>>, %arg6: memref<1x64xf32, #tpu.memory_space<vmem>>, %arg7: memref<8x32xbf16, #tpu.memory_space<vmem>>, %arg8: memref<1x32xf32, #tpu.memory_space<vmem>>, %arg9: memref<256x64xbf16, #tpu.memory_space<vmem>>, %arg10: memref<32x64xbf16, #tpu.memory_space<vmem>>, %arg11: memref<1x64xf32, #tpu.memory_space<vmem>>, %arg12: memref<64x1xbf16, #tpu.memory_space<vmem>>, %arg13: memref<1x1xf32, #tpu.memory_space<vmem>>, %arg14: memref<8x1xf32, #tpu.memory_space<vmem>>) attributes {dimension_semantics = [#tpu.dimension_semantics<parallel>], iteration_bounds = array<i64: 2>, scalar_prefetch = 0 : i64, scratch_operands = 0 : i64, tpu.core_type = #tpu.core_type<tc>, window_params = [{transform_indices = @transform_0, window_bounds = array<i64: 8, 22, 4>}, {transform_indices = @transform_1, window_bounds = array<i64: 8, 8>}, {pipeline_mode = #tpu.pipeline_mode<synchronous>, transform_indices = @transform_2, window_bounds = array<i64: 28, 32>}, {pipeline_mode = #tpu.pipeline_mode<synchronous>, transform_indices = @transform_3, window_bounds = array<i64: 1, 32>}, {pipeline_mode = #tpu.pipeline_mode<synchronous>, transform_indices = @transform_4, window_bounds = array<i64: 160, 64>}, {pipeline_mode = #tpu.pipeline_mode<synchronous>, transform_indices = @transform_5, window_bounds = array<i64: 1, 64>}, {pipeline_mode = #tpu.pipeline_mode<synchronous>, transform_indices = @transform_6, window_bounds = array<i64: 8, 32>}, {pipeline_mode = #tpu.pipeline_mode<synchronous>, transform_indices = @transform_7, window_bounds = array<i64: 1, 32>}, {pipeline_mode = #tpu.pipeline_mode<synchronous>, transform_indices = @transform_8, window_bounds = array<i64: 256, 64>}, {pipeline_mode = #tpu.pipeline_mode<synchronous>, transform_indices = @transform_9, window_bounds = array<i64: 32, 64>}, {pipeline_mode = #tpu.pipeline_mode<synchronous>, transform_indices = @transform_10, window_bounds = array<i64: 1, 64>}, {pipeline_mode = #tpu.pipeline_mode<synchronous>, transform_indices = @transform_11, window_bounds = array<i64: 64, 1>}, {pipeline_mode = #tpu.pipeline_mode<synchronous>, transform_indices = @transform_12, window_bounds = array<i64: 1, 1>}, {transform_indices = @transform_13, window_bounds = array<i64: 8, 1>}]} {
    %c0 = arith.constant 0 : index
    %c0_0 = arith.constant 0 : index
    %c0_1 = arith.constant 0 : index
    %0 = vector.load %arg1[%c0, %c0_0, %c0_1] : memref<8x22x4xbf16, #tpu.memory_space<vmem>>, vector<8x22x4xbf16>
    %1 = arith.extf %0 : vector<8x22x4xbf16> to vector<8x22x4xf32>
    %2 = vector.extract_strided_slice %1 {offsets = [0, 0, 0], sizes = [8, 16, 4], strides = [1, 1, 1]} : vector<8x22x4xf32> to vector<8x16x4xf32>
    %3 = vector.extract_strided_slice %1 {offsets = [0, 1, 0], sizes = [8, 16, 4], strides = [1, 1, 1]} : vector<8x22x4xf32> to vector<8x16x4xf32>
    %4 = vector.extract_strided_slice %1 {offsets = [0, 2, 0], sizes = [8, 16, 4], strides = [1, 1, 1]} : vector<8x22x4xf32> to vector<8x16x4xf32>
    %5 = vector.extract_strided_slice %1 {offsets = [0, 3, 0], sizes = [8, 16, 4], strides = [1, 1, 1]} : vector<8x22x4xf32> to vector<8x16x4xf32>
    %6 = vector.extract_strided_slice %1 {offsets = [0, 4, 0], sizes = [8, 16, 4], strides = [1, 1, 1]} : vector<8x22x4xf32> to vector<8x16x4xf32>
    %7 = vector.extract_strided_slice %1 {offsets = [0, 5, 0], sizes = [8, 16, 4], strides = [1, 1, 1]} : vector<8x22x4xf32> to vector<8x16x4xf32>
    %8 = vector.extract_strided_slice %1 {offsets = [0, 6, 0], sizes = [8, 16, 4], strides = [1, 1, 1]} : vector<8x22x4xf32> to vector<8x16x4xf32>
    %9 = tpu.concatenate %2, %3, %4, %5, %6, %7, %8 in 2 : vector<8x16x4xf32>, vector<8x16x4xf32>, vector<8x16x4xf32>, vector<8x16x4xf32>, vector<8x16x4xf32>, vector<8x16x4xf32>, vector<8x16x4xf32> -> vector<8x16x28xf32>
    %10 = vector.shape_cast %9 : vector<8x16x28xf32> to vector<128x28xf32>
    %11 = arith.truncf %10 : vector<128x28xf32> to vector<128x28xbf16>
    %c0_2 = arith.constant 0 : index
    %c0_3 = arith.constant 0 : index
    %12 = vector.load %arg3[%c0_2, %c0_3] : memref<28x32xbf16, #tpu.memory_space<vmem>>, vector<28x32xbf16>
    %cst = arith.constant dense<0.000000e+00> : vector<128x32xf32>
    %13 = tpu.matmul %11, %12, %cst {dimension_numbers = #tpu.dot_dimension_numbers<[1], [0], [0], [1], [0, 0, 1, 1], [], []>} : vector<128x28xbf16>, vector<28x32xbf16>, vector<128x32xf32> -> vector<128x32xf32>
    %c0_4 = arith.constant 0 : index
    %c0_5 = arith.constant 0 : index
    %14 = vector.load %arg4[%c0_4, %c0_5] : memref<1x32xf32, #tpu.memory_space<vmem>>, vector<1x32xf32>
    %15 = vector.broadcast %14 : vector<1x32xf32> to vector<128x32xf32>
    %16 = arith.addf %13, %15 : vector<128x32xf32>
    %cst_6 = arith.constant 0.000000e+00 : f32
    %17 = vector.broadcast %cst_6 : f32 to vector<128x32xf32>
    %18 = arith.maximumf %16, %17 : vector<128x32xf32>
    %19 = vector.shape_cast %18 : vector<128x32xf32> to vector<8x16x32xf32>
    %20 = vector.shape_cast %19 : vector<8x16x32xf32> to vector<8x8x2x32xf32>
    %21 = vector.extract_strided_slice %20 {offsets = [0, 0, 0, 0], sizes = [8, 8, 1, 32], strides = [1, 1, 1, 1]} : vector<8x8x2x32xf32> to vector<8x8x1x32xf32>
    %22 = vector.shape_cast %21 : vector<8x8x1x32xf32> to vector<8x8x32xf32>
    %23 = vector.extract_strided_slice %20 {offsets = [0, 0, 1, 0], sizes = [8, 8, 1, 32], strides = [1, 1, 1, 1]} : vector<8x8x2x32xf32> to vector<8x8x1x32xf32>
    %24 = vector.shape_cast %23 : vector<8x8x1x32xf32> to vector<8x8x32xf32>
    %25 = arith.maximumf %22, %24 : vector<8x8x32xf32>
    %cst_7 = arith.constant 0.000000e+00 : f32
    %26 = vector.broadcast %cst_7 : f32 to vector<8x2x32xf32>
    %27 = tpu.concatenate %26, %25, %26 in 1 : vector<8x2x32xf32>, vector<8x8x32xf32>, vector<8x2x32xf32> -> vector<8x12x32xf32>
    %28 = vector.extract_strided_slice %27 {offsets = [0, 0, 0], sizes = [8, 8, 32], strides = [1, 1, 1]} : vector<8x12x32xf32> to vector<8x8x32xf32>
    %29 = vector.extract_strided_slice %27 {offsets = [0, 1, 0], sizes = [8, 8, 32], strides = [1, 1, 1]} : vector<8x12x32xf32> to vector<8x8x32xf32>
    %30 = vector.extract_strided_slice %27 {offsets = [0, 2, 0], sizes = [8, 8, 32], strides = [1, 1, 1]} : vector<8x12x32xf32> to vector<8x8x32xf32>
    %31 = vector.extract_strided_slice %27 {offsets = [0, 3, 0], sizes = [8, 8, 32], strides = [1, 1, 1]} : vector<8x12x32xf32> to vector<8x8x32xf32>
    %32 = vector.extract_strided_slice %27 {offsets = [0, 4, 0], sizes = [8, 8, 32], strides = [1, 1, 1]} : vector<8x12x32xf32> to vector<8x8x32xf32>
    %33 = tpu.concatenate %28, %29, %30, %31, %32 in 2 : vector<8x8x32xf32>, vector<8x8x32xf32>, vector<8x8x32xf32>, vector<8x8x32xf32>, vector<8x8x32xf32> -> vector<8x8x160xf32>
    %34 = vector.shape_cast %33 : vector<8x8x160xf32> to vector<64x160xf32>
    %35 = arith.truncf %34 : vector<64x160xf32> to vector<64x160xbf16>
    %c0_8 = arith.constant 0 : index
    %c0_9 = arith.constant 0 : index
    %36 = vector.load %arg5[%c0_8, %c0_9] : memref<160x64xbf16, #tpu.memory_space<vmem>>, vector<160x64xbf16>
    %cst_10 = arith.constant dense<0.000000e+00> : vector<64x64xf32>
    %37 = tpu.matmul %35, %36, %cst_10 {dimension_numbers = #tpu.dot_dimension_numbers<[1], [0], [0], [1], [0, 0, 1, 1], [], []>} : vector<64x160xbf16>, vector<160x64xbf16>, vector<64x64xf32> -> vector<64x64xf32>
    %c0_11 = arith.constant 0 : index
    %c0_12 = arith.constant 0 : index
    %38 = vector.load %arg6[%c0_11, %c0_12] : memref<1x64xf32, #tpu.memory_space<vmem>>, vector<1x64xf32>
    %39 = vector.broadcast %38 : vector<1x64xf32> to vector<64x64xf32>
    %40 = arith.addf %37, %39 : vector<64x64xf32>
    %cst_13 = arith.constant 0.000000e+00 : f32
    %41 = vector.broadcast %cst_13 : f32 to vector<64x64xf32>
    %42 = arith.maximumf %40, %41 : vector<64x64xf32>
    %43 = vector.shape_cast %42 : vector<64x64xf32> to vector<8x8x64xf32>
    %44 = vector.shape_cast %43 : vector<8x8x64xf32> to vector<8x4x2x64xf32>
    %45 = vector.extract_strided_slice %44 {offsets = [0, 0, 0, 0], sizes = [8, 4, 1, 64], strides = [1, 1, 1, 1]} : vector<8x4x2x64xf32> to vector<8x4x1x64xf32>
    %46 = vector.shape_cast %45 : vector<8x4x1x64xf32> to vector<8x4x64xf32>
    %47 = vector.extract_strided_slice %44 {offsets = [0, 0, 1, 0], sizes = [8, 4, 1, 64], strides = [1, 1, 1, 1]} : vector<8x4x2x64xf32> to vector<8x4x1x64xf32>
    %48 = vector.shape_cast %47 : vector<8x4x1x64xf32> to vector<8x4x64xf32>
    %49 = arith.maximumf %46, %48 : vector<8x4x64xf32>
    %c0_14 = arith.constant 0 : index
    %c0_15 = arith.constant 0 : index
    %50 = vector.load %arg2[%c0_14, %c0_15] : memref<8x8xbf16, #tpu.memory_space<vmem>>, vector<8x8xbf16>
    %c0_16 = arith.constant 0 : index
    %c0_17 = arith.constant 0 : index
    %51 = vector.load %arg7[%c0_16, %c0_17] : memref<8x32xbf16, #tpu.memory_space<vmem>>, vector<8x32xbf16>
    %cst_18 = arith.constant dense<0.000000e+00> : vector<8x32xf32>
    %52 = tpu.matmul %50, %51, %cst_18 {dimension_numbers = #tpu.dot_dimension_numbers<[1], [0], [0], [1], [0, 0, 1, 1], [], []>} : vector<8x8xbf16>, vector<8x32xbf16>, vector<8x32xf32> -> vector<8x32xf32>
    %c0_19 = arith.constant 0 : index
    %c0_20 = arith.constant 0 : index
    %53 = vector.load %arg8[%c0_19, %c0_20] : memref<1x32xf32, #tpu.memory_space<vmem>>, vector<1x32xf32>
    %54 = vector.broadcast %53 : vector<1x32xf32> to vector<8x32xf32>
    %55 = arith.addf %52, %54 : vector<8x32xf32>
    %cst_21 = arith.constant 0.000000e+00 : f32
    %56 = vector.broadcast %cst_21 : f32 to vector<8x32xf32>
    %57 = arith.maximumf %55, %56 : vector<8x32xf32>
    %58 = vector.shape_cast %49 : vector<8x4x64xf32> to vector<8x256xf32>
    %59 = arith.truncf %58 : vector<8x256xf32> to vector<8x256xbf16>
    %c0_22 = arith.constant 0 : index
    %c0_23 = arith.constant 0 : index
    %60 = vector.load %arg9[%c0_22, %c0_23] : memref<256x64xbf16, #tpu.memory_space<vmem>>, vector<256x64xbf16>
    %cst_24 = arith.constant dense<0.000000e+00> : vector<8x64xf32>
    %61 = tpu.matmul %59, %60, %cst_24 {dimension_numbers = #tpu.dot_dimension_numbers<[1], [0], [0], [1], [0, 0, 1, 1], [], []>} : vector<8x256xbf16>, vector<256x64xbf16>, vector<8x64xf32> -> vector<8x64xf32>
    %62 = arith.truncf %57 : vector<8x32xf32> to vector<8x32xbf16>
    %c0_25 = arith.constant 0 : index
    %c0_26 = arith.constant 0 : index
    %63 = vector.load %arg10[%c0_25, %c0_26] : memref<32x64xbf16, #tpu.memory_space<vmem>>, vector<32x64xbf16>
    %cst_27 = arith.constant dense<0.000000e+00> : vector<8x64xf32>
    %64 = tpu.matmul %62, %63, %cst_27 {dimension_numbers = #tpu.dot_dimension_numbers<[1], [0], [0], [1], [0, 0, 1, 1], [], []>} : vector<8x32xbf16>, vector<32x64xbf16>, vector<8x64xf32> -> vector<8x64xf32>
    %65 = arith.addf %61, %64 : vector<8x64xf32>
    %c0_28 = arith.constant 0 : index
    %c0_29 = arith.constant 0 : index
    %66 = vector.load %arg11[%c0_28, %c0_29] : memref<1x64xf32, #tpu.memory_space<vmem>>, vector<1x64xf32>
    %67 = vector.broadcast %66 : vector<1x64xf32> to vector<8x64xf32>
    %68 = arith.addf %65, %67 : vector<8x64xf32>
    %cst_30 = arith.constant 0.000000e+00 : f32
    %69 = vector.broadcast %cst_30 : f32 to vector<8x64xf32>
    %70 = arith.maximumf %68, %69 : vector<8x64xf32>
    %71 = arith.truncf %70 : vector<8x64xf32> to vector<8x64xbf16>
    %c0_31 = arith.constant 0 : index
    %c0_32 = arith.constant 0 : index
    %72 = vector.load %arg12[%c0_31, %c0_32] : memref<64x1xbf16, #tpu.memory_space<vmem>>, vector<64x1xbf16>
    %cst_33 = arith.constant dense<0.000000e+00> : vector<8x1xf32>
    %73 = tpu.matmul %71, %72, %cst_33 {dimension_numbers = #tpu.dot_dimension_numbers<[1], [0], [0], [1], [0, 0, 1, 1], [], []>} : vector<8x64xbf16>, vector<64x1xbf16>, vector<8x1xf32> -> vector<8x1xf32>
    %c0_34 = arith.constant 0 : index
    %c0_35 = arith.constant 0 : index
    %74 = vector.load %arg13[%c0_34, %c0_35] : memref<1x1xf32, #tpu.memory_space<vmem>>, vector<1x1xf32>
    %75 = vector.broadcast %74 : vector<1x1xf32> to vector<8x1xf32>
    %76 = arith.addf %73, %75 : vector<8x1xf32>
    %cst_36 = arith.constant 0.000000e+00 : f32
    %77 = vector.broadcast %cst_36 : f32 to vector<8x1xf32>
    %78 = arith.subf %77, %76 : vector<8x1xf32>
    %79 = math.exp %78 : vector<8x1xf32>
    %cst_37 = arith.constant 1.000000e+00 : f32
    %80 = vector.broadcast %cst_37 : f32 to vector<8x1xf32>
    %81 = arith.addf %80, %79 : vector<8x1xf32>
    %cst_38 = arith.constant 1.000000e+00 : f32
    %82 = vector.broadcast %cst_38 : f32 to vector<8x1xf32>
    %83 = arith.divf %82, %81 : vector<8x1xf32>
    %c0_39 = arith.constant 0 : index
    %c0_40 = arith.constant 0 : index
    %84 = vector.load %arg14[%c0_39, %c0_40] : memref<8x1xf32, #tpu.memory_space<vmem>>, vector<8x1xf32>
    tpu.vector_store %arg14[%c0_39, %c0_40], %83 {strides = array<i32>} : memref<8x1xf32, #tpu.memory_space<vmem>>, vector<8x1xf32>,
    return
  }
  func.func @transform_0(%arg0: i32) -> (i32, i32, i32) {
    %c0_i32 = arith.constant 0 : i32
    %c0_i32_0 = arith.constant 0 : i32
    %c0_i32_1 = arith.constant 0 : i32
    return %arg0, %c0_i32, %c0_i32_0 : i32, i32, i32
  }
  func.func @transform_1(%arg0: i32) -> (i32, i32) {
    %c0_i32 = arith.constant 0 : i32
    %c0_i32_0 = arith.constant 0 : i32
    return %arg0, %c0_i32 : i32, i32
  }
  func.func @transform_2(%arg0: i32) -> (i32, i32) {
    %c0_i32 = arith.constant 0 : i32
    %c0_i32_0 = arith.constant 0 : i32
    %c0_i32_1 = arith.constant 0 : i32
    return %c0_i32, %c0_i32_0 : i32, i32
  }
  func.func @transform_3(%arg0: i32) -> (i32, i32) {
    %c0_i32 = arith.constant 0 : i32
    %c0_i32_0 = arith.constant 0 : i32
    %c0_i32_1 = arith.constant 0 : i32
    return %c0_i32, %c0_i32_0 : i32, i32
  }
  func.func @transform_4(%arg0: i32) -> (i32, i32) {
    %c0_i32 = arith.constant 0 : i32
    %c0_i32_0 = arith.constant 0 : i32
    %c0_i32_1 = arith.constant 0 : i32
    return %c0_i32, %c0_i32_0 : i32, i32
  }
  func.func @transform_5(%arg0: i32) -> (i32, i32) {
    %c0_i32 = arith.constant 0 : i32
    %c0_i32_0 = arith.constant 0 : i32
    %c0_i32_1 = arith.constant 0 : i32
    return %c0_i32, %c0_i32_0 : i32, i32
  }
  func.func @transform_6(%arg0: i32) -> (i32, i32) {
    %c0_i32 = arith.constant 0 : i32
    %c0_i32_0 = arith.constant 0 : i32
    %c0_i32_1 = arith.constant 0 : i32
    return %c0_i32, %c0_i32_0 : i32, i32
  }
  func.func @transform_7(%arg0: i32) -> (i32, i32) {
    %c0_i32 = arith.constant 0 : i32
    %c0_i32_0 = arith.constant 0 : i32
    %c0_i32_1 = arith.constant 0 : i32
    return %c0_i32, %c0_i32_0 : i32, i32
  }
  func.func @transform_8(%arg0: i32) -> (i32, i32) {
    %c0_i32 = arith.constant 0 : i32
    %c0_i32_0 = arith.constant 0 : i32
    %c0_i32_1 = arith.constant 0 : i32
    return %c0_i32, %c0_i32_0 : i32, i32
  }
  func.func @transform_9(%arg0: i32) -> (i32, i32) {
    %c0_i32 = arith.constant 0 : i32
    %c0_i32_0 = arith.constant 0 : i32
    %c0_i32_1 = arith.constant 0 : i32
    return %c0_i32, %c0_i32_0 : i32, i32
  }
  func.func @transform_10(%arg0: i32) -> (i32, i32) {
    %c0_i32 = arith.constant 0 : i32
    %c0_i32_0 = arith.constant 0 : i32
    %c0_i32_1 = arith.constant 0 : i32
    return %c0_i32, %c0_i32_0 : i32, i32
  }
  func.func @transform_11(%arg0: i32) -> (i32, i32) {
    %c0_i32 = arith.constant 0 : i32
    %c0_i32_0 = arith.constant 0 : i32
    %c0_i32_1 = arith.constant 0 : i32
    return %c0_i32, %c0_i32_0 : i32, i32
  }
  func.func @transform_12(%arg0: i32) -> (i32, i32) {
    %c0_i32 = arith.constant 0 : i32
    %c0_i32_0 = arith.constant 0 : i32
    %c0_i32_1 = arith.constant 0 : i32
    return %c0_i32, %c0_i32_0 : i32, i32
  }
  func.func @transform_13(%arg0: i32) -> (i32, i32) {
    %c0_i32 = arith.constant 0 : i32
    %c0_i32_0 = arith.constant 0 : i32
    return %arg0, %c0_i32 : i32, i32
  }
}

</mosaic_0001>

<llo_original>
// kernel: tpu_custom_call.1
$region0: #{tpu_custom_call.1}
  #allocation0 [shape = 'u32[]', space=smem, size = 0x4, offset = 0x4, fixed_abs, tag = 'smem constant byte address 0x4 - core index']
  #allocation1 [shape = 'u32[144,128]{1,0:T(1,128)}', space=vmem, size = 0x12000, scoped, tag = 'internal scratch']
  #allocation2 [shape = 'f32[1,1]{1,0:T(1,128)S(1)}', space=vmem, size = 0x200, scoped, tag = 'scoped memory for tpu_custom_call.1']
  %s0 = inlined_call_operand.vmem [shape: bf16[16,22,4], index: 0, kind: input, shape index: {}]
  %s1 = inlined_call_operand.vmem [shape: bf16[16,8], index: 1, kind: input, shape index: {}]
  %s2 = inlined_call_operand.vmem [shape: bf16[28,32], index: 2, kind: input, shape index: {}]
  %s3 = inlined_call_operand.vmem [shape: f32[1,32], index: 3, kind: input, shape index: {}]
  %s4 = inlined_call_operand.vmem [shape: bf16[160,64], index: 4, kind: input, shape index: {}]
  %s5 = inlined_call_operand.vmem [shape: f32[1,64], index: 5, kind: input, shape index: {}]
  %s6 = inlined_call_operand.vmem [shape: bf16[8,32], index: 6, kind: input, shape index: {}]
  %s7 = inlined_call_operand.vmem [shape: f32[1,32], index: 7, kind: input, shape index: {}]
  %s8 = inlined_call_operand.vmem [shape: bf16[256,64], index: 8, kind: input, shape index: {}]
  %s9 = inlined_call_operand.vmem [shape: bf16[32,64], index: 9, kind: input, shape index: {}]
  %s10 = inlined_call_operand.vmem [shape: f32[1,64], index: 10, kind: input, shape index: {}]
  %s11 = inlined_call_operand.vmem [shape: bf16[64,1], index: 11, kind: input, shape index: {}]
  %s12 = inlined_call_operand.<no memory space> [shape: f32[1,1], index: 12, kind: input, shape index: {}]
  %s13 = inlined_call_operand.vmem [shape: f32[16,1], index: 13, kind: output, shape index: {}]
  %s14 = sld [smem:[#allocation0]]
  $region85: #{tpu_custom_call.1} parent=0
    _
  %s16 = ssub.s32 1, %s14
  %s17 = scalar_select 0, %s16, %s14
  %v18 = vstv %s12
  %19 = vst [vmem:[#allocation2] sm:$0x1] %v18
  loop: start=0, step=1, limit=4
  $region2: #{tpu_custom_call.1} parent=0 // loop_pre_header
    _
  $region3: #{tpu_custom_call.1} parent=0 // loop_header
    %s21 = sphi 0, %s25
    %p22 = scmp.ge.s32.totalorder %s21, 4
    %s31 = sphi 0, %s33
    %s34 = sphi 0, %s31
    %s35 = sphi 0, %s34
    %s51 = sphi 0, %s35
    %s57 = sphi 0, %s59
    %s60 = sphi 0, %s57
    %s61 = sphi 0, %s60
    %s77 = sphi 0, %s61
    %s81 = sphi 0, %s81
    %s83 = sphi 0, %s81
    %s84 = sphi 0, %s83
    %s98 = sphi 0, %s84
    %s102 = sphi 0, %s102
    %s104 = sphi 0, %s102
    %s105 = sphi 0, %s104
    %s119 = sphi 0, %s105
    %s123 = sphi 0, %s123
    %s125 = sphi 0, %s123
    %s126 = sphi 0, %s125
    %s140 = sphi 0, %s126
    %s144 = sphi 0, %s144
    %s146 = sphi 0, %s144
    %s147 = sphi 0, %s146
    %s161 = sphi 0, %s147
    %s165 = sphi 0, %s165
    %s167 = sphi 0, %s165
    %s168 = sphi 0, %s167
    %s182 = sphi 0, %s168
    %s186 = sphi 0, %s186
    %s188 = sphi 0, %s186
    %s189 = sphi 0, %s188
    %s203 = sphi 0, %s189
    %s207 = sphi 0, %s207
    %s209 = sphi 0, %s207
    %s210 = sphi 0, %s209
    %s224 = sphi 0, %s210
    %s228 = sphi 0, %s228
    %s230 = sphi 0, %s228
    %s231 = sphi 0, %s230
    %s245 = sphi 0, %s231
    %s249 = sphi 0, %s249
    %s251 = sphi 0, %s249
    %s252 = sphi 0, %s251
    %s266 = sphi 0, %s252
    %s270 = sphi 0, %s270
    %s272 = sphi 0, %s270
    %s273 = sphi 0, %s272
    %s287 = sphi 0, %s273
    %s291 = sphi 0, %s291
    %s293 = sphi 0, %s291
    %s294 = sphi 0, %s293
    %s308 = sphi 0, %s294
    %s314 = sphi 0, %s316
    %s317 = sphi 0, %s314
    %s318 = sphi 0, %s317
    %s334 = sphi 0, %s318
  $region4: #{tpu_custom_call.1} parent=0 // loop_header_branch
    %24 = sbr.rel (%p22) target = $region8
  $region5: #{tpu_custom_call.1} parent=0 // loop_body
    %s26 = ssub.s32 %s21, 1
    %s27 = ssub.s32 %s21, 2
    %s28 = sadd.s32 %s21, 1
    %s29 = ssub.s32 %s21, %s28
    %p30 = scmp.eq.s32.totalorder %s29, 0
    %s32 = sadd.s32 %s31, 1
    %s33 = scalar_select %p30, %s31, %s32
    %p36 = pneg %p30
    %p37 = scmp.eq.s32.totalorder %s21, 1
    %p38 = por %p36, %p37
    %p39 = scmp.ne.s32.totalorder %s31, %s34
    %p40 = scmp.eq.s32.totalorder %s21, 0
    %p41 = por %p39, %p40
    %p42 = scmp.ne.s32.totalorder %s31, %s34
    %p43 = scmp.eq.s32.totalorder %s26, 1
    %p44 = por %p42, %p43
    %p45 = scmp.ne.s32.totalorder %s34, %s35
    %p46 = scmp.eq.s32.totalorder %s26, 0
    %p47 = por %p45, %p46
    %p48 = scmp.ne.s32.totalorder %s34, %s35
    %p49 = scmp.eq.s32.totalorder %s27, 1
    %p50 = por %p48, %p49
    %p52 = scmp.ne.s32.totalorder %s35, %s51
    %p53 = scmp.eq.s32.totalorder %s27, 0
    %p54 = por %p52, %p53
    %s55 = ssub.s32 %s21, %s28
    %p56 = scmp.eq.s32.totalorder %s55, 0
    %s58 = sadd.s32 %s57, 1
    %s59 = scalar_select %p56, %s57, %s58
    %p62 = pneg %p56
    %p63 = scmp.eq.s32.totalorder %s21, 1
    %p64 = por %p62, %p63
    %p65 = scmp.ne.s32.totalorder %s57, %s60
    %p66 = scmp.eq.s32.totalorder %s21, 0
    %p67 = por %p65, %p66
    %p68 = scmp.ne.s32.totalorder %s57, %s60
    %p69 = scmp.eq.s32.totalorder %s26, 1
    %p70 = por %p68, %p69
    %p71 = scmp.ne.s32.totalorder %s60, %s61
    %p72 = scmp.eq.s32.totalorder %s26, 0
    %p73 = por %p71, %p72
    %p74 = scmp.ne.s32.totalorder %s60, %s61
    %p75 = scmp.eq.s32.totalorder %s27, 1
    %p76 = por %p74, %p75
    %p78 = scmp.ne.s32.totalorder %s61, %s77
    %p79 = scmp.eq.s32.totalorder %s27, 0
    %p80 = por %p78, %p79
    %s82 = sadd.s32 %s81, 1
    %p85 = scmp.eq.s32.totalorder %s21, 1
    %p86 = scmp.ne.s32.totalorder %s81, %s83
    %p87 = scmp.eq.s32.totalorder %s21, 0
    %p88 = por %p86, %p87
    %p89 = scmp.ne.s32.totalorder %s81, %s83
    %p90 = scmp.eq.s32.totalorder %s26, 1
    %p91 = por %p89, %p90
    %p92 = scmp.ne.s32.totalorder %s83, %s84
    %p93 = scmp.eq.s32.totalorder %s26, 0
    %p94 = por %p92, %p93
    %p95 = scmp.ne.s32.totalorder %s83, %s84
    %p96 = scmp.eq.s32.totalorder %s27, 1
    %p97 = por %p95, %p96
    %p99 = scmp.ne.s32.totalorder %s84, %s98
    %p100 = scmp.eq.s32.totalorder %s27, 0
    %p101 = por %p99, %p100
    %s103 = sadd.s32 %s102, 1
    %p106 = scmp.eq.s32.totalorder %s21, 1
    %p107 = scmp.ne.s32.totalorder %s102, %s104
    %p108 = scmp.eq.s32.totalorder %s21, 0
    %p109 = por %p107, %p108
    %p110 = scmp.ne.s32.totalorder %s102, %s104
    %p111 = scmp.eq.s32.totalorder %s26, 1
    %p112 = por %p110, %p111
    %p113 = scmp.ne.s32.totalorder %s104, %s105
    %p114 = scmp.eq.s32.totalorder %s26, 0
    %p115 = por %p113, %p114
    %p116 = scmp.ne.s32.totalorder %s104, %s105
    %p117 = scmp.eq.s32.totalorder %s27, 1
    %p118 = por %p116, %p117
    %p120 = scmp.ne.s32.totalorder %s105, %s119
    %p121 = scmp.eq.s32.totalorder %s27, 0
    %p122 = por %p120, %p121
    %s124 = sadd.s32 %s123, 1
    %p127 = scmp.eq.s32.totalorder %s21, 1
    %p128 = scmp.ne.s32.totalorder %s123, %s125
    %p129 = scmp.eq.s32.totalorder %s21, 0
    %p130 = por %p128, %p129
    %p131 = scmp.ne.s32.totalorder %s123, %s125
    %p132 = scmp.eq.s32.totalorder %s26, 1
    %p133 = por %p131, %p132
    %p134 = scmp.ne.s32.totalorder %s125, %s126
    %p135 = scmp.eq.s32.totalorder %s26, 0
    %p136 = por %p134, %p135
    %p137 = scmp.ne.s32.totalorder %s125, %s126
    %p138 = scmp.eq.s32.totalorder %s27, 1
    %p139 = por %p137, %p138
    %p141 = scmp.ne.s32.totalorder %s126, %s140
    %p142 = scmp.eq.s32.totalorder %s27, 0
    %p143 = por %p141, %p142
    %s145 = sadd.s32 %s144, 1
    %p148 = scmp.eq.s32.totalorder %s21, 1
    %p149 = scmp.ne.s32.totalorder %s144, %s146
    %p150 = scmp.eq.s32.totalorder %s21, 0
    %p151 = por %p149, %p150
    %p152 = scmp.ne.s32.totalorder %s144, %s146
    %p153 = scmp.eq.s32.totalorder %s26, 1
    %p154 = por %p152, %p153
    %p155 = scmp.ne.s32.totalorder %s146, %s147
    %p156 = scmp.eq.s32.totalorder %s26, 0
    %p157 = por %p155, %p156
    %p158 = scmp.ne.s32.totalorder %s146, %s147
    %p159 = scmp.eq.s32.totalorder %s27, 1
    %p160 = por %p158, %p159
    %p162 = scmp.ne.s32.totalorder %s147, %s161
    %p163 = scmp.eq.s32.totalorder %s27, 0
    %p164 = por %p162, %p163
    %s166 = sadd.s32 %s165, 1
    %p169 = scmp.eq.s32.totalorder %s21, 1
    %p170 = scmp.ne.s32.totalorder %s165, %s167
    %p171 = scmp.eq.s32.totalorder %s21, 0
    %p172 = por %p170, %p171
    %p173 = scmp.ne.s32.totalorder %s165, %s167
    %p174 = scmp.eq.s32.totalorder %s26, 1
    %p175 = por %p173, %p174
    %p176 = scmp.ne.s32.totalorder %s167, %s168
    %p177 = scmp.eq.s32.totalorder %s26, 0
    %p178 = por %p176, %p177
    %p179 = scmp.ne.s32.totalorder %s167, %s168
    %p180 = scmp.eq.s32.totalorder %s27, 1
    %p181 = por %p179, %p180
    %p183 = scmp.ne.s32.totalorder %s168, %s182
    %p184 = scmp.eq.s32.totalorder %s27, 0
    %p185 = por %p183, %p184
    %s187 = sadd.s32 %s186, 1
    %p190 = scmp.eq.s32.totalorder %s21, 1
    %p191 = scmp.ne.s32.totalorder %s186, %s188
    %p192 = scmp.eq.s32.totalorder %s21, 0
    %p193 = por %p191, %p192
    %p194 = scmp.ne.s32.totalorder %s186, %s188
    %p195 = scmp.eq.s32.totalorder %s26, 1
    %p196 = por %p194, %p195
    %p197 = scmp.ne.s32.totalorder %s188, %s189
    %p198 = scmp.eq.s32.totalorder %s26, 0
    %p199 = por %p197, %p198
    %p200 = scmp.ne.s32.totalorder %s188, %s189
    %p201 = scmp.eq.s32.totalorder %s27, 1
    %p202 = por %p200, %p201
    %p204 = scmp.ne.s32.totalorder %s189, %s203
    %p205 = scmp.eq.s32.totalorder %s27, 0
    %p206 = por %p204, %p205
    %s208 = sadd.s32 %s207, 1
    %p211 = scmp.eq.s32.totalorder %s21, 1
    %p212 = scmp.ne.s32.totalorder %s207, %s209
    %p213 = scmp.eq.s32.totalorder %s21, 0
    %p214 = por %p212, %p213
    %p215 = scmp.ne.s32.totalorder %s207, %s209
    %p216 = scmp.eq.s32.totalorder %s26, 1
    %p217 = por %p215, %p216
    %p218 = scmp.ne.s32.totalorder %s209, %s210
    %p219 = scmp.eq.s32.totalorder %s26, 0
    %p220 = por %p218, %p219
    %p221 = scmp.ne.s32.totalorder %s209, %s210
    %p222 = scmp.eq.s32.totalorder %s27, 1
    %p223 = por %p221, %p222
    %p225 = scmp.ne.s32.totalorder %s210, %s224
    %p226 = scmp.eq.s32.totalorder %s27, 0
    %p227 = por %p225, %p226
    %s229 = sadd.s32 %s228, 1
    %p232 = scmp.eq.s32.totalorder %s21, 1
    %p233 = scmp.ne.s32.totalorder %s228, %s230
    %p234 = scmp.eq.s32.totalorder %s21, 0
    %p235 = por %p233, %p234
    %p236 = scmp.ne.s32.totalorder %s228, %s230
    %p237 = scmp.eq.s32.totalorder %s26, 1
    %p238 = por %p236, %p237
    %p239 = scmp.ne.s32.totalorder %s230, %s231
    %p240 = scmp.eq.s32.totalorder %s26, 0
    %p241 = por %p239, %p240
    %p242 = scmp.ne.s32.totalorder %s230, %s231
    %p243 = scmp.eq.s32.totalorder %s27, 1
    %p244 = por %p242, %p243
    %p246 = scmp.ne.s32.totalorder %s231, %s245
    %p247 = scmp.eq.s32.totalorder %s27, 0
    %p248 = por %p246, %p247
    %s250 = sadd.s32 %s249, 1
    %p253 = scmp.eq.s32.totalorder %s21, 1
    %p254 = scmp.ne.s32.totalorder %s249, %s251
    %p255 = scmp.eq.s32.totalorder %s21, 0
    %p256 = por %p254, %p255
    %p257 = scmp.ne.s32.totalorder %s249, %s251
    %p258 = scmp.eq.s32.totalorder %s26, 1
    %p259 = por %p257, %p258
    %p260 = scmp.ne.s32.totalorder %s251, %s252
    %p261 = scmp.eq.s32.totalorder %s26, 0
    %p262 = por %p260, %p261
    %p263 = scmp.ne.s32.totalorder %s251, %s252
    %p264 = scmp.eq.s32.totalorder %s27, 1
    %p265 = por %p263, %p264
    %p267 = scmp.ne.s32.totalorder %s252, %s266
    %p268 = scmp.eq.s32.totalorder %s27, 0
    %p269 = por %p267, %p268
    %s271 = sadd.s32 %s270, 1
    %p274 = scmp.eq.s32.totalorder %s21, 1
    %p275 = scmp.ne.s32.totalorder %s270, %s272
    %p276 = scmp.eq.s32.totalorder %s21, 0
    %p277 = por %p275, %p276
    %p278 = scmp.ne.s32.totalorder %s270, %s272
    %p279 = scmp.eq.s32.totalorder %s26, 1
    %p280 = por %p278, %p279
    %p281 = scmp.ne.s32.totalorder %s272, %s273
    %p282 = scmp.eq.s32.totalorder %s26, 0
    %p283 = por %p281, %p282
    %p284 = scmp.ne.s32.totalorder %s272, %s273
    %p285 = scmp.eq.s32.totalorder %s27, 1
    %p286 = por %p284, %p285
    %p288 = scmp.ne.s32.totalorder %s273, %s287
    %p289 = scmp.eq.s32.totalorder %s27, 0
    %p290 = por %p288, %p289
    %s292 = sadd.s32 %s291, 1
    %p295 = scmp.eq.s32.totalorder %s21, 1
    %p296 = scmp.ne.s32.totalorder %s291, %s293
    %p297 = scmp.eq.s32.totalorder %s21, 0
    %p298 = por %p296, %p297
    %p299 = scmp.ne.s32.totalorder %s291, %s293
    %p300 = scmp.eq.s32.totalorder %s26, 1
    %p301 = por %p299, %p300
    %p302 = scmp.ne.s32.totalorder %s293, %s294
    %p303 = scmp.eq.s32.totalorder %s26, 0
    %p304 = por %p302, %p303
    %p305 = scmp.ne.s32.totalorder %s293, %s294
    %p306 = scmp.eq.s32.totalorder %s27, 1
    %p307 = por %p305, %p306
    %p309 = scmp.ne.s32.totalorder %s294, %s308
    %p310 = scmp.eq.s32.totalorder %s27, 0
    %p311 = por %p309, %p310
    %s312 = ssub.s32 %s21, %s28
    %p313 = scmp.eq.s32.totalorder %s312, 0
    %s315 = sadd.s32 %s314, 1
    %s316 = scalar_select %p313, %s314, %s315
    %p319 = pneg %p313
    %p320 = scmp.eq.s32.totalorder %s21, 1
    %p321 = por %p319, %p320
    %p322 = scmp.ne.s32.totalorder %s314, %s317
    %p323 = scmp.eq.s32.totalorder %s21, 0
    %p324 = por %p322, %p323
    %p325 = scmp.ne.s32.totalorder %s314, %s317
    %p326 = scmp.eq.s32.totalorder %s26, 1
    %p327 = por %p325, %p326
    %p328 = scmp.ne.s32.totalorder %s317, %s318
    %p329 = scmp.eq.s32.totalorder %s26, 0
    %p330 = por %p328, %p329
    %p331 = scmp.ne.s32.totalorder %s317, %s318
    %p332 = scmp.eq.s32.totalorder %s27, 1
    %p333 = por %p331, %p332
    %p335 = scmp.ne.s32.totalorder %s318, %s334
    %p336 = scmp.eq.s32.totalorder %s27, 0
    %p337 = por %p335, %p336
    %p338 = scmp.le.s32.totalorder 1, %s21
    %p339 = scmp.lt.s32.totalorder %s21, 3
    %p340 = pnand %p338, %p339
    %p341 = pneg %p340
    // Predicated region
    $region9: #{tpu_custom_call.1} parent=5 // pred_check
      _
    $region10: #{tpu_custom_call.1} parent=5 // pred_check_branch
      %343 = sbr.rel (%p340) target = $region12
    $region11: #{tpu_custom_call.1} parent=5 // pred_region
      %s344 = ssub.s32 %s21, 1
      // Predicated region
      $region13: #{tpu_custom_call.1} parent=11 // pred_check
        %p345 = pneg %p94
      $region14: #{tpu_custom_call.1} parent=11 // pred_check_branch
        %347 = sbr.rel (%p345) target = $region16
      $region15: #{tpu_custom_call.1} parent=11 // pred_region
        _
      $region16: #{tpu_custom_call.1} parent=11 // pred_fallthru
        _
      // Predicated region
      $region17: #{tpu_custom_call.1} parent=11 // pred_check
        %p348 = pneg %p115
      $region18: #{tpu_custom_call.1} parent=11 // pred_check_branch
        %350 = sbr.rel (%p348) target = $region20
      $region19: #{tpu_custom_call.1} parent=11 // pred_region
        _
      $region20: #{tpu_custom_call.1} parent=11 // pred_fallthru
        _
      // Predicated region
      $region21: #{tpu_custom_call.1} parent=11 // pred_check
        %p351 = pneg %p136
      $region22: #{tpu_custom_call.1} parent=11 // pred_check_branch
        %353 = sbr.rel (%p351) target = $region24
      $region23: #{tpu_custom_call.1} parent=11 // pred_region
        _
      $region24: #{tpu_custom_call.1} parent=11 // pred_fallthru
        _
      // Predicated region
      $region25: #{tpu_custom_call.1} parent=11 // pred_check
        %p354 = pneg %p157
      $region26: #{tpu_custom_call.1} parent=11 // pred_check_branch
        %356 = sbr.rel (%p354) target = $region28
      $region27: #{tpu_custom_call.1} parent=11 // pred_region
        _
      $region28: #{tpu_custom_call.1} parent=11 // pred_fallthru
        _
      // Predicated region
      $region29: #{tpu_custom_call.1} parent=11 // pred_check
        %p357 = pneg %p178
      $region30: #{tpu_custom_call.1} parent=11 // pred_check_branch
        %359 = sbr.rel (%p357) target = $region32
      $region31: #{tpu_custom_call.1} parent=11 // pred_region
        _
      $region32: #{tpu_custom_call.1} parent=11 // pred_fallthru
        _
      // Predicated region
      $region33: #{tpu_custom_call.1} parent=11 // pred_check
        %p360 = pneg %p199
      $region34: #{tpu_custom_call.1} parent=11 // pred_check_branch
        %362 = sbr.rel (%p360) target = $region36
      $region35: #{tpu_custom_call.1} parent=11 // pred_region
        _
      $region36: #{tpu_custom_call.1} parent=11 // pred_fallthru
        _
      // Predicated region
      $region37: #{tpu_custom_call.1} parent=11 // pred_check
        %p363 = pneg %p220
      $region38: #{tpu_custom_call.1} parent=11 // pred_check_branch
        %365 = sbr.rel (%p363) target = $region40
      $region39: #{tpu_custom_call.1} parent=11 // pred_region
        _
      $region40: #{tpu_custom_call.1} parent=11 // pred_fallthru
        _
      // Predicated region
      $region41: #{tpu_custom_call.1} parent=11 // pred_check
        %p366 = pneg %p241
      $region42: #{tpu_custom_call.1} parent=11 // pred_check_branch
        %368 = sbr.rel (%p366) target = $region44
      $region43: #{tpu_custom_call.1} parent=11 // pred_region
        _
      $region44: #{tpu_custom_call.1} parent=11 // pred_fallthru
        _
      // Predicated region
      $region45: #{tpu_custom_call.1} parent=11 // pred_check
        %p369 = pneg %p262
      $region46: #{tpu_custom_call.1} parent=11 // pred_check_branch
        %371 = sbr.rel (%p369) target = $region48
      $region47: #{tpu_custom_call.1} parent=11 // pred_region
        _
      $region48: #{tpu_custom_call.1} parent=11 // pred_fallthru
        _
      // Predicated region
      $region49: #{tpu_custom_call.1} parent=11 // pred_check
        %p372 = pneg %p283
      $region50: #{tpu_custom_call.1} parent=11 // pred_check_branch
        %374 = sbr.rel (%p372) target = $region52
      $region51: #{tpu_custom_call.1} parent=11 // pred_region
        _
      $region52: #{tpu_custom_call.1} parent=11 // pred_fallthru
        _
      // Predicated region
      $region53: #{tpu_custom_call.1} parent=11 // pred_check
        %p375 = pneg %p304
      $region54: #{tpu_custom_call.1} parent=11 // pred_check_branch
        %377 = sbr.rel (%p375) target = $region56
      $region55: #{tpu_custom_call.1} parent=11 // pred_region
        _
      $region56: #{tpu_custom_call.1} parent=11 // pred_fallthru
        _
    $region12: #{tpu_custom_call.1} parent=5 // pred_fallthru
      _
    %p378 = scmp.lt.s32.totalorder %s21, 2
    // Predicated region
    $region57: #{tpu_custom_call.1} parent=5 // pred_check
      %p379 = pneg %p378
    $region58: #{tpu_custom_call.1} parent=5 // pred_check_branch
      %381 = sbr.rel (%p379) target = $region60
    $region59: #{tpu_custom_call.1} parent=5 // pred_region
      // Predicated region
      $region61: #{tpu_custom_call.1} parent=59 // pred_check
        %p382 = pneg %p41
      $region62: #{tpu_custom_call.1} parent=59 // pred_check_branch
        %384 = sbr.rel (%p382) target = $region64
      $region63: #{tpu_custom_call.1} parent=59 // pred_region
        %s385 = smul.u32 8, %s21
        %p386 = scmp.lt.s32.totalorder %s385, 15
        %s387 = scalar_select %p386, %s385, 15
        %s388 = smul.addr %s387, 3
        %s389 = smul.addr %s388, 4
        %s390 = scalar_lea.vmem %s0, %s389
        %s391 = smul.u32 8, %s21
      $region64: #{tpu_custom_call.1} parent=59 // pred_fallthru
        _
      // Predicated region
      $region65: #{tpu_custom_call.1} parent=59 // pred_check
        %p392 = pneg %p67
      $region66: #{tpu_custom_call.1} parent=59 // pred_check_branch
        %394 = sbr.rel (%p392) target = $region68
      $region67: #{tpu_custom_call.1} parent=59 // pred_region
        %p395 = scmp.lt.s32.totalorder %s21, 1
        %s396 = scalar_select %p395, %s21, 1
        %s397 = smul.addr %s396, 4
        %s398 = scalar_lea.vmem %s1, %s397
      $region68: #{tpu_custom_call.1} parent=59 // pred_fallthru
        _
    $region60: #{tpu_custom_call.1} parent=5 // pred_fallthru
      _
    %p399 = scmp.le.s32.totalorder 1, %s21
    %p400 = scmp.lt.s32.totalorder %s21, 3
    %p401 = pnand %p399, %p400
    %p402 = pneg %p401
    // Predicated region
    $region69: #{tpu_custom_call.1} parent=5 // pred_check
      _
    $region70: #{tpu_custom_call.1} parent=5 // pred_check_branch
      %404 = sbr.rel (%p401) target = $region72
    $region71: #{tpu_custom_call.1} parent=5 // pred_region
      %s405 = ssub.s32 %s21, 1
      %s406 = smul.u32 8, %s26
      %p407 = scmp.lt.s32.totalorder %s406, 15
      %s408 = scalar_select %p407, %s406, 15
      %s409 = smul.addr %s408, 3
      %s410 = smul.addr %s409, 4
      %s411 = scalar_lea.vmem %s0, %s410
      %p412 = pneg %p47
      %p413 = pneg %p44
      %p414 = scmp.lt.s32.totalorder %s26, 1
      %s415 = scalar_select %p414, %s26, 1
      %s416 = smul.addr %s415, 4
      %s417 = scalar_lea.vmem %s1, %s416
      %p418 = pneg %p73
      %p419 = pneg %p70
      %p420 = pneg %p94
      %p421 = pneg %p91
      %p422 = pneg %p115
      %p423 = pneg %p112
      %p424 = pneg %p136
      %p425 = pneg %p133
      %p426 = pneg %p157
      %p427 = pneg %p154
      %p428 = pneg %p178
      %p429 = pneg %p175
      %p430 = pneg %p199
      %p431 = pneg %p196
      %p432 = pneg %p220
      %p433 = pneg %p217
      %p434 = pneg %p241
      %p435 = pneg %p238
      %p436 = pneg %p262
      %p437 = pneg %p259
      %p438 = pneg %p283
      %p439 = pneg %p280
      %p440 = pneg %p304
      %p441 = pneg %p301
      %p442 = pneg %p330
      %p443 = pneg %p327
      %p444 = scmp.lt.s32.totalorder %s26, 1
      %s445 = scalar_select %p444, %s26, 1
      %s446 = smul.addr %s445, 8
      %s447 = scalar_lea.vmem %s13, %s446
      %s448 = smul.u32 8, %s26
      %p449 = scmp.lt.s32.totalorder %s448, 15
      %s450 = scalar_select %p449, %s448, 15
      %s451 = smul.addr %s450, 3
      %s452 = smul.addr %s451, 4
      %s453 = scalar_lea.vmem %s0, %s452
      %s454 = smul.u32 8, %s26
      %p455 = scmp.lt.s32.totalorder %s26, 1
      %s456 = scalar_select %p455, %s26, 1
      %s457 = smul.addr %s456, 4
      %s458 = scalar_lea.vmem %s1, %s457
      %p459 = scmp.lt.s32.totalorder %s26, 1
      %s460 = scalar_select %p459, %s26, 1
      %s461 = smul.addr %s460, 8
      %s462 = scalar_lea.vmem %s13, %s461
      %v464 = vld [vmem:[%s453] sm:$0xf]
      %v465 = vld [vmem:[%s453 + $0x4] sm:$0xf]
      %v466 = vld [vmem:[%s453 + $0x8] sm:$0x7]
      %v467 = vld [vmem:[%s453 + $0xc] sm:$0xf]
      %v468 = vld [vmem:[%s453 + $0x10] sm:$0xf]
      %v469 = vld [vmem:[%s453 + $0x14] sm:$0x7]
      %v470 = vld [vmem:[%s453 + $0x18] sm:$0xf]
      %v471 = vld [vmem:[%s453 + $0x1c] sm:$0xf]
      %v472 = vld [vmem:[%s453 + $0x20] sm:$0x7]
      %v473 = vld [vmem:[%s453 + $0x24] sm:$0xf]
      %v474 = vld [vmem:[%s453 + $0x28] sm:$0xf]
      %v475 = vld [vmem:[%s453 + $0x2c] sm:$0x7]
      %v476 = vld [vmem:[%s453 + $0x30] sm:$0xf]
      %v477 = vld [vmem:[%s453 + $0x34] sm:$0xf]
      %v478 = vld [vmem:[%s453 + $0x38] sm:$0x7]
      %v479 = vld [vmem:[%s453 + $0x3c] sm:$0xf]
      %v480 = vld [vmem:[%s453 + $0x40] sm:$0xf]
      %v481 = vld [vmem:[%s453 + $0x44] sm:$0x7]
      %v482 = vld [vmem:[%s453 + $0x48] sm:$0xf]
      %v483 = vld [vmem:[%s453 + $0x4c] sm:$0xf]
      %v484 = vld [vmem:[%s453 + $0x50] sm:$0x7]
      %v485 = vld [vmem:[%s453 + $0x54] sm:$0xf]
      %v486 = vld [vmem:[%s453 + $0x58] sm:$0xf]
      %v487 = vld [vmem:[%s453 + $0x5c] sm:$0x7]
      %v488 = vunpack.c.l.bf16 %v464
      %v489 = vunpack.c.l.bf16 %v465
      %v490 = vunpack.c.l.bf16 %v466
      %v491 = vunpack.c.l.bf16 %v467
      %v492 = vunpack.c.l.bf16 %v468
      %v493 = vunpack.c.l.bf16 %v469
      %v494 = vunpack.c.l.bf16 %v470
      %v495 = vunpack.c.l.bf16 %v471
      %v496 = vunpack.c.l.bf16 %v472
      %v497 = vunpack.c.l.bf16 %v473
      %v498 = vunpack.c.l.bf16 %v474
      %v499 = vunpack.c.l.bf16 %v475
      %v500 = vunpack.c.l.bf16 %v476
      %v501 = vunpack.c.l.bf16 %v477
      %v502 = vunpack.c.l.bf16 %v478
      %v503 = vunpack.c.l.bf16 %v479
      %v504 = vunpack.c.l.bf16 %v480
      %v505 = vunpack.c.l.bf16 %v481
      %v506 = vunpack.c.l.bf16 %v482
      %v507 = vunpack.c.l.bf16 %v483
      %v508 = vunpack.c.l.bf16 %v484
      %v509 = vunpack.c.l.bf16 %v485
      %v510 = vunpack.c.l.bf16 %v486
      %v511 = vunpack.c.l.bf16 %v487
      %vm536 = vcmask 1046528
      %v537 = vrot.slane %v488, 1
      %v538 = vrot.slane %v489, 1
      %v539 = vsel %vm536, %v537, %v538
      %v540 = vrot.slane %v490, 1
      %v541 = vsel %vm536, %v538, %v540
      %v542 = vrot.slane %v491, 1
      %v543 = vrot.slane %v492, 1
      %v544 = vsel %vm536, %v542, %v543
      %v545 = vrot.slane %v493, 1
      %v546 = vsel %vm536, %v543, %v545
      %v547 = vrot.slane %v494, 1
      %v548 = vrot.slane %v495, 1
      %v549 = vsel %vm536, %v547, %v548
      %v550 = vrot.slane %v496, 1
      %v551 = vsel %vm536, %v548, %v550
      %v552 = vrot.slane %v497, 1
      %v553 = vrot.slane %v498, 1
      %v554 = vsel %vm536, %v552, %v553
      %v555 = vrot.slane %v499, 1
      %v556 = vsel %vm536, %v553, %v555
      %v557 = vrot.slane %v500, 1
      %v558 = vrot.slane %v501, 1
      %v559 = vsel %vm536, %v557, %v558
      %v560 = vrot.slane %v502, 1
      %v561 = vsel %vm536, %v558, %v560
      %v562 = vrot.slane %v503, 1
      %v563 = vrot.slane %v504, 1
      %v564 = vsel %vm536, %v562, %v563
      %v565 = vrot.slane %v505, 1
      %v566 = vsel %vm536, %v563, %v565
      %v567 = vrot.slane %v506, 1
      %v568 = vrot.slane %v507, 1
      %v569 = vsel %vm536, %v567, %v568
      %v570 = vrot.slane %v508, 1
      %v571 = vsel %vm536, %v568, %v570
      %v572 = vrot.slane %v509, 1
      %v573 = vrot.slane %v510, 1
      %v574 = vsel %vm536, %v572, %v573
      %v575 = vrot.slane %v511, 1
      %v576 = vsel %vm536, %v573, %v575
      %577 = vrot.lane.b32.xlu0 %v539, 4
      %v578 = vpop.permute.xlu0 %577
      %579 = vrot.lane.b32.xlu0 %v541, 4
      %v580 = vpop.permute.xlu0 %579
      %581 = vrot.lane.b32.xlu0 %v544, 4
      %v582 = vpop.permute.xlu0 %581
      %583 = vrot.lane.b32.xlu0 %v546, 4
      %v584 = vpop.permute.xlu0 %583
      %585 = vrot.lane.b32.xlu0 %v549, 4
      %v586 = vpop.permute.xlu0 %585
      %587 = vrot.lane.b32.xlu0 %v551, 4
      %v588 = vpop.permute.xlu0 %587
      %589 = vrot.lane.b32.xlu0 %v554, 4
      %v590 = vpop.permute.xlu0 %589
      %591 = vrot.lane.b32.xlu0 %v556, 4
      %v592 = vpop.permute.xlu0 %591
      %593 = vrot.lane.b32.xlu0 %v559, 4
      %v594 = vpop.permute.xlu0 %593
      %595 = vrot.lane.b32.xlu0 %v561, 4
      %v596 = vpop.permute.xlu0 %595
      %597 = vrot.lane.b32.xlu0 %v564, 4
      %v598 = vpop.permute.xlu0 %597
      %599 = vrot.lane.b32.xlu0 %v566, 4
      %v600 = vpop.permute.xlu0 %599
      %601 = vrot.lane.b32.xlu0 %v569, 4
      %v602 = vpop.permute.xlu0 %601
      %603 = vrot.lane.b32.xlu0 %v571, 4
      %v604 = vpop.permute.xlu0 %603
      %605 = vrot.lane.b32.xlu0 %v574, 4
      %v606 = vpop.permute.xlu0 %605
      %607 = vrot.lane.b32.xlu0 %v576, 4
      %v608 = vpop.permute.xlu0 %607
      %vm625 = vcmask 1045504
      %v626 = vrot.slane %v488, 2
      %v627 = vrot.slane %v489, 2
      %v628 = vsel %vm625, %v626, %v627
      %v629 = vrot.slane %v490, 2
      %v630 = vsel %vm625, %v627, %v629
      %v631 = vrot.slane %v491, 2
      %v632 = vrot.slane %v492, 2
      %v633 = vsel %vm625, %v631, %v632
      %v634 = vrot.slane %v493, 2
      %v635 = vsel %vm625, %v632, %v634
      %v636 = vrot.slane %v494, 2
      %v637 = vrot.slane %v495, 2
      %v638 = vsel %vm625, %v636, %v637
      %v639 = vrot.slane %v496, 2
      %v640 = vsel %vm625, %v637, %v639
      %v641 = vrot.slane %v497, 2
      %v642 = vrot.slane %v498, 2
      %v643 = vsel %vm625, %v641, %v642
      %v644 = vrot.slane %v499, 2
      %v645 = vsel %vm625, %v642, %v644
      %v646 = vrot.slane %v500, 2
      %v647 = vrot.slane %v501, 2
      %v648 = vsel %vm625, %v646, %v647
      %v649 = vrot.slane %v502, 2
      %v650 = vsel %vm625, %v647, %v649
      %v651 = vrot.slane %v503, 2
      %v652 = vrot.slane %v504, 2
      %v653 = vsel %vm625, %v651, %v652
      %v654 = vrot.slane %v505, 2
      %v655 = vsel %vm625, %v652, %v654
      %v656 = vrot.slane %v506, 2
      %v657 = vrot.slane %v507, 2
      %v658 = vsel %vm625, %v656, %v657
      %v659 = vrot.slane %v508, 2
      %v660 = vsel %vm625, %v657, %v659
      %v661 = vrot.slane %v509, 2
      %v662 = vrot.slane %v510, 2
      %v663 = vsel %vm625, %v661, %v662
      %v664 = vrot.slane %v511, 2
      %v665 = vsel %vm625, %v662, %v664
      %666 = vrot.lane.b32.xlu0 %v628, 8
      %v667 = vpop.permute.xlu0 %666
      %668 = vrot.lane.b32.xlu0 %v630, 8
      %v669 = vpop.permute.xlu0 %668
      %670 = vrot.lane.b32.xlu0 %v633, 8
      %v671 = vpop.permute.xlu0 %670
      %672 = vrot.lane.b32.xlu0 %v635, 8
      %v673 = vpop.permute.xlu0 %672
      %674 = vrot.lane.b32.xlu0 %v638, 8
      %v675 = vpop.permute.xlu0 %674
      %676 = vrot.lane.b32.xlu0 %v640, 8
      %v677 = vpop.permute.xlu0 %676
      %678 = vrot.lane.b32.xlu0 %v643, 8
      %v679 = vpop.permute.xlu0 %678
      %680 = vrot.lane.b32.xlu0 %v645, 8
      %v681 = vpop.permute.xlu0 %680
      %682 = vrot.lane.b32.xlu0 %v648, 8
      %v683 = vpop.permute.xlu0 %682
      %684 = vrot.lane.b32.xlu0 %v650, 8
      %v685 = vpop.permute.xlu0 %684
      %686 = vrot.lane.b32.xlu0 %v653, 8
      %v687 = vpop.permute.xlu0 %686
      %688 = vrot.lane.b32.xlu0 %v655, 8
      %v689 = vpop.permute.xlu0 %688
      %690 = vrot.lane.b32.xlu0 %v658, 8
      %v691 = vpop.permute.xlu0 %690
      %692 = vrot.lane.b32.xlu0 %v660, 8
      %v693 = vpop.permute.xlu0 %692
      %694 = vrot.lane.b32.xlu0 %v663, 8
      %v695 = vpop.permute.xlu0 %694
      %696 = vrot.lane.b32.xlu0 %v665, 8
      %v697 = vpop.permute.xlu0 %696
      %vm714 = vcmask 1044480
      %v715 = vrot.slane %v488, 3
      %v716 = vrot.slane %v489, 3
      %v717 = vsel %vm714, %v715, %v716
      %v718 = vrot.slane %v490, 3
      %v719 = vsel %vm714, %v716, %v718
      %v720 = vrot.slane %v491, 3
      %v721 = vrot.slane %v492, 3
      %v722 = vsel %vm714, %v720, %v721
      %v723 = vrot.slane %v493, 3
      %v724 = vsel %vm714, %v721, %v723
      %v725 = vrot.slane %v494, 3
      %v726 = vrot.slane %v495, 3
      %v727 = vsel %vm714, %v725, %v726
      %v728 = vrot.slane %v496, 3
      %v729 = vsel %vm714, %v726, %v728
      %v730 = vrot.slane %v497, 3
      %v731 = vrot.slane %v498, 3
      %v732 = vsel %vm714, %v730, %v731
      %v733 = vrot.slane %v499, 3
      %v734 = vsel %vm714, %v731, %v733
      %v735 = vrot.slane %v500, 3
      %v736 = vrot.slane %v501, 3
      %v737 = vsel %vm714, %v735, %v736
      %v738 = vrot.slane %v502, 3
      %v739 = vsel %vm714, %v736, %v738
      %v740 = vrot.slane %v503, 3
      %v741 = vrot.slane %v504, 3
      %v742 = vsel %vm714, %v740, %v741
      %v743 = vrot.slane %v505, 3
      %v744 = vsel %vm714, %v741, %v743
      %v745 = vrot.slane %v506, 3
      %v746 = vrot.slane %v507, 3
      %v747 = vsel %vm714, %v745, %v746
      %v748 = vrot.slane %v508, 3
      %v749 = vsel %vm714, %v746, %v748
      %v750 = vrot.slane %v509, 3
      %v751 = vrot.slane %v510, 3
      %v752 = vsel %vm714, %v750, %v751
      %v753 = vrot.slane %v511, 3
      %v754 = vsel %vm714, %v751, %v753
      %755 = vrot.lane.b32.xlu0 %v717, 12
      %v756 = vpop.permute.xlu0 %755
      %757 = vrot.lane.b32.xlu0 %v719, 12
      %v758 = vpop.permute.xlu0 %757
      %759 = vrot.lane.b32.xlu0 %v722, 12
      %v760 = vpop.permute.xlu0 %759
      %761 = vrot.lane.b32.xlu0 %v724, 12
      %v762 = vpop.permute.xlu0 %761
      %763 = vrot.lane.b32.xlu0 %v727, 12
      %v764 = vpop.permute.xlu0 %763
      %765 = vrot.lane.b32.xlu0 %v729, 12
      %v766 = vpop.permute.xlu0 %765
      %767 = vrot.lane.b32.xlu0 %v732, 12
      %v768 = vpop.permute.xlu0 %767
      %769 = vrot.lane.b32.xlu0 %v734, 12
      %v770 = vpop.permute.xlu0 %769
      %771 = vrot.lane.b32.xlu0 %v737, 12
      %v772 = vpop.permute.xlu0 %771
      %773 = vrot.lane.b32.xlu0 %v739, 12
      %v774 = vpop.permute.xlu0 %773
      %775 = vrot.lane.b32.xlu0 %v742, 12
      %v776 = vpop.permute.xlu0 %775
      %777 = vrot.lane.b32.xlu0 %v744, 12
      %v778 = vpop.permute.xlu0 %777
      %779 = vrot.lane.b32.xlu0 %v747, 12
      %v780 = vpop.permute.xlu0 %779
      %781 = vrot.lane.b32.xlu0 %v749, 12
      %v782 = vpop.permute.xlu0 %781
      %783 = vrot.lane.b32.xlu0 %v752, 12
      %v784 = vpop.permute.xlu0 %783
      %785 = vrot.lane.b32.xlu0 %v754, 12
      %v786 = vpop.permute.xlu0 %785
      %vm803 = vcmask 1043456
      %v804 = vrot.slane %v488, 4
      %v805 = vrot.slane %v489, 4
      %v806 = vsel %vm803, %v804, %v805
      %v807 = vrot.slane %v490, 4
      %v808 = vsel %vm803, %v805, %v807
      %v809 = vrot.slane %v491, 4
      %v810 = vrot.slane %v492, 4
      %v811 = vsel %vm803, %v809, %v810
      %v812 = vrot.slane %v493, 4
      %v813 = vsel %vm803, %v810, %v812
      %v814 = vrot.slane %v494, 4
      %v815 = vrot.slane %v495, 4
      %v816 = vsel %vm803, %v814, %v815
      %v817 = vrot.slane %v496, 4
      %v818 = vsel %vm803, %v815, %v817
      %v819 = vrot.slane %v497, 4
      %v820 = vrot.slane %v498, 4
      %v821 = vsel %vm803, %v819, %v820
      %v822 = vrot.slane %v499, 4
      %v823 = vsel %vm803, %v820, %v822
      %v824 = vrot.slane %v500, 4
      %v825 = vrot.slane %v501, 4
      %v826 = vsel %vm803, %v824, %v825
      %v827 = vrot.slane %v502, 4
      %v828 = vsel %vm803, %v825, %v827
      %v829 = vrot.slane %v503, 4
      %v830 = vrot.slane %v504, 4
      %v831 = vsel %vm803, %v829, %v830
      %v832 = vrot.slane %v505, 4
      %v833 = vsel %vm803, %v830, %v832
      %v834 = vrot.slane %v506, 4
      %v835 = vrot.slane %v507, 4
      %v836 = vsel %vm803, %v834, %v835
      %v837 = vrot.slane %v508, 4
      %v838 = vsel %vm803, %v835, %v837
      %v839 = vrot.slane %v509, 4
      %v840 = vrot.slane %v510, 4
      %v841 = vsel %vm803, %v839, %v840
      %v842 = vrot.slane %v511, 4
      %v843 = vsel %vm803, %v840, %v842
      %844 = vrot.lane.b32.xlu0 %v806, 16
      %v845 = vpop.permute.xlu0 %844
      %846 = vrot.lane.b32.xlu0 %v808, 16
      %v847 = vpop.permute.xlu0 %846
      %848 = vrot.lane.b32.xlu0 %v811, 16
      %v849 = vpop.permute.xlu0 %848
      %850 = vrot.lane.b32.xlu0 %v813, 16
      %v851 = vpop.permute.xlu0 %850
      %852 = vrot.lane.b32.xlu0 %v816, 16
      %v853 = vpop.permute.xlu0 %852
      %854 = vrot.lane.b32.xlu0 %v818, 16
      %v855 = vpop.permute.xlu0 %854
      %856 = vrot.lane.b32.xlu0 %v821, 16
      %v857 = vpop.permute.xlu0 %856
      %858 = vrot.lane.b32.xlu0 %v823, 16
      %v859 = vpop.permute.xlu0 %858
      %860 = vrot.lane.b32.xlu0 %v826, 16
      %v861 = vpop.permute.xlu0 %860
      %862 = vrot.lane.b32.xlu0 %v828, 16
      %v863 = vpop.permute.xlu0 %862
      %864 = vrot.lane.b32.xlu0 %v831, 16
      %v865 = vpop.permute.xlu0 %864
      %866 = vrot.lane.b32.xlu0 %v833, 16
      %v867 = vpop.permute.xlu0 %866
      %868 = vrot.lane.b32.xlu0 %v836, 16
      %v869 = vpop.permute.xlu0 %868
      %870 = vrot.lane.b32.xlu0 %v838, 16
      %v871 = vpop.permute.xlu0 %870
      %872 = vrot.lane.b32.xlu0 %v841, 16
      %v873 = vpop.permute.xlu0 %872
      %874 = vrot.lane.b32.xlu0 %v843, 16
      %v875 = vpop.permute.xlu0 %874
      %vm892 = vcmask 1042432
      %v893 = vrot.slane %v488, 5
      %v894 = vrot.slane %v489, 5
      %v895 = vsel %vm892, %v893, %v894
      %v896 = vrot.slane %v490, 5
      %v897 = vsel %vm892, %v894, %v896
      %v898 = vrot.slane %v491, 5
      %v899 = vrot.slane %v492, 5
      %v900 = vsel %vm892, %v898, %v899
      %v901 = vrot.slane %v493, 5
      %v902 = vsel %vm892, %v899, %v901
      %v903 = vrot.slane %v494, 5
      %v904 = vrot.slane %v495, 5
      %v905 = vsel %vm892, %v903, %v904
      %v906 = vrot.slane %v496, 5
      %v907 = vsel %vm892, %v904, %v906
      %v908 = vrot.slane %v497, 5
      %v909 = vrot.slane %v498, 5
      %v910 = vsel %vm892, %v908, %v909
      %v911 = vrot.slane %v499, 5
      %v912 = vsel %vm892, %v909, %v911
      %v913 = vrot.slane %v500, 5
      %v914 = vrot.slane %v501, 5
      %v915 = vsel %vm892, %v913, %v914
      %v916 = vrot.slane %v502, 5
      %v917 = vsel %vm892, %v914, %v916
      %v918 = vrot.slane %v503, 5
      %v919 = vrot.slane %v504, 5
      %v920 = vsel %vm892, %v918, %v919
      %v921 = vrot.slane %v505, 5
      %v922 = vsel %vm892, %v919, %v921
      %v923 = vrot.slane %v506, 5
      %v924 = vrot.slane %v507, 5
      %v925 = vsel %vm892, %v923, %v924
      %v926 = vrot.slane %v508, 5
      %v927 = vsel %vm892, %v924, %v926
      %v928 = vrot.slane %v509, 5
      %v929 = vrot.slane %v510, 5
      %v930 = vsel %vm892, %v928, %v929
      %v931 = vrot.slane %v511, 5
      %v932 = vsel %vm892, %v929, %v931
      %933 = vrot.lane.b32.xlu0 %v895, 20
      %v934 = vpop.permute.xlu0 %933
      %935 = vrot.lane.b32.xlu0 %v897, 20
      %v936 = vpop.permute.xlu0 %935
      %937 = vrot.lane.b32.xlu0 %v900, 20
      %v938 = vpop.permute.xlu0 %937
      %939 = vrot.lane.b32.xlu0 %v902, 20
      %v940 = vpop.permute.xlu0 %939
      %941 = vrot.lane.b32.xlu0 %v905, 20
      %v942 = vpop.permute.xlu0 %941
      %943 = vrot.lane.b32.xlu0 %v907, 20
      %v944 = vpop.permute.xlu0 %943
      %945 = vrot.lane.b32.xlu0 %v910, 20
      %v946 = vpop.permute.xlu0 %945
      %947 = vrot.lane.b32.xlu0 %v912, 20
      %v948 = vpop.permute.xlu0 %947
      %949 = vrot.lane.b32.xlu0 %v915, 20
      %v950 = vpop.permute.xlu0 %949
      %951 = vrot.lane.b32.xlu0 %v917, 20
      %v952 = vpop.permute.xlu0 %951
      %953 = vrot.lane.b32.xlu0 %v920, 20
      %v954 = vpop.permute.xlu0 %953
      %955 = vrot.lane.b32.xlu0 %v922, 20
      %v956 = vpop.permute.xlu0 %955
      %957 = vrot.lane.b32.xlu0 %v925, 20
      %v958 = vpop.permute.xlu0 %957
      %959 = vrot.lane.b32.xlu0 %v927, 20
      %v960 = vpop.permute.xlu0 %959
      %961 = vrot.lane.b32.xlu0 %v930, 20
      %v962 = vpop.permute.xlu0 %961
      %963 = vrot.lane.b32.xlu0 %v932, 20
      %v964 = vpop.permute.xlu0 %963
      %vm981 = vcmask 1041408
      %v982 = vrot.slane %v488, 6
      %v983 = vrot.slane %v489, 6
      %v984 = vsel %vm981, %v982, %v983
      %v985 = vrot.slane %v490, 6
      %v986 = vsel %vm981, %v983, %v985
      %v987 = vrot.slane %v491, 6
      %v988 = vrot.slane %v492, 6
      %v989 = vsel %vm981, %v987, %v988
      %v990 = vrot.slane %v493, 6
      %v991 = vsel %vm981, %v988, %v990
      %v992 = vrot.slane %v494, 6
      %v993 = vrot.slane %v495, 6
      %v994 = vsel %vm981, %v992, %v993
      %v995 = vrot.slane %v496, 6
      %v996 = vsel %vm981, %v993, %v995
      %v997 = vrot.slane %v497, 6
      %v998 = vrot.slane %v498, 6
      %v999 = vsel %vm981, %v997, %v998
      %v1000 = vrot.slane %v499, 6
      %v1001 = vsel %vm981, %v998, %v1000
      %v1002 = vrot.slane %v500, 6
      %v1003 = vrot.slane %v501, 6
      %v1004 = vsel %vm981, %v1002, %v1003
      %v1005 = vrot.slane %v502, 6
      %v1006 = vsel %vm981, %v1003, %v1005
      %v1007 = vrot.slane %v503, 6
      %v1008 = vrot.slane %v504, 6
      %v1009 = vsel %vm981, %v1007, %v1008
      %v1010 = vrot.slane %v505, 6
      %v1011 = vsel %vm981, %v1008, %v1010
      %v1012 = vrot.slane %v506, 6
      %v1013 = vrot.slane %v507, 6
      %v1014 = vsel %vm981, %v1012, %v1013
      %v1015 = vrot.slane %v508, 6
      %v1016 = vsel %vm981, %v1013, %v1015
      %v1017 = vrot.slane %v509, 6
      %v1018 = vrot.slane %v510, 6
      %v1019 = vsel %vm981, %v1017, %v1018
      %v1020 = vrot.slane %v511, 6
      %v1021 = vsel %vm981, %v1018, %v1020
      %1022 = vrot.lane.b32.xlu0 %v984, 24
      %v1023 = vpop.permute.xlu0 %1022
      %1024 = vrot.lane.b32.xlu0 %v986, 24
      %v1025 = vpop.permute.xlu0 %1024
      %1026 = vrot.lane.b32.xlu0 %v989, 24
      %v1027 = vpop.permute.xlu0 %1026
      %1028 = vrot.lane.b32.xlu0 %v991, 24
      %v1029 = vpop.permute.xlu0 %1028
      %1030 = vrot.lane.b32.xlu0 %v994, 24
      %v1031 = vpop.permute.xlu0 %1030
      %1032 = vrot.lane.b32.xlu0 %v996, 24
      %v1033 = vpop.permute.xlu0 %1032
      %1034 = vrot.lane.b32.xlu0 %v999, 24
      %v1035 = vpop.permute.xlu0 %1034
      %1036 = vrot.lane.b32.xlu0 %v1001, 24
      %v1037 = vpop.permute.xlu0 %1036
      %1038 = vrot.lane.b32.xlu0 %v1004, 24
      %v1039 = vpop.permute.xlu0 %1038
      %1040 = vrot.lane.b32.xlu0 %v1006, 24
      %v1041 = vpop.permute.xlu0 %1040
      %1042 = vrot.lane.b32.xlu0 %v1009, 24
      %v1043 = vpop.permute.xlu0 %1042
      %1044 = vrot.lane.b32.xlu0 %v1011, 24
      %v1045 = vpop.permute.xlu0 %1044
      %1046 = vrot.lane.b32.xlu0 %v1014, 24
      %v1047 = vpop.permute.xlu0 %1046
      %1048 = vrot.lane.b32.xlu0 %v1016, 24
      %v1049 = vpop.permute.xlu0 %1048
      %1050 = vrot.lane.b32.xlu0 %v1019, 24
      %v1051 = vpop.permute.xlu0 %1050
      %1052 = vrot.lane.b32.xlu0 %v1021, 24
      %v1053 = vpop.permute.xlu0 %1052
      %vm1070 = vcmask 31744
      %v1071 = vsel %vm1070, %v488, %v578
      %v1072 = vsel %vm1070, %v489, %v580
      %v1073 = vsel %vm1070, %v491, %v582
      %v1074 = vsel %vm1070, %v492, %v584
      %v1075 = vsel %vm1070, %v494, %v586
      %v1076 = vsel %vm1070, %v495, %v588
      %v1077 = vsel %vm1070, %v497, %v590
      %v1078 = vsel %vm1070, %v498, %v592
      %v1079 = vsel %vm1070, %v500, %v594
      %v1080 = vsel %vm1070, %v501, %v596
      %v1081 = vsel %vm1070, %v503, %v598
      %v1082 = vsel %vm1070, %v504, %v600
      %v1083 = vsel %vm1070, %v506, %v602
      %v1084 = vsel %vm1070, %v507, %v604
      %v1085 = vsel %vm1070, %v509, %v606
      %v1086 = vsel %vm1070, %v510, %v608
      %vm1087 = vcmask 64512
      %v1088 = vsel %vm1087, %v1071, %v667
      %v1089 = vsel %vm1087, %v1072, %v669
      %v1090 = vsel %vm1087, %v1073, %v671
      %v1091 = vsel %vm1087, %v1074, %v673
      %v1092 = vsel %vm1087, %v1075, %v675
      %v1093 = vsel %vm1087, %v1076, %v677
      %v1094 = vsel %vm1087, %v1077, %v679
      %v1095 = vsel %vm1087, %v1078, %v681
      %v1096 = vsel %vm1087, %v1079, %v683
      %v1097 = vsel %vm1087, %v1080, %v685
      %v1098 = vsel %vm1087, %v1081, %v687
      %v1099 = vsel %vm1087, %v1082, %v689
      %v1100 = vsel %vm1087, %v1083, %v691
      %v1101 = vsel %vm1087, %v1084, %v693
      %v1102 = vsel %vm1087, %v1085, %v695
      %v1103 = vsel %vm1087, %v1086, %v697
      %vm1104 = vcmask 97280
      %v1105 = vsel %vm1104, %v1088, %v756
      %v1106 = vsel %vm1104, %v1089, %v758
      %v1107 = vsel %vm1104, %v1090, %v760
      %v1108 = vsel %vm1104, %v1091, %v762
      %v1109 = vsel %vm1104, %v1092, %v764
      %v1110 = vsel %vm1104, %v1093, %v766
      %v1111 = vsel %vm1104, %v1094, %v768
      %v1112 = vsel %vm1104, %v1095, %v770
      %v1113 = vsel %vm1104, %v1096, %v772
      %v1114 = vsel %vm1104, %v1097, %v774
      %v1115 = vsel %vm1104, %v1098, %v776
      %v1116 = vsel %vm1104, %v1099, %v778
      %v1117 = vsel %vm1104, %v1100, %v780
      %v1118 = vsel %vm1104, %v1101, %v782
      %v1119 = vsel %vm1104, %v1102, %v784
      %v1120 = vsel %vm1104, %v1103, %v786
      %vm1121 = vcmask 130048
      %v1122 = vsel %vm1121, %v1105, %v845
      %v1123 = vsel %vm1121, %v1106, %v847
      %v1124 = vsel %vm1121, %v1107, %v849
      %v1125 = vsel %vm1121, %v1108, %v851
      %v1126 = vsel %vm1121, %v1109, %v853
      %v1127 = vsel %vm1121, %v1110, %v855
      %v1128 = vsel %vm1121, %v1111, %v857
      %v1129 = vsel %vm1121, %v1112, %v859
      %v1130 = vsel %vm1121, %v1113, %v861
      %v1131 = vsel %vm1121, %v1114, %v863
      %v1132 = vsel %vm1121, %v1115, %v865
      %v1133 = vsel %vm1121, %v1116, %v867
      %v1134 = vsel %vm1121, %v1117, %v869
      %v1135 = vsel %vm1121, %v1118, %v871
      %v1136 = vsel %vm1121, %v1119, %v873
      %v1137 = vsel %vm1121, %v1120, %v875
      %vm1138 = vcmask 162816
      %v1139 = vsel %vm1138, %v1122, %v934
      %v1140 = vsel %vm1138, %v1123, %v936
      %v1141 = vsel %vm1138, %v1124, %v938
      %v1142 = vsel %vm1138, %v1125, %v940
      %v1143 = vsel %vm1138, %v1126, %v942
      %v1144 = vsel %vm1138, %v1127, %v944
      %v1145 = vsel %vm1138, %v1128, %v946
      %v1146 = vsel %vm1138, %v1129, %v948
      %v1147 = vsel %vm1138, %v1130, %v950
      %v1148 = vsel %vm1138, %v1131, %v952
      %v1149 = vsel %vm1138, %v1132, %v954
      %v1150 = vsel %vm1138, %v1133, %v956
      %v1151 = vsel %vm1138, %v1134, %v958
      %v1152 = vsel %vm1138, %v1135, %v960
      %v1153 = vsel %vm1138, %v1136, %v962
      %v1154 = vsel %vm1138, %v1137, %v964
      %vm1155 = vcmask 195584
      %v1156 = vsel %vm1155, %v1139, %v1023
      %v1157 = vsel %vm1155, %v1140, %v1025
      %v1158 = vsel %vm1155, %v1141, %v1027
      %v1159 = vsel %vm1155, %v1142, %v1029
      %v1160 = vsel %vm1155, %v1143, %v1031
      %v1161 = vsel %vm1155, %v1144, %v1033
      %v1162 = vsel %vm1155, %v1145, %v1035
      %v1163 = vsel %vm1155, %v1146, %v1037
      %v1164 = vsel %vm1155, %v1147, %v1039
      %v1165 = vsel %vm1155, %v1148, %v1041
      %v1166 = vsel %vm1155, %v1149, %v1043
      %v1167 = vsel %vm1155, %v1150, %v1045
      %v1168 = vsel %vm1155, %v1151, %v1047
      %v1169 = vsel %vm1155, %v1152, %v1049
      %v1170 = vsel %vm1155, %v1153, %v1051
      %v1171 = vsel %vm1155, %v1154, %v1053
      %v1172 = vpack.c.bf16 %v1157, %v1156
      %v1173 = vpack.c.bf16 %v1159, %v1158
      %v1174 = vpack.c.bf16 %v1161, %v1160
      %v1175 = vpack.c.bf16 %v1163, %v1162
      %v1176 = vpack.c.bf16 %v1165, %v1164
      %v1177 = vpack.c.bf16 %v1167, %v1166
      %v1178 = vpack.c.bf16 %v1169, %v1168
      %v1179 = vpack.c.bf16 %v1171, %v1170
      %v1180 = vld [vmem:[%s2] sm:$0xf]
      %v1181 = vld [vmem:[%s2 + $0x4] sm:$0xf]
      %v1182 = vld [vmem:[%s2 + $0x8] sm:$0xf]
      %v1183 = vld [vmem:[%s2 + $0xc] sm:$0x3]
      %v1184 = vld [vmem:[%s3] sm:$0x1]
      %v1186 = vlaneseq
      %v1187 = vshrl.u32 %v1186, 7
      %v1188 = vsub.s32 0, %v1187
      %v1189 = vrot.slane %v1184, %v1188
      %v1195 = vunpack.c.l.b16 %v1180
      %v1196 = vunpack.c.l.b16 %v1181
      %v1197 = vunpack.c.l.b16 %v1182
      %v1198 = vunpack.c.l.b16 %v1183
      %v1199 = vpack.c.b16 %v1196, %v1195
      %v1200 = vpack.c.b16 %v1198, %v1197
      %vm1202 = vcmask 228352
      %v1204 = vsel %vm1202, %v1172, 0
      %v1207 = vsel %vm1202, %v1173, 0
      %v1210 = vsel %vm1202, %v1174, 0
      %v1213 = vsel %vm1202, %v1175, 0
      %v1216 = vsel %vm1202, %v1176, 0
      %v1219 = vsel %vm1202, %v1177, 0
      %v1222 = vsel %vm1202, %v1178, 0
      %v1225 = vsel %vm1202, %v1179, 0
      %v1228 = vsel %vm625, %v1200, 0
      %1230 = vmatprep.subr.bf16.mxu0 0
      %1231 = vmatpush1.bf16.msra.mxu0 0
      %1232 = vmatprep.subr.bf16.mxu0 0
      %1233 = vmatpush1.bf16.msra.mxu0 0
      %1234 = vmatprep.subr.bf16.mxu0 0
      %1235 = vmatpush1.bf16.msra.mxu0 0
      %1236 = vmatprep.subr.bf16.mxu0 0
      %1237 = vmatpush1.bf16.msra.mxu0 0
      %1238 = vmatprep.subr.bf16.mxu0 0
      %1239 = vmatpush1.bf16.msra.mxu0 0
      %1240 = vmatprep.subr.bf16.mxu0 0
      %1241 = vmatpush1.bf16.msra.mxu0 0
      %1242 = vmatprep.subr.bf16.mxu0 0
      %1243 = vmatpush1.bf16.msra.mxu0 %v1228
      %1244 = vmatprep.subr.bf16.mxu0 0
      %1245 = vmatpush1.bf16.msra.mxu0 %v1199
      %1246 = vmatprep.subr.bf16.mxu0 0
      %1247 = vmatpush2.bf16.msra.mxu0 0
      %1248 = vmatprep.subr.bf16.mxu0 0
      %1249 = vmatpush2.bf16.msra.mxu0 0
      %1250 = vmatprep.subr.bf16.mxu0 0
      %1251 = vmatpush2.bf16.msra.mxu0 0
      %1252 = vmatprep.subr.bf16.mxu0 0
      %1253 = vmatpush2.bf16.msra.mxu0 0
      %1254 = vmatprep.subr.bf16.mxu0 0
      %1255 = vmatpush2.bf16.msra.mxu0 0
      %1256 = vmatprep.subr.bf16.mxu0 0
      %1257 = vmatpush2.bf16.msra.mxu0 0
      %1258 = vmatprep.subr.bf16.mxu0 0
      %1259 = vmatpush2.bf16.msra.mxu0 0
      %1260 = vmatprep.subr.bf16.mxu0 0
      %1261 = vmatpush2.bf16.msra.mxu0 0
      %1262 = vmatprep.mubr.bf16.mxu0 0
      %1263 = vmatmul.mubr.bf16.gmra.mxu0 %v1204
      %v1264 = vpop.f32.mrf.mxu0
      %v1265 = vadd.f32 %v1189, %v1264
      %v1266 = vpop.f32.mrf.mxu0
      %v1267 = vpop.f32.mrf.mxu0
      %v1268 = vadd.f32 %v1189, %v1267
      %v1269 = vpop.f32.mrf.mxu0
      %1270 = vmatprep.mubr.bf16.mxu0 0
      %1271 = vmatmul.mubr.bf16.gmra.mxu0 %v1207
      %v1272 = vpop.f32.mrf.mxu0
      %v1273 = vadd.f32 %v1189, %v1272
      %v1274 = vpop.f32.mrf.mxu0
      %v1275 = vpop.f32.mrf.mxu0
      %v1276 = vadd.f32 %v1189, %v1275
      %v1277 = vpop.f32.mrf.mxu0
      %1278 = vmatprep.mubr.bf16.mxu0 0
      %1279 = vmatmul.mubr.bf16.gmra.mxu0 %v1210
      %v1280 = vpop.f32.mrf.mxu0
      %v1281 = vadd.f32 %v1189, %v1280
      %v1282 = vpop.f32.mrf.mxu0
      %v1283 = vpop.f32.mrf.mxu0
      %v1284 = vadd.f32 %v1189, %v1283
      %v1285 = vpop.f32.mrf.mxu0
      %1286 = vmatprep.mubr.bf16.mxu0 0
      %1287 = vmatmul.mubr.bf16.gmra.mxu0 %v1213
      %v1288 = vpop.f32.mrf.mxu0
      %v1289 = vadd.f32 %v1189, %v1288
      %v1290 = vpop.f32.mrf.mxu0
      %v1291 = vpop.f32.mrf.mxu0
      %v1292 = vadd.f32 %v1189, %v1291
      %v1293 = vpop.f32.mrf.mxu0
      %1294 = vmatprep.mubr.bf16.mxu0 0
      %1295 = vmatmul.mubr.bf16.gmra.mxu0 %v1216
      %v1296 = vpop.f32.mrf.mxu0
      %v1297 = vadd.f32 %v1189, %v1296
      %v1298 = vpop.f32.mrf.mxu0
      %v1299 = vpop.f32.mrf.mxu0
      %v1300 = vadd.f32 %v1189, %v1299
      %v1301 = vpop.f32.mrf.mxu0
      %1302 = vmatprep.mubr.bf16.mxu0 0
      %1303 = vmatmul.mubr.bf16.gmra.mxu0 %v1219
      %v1304 = vpop.f32.mrf.mxu0
      %v1305 = vadd.f32 %v1189, %v1304
      %v1306 = vpop.f32.mrf.mxu0
      %v1307 = vpop.f32.mrf.mxu0
      %v1308 = vadd.f32 %v1189, %v1307
      %v1309 = vpop.f32.mrf.mxu0
      %1310 = vmatprep.mubr.bf16.mxu0 0
      %1311 = vmatmul.mubr.bf16.gmra.mxu0 %v1222
      %v1312 = vpop.f32.mrf.mxu0
      %v1313 = vadd.f32 %v1189, %v1312
      %v1314 = vpop.f32.mrf.mxu0
      %v1315 = vpop.f32.mrf.mxu0
      %v1316 = vadd.f32 %v1189, %v1315
      %v1317 = vpop.f32.mrf.mxu0
      %1318 = vmatprep.mubr.bf16.mxu0 0
      %1319 = vmatmul.mubr.bf16.gmra.mxu0 %v1225
      %v1320 = vpop.f32.mrf.mxu0
      %v1321 = vadd.f32 %v1189, %v1320
      %v1322 = vpop.f32.mrf.mxu0
      %v1323 = vpop.f32.mrf.mxu0
      %v1324 = vadd.f32 %v1189, %v1323
      %v1325 = vpop.f32.mrf.mxu0
      %1326 = vdwg.mxu0
      %v1327 = vmax.f32 %v1265, 0.0
      %v1328 = vmax.f32 %v1268, 0.0
      %v1329 = vmax.f32 %v1273, 0.0
      %v1330 = vmax.f32 %v1276, 0.0
      %v1331 = vmax.f32 %v1281, 0.0
      %v1332 = vmax.f32 %v1284, 0.0
      %v1333 = vmax.f32 %v1289, 0.0
      %v1334 = vmax.f32 %v1292, 0.0
      %v1335 = vmax.f32 %v1297, 0.0
      %v1336 = vmax.f32 %v1300, 0.0
      %v1337 = vmax.f32 %v1305, 0.0
      %v1338 = vmax.f32 %v1308, 0.0
      %v1339 = vmax.f32 %v1313, 0.0
      %v1340 = vmax.f32 %v1316, 0.0
      %v1341 = vmax.f32 %v1321, 0.0
      %v1342 = vmax.f32 %v1324, 0.0
      %v1359 = vcombine.high %v1327, %v1327
      %v1361 = vunpack.c.l.s4 1983009808
      %v1362 = vunpack.c.0.s8 %v1361
      %v1363 = vlaneseq
      %v1364 = vshrl.u32 %v1363, 7
      %v1365 = vsub.s32 %v1362, %v1364
      %v1366 = vrot.slane %v1327, %v1365
      %v1368 = vunpack.c.l.s4 1983009808
      %v1369 = vunpack.c.0.s8 %v1368
      %v1370 = vlaneseq
      %v1371 = vshrl.u32 %v1370, 7
      %v1372 = vsub.s32 %v1369, %v1371
      %v1373 = vrot.slane %v1359, %v1372
      %v1374 = vcombine.high %v1366, %v1366
      %v1375 = vcombine.high %v1373, %v1373
      %v1376 = vcombine.high %v1328, %v1328
      %v1378 = vunpack.c.l.s4 1983009808
      %v1379 = vunpack.c.0.s8 %v1378
      %v1380 = vlaneseq
      %v1381 = vshrl.u32 %v1380, 7
      %v1382 = vsub.s32 %v1379, %v1381
      %v1383 = vrot.slane %v1328, %v1382
      %v1385 = vunpack.c.l.s4 1983009808
      %v1386 = vunpack.c.0.s8 %v1385
      %v1387 = vlaneseq
      %v1388 = vshrl.u32 %v1387, 7
      %v1389 = vsub.s32 %v1386, %v1388
      %v1390 = vrot.slane %v1376, %v1389
      %v1391 = vcombine.high %v1383, %v1383
      %v1392 = vcombine.high %v1390, %v1390
      %v1393 = vcombine.high %v1329, %v1329
      %v1395 = vunpack.c.l.s4 1983009808
      %v1396 = vunpack.c.0.s8 %v1395
      %v1397 = vlaneseq
      %v1398 = vshrl.u32 %v1397, 7
      %v1399 = vsub.s32 %v1396, %v1398
      %v1400 = vrot.slane %v1329, %v1399
      %v1402 = vunpack.c.l.s4 1983009808
      %v1403 = vunpack.c.0.s8 %v1402
      %v1404 = vlaneseq
      %v1405 = vshrl.u32 %v1404, 7
      %v1406 = vsub.s32 %v1403, %v1405
      %v1407 = vrot.slane %v1393, %v1406
      %v1408 = vcombine.high %v1400, %v1400
      %v1409 = vcombine.high %v1407, %v1407
      %v1410 = vcombine.high %v1330, %v1330
      %v1412 = vunpack.c.l.s4 1983009808
      %v1413 = vunpack.c.0.s8 %v1412
      %v1414 = vlaneseq
      %v1415 = vshrl.u32 %v1414, 7
      %v1416 = vsub.s32 %v1413, %v1415
      %v1417 = vrot.slane %v1330, %v1416
      %v1419 = vunpack.c.l.s4 1983009808
      %v1420 = vunpack.c.0.s8 %v1419
      %v1421 = vlaneseq
      %v1422 = vshrl.u32 %v1421, 7
      %v1423 = vsub.s32 %v1420, %v1422
      %v1424 = vrot.slane %v1410, %v1423
      %v1425 = vcombine.high %v1417, %v1417
      %v1426 = vcombine.high %v1424, %v1424
      %v1427 = vcombine.high %v1331, %v1331
      %v1429 = vunpack.c.l.s4 1983009808
      %v1430 = vunpack.c.0.s8 %v1429
      %v1431 = vlaneseq
      %v1432 = vshrl.u32 %v1431, 7
      %v1433 = vsub.s32 %v1430, %v1432
      %v1434 = vrot.slane %v1331, %v1433
      %v1436 = vunpack.c.l.s4 1983009808
      %v1437 = vunpack.c.0.s8 %v1436
      %v1438 = vlaneseq
      %v1439 = vshrl.u32 %v1438, 7
      %v1440 = vsub.s32 %v1437, %v1439
      %v1441 = vrot.slane %v1427, %v1440
      %v1442 = vcombine.high %v1434, %v1434
      %v1443 = vcombine.high %v1441, %v1441
      %v1444 = vcombine.high %v1332, %v1332
      %v1446 = vunpack.c.l.s4 1983009808
      %v1447 = vunpack.c.0.s8 %v1446
      %v1448 = vlaneseq
      %v1449 = vshrl.u32 %v1448, 7
      %v1450 = vsub.s32 %v1447, %v1449
      %v1451 = vrot.slane %v1332, %v1450
      %v1453 = vunpack.c.l.s4 1983009808
      %v1454 = vunpack.c.0.s8 %v1453
      %v1455 = vlaneseq
      %v1456 = vshrl.u32 %v1455, 7
      %v1457 = vsub.s32 %v1454, %v1456
      %v1458 = vrot.slane %v1444, %v1457
      %v1459 = vcombine.high %v1451, %v1451
      %v1460 = vcombine.high %v1458, %v1458
      %v1461 = vcombine.high %v1333, %v1333
      %v1463 = vunpack.c.l.s4 1983009808
      %v1464 = vunpack.c.0.s8 %v1463
      %v1465 = vlaneseq
      %v1466 = vshrl.u32 %v1465, 7
      %v1467 = vsub.s32 %v1464, %v1466
      %v1468 = vrot.slane %v1333, %v1467
      %v1470 = vunpack.c.l.s4 1983009808
      %v1471 = vunpack.c.0.s8 %v1470
      %v1472 = vlaneseq
      %v1473 = vshrl.u32 %v1472, 7
      %v1474 = vsub.s32 %v1471, %v1473
      %v1475 = vrot.slane %v1461, %v1474
      %v1476 = vcombine.high %v1468, %v1468
      %v1477 = vcombine.high %v1475, %v1475
      %v1478 = vcombine.high %v1334, %v1334
      %v1480 = vunpack.c.l.s4 1983009808
      %v1481 = vunpack.c.0.s8 %v1480
      %v1482 = vlaneseq
      %v1483 = vshrl.u32 %v1482, 7
      %v1484 = vsub.s32 %v1481, %v1483
      %v1485 = vrot.slane %v1334, %v1484
      %v1487 = vunpack.c.l.s4 1983009808
      %v1488 = vunpack.c.0.s8 %v1487
      %v1489 = vlaneseq
      %v1490 = vshrl.u32 %v1489, 7
      %v1491 = vsub.s32 %v1488, %v1490
      %v1492 = vrot.slane %v1478, %v1491
      %v1493 = vcombine.high %v1485, %v1485
      %v1494 = vcombine.high %v1492, %v1492
      %v1495 = vcombine.high %v1335, %v1335
      %v1497 = vunpack.c.l.s4 1983009808
      %v1498 = vunpack.c.0.s8 %v1497
      %v1499 = vlaneseq
      %v1500 = vshrl.u32 %v1499, 7
      %v1501 = vsub.s32 %v1498, %v1500
      %v1502 = vrot.slane %v1335, %v1501
      %v1504 = vunpack.c.l.s4 1983009808
      %v1505 = vunpack.c.0.s8 %v1504
      %v1506 = vlaneseq
      %v1507 = vshrl.u32 %v1506, 7
      %v1508 = vsub.s32 %v1505, %v1507
      %v1509 = vrot.slane %v1495, %v1508
      %v1510 = vcombine.high %v1502, %v1502
      %v1511 = vcombine.high %v1509, %v1509
      %v1512 = vcombine.high %v1336, %v1336
      %v1514 = vunpack.c.l.s4 1983009808
      %v1515 = vunpack.c.0.s8 %v1514
      %v1516 = vlaneseq
      %v1517 = vshrl.u32 %v1516, 7
      %v1518 = vsub.s32 %v1515, %v1517
      %v1519 = vrot.slane %v1336, %v1518
      %v1521 = vunpack.c.l.s4 1983009808
      %v1522 = vunpack.c.0.s8 %v1521
      %v1523 = vlaneseq
      %v1524 = vshrl.u32 %v1523, 7
      %v1525 = vsub.s32 %v1522, %v1524
      %v1526 = vrot.slane %v1512, %v1525
      %v1527 = vcombine.high %v1519, %v1519
      %v1528 = vcombine.high %v1526, %v1526
      %v1529 = vcombine.high %v1337, %v1337
      %v1531 = vunpack.c.l.s4 1983009808
      %v1532 = vunpack.c.0.s8 %v1531
      %v1533 = vlaneseq
      %v1534 = vshrl.u32 %v1533, 7
      %v1535 = vsub.s32 %v1532, %v1534
      %v1536 = vrot.slane %v1337, %v1535
      %v1538 = vunpack.c.l.s4 1983009808
      %v1539 = vunpack.c.0.s8 %v1538
      %v1540 = vlaneseq
      %v1541 = vshrl.u32 %v1540, 7
      %v1542 = vsub.s32 %v1539, %v1541
      %v1543 = vrot.slane %v1529, %v1542
      %v1544 = vcombine.high %v1536, %v1536
      %v1545 = vcombine.high %v1543, %v1543
      %v1546 = vcombine.high %v1338, %v1338
      %v1548 = vunpack.c.l.s4 1983009808
      %v1549 = vunpack.c.0.s8 %v1548
      %v1550 = vlaneseq
      %v1551 = vshrl.u32 %v1550, 7
      %v1552 = vsub.s32 %v1549, %v1551
      %v1553 = vrot.slane %v1338, %v1552
      %v1555 = vunpack.c.l.s4 1983009808
      %v1556 = vunpack.c.0.s8 %v1555
      %v1557 = vlaneseq
      %v1558 = vshrl.u32 %v1557, 7
      %v1559 = vsub.s32 %v1556, %v1558
      %v1560 = vrot.slane %v1546, %v1559
      %v1561 = vcombine.high %v1553, %v1553
      %v1562 = vcombine.high %v1560, %v1560
      %v1563 = vcombine.high %v1339, %v1339
      %v1565 = vunpack.c.l.s4 1983009808
      %v1566 = vunpack.c.0.s8 %v1565
      %v1567 = vlaneseq
      %v1568 = vshrl.u32 %v1567, 7
      %v1569 = vsub.s32 %v1566, %v1568
      %v1570 = vrot.slane %v1339, %v1569
      %v1572 = vunpack.c.l.s4 1983009808
      %v1573 = vunpack.c.0.s8 %v1572
      %v1574 = vlaneseq
      %v1575 = vshrl.u32 %v1574, 7
      %v1576 = vsub.s32 %v1573, %v1575
      %v1577 = vrot.slane %v1563, %v1576
      %v1578 = vcombine.high %v1570, %v1570
      %v1579 = vcombine.high %v1577, %v1577
      %v1580 = vcombine.high %v1340, %v1340
      %v1582 = vunpack.c.l.s4 1983009808
      %v1583 = vunpack.c.0.s8 %v1582
      %v1584 = vlaneseq
      %v1585 = vshrl.u32 %v1584, 7
      %v1586 = vsub.s32 %v1583, %v1585
      %v1587 = vrot.slane %v1340, %v1586
      %v1589 = vunpack.c.l.s4 1983009808
      %v1590 = vunpack.c.0.s8 %v1589
      %v1591 = vlaneseq
      %v1592 = vshrl.u32 %v1591, 7
      %v1593 = vsub.s32 %v1590, %v1592
      %v1594 = vrot.slane %v1580, %v1593
      %v1595 = vcombine.high %v1587, %v1587
      %v1596 = vcombine.high %v1594, %v1594
      %v1597 = vcombine.high %v1341, %v1341
      %v1599 = vunpack.c.l.s4 1983009808
      %v1600 = vunpack.c.0.s8 %v1599
      %v1601 = vlaneseq
      %v1602 = vshrl.u32 %v1601, 7
      %v1603 = vsub.s32 %v1600, %v1602
      %v1604 = vrot.slane %v1341, %v1603
      %v1606 = vunpack.c.l.s4 1983009808
      %v1607 = vunpack.c.0.s8 %v1606
      %v1608 = vlaneseq
      %v1609 = vshrl.u32 %v1608, 7
      %v1610 = vsub.s32 %v1607, %v1609
      %v1611 = vrot.slane %v1597, %v1610
      %v1612 = vcombine.high %v1604, %v1604
      %v1613 = vcombine.high %v1611, %v1611
      %v1614 = vcombine.high %v1342, %v1342
      %v1616 = vunpack.c.l.s4 1983009808
      %v1617 = vunpack.c.0.s8 %v1616
      %v1618 = vlaneseq
      %v1619 = vshrl.u32 %v1618, 7
      %v1620 = vsub.s32 %v1617, %v1619
      %v1621 = vrot.slane %v1342, %v1620
      %v1623 = vunpack.c.l.s4 1983009808
      %v1624 = vunpack.c.0.s8 %v1623
      %v1625 = vlaneseq
      %v1626 = vshrl.u32 %v1625, 7
      %v1627 = vsub.s32 %v1624, %v1626
      %v1628 = vrot.slane %v1614, %v1627
      %v1629 = vcombine.high %v1621, %v1621
      %v1630 = vcombine.high %v1628, %v1628
      %v1695 = vrot.slane %v1366, 7
      %v1696 = vrot.slane %v1695, 2
      %v1697 = vrot.slane %v1374, 7
      %v1698 = vrot.slane %v1697, 2
      %v1699 = vrot.slane %v1373, 7
      %v1700 = vrot.slane %v1699, 2
      %v1701 = vrot.slane %v1375, 7
      %v1702 = vrot.slane %v1701, 2
      %v1703 = vrot.slane %v1383, 7
      %v1704 = vrot.slane %v1703, 2
      %v1705 = vrot.slane %v1391, 7
      %v1706 = vrot.slane %v1705, 2
      %v1707 = vrot.slane %v1390, 7
      %v1708 = vrot.slane %v1707, 2
      %v1709 = vrot.slane %v1392, 7
      %v1710 = vrot.slane %v1709, 2
      %v1711 = vrot.slane %v1400, 7
      %v1712 = vrot.slane %v1711, 2
      %v1713 = vrot.slane %v1408, 7
      %v1714 = vrot.slane %v1713, 2
      %v1715 = vrot.slane %v1407, 7
      %v1716 = vrot.slane %v1715, 2
      %v1717 = vrot.slane %v1409, 7
      %v1718 = vrot.slane %v1717, 2
      %v1719 = vrot.slane %v1417, 7
      %v1720 = vrot.slane %v1719, 2
      %v1721 = vrot.slane %v1425, 7
      %v1722 = vrot.slane %v1721, 2
      %v1723 = vrot.slane %v1424, 7
      %v1724 = vrot.slane %v1723, 2
      %v1725 = vrot.slane %v1426, 7
      %v1726 = vrot.slane %v1725, 2
      %v1727 = vrot.slane %v1434, 7
      %v1728 = vrot.slane %v1727, 2
      %v1729 = vrot.slane %v1442, 7
      %v1730 = vrot.slane %v1729, 2
      %v1731 = vrot.slane %v1441, 7
      %v1732 = vrot.slane %v1731, 2
      %v1733 = vrot.slane %v1443, 7
      %v1734 = vrot.slane %v1733, 2
      %v1735 = vrot.slane %v1451, 7
      %v1736 = vrot.slane %v1735, 2
      %v1737 = vrot.slane %v1459, 7
      %v1738 = vrot.slane %v1737, 2
      %v1739 = vrot.slane %v1458, 7
      %v1740 = vrot.slane %v1739, 2
      %v1741 = vrot.slane %v1460, 7
      %v1742 = vrot.slane %v1741, 2
      %v1743 = vrot.slane %v1468, 7
      %v1744 = vrot.slane %v1743, 2
      %v1745 = vrot.slane %v1476, 7
      %v1746 = vrot.slane %v1745, 2
      %v1747 = vrot.slane %v1475, 7
      %v1748 = vrot.slane %v1747, 2
      %v1749 = vrot.slane %v1477, 7
      %v1750 = vrot.slane %v1749, 2
      %v1751 = vrot.slane %v1485, 7
      %v1752 = vrot.slane %v1751, 2
      %v1753 = vrot.slane %v1493, 7
      %v1754 = vrot.slane %v1753, 2
      %v1755 = vrot.slane %v1492, 7
      %v1756 = vrot.slane %v1755, 2
      %v1757 = vrot.slane %v1494, 7
      %v1758 = vrot.slane %v1757, 2
      %v1759 = vrot.slane %v1502, 7
      %v1760 = vrot.slane %v1759, 2
      %v1761 = vrot.slane %v1510, 7
      %v1762 = vrot.slane %v1761, 2
      %v1763 = vrot.slane %v1509, 7
      %v1764 = vrot.slane %v1763, 2
      %v1765 = vrot.slane %v1511, 7
      %v1766 = vrot.slane %v1765, 2
      %v1767 = vrot.slane %v1519, 7
      %v1768 = vrot.slane %v1767, 2
      %v1769 = vrot.slane %v1527, 7
      %v1770 = vrot.slane %v1769, 2
      %v1771 = vrot.slane %v1526, 7
      %v1772 = vrot.slane %v1771, 2
      %v1773 = vrot.slane %v1528, 7
      %v1774 = vrot.slane %v1773, 2
      %v1775 = vrot.slane %v1536, 7
      %v1776 = vrot.slane %v1775, 2
      %v1777 = vrot.slane %v1544, 7
      %v1778 = vrot.slane %v1777, 2
      %v1779 = vrot.slane %v1543, 7
      %v1780 = vrot.slane %v1779, 2
      %v1781 = vrot.slane %v1545, 7
      %v1782 = vrot.slane %v1781, 2
      %v1783 = vrot.slane %v1553, 7
      %v1784 = vrot.slane %v1783, 2
      %v1785 = vrot.slane %v1561, 7
      %v1786 = vrot.slane %v1785, 2
      %v1787 = vrot.slane %v1560, 7
      %v1788 = vrot.slane %v1787, 2
      %v1789 = vrot.slane %v1562, 7
      %v1790 = vrot.slane %v1789, 2
      %v1791 = vrot.slane %v1570, 7
      %v1792 = vrot.slane %v1791, 2
      %v1793 = vrot.slane %v1578, 7
      %v1794 = vrot.slane %v1793, 2
      %v1795 = vrot.slane %v1577, 7
      %v1796 = vrot.slane %v1795, 2
      %v1797 = vrot.slane %v1579, 7
      %v1798 = vrot.slane %v1797, 2
      %v1799 = vrot.slane %v1587, 7
      %v1800 = vrot.slane %v1799, 2
      %v1801 = vrot.slane %v1595, 7
      %v1802 = vrot.slane %v1801, 2
      %v1803 = vrot.slane %v1594, 7
      %v1804 = vrot.slane %v1803, 2
      %v1805 = vrot.slane %v1596, 7
      %v1806 = vrot.slane %v1805, 2
      %v1807 = vrot.slane %v1604, 7
      %v1808 = vrot.slane %v1807, 2
      %v1809 = vrot.slane %v1612, 7
      %v1810 = vrot.slane %v1809, 2
      %v1811 = vrot.slane %v1611, 7
      %v1812 = vrot.slane %v1811, 2
      %v1813 = vrot.slane %v1613, 7
      %v1814 = vrot.slane %v1813, 2
      %v1815 = vrot.slane %v1621, 7
      %v1816 = vrot.slane %v1815, 2
      %v1817 = vrot.slane %v1629, 7
      %v1818 = vrot.slane %v1817, 2
      %v1819 = vrot.slane %v1628, 7
      %v1820 = vrot.slane %v1819, 2
      %v1821 = vrot.slane %v1630, 7
      %v1822 = vrot.slane %v1821, 2
      %v1887 = vmax.f32 %v1366, %v1696
      %v1888 = vmax.f32 %v1374, %v1698
      %v1889 = vmax.f32 %v1373, %v1700
      %v1890 = vmax.f32 %v1375, %v1702
      %v1891 = vmax.f32 %v1383, %v1704
      %v1892 = vmax.f32 %v1391, %v1706
      %v1893 = vmax.f32 %v1390, %v1708
      %v1894 = vmax.f32 %v1392, %v1710
      %v1895 = vmax.f32 %v1400, %v1712
      %v1896 = vmax.f32 %v1408, %v1714
      %v1897 = vmax.f32 %v1407, %v1716
      %v1898 = vmax.f32 %v1409, %v1718
      %v1899 = vmax.f32 %v1417, %v1720
      %v1900 = vmax.f32 %v1425, %v1722
      %v1901 = vmax.f32 %v1424, %v1724
      %v1902 = vmax.f32 %v1426, %v1726
      %v1903 = vmax.f32 %v1434, %v1728
      %v1904 = vmax.f32 %v1442, %v1730
      %v1905 = vmax.f32 %v1441, %v1732
      %v1906 = vmax.f32 %v1443, %v1734
      %v1907 = vmax.f32 %v1451, %v1736
      %v1908 = vmax.f32 %v1459, %v1738
      %v1909 = vmax.f32 %v1458, %v1740
      %v1910 = vmax.f32 %v1460, %v1742
      %v1911 = vmax.f32 %v1468, %v1744
      %v1912 = vmax.f32 %v1476, %v1746
      %v1913 = vmax.f32 %v1475, %v1748
      %v1914 = vmax.f32 %v1477, %v1750
      %v1915 = vmax.f32 %v1485, %v1752
      %v1916 = vmax.f32 %v1493, %v1754
      %v1917 = vmax.f32 %v1492, %v1756
      %v1918 = vmax.f32 %v1494, %v1758
      %v1919 = vmax.f32 %v1502, %v1760
      %v1920 = vmax.f32 %v1510, %v1762
      %v1921 = vmax.f32 %v1509, %v1764
      %v1922 = vmax.f32 %v1511, %v1766
      %v1923 = vmax.f32 %v1519, %v1768
      %v1924 = vmax.f32 %v1527, %v1770
      %v1925 = vmax.f32 %v1526, %v1772
      %v1926 = vmax.f32 %v1528, %v1774
      %v1927 = vmax.f32 %v1536, %v1776
      %v1928 = vmax.f32 %v1544, %v1778
      %v1929 = vmax.f32 %v1543, %v1780
      %v1930 = vmax.f32 %v1545, %v1782
      %v1931 = vmax.f32 %v1553, %v1784
      %v1932 = vmax.f32 %v1561, %v1786
      %v1933 = vmax.f32 %v1560, %v1788
      %v1934 = vmax.f32 %v1562, %v1790
      %v1935 = vmax.f32 %v1570, %v1792
      %v1936 = vmax.f32 %v1578, %v1794
      %v1937 = vmax.f32 %v1577, %v1796
      %v1938 = vmax.f32 %v1579, %v1798
      %v1939 = vmax.f32 %v1587, %v1800
      %v1940 = vmax.f32 %v1595, %v1802
      %v1941 = vmax.f32 %v1594, %v1804
      %v1942 = vmax.f32 %v1596, %v1806
      %v1943 = vmax.f32 %v1604, %v1808
      %v1944 = vmax.f32 %v1612, %v1810
      %v1945 = vmax.f32 %v1611, %v1812
      %v1946 = vmax.f32 %v1613, %v1814
      %v1947 = vmax.f32 %v1621, %v1816
      %v1948 = vmax.f32 %v1629, %v1818
      %v1949 = vmax.f32 %v1628, %v1820
      %v1950 = vmax.f32 %v1630, %v1822
      %v2015 = vlaneseq
      %v2016 = vshrl.u32 %v2015, 7
      %v2017 = vsub.s32 0, %v2016
      %v2018 = vrot.slane %v1887, %v2017
      %v2019 = vlaneseq
      %v2020 = vshrl.u32 %v2019, 7
      %v2021 = vsub.s32 0, %v2020
      %v2022 = vrot.slane %v1888, %v2021
      %v2023 = vlaneseq
      %v2024 = vshrl.u32 %v2023, 7
      %v2025 = vsub.s32 0, %v2024
      %v2026 = vrot.slane %v1889, %v2025
      %v2027 = vlaneseq
      %v2028 = vshrl.u32 %v2027, 7
      %v2029 = vsub.s32 0, %v2028
      %v2030 = vrot.slane %v1890, %v2029
      %v2031 = vlaneseq
      %v2032 = vshrl.u32 %v2031, 7
      %v2033 = vsub.s32 0, %v2032
      %v2034 = vrot.slane %v1891, %v2033
      %v2035 = vlaneseq
      %v2036 = vshrl.u32 %v2035, 7
      %v2037 = vsub.s32 0, %v2036
      %v2038 = vrot.slane %v1892, %v2037
      %v2039 = vlaneseq
      %v2040 = vshrl.u32 %v2039, 7
      %v2041 = vsub.s32 0, %v2040
      %v2042 = vrot.slane %v1893, %v2041
      %v2043 = vlaneseq
      %v2044 = vshrl.u32 %v2043, 7
      %v2045 = vsub.s32 0, %v2044
      %v2046 = vrot.slane %v1894, %v2045
      %v2047 = vlaneseq
      %v2048 = vshrl.u32 %v2047, 7
      %v2049 = vsub.s32 0, %v2048
      %v2050 = vrot.slane %v1895, %v2049
      %v2051 = vlaneseq
      %v2052 = vshrl.u32 %v2051, 7
      %v2053 = vsub.s32 0, %v2052
      %v2054 = vrot.slane %v1896, %v2053
      %v2055 = vlaneseq
      %v2056 = vshrl.u32 %v2055, 7
      %v2057 = vsub.s32 0, %v2056
      %v2058 = vrot.slane %v1897, %v2057
      %v2059 = vlaneseq
      %v2060 = vshrl.u32 %v2059, 7
      %v2061 = vsub.s32 0, %v2060
      %v2062 = vrot.slane %v1898, %v2061
      %v2063 = vlaneseq
      %v2064 = vshrl.u32 %v2063, 7
      %v2065 = vsub.s32 0, %v2064
      %v2066 = vrot.slane %v1899, %v2065
      %v2067 = vlaneseq
      %v2068 = vshrl.u32 %v2067, 7
      %v2069 = vsub.s32 0, %v2068
      %v2070 = vrot.slane %v1900, %v2069
      %v2071 = vlaneseq
      %v2072 = vshrl.u32 %v2071, 7
      %v2073 = vsub.s32 0, %v2072
      %v2074 = vrot.slane %v1901, %v2073
      %v2075 = vlaneseq
      %v2076 = vshrl.u32 %v2075, 7
      %v2077 = vsub.s32 0, %v2076
      %v2078 = vrot.slane %v1902, %v2077
      %v2079 = vlaneseq
      %v2080 = vshrl.u32 %v2079, 7
      %v2081 = vsub.s32 0, %v2080
      %v2082 = vrot.slane %v1903, %v2081
      %v2083 = vlaneseq
      %v2084 = vshrl.u32 %v2083, 7
      %v2085 = vsub.s32 0, %v2084
      %v2086 = vrot.slane %v1904, %v2085
      %v2087 = vlaneseq
      %v2088 = vshrl.u32 %v2087, 7
      %v2089 = vsub.s32 0, %v2088
      %v2090 = vrot.slane %v1905, %v2089
      %v2091 = vlaneseq
      %v2092 = vshrl.u32 %v2091, 7
      %v2093 = vsub.s32 0, %v2092
      %v2094 = vrot.slane %v1906, %v2093
      %v2095 = vlaneseq
      %v2096 = vshrl.u32 %v2095, 7
      %v2097 = vsub.s32 0, %v2096
      %v2098 = vrot.slane %v1907, %v2097
      %v2099 = vlaneseq
      %v2100 = vshrl.u32 %v2099, 7
      %v2101 = vsub.s32 0, %v2100
      %v2102 = vrot.slane %v1908, %v2101
      %v2103 = vlaneseq
      %v2104 = vshrl.u32 %v2103, 7
      %v2105 = vsub.s32 0, %v2104
      %v2106 = vrot.slane %v1909, %v2105
      %v2107 = vlaneseq
      %v2108 = vshrl.u32 %v2107, 7
      %v2109 = vsub.s32 0, %v2108
      %v2110 = vrot.slane %v1910, %v2109
      %v2111 = vlaneseq
      %v2112 = vshrl.u32 %v2111, 7
      %v2113 = vsub.s32 0, %v2112
      %v2114 = vrot.slane %v1911, %v2113
      %v2115 = vlaneseq
      %v2116 = vshrl.u32 %v2115, 7
      %v2117 = vsub.s32 0, %v2116
      %v2118 = vrot.slane %v1912, %v2117
      %v2119 = vlaneseq
      %v2120 = vshrl.u32 %v2119, 7
      %v2121 = vsub.s32 0, %v2120
      %v2122 = vrot.slane %v1913, %v2121
      %v2123 = vlaneseq
      %v2124 = vshrl.u32 %v2123, 7
      %v2125 = vsub.s32 0, %v2124
      %v2126 = vrot.slane %v1914, %v2125
      %v2127 = vlaneseq
      %v2128 = vshrl.u32 %v2127, 7
      %v2129 = vsub.s32 0, %v2128
      %v2130 = vrot.slane %v1915, %v2129
      %v2131 = vlaneseq
      %v2132 = vshrl.u32 %v2131, 7
      %v2133 = vsub.s32 0, %v2132
      %v2134 = vrot.slane %v1916, %v2133
      %v2135 = vlaneseq
      %v2136 = vshrl.u32 %v2135, 7
      %v2137 = vsub.s32 0, %v2136
      %v2138 = vrot.slane %v1917, %v2137
      %v2139 = vlaneseq
      %v2140 = vshrl.u32 %v2139, 7
      %v2141 = vsub.s32 0, %v2140
      %v2142 = vrot.slane %v1918, %v2141
      %v2143 = vlaneseq
      %v2144 = vshrl.u32 %v2143, 7
      %v2145 = vsub.s32 0, %v2144
      %v2146 = vrot.slane %v1919, %v2145
      %v2147 = vlaneseq
      %v2148 = vshrl.u32 %v2147, 7
      %v2149 = vsub.s32 0, %v2148
      %v2150 = vrot.slane %v1920, %v2149
      %v2151 = vlaneseq
      %v2152 = vshrl.u32 %v2151, 7
      %v2153 = vsub.s32 0, %v2152
      %v2154 = vrot.slane %v1921, %v2153
      %v2155 = vlaneseq
      %v2156 = vshrl.u32 %v2155, 7
      %v2157 = vsub.s32 0, %v2156
      %v2158 = vrot.slane %v1922, %v2157
      %v2159 = vlaneseq
      %v2160 = vshrl.u32 %v2159, 7
      %v2161 = vsub.s32 0, %v2160
      %v2162 = vrot.slane %v1923, %v2161
      %v2163 = vlaneseq
      %v2164 = vshrl.u32 %v2163, 7
      %v2165 = vsub.s32 0, %v2164
      %v2166 = vrot.slane %v1924, %v2165
      %v2167 = vlaneseq
      %v2168 = vshrl.u32 %v2167, 7
      %v2169 = vsub.s32 0, %v2168
      %v2170 = vrot.slane %v1925, %v2169
      %v2171 = vlaneseq
      %v2172 = vshrl.u32 %v2171, 7
      %v2173 = vsub.s32 0, %v2172
      %v2174 = vrot.slane %v1926, %v2173
      %v2175 = vlaneseq
      %v2176 = vshrl.u32 %v2175, 7
      %v2177 = vsub.s32 0, %v2176
      %v2178 = vrot.slane %v1927, %v2177
      %v2179 = vlaneseq
      %v2180 = vshrl.u32 %v2179, 7
      %v2181 = vsub.s32 0, %v2180
      %v2182 = vrot.slane %v1928, %v2181
      %v2183 = vlaneseq
      %v2184 = vshrl.u32 %v2183, 7
      %v2185 = vsub.s32 0, %v2184
      %v2186 = vrot.slane %v1929, %v2185
      %v2187 = vlaneseq
      %v2188 = vshrl.u32 %v2187, 7
      %v2189 = vsub.s32 0, %v2188
      %v2190 = vrot.slane %v1930, %v2189
      %v2191 = vlaneseq
      %v2192 = vshrl.u32 %v2191, 7
      %v2193 = vsub.s32 0, %v2192
      %v2194 = vrot.slane %v1931, %v2193
      %v2195 = vlaneseq
      %v2196 = vshrl.u32 %v2195, 7
      %v2197 = vsub.s32 0, %v2196
      %v2198 = vrot.slane %v1932, %v2197
      %v2199 = vlaneseq
      %v2200 = vshrl.u32 %v2199, 7
      %v2201 = vsub.s32 0, %v2200
      %v2202 = vrot.slane %v1933, %v2201
      %v2203 = vlaneseq
      %v2204 = vshrl.u32 %v2203, 7
      %v2205 = vsub.s32 0, %v2204
      %v2206 = vrot.slane %v1934, %v2205
      %v2207 = vlaneseq
      %v2208 = vshrl.u32 %v2207, 7
      %v2209 = vsub.s32 0, %v2208
      %v2210 = vrot.slane %v1935, %v2209
      %v2211 = vlaneseq
      %v2212 = vshrl.u32 %v2211, 7
      %v2213 = vsub.s32 0, %v2212
      %v2214 = vrot.slane %v1936, %v2213
      %v2215 = vlaneseq
      %v2216 = vshrl.u32 %v2215, 7
      %v2217 = vsub.s32 0, %v2216
      %v2218 = vrot.slane %v1937, %v2217
      %v2219 = vlaneseq
      %v2220 = vshrl.u32 %v2219, 7
      %v2221 = vsub.s32 0, %v2220
      %v2222 = vrot.slane %v1938, %v2221
      %v2223 = vlaneseq
      %v2224 = vshrl.u32 %v2223, 7
      %v2225 = vsub.s32 0, %v2224
      %v2226 = vrot.slane %v1939, %v2225
      %v2227 = vlaneseq
      %v2228 = vshrl.u32 %v2227, 7
      %v2229 = vsub.s32 0, %v2228
      %v2230 = vrot.slane %v1940, %v2229
      %v2231 = vlaneseq
      %v2232 = vshrl.u32 %v2231, 7
      %v2233 = vsub.s32 0, %v2232
      %v2234 = vrot.slane %v1941, %v2233
      %v2235 = vlaneseq
      %v2236 = vshrl.u32 %v2235, 7
      %v2237 = vsub.s32 0, %v2236
      %v2238 = vrot.slane %v1942, %v2237
      %v2239 = vlaneseq
      %v2240 = vshrl.u32 %v2239, 7
      %v2241 = vsub.s32 0, %v2240
      %v2242 = vrot.slane %v1943, %v2241
      %v2243 = vlaneseq
      %v2244 = vshrl.u32 %v2243, 7
      %v2245 = vsub.s32 0, %v2244
      %v2246 = vrot.slane %v1944, %v2245
      %v2247 = vlaneseq
      %v2248 = vshrl.u32 %v2247, 7
      %v2249 = vsub.s32 0, %v2248
      %v2250 = vrot.slane %v1945, %v2249
      %v2251 = vlaneseq
      %v2252 = vshrl.u32 %v2251, 7
      %v2253 = vsub.s32 0, %v2252
      %v2254 = vrot.slane %v1946, %v2253
      %v2255 = vlaneseq
      %v2256 = vshrl.u32 %v2255, 7
      %v2257 = vsub.s32 0, %v2256
      %v2258 = vrot.slane %v1947, %v2257
      %v2259 = vlaneseq
      %v2260 = vshrl.u32 %v2259, 7
      %v2261 = vsub.s32 0, %v2260
      %v2262 = vrot.slane %v1948, %v2261
      %v2263 = vlaneseq
      %v2264 = vshrl.u32 %v2263, 7
      %v2265 = vsub.s32 0, %v2264
      %v2266 = vrot.slane %v1949, %v2265
      %v2267 = vlaneseq
      %v2268 = vshrl.u32 %v2267, 7
      %v2269 = vsub.s32 0, %v2268
      %v2270 = vrot.slane %v1950, %v2269
      %vm2271 = vcmask 1043459
      %v2272 = vsel %vm2271, %v2022, %v2018
      %vm2273 = vcmask 1044484
      %v2274 = vsel %vm2273, %v2026, %v2272
      %vm2275 = vcmask 1045509
      %v2276 = vsel %vm2275, %v2030, %v2274
      %vm2277 = vcmask 1046534
      %v2278 = vsel %vm2277, %v2034, %v2276
      %vm2279 = vcmask 1047559
      %v2280 = vsel %vm2279, %v2038, %v2278
      %vm2281 = vcmask 1041409
      %v2282 = vsel %vm2281, %v2046, %v2042
      %v2283 = vsel %vm2271, %v2054, %v2050
      %v2284 = vsel %vm2273, %v2058, %v2283
      %v2285 = vsel %vm2275, %v2062, %v2284
      %v2286 = vsel %vm2277, %v2066, %v2285
      %v2287 = vsel %vm2279, %v2070, %v2286
      %v2288 = vsel %vm2281, %v2078, %v2074
      %v2289 = vsel %vm2271, %v2086, %v2082
      %v2290 = vsel %vm2273, %v2090, %v2289
      %v2291 = vsel %vm2275, %v2094, %v2290
      %v2292 = vsel %vm2277, %v2098, %v2291
      %v2293 = vsel %vm2279, %v2102, %v2292
      %v2294 = vsel %vm2281, %v2110, %v2106
      %v2295 = vsel %vm2271, %v2118, %v2114
      %v2296 = vsel %vm2273, %v2122, %v2295
      %v2297 = vsel %vm2275, %v2126, %v2296
      %v2298 = vsel %vm2277, %v2130, %v2297
      %v2299 = vsel %vm2279, %v2134, %v2298
      %v2300 = vsel %vm2281, %v2142, %v2138
      %v2301 = vsel %vm2271, %v2150, %v2146
      %v2302 = vsel %vm2273, %v2154, %v2301
      %v2303 = vsel %vm2275, %v2158, %v2302
      %v2304 = vsel %vm2277, %v2162, %v2303
      %v2305 = vsel %vm2279, %v2166, %v2304
      %v2306 = vsel %vm2281, %v2174, %v2170
      %v2307 = vsel %vm2271, %v2182, %v2178
      %v2308 = vsel %vm2273, %v2186, %v2307
      %v2309 = vsel %vm2275, %v2190, %v2308
      %v2310 = vsel %vm2277, %v2194, %v2309
      %v2311 = vsel %vm2279, %v2198, %v2310
      %v2312 = vsel %vm2281, %v2206, %v2202
      %v2313 = vsel %vm2271, %v2214, %v2210
      %v2314 = vsel %vm2273, %v2218, %v2313
      %v2315 = vsel %vm2275, %v2222, %v2314
      %v2316 = vsel %vm2277, %v2226, %v2315
      %v2317 = vsel %vm2279, %v2230, %v2316
      %v2318 = vsel %vm2281, %v2238, %v2234
      %v2319 = vsel %vm2271, %v2246, %v2242
      %v2320 = vsel %vm2273, %v2250, %v2319
      %v2321 = vsel %vm2275, %v2254, %v2320
      %v2322 = vsel %vm2277, %v2258, %v2321
      %v2323 = vsel %vm2279, %v2262, %v2322
      %v2324 = vsel %vm2281, %v2270, %v2266
      %v2341 = vsel %vm981, 0.0, %v2280
      %v2342 = vsel %vm981, 0.0, %v2287
      %v2343 = vsel %vm981, 0.0, %v2293
      %v2344 = vsel %vm981, 0.0, %v2299
      %v2345 = vsel %vm981, 0.0, %v2305
      %v2346 = vsel %vm981, 0.0, %v2311
      %v2347 = vsel %vm981, 0.0, %v2317
      %v2348 = vsel %vm981, 0.0, %v2323
      %v2349 = vsel %vm981, %v2282, 0.0
      %v2350 = vsel %vm981, %v2288, 0.0
      %v2351 = vsel %vm981, %v2294, 0.0
      %v2352 = vsel %vm981, %v2300, 0.0
      %v2353 = vsel %vm981, %v2306, 0.0
      %v2354 = vsel %vm981, %v2312, 0.0
      %v2355 = vsel %vm981, %v2318, 0.0
      %v2356 = vsel %vm981, %v2324, 0.0
      %v2373 = vrot.slane %v2341, 1
      %v2374 = vrot.slane %v2349, 1
      %v2375 = vsel %vm536, %v2373, %v2374
      %v2376 = vrot.slane %v2342, 1
      %v2377 = vrot.slane %v2350, 1
      %v2378 = vsel %vm536, %v2376, %v2377
      %v2379 = vrot.slane %v2343, 1
      %v2380 = vrot.slane %v2351, 1
      %v2381 = vsel %vm536, %v2379, %v2380
      %v2382 = vrot.slane %v2344, 1
      %v2383 = vrot.slane %v2352, 1
      %v2384 = vsel %vm536, %v2382, %v2383
      %v2385 = vrot.slane %v2345, 1
      %v2386 = vrot.slane %v2353, 1
      %v2387 = vsel %vm536, %v2385, %v2386
      %v2388 = vrot.slane %v2346, 1
      %v2389 = vrot.slane %v2354, 1
      %v2390 = vsel %vm536, %v2388, %v2389
      %v2391 = vrot.slane %v2347, 1
      %v2392 = vrot.slane %v2355, 1
      %v2393 = vsel %vm536, %v2391, %v2392
      %v2394 = vrot.slane %v2348, 1
      %v2395 = vrot.slane %v2356, 1
      %v2396 = vsel %vm536, %v2394, %v2395
      %2397 = vrot.lane.b32.xlu0 %v2375, 32
      %v2398 = vpop.permute.xlu0 %2397
      %2399 = vrot.lane.b32.xlu0 %v2378, 32
      %v2400 = vpop.permute.xlu0 %2399
      %2401 = vrot.lane.b32.xlu0 %v2381, 32
      %v2402 = vpop.permute.xlu0 %2401
      %2403 = vrot.lane.b32.xlu0 %v2384, 32
      %v2404 = vpop.permute.xlu0 %2403
      %2405 = vrot.lane.b32.xlu0 %v2387, 32
      %v2406 = vpop.permute.xlu0 %2405
      %2407 = vrot.lane.b32.xlu0 %v2390, 32
      %v2408 = vpop.permute.xlu0 %2407
      %2409 = vrot.lane.b32.xlu0 %v2393, 32
      %v2410 = vpop.permute.xlu0 %2409
      %2411 = vrot.lane.b32.xlu0 %v2396, 32
      %v2412 = vpop.permute.xlu0 %2411
      %v2421 = vrot.slane %v2341, 2
      %v2422 = vrot.slane %v2349, 2
      %v2423 = vsel %vm625, %v2421, %v2422
      %v2424 = vrot.slane %v2342, 2
      %v2425 = vrot.slane %v2350, 2
      %v2426 = vsel %vm625, %v2424, %v2425
      %v2427 = vrot.slane %v2343, 2
      %v2428 = vrot.slane %v2351, 2
      %v2429 = vsel %vm625, %v2427, %v2428
      %v2430 = vrot.slane %v2344, 2
      %v2431 = vrot.slane %v2352, 2
      %v2432 = vsel %vm625, %v2430, %v2431
      %v2433 = vrot.slane %v2345, 2
      %v2434 = vrot.slane %v2353, 2
      %v2435 = vsel %vm625, %v2433, %v2434
      %v2436 = vrot.slane %v2346, 2
      %v2437 = vrot.slane %v2354, 2
      %v2438 = vsel %vm625, %v2436, %v2437
      %v2439 = vrot.slane %v2347, 2
      %v2440 = vrot.slane %v2355, 2
      %v2441 = vsel %vm625, %v2439, %v2440
      %v2442 = vrot.slane %v2348, 2
      %v2443 = vrot.slane %v2356, 2
      %v2444 = vsel %vm625, %v2442, %v2443
      %2445 = vrot.lane.b32.xlu0 %v2423, 64
      %v2446 = vpop.permute.xlu0 %2445
      %2447 = vrot.lane.b32.xlu0 %v2426, 64
      %v2448 = vpop.permute.xlu0 %2447
      %2449 = vrot.lane.b32.xlu0 %v2429, 64
      %v2450 = vpop.permute.xlu0 %2449
      %2451 = vrot.lane.b32.xlu0 %v2432, 64
      %v2452 = vpop.permute.xlu0 %2451
      %2453 = vrot.lane.b32.xlu0 %v2435, 64
      %v2454 = vpop.permute.xlu0 %2453
      %2455 = vrot.lane.b32.xlu0 %v2438, 64
      %v2456 = vpop.permute.xlu0 %2455
      %2457 = vrot.lane.b32.xlu0 %v2441, 64
      %v2458 = vpop.permute.xlu0 %2457
      %2459 = vrot.lane.b32.xlu0 %v2444, 64
      %v2460 = vpop.permute.xlu0 %2459
      %v2469 = vrot.slane %v2341, 3
      %v2470 = vrot.slane %v2349, 3
      %v2471 = vsel %vm714, %v2469, %v2470
      %v2472 = vrot.slane %v2342, 3
      %v2473 = vrot.slane %v2350, 3
      %v2474 = vsel %vm714, %v2472, %v2473
      %v2475 = vrot.slane %v2343, 3
      %v2476 = vrot.slane %v2351, 3
      %v2477 = vsel %vm714, %v2475, %v2476
      %v2478 = vrot.slane %v2344, 3
      %v2479 = vrot.slane %v2352, 3
      %v2480 = vsel %vm714, %v2478, %v2479
      %v2481 = vrot.slane %v2345, 3
      %v2482 = vrot.slane %v2353, 3
      %v2483 = vsel %vm714, %v2481, %v2482
      %v2484 = vrot.slane %v2346, 3
      %v2485 = vrot.slane %v2354, 3
      %v2486 = vsel %vm714, %v2484, %v2485
      %v2487 = vrot.slane %v2347, 3
      %v2488 = vrot.slane %v2355, 3
      %v2489 = vsel %vm714, %v2487, %v2488
      %v2490 = vrot.slane %v2348, 3
      %v2491 = vrot.slane %v2356, 3
      %v2492 = vsel %vm714, %v2490, %v2491
      %2493 = vrot.lane.b32.xlu0 %v2471, 96
      %v2494 = vpop.permute.xlu0 %2493
      %2495 = vrot.lane.b32.xlu0 %v2474, 96
      %v2496 = vpop.permute.xlu0 %2495
      %2497 = vrot.lane.b32.xlu0 %v2477, 96
      %v2498 = vpop.permute.xlu0 %2497
      %2499 = vrot.lane.b32.xlu0 %v2480, 96
      %v2500 = vpop.permute.xlu0 %2499
      %2501 = vrot.lane.b32.xlu0 %v2483, 96
      %v2502 = vpop.permute.xlu0 %2501
      %2503 = vrot.lane.b32.xlu0 %v2486, 96
      %v2504 = vpop.permute.xlu0 %2503
      %2505 = vrot.lane.b32.xlu0 %v2489, 96
      %v2506 = vpop.permute.xlu0 %2505
      %2507 = vrot.lane.b32.xlu0 %v2492, 96
      %v2508 = vpop.permute.xlu0 %2507
      %v2517 = vrot.slane %v2341, 4
      %v2518 = vrot.slane %v2349, 4
      %v2519 = vsel %vm803, %v2517, %v2518
      %v2520 = vrot.slane %v2342, 4
      %v2521 = vrot.slane %v2350, 4
      %v2522 = vsel %vm803, %v2520, %v2521
      %v2523 = vrot.slane %v2343, 4
      %v2524 = vrot.slane %v2351, 4
      %v2525 = vsel %vm803, %v2523, %v2524
      %v2526 = vrot.slane %v2344, 4
      %v2527 = vrot.slane %v2352, 4
      %v2528 = vsel %vm803, %v2526, %v2527
      %v2529 = vrot.slane %v2345, 4
      %v2530 = vrot.slane %v2353, 4
      %v2531 = vsel %vm803, %v2529, %v2530
      %v2532 = vrot.slane %v2346, 4
      %v2533 = vrot.slane %v2354, 4
      %v2534 = vsel %vm803, %v2532, %v2533
      %v2535 = vrot.slane %v2347, 4
      %v2536 = vrot.slane %v2355, 4
      %v2537 = vsel %vm803, %v2535, %v2536
      %v2538 = vrot.slane %v2348, 4
      %v2539 = vrot.slane %v2356, 4
      %v2540 = vsel %vm803, %v2538, %v2539
      %vm2549 = vcmask 261120
      %v2550 = vsel %vm2549, %v2341, %v2398
      %v2551 = vsel %vm2549, %v2342, %v2400
      %v2552 = vsel %vm2549, %v2343, %v2402
      %v2553 = vsel %vm2549, %v2344, %v2404
      %v2554 = vsel %vm2549, %v2345, %v2406
      %v2555 = vsel %vm2549, %v2346, %v2408
      %v2556 = vsel %vm2549, %v2347, %v2410
      %v2557 = vsel %vm2549, %v2348, %v2412
      %vm2558 = vcmask 523264
      %v2559 = vsel %vm2558, %v2550, %v2446
      %v2560 = vsel %vm2558, %v2551, %v2448
      %v2561 = vsel %vm2558, %v2552, %v2450
      %v2562 = vsel %vm2558, %v2553, %v2452
      %v2563 = vsel %vm2558, %v2554, %v2454
      %v2564 = vsel %vm2558, %v2555, %v2456
      %v2565 = vsel %vm2558, %v2556, %v2458
      %v2566 = vsel %vm2558, %v2557, %v2460
      %vm2567 = vcmask 785408
      %v2568 = vsel %vm2567, %v2559, %v2494
      %v2569 = vsel %vm2567, %v2560, %v2496
      %v2570 = vsel %vm2567, %v2561, %v2498
      %v2571 = vsel %vm2567, %v2562, %v2500
      %v2572 = vsel %vm2567, %v2563, %v2502
      %v2573 = vsel %vm2567, %v2564, %v2504
      %v2574 = vsel %vm2567, %v2565, %v2506
      %v2575 = vsel %vm2567, %v2566, %v2508
      %v2576 = vpack.c.bf16 %v2569, %v2568
      %v2577 = vpack.c.bf16 %v2522, %v2519
      %v2578 = vpack.c.bf16 %v2571, %v2570
      %v2579 = vpack.c.bf16 %v2528, %v2525
      %v2580 = vpack.c.bf16 %v2573, %v2572
      %v2581 = vpack.c.bf16 %v2534, %v2531
      %v2582 = vpack.c.bf16 %v2575, %v2574
      %v2583 = vpack.c.bf16 %v2540, %v2537
      %v2584 = vld [vmem:[%s4] sm:$0xf]
      %v2585 = vld [vmem:[%s4 + $0x4] sm:$0xf]
      %v2586 = vld [vmem:[%s4 + $0x8] sm:$0xf]
      %v2587 = vld [vmem:[%s4 + $0xc] sm:$0xf]
      %v2588 = vld [vmem:[%s4 + $0x10] sm:$0xf]
      %v2589 = vld [vmem:[%s4 + $0x14] sm:$0xf]
      %v2590 = vld [vmem:[%s4 + $0x18] sm:$0xf]
      %v2591 = vld [vmem:[%s4 + $0x1c] sm:$0xf]
      %v2592 = vld [vmem:[%s4 + $0x20] sm:$0xf]
      %v2593 = vld [vmem:[%s4 + $0x24] sm:$0xf]
      %v2594 = vld [vmem:[%s4 + $0x28] sm:$0xf]
      %v2595 = vld [vmem:[%s4 + $0x2c] sm:$0xf]
      %v2596 = vld [vmem:[%s4 + $0x30] sm:$0xf]
      %v2597 = vld [vmem:[%s4 + $0x34] sm:$0xf]
      %v2598 = vld [vmem:[%s4 + $0x38] sm:$0xf]
      %v2599 = vld [vmem:[%s4 + $0x3c] sm:$0xf]
      %v2600 = vld [vmem:[%s4 + $0x40] sm:$0xf]
      %v2601 = vld [vmem:[%s4 + $0x44] sm:$0xf]
      %v2602 = vld [vmem:[%s4 + $0x48] sm:$0xf]
      %v2603 = vld [vmem:[%s4 + $0x4c] sm:$0xf]
      %v2604 = vld [vmem:[%s5] sm:$0x1]
      %v2606 = vlaneseq
      %v2607 = vshrl.u32 %v2606, 7
      %v2608 = vsub.s32 0, %v2607
      %v2609 = vrot.slane %v2604, %v2608
      %v2631 = vunpack.c.l.b16 %v2584
      %v2632 = vunpack.c.l.b16 %v2585
      %v2633 = vunpack.c.l.b16 %v2586
      %v2634 = vunpack.c.l.b16 %v2587
      %v2635 = vunpack.c.l.b16 %v2588
      %v2636 = vunpack.c.l.b16 %v2589
      %v2637 = vunpack.c.l.b16 %v2590
      %v2638 = vunpack.c.l.b16 %v2591
      %v2639 = vunpack.c.l.b16 %v2592
      %v2640 = vunpack.c.l.b16 %v2593
      %v2641 = vunpack.c.l.b16 %v2594
      %v2642 = vunpack.c.l.b16 %v2595
      %v2643 = vunpack.c.l.b16 %v2596
      %v2644 = vunpack.c.l.b16 %v2597
      %v2645 = vunpack.c.l.b16 %v2598
      %v2646 = vunpack.c.l.b16 %v2599
      %v2647 = vunpack.c.l.b16 %v2600
      %v2648 = vunpack.c.l.b16 %v2601
      %v2649 = vunpack.c.l.b16 %v2602
      %v2650 = vunpack.c.l.b16 %v2603
      %v2651 = vpack.c.b16 %v2632, %v2631
      %v2652 = vpack.c.b16 %v2634, %v2633
      %v2653 = vpack.c.b16 %v2636, %v2635
      %v2654 = vpack.c.b16 %v2638, %v2637
      %v2655 = vpack.c.b16 %v2640, %v2639
      %v2656 = vpack.c.b16 %v2642, %v2641
      %v2657 = vpack.c.b16 %v2644, %v2643
      %v2658 = vpack.c.b16 %v2646, %v2645
      %v2659 = vpack.c.b16 %v2648, %v2647
      %v2660 = vpack.c.b16 %v2650, %v2649
      %v2672 = vsel %vm2549, %v2577, 0
      %v2675 = vsel %vm2549, %v2579, 0
      %v2678 = vsel %vm2549, %v2581, 0
      %v2681 = vsel %vm2549, %v2583, 0
      %2683 = vmatprep.subr.bf16.mxu0 0
      %2684 = vmatpush1.bf16.msra.mxu0 %v2658
      %2685 = vmatprep.subr.bf16.mxu0 0
      %2686 = vmatpush1.bf16.msra.mxu0 %v2657
      %2687 = vmatprep.subr.bf16.mxu0 0
      %2688 = vmatpush1.bf16.msra.mxu0 %v2656
      %2689 = vmatprep.subr.bf16.mxu0 0
      %2690 = vmatpush1.bf16.msra.mxu0 %v2655
      %2691 = vmatprep.subr.bf16.mxu0 0
      %2692 = vmatpush1.bf16.msra.mxu0 %v2654
      %2693 = vmatprep.subr.bf16.mxu0 0
      %2694 = vmatpush1.bf16.msra.mxu0 %v2653
      %2695 = vmatprep.subr.bf16.mxu0 0
      %2696 = vmatpush1.bf16.msra.mxu0 %v2652
      %2697 = vmatprep.subr.bf16.mxu0 0
      %2698 = vmatpush1.bf16.msra.mxu0 %v2651
      %2699 = vmatprep.subr.bf16.mxu0 0
      %2700 = vmatpush2.bf16.msra.mxu0 0
      %2701 = vmatprep.subr.bf16.mxu0 0
      %2702 = vmatpush2.bf16.msra.mxu0 0
      %2703 = vmatprep.subr.bf16.mxu0 0
      %2704 = vmatpush2.bf16.msra.mxu0 0
      %2705 = vmatprep.subr.bf16.mxu0 0
      %2706 = vmatpush2.bf16.msra.mxu0 0
      %2707 = vmatprep.subr.bf16.mxu0 0
      %2708 = vmatpush2.bf16.msra.mxu0 0
      %2709 = vmatprep.subr.bf16.mxu0 0
      %2710 = vmatpush2.bf16.msra.mxu0 0
      %2711 = vmatprep.subr.bf16.mxu0 0
      %2712 = vmatpush2.bf16.msra.mxu0 %v2660
      %2713 = vmatprep.subr.bf16.mxu0 0
      %2714 = vmatpush2.bf16.msra.mxu0 %v2659
      %2715 = vmatprep.mubr.bf16.mxu0 %v2672
      %2716 = vmatmul.mubr.bf16.gmra.mxu0 %v2576
      %v2717 = vpop.f32.mrf.mxu0
      %v2718 = vadd.f32 %v2609, %v2717
      %v2719 = vpop.f32.mrf.mxu0
      %v2720 = vpop.f32.mrf.mxu0
      %v2721 = vadd.f32 %v2609, %v2720
      %v2722 = vpop.f32.mrf.mxu0
      %2723 = vmatprep.mubr.bf16.mxu0 %v2675
      %2724 = vmatmul.mubr.bf16.gmra.mxu0 %v2578
      %v2725 = vpop.f32.mrf.mxu0
      %v2726 = vadd.f32 %v2609, %v2725
      %v2727 = vpop.f32.mrf.mxu0
      %v2728 = vpop.f32.mrf.mxu0
      %v2729 = vadd.f32 %v2609, %v2728
      %v2730 = vpop.f32.mrf.mxu0
      %2731 = vmatprep.mubr.bf16.mxu0 %v2678
      %2732 = vmatmul.mubr.bf16.gmra.mxu0 %v2580
      %v2733 = vpop.f32.mrf.mxu0
      %v2734 = vadd.f32 %v2609, %v2733
      %v2735 = vpop.f32.mrf.mxu0
      %v2736 = vpop.f32.mrf.mxu0
      %v2737 = vadd.f32 %v2609, %v2736
      %v2738 = vpop.f32.mrf.mxu0
      %2739 = vmatprep.mubr.bf16.mxu0 %v2681
      %2740 = vmatmul.mubr.bf16.gmra.mxu0 %v2582
      %v2741 = vpop.f32.mrf.mxu0
      %v2742 = vadd.f32 %v2609, %v2741
      %v2743 = vpop.f32.mrf.mxu0
      %v2744 = vpop.f32.mrf.mxu0
      %v2745 = vadd.f32 %v2609, %v2744
      %v2746 = vpop.f32.mrf.mxu0
      %2747 = vdwg.mxu0
      %v2748 = vmax.f32 %v2718, 0.0
      %v2749 = vmax.f32 %v2721, 0.0
      %v2750 = vmax.f32 %v2726, 0.0
      %v2751 = vmax.f32 %v2729, 0.0
      %v2752 = vmax.f32 %v2734, 0.0
      %v2753 = vmax.f32 %v2737, 0.0
      %v2754 = vmax.f32 %v2742, 0.0
      %v2755 = vmax.f32 %v2745, 0.0
      %v2764 = vcombine.high %v2748, %v2748
      %v2766 = vunpack.c.l.s4 1983009808
      %v2767 = vunpack.c.0.s8 %v2766
      %v2768 = vlaneseq
      %v2769 = vshrl.u32 %v2768, 7
      %v2770 = vsub.s32 %v2767, %v2769
      %v2771 = vrot.slane %v2748, %v2770
      %v2773 = vunpack.c.l.s4 1983009808
      %v2774 = vunpack.c.0.s8 %v2773
      %v2775 = vlaneseq
      %v2776 = vshrl.u32 %v2775, 7
      %v2777 = vsub.s32 %v2774, %v2776
      %v2778 = vrot.slane %v2764, %v2777
      %v2779 = vcombine.high %v2771, %v2771
      %v2780 = vcombine.high %v2778, %v2778
      %v2781 = vcombine.high %v2749, %v2749
      %v2783 = vunpack.c.l.s4 1983009808
      %v2784 = vunpack.c.0.s8 %v2783
      %v2785 = vlaneseq
      %v2786 = vshrl.u32 %v2785, 7
      %v2787 = vsub.s32 %v2784, %v2786
      %v2788 = vrot.slane %v2749, %v2787
      %v2790 = vunpack.c.l.s4 1983009808
      %v2791 = vunpack.c.0.s8 %v2790
      %v2792 = vlaneseq
      %v2793 = vshrl.u32 %v2792, 7
      %v2794 = vsub.s32 %v2791, %v2793
      %v2795 = vrot.slane %v2781, %v2794
      %v2796 = vcombine.high %v2788, %v2788
      %v2797 = vcombine.high %v2795, %v2795
      %v2798 = vcombine.high %v2750, %v2750
      %v2800 = vunpack.c.l.s4 1983009808
      %v2801 = vunpack.c.0.s8 %v2800
      %v2802 = vlaneseq
      %v2803 = vshrl.u32 %v2802, 7
      %v2804 = vsub.s32 %v2801, %v2803
      %v2805 = vrot.slane %v2750, %v2804
      %v2807 = vunpack.c.l.s4 1983009808
      %v2808 = vunpack.c.0.s8 %v2807
      %v2809 = vlaneseq
      %v2810 = vshrl.u32 %v2809, 7
      %v2811 = vsub.s32 %v2808, %v2810
      %v2812 = vrot.slane %v2798, %v2811
      %v2813 = vcombine.high %v2805, %v2805
      %v2814 = vcombine.high %v2812, %v2812
      %v2815 = vcombine.high %v2751, %v2751
      %v2817 = vunpack.c.l.s4 1983009808
      %v2818 = vunpack.c.0.s8 %v2817
      %v2819 = vlaneseq
      %v2820 = vshrl.u32 %v2819, 7
      %v2821 = vsub.s32 %v2818, %v2820
      %v2822 = vrot.slane %v2751, %v2821
      %v2824 = vunpack.c.l.s4 1983009808
      %v2825 = vunpack.c.0.s8 %v2824
      %v2826 = vlaneseq
      %v2827 = vshrl.u32 %v2826, 7
      %v2828 = vsub.s32 %v2825, %v2827
      %v2829 = vrot.slane %v2815, %v2828
      %v2830 = vcombine.high %v2822, %v2822
      %v2831 = vcombine.high %v2829, %v2829
      %v2832 = vcombine.high %v2752, %v2752
      %v2834 = vunpack.c.l.s4 1983009808
      %v2835 = vunpack.c.0.s8 %v2834
      %v2836 = vlaneseq
      %v2837 = vshrl.u32 %v2836, 7
      %v2838 = vsub.s32 %v2835, %v2837
      %v2839 = vrot.slane %v2752, %v2838
      %v2841 = vunpack.c.l.s4 1983009808
      %v2842 = vunpack.c.0.s8 %v2841
      %v2843 = vlaneseq
      %v2844 = vshrl.u32 %v2843, 7
      %v2845 = vsub.s32 %v2842, %v2844
      %v2846 = vrot.slane %v2832, %v2845
      %v2847 = vcombine.high %v2839, %v2839
      %v2848 = vcombine.high %v2846, %v2846
      %v2849 = vcombine.high %v2753, %v2753
      %v2851 = vunpack.c.l.s4 1983009808
      %v2852 = vunpack.c.0.s8 %v2851
      %v2853 = vlaneseq
      %v2854 = vshrl.u32 %v2853, 7
      %v2855 = vsub.s32 %v2852, %v2854
      %v2856 = vrot.slane %v2753, %v2855
      %v2858 = vunpack.c.l.s4 1983009808
      %v2859 = vunpack.c.0.s8 %v2858
      %v2860 = vlaneseq
      %v2861 = vshrl.u32 %v2860, 7
      %v2862 = vsub.s32 %v2859, %v2861
      %v2863 = vrot.slane %v2849, %v2862
      %v2864 = vcombine.high %v2856, %v2856
      %v2865 = vcombine.high %v2863, %v2863
      %v2866 = vcombine.high %v2754, %v2754
      %v2868 = vunpack.c.l.s4 1983009808
      %v2869 = vunpack.c.0.s8 %v2868
      %v2870 = vlaneseq
      %v2871 = vshrl.u32 %v2870, 7
      %v2872 = vsub.s32 %v2869, %v2871
      %v2873 = vrot.slane %v2754, %v2872
      %v2875 = vunpack.c.l.s4 1983009808
      %v2876 = vunpack.c.0.s8 %v2875
      %v2877 = vlaneseq
      %v2878 = vshrl.u32 %v2877, 7
      %v2879 = vsub.s32 %v2876, %v2878
      %v2880 = vrot.slane %v2866, %v2879
      %v2881 = vcombine.high %v2873, %v2873
      %v2882 = vcombine.high %v2880, %v2880
      %v2883 = vcombine.high %v2755, %v2755
      %v2885 = vunpack.c.l.s4 1983009808
      %v2886 = vunpack.c.0.s8 %v2885
      %v2887 = vlaneseq
      %v2888 = vshrl.u32 %v2887, 7
      %v2889 = vsub.s32 %v2886, %v2888
      %v2890 = vrot.slane %v2755, %v2889
      %v2892 = vunpack.c.l.s4 1983009808
      %v2893 = vunpack.c.0.s8 %v2892
      %v2894 = vlaneseq
      %v2895 = vshrl.u32 %v2894, 7
      %v2896 = vsub.s32 %v2893, %v2895
      %v2897 = vrot.slane %v2883, %v2896
      %v2898 = vcombine.high %v2890, %v2890
      %v2899 = vcombine.high %v2897, %v2897
      %v2932 = vrot.slane %v2771, 7
      %v2933 = vrot.slane %v2932, 2
      %v2934 = vrot.slane %v2779, 7
      %v2935 = vrot.slane %v2934, 2
      %v2936 = vrot.slane %v2778, 7
      %v2937 = vrot.slane %v2936, 2
      %v2938 = vrot.slane %v2780, 7
      %v2939 = vrot.slane %v2938, 2
      %v2940 = vrot.slane %v2788, 7
      %v2941 = vrot.slane %v2940, 2
      %v2942 = vrot.slane %v2796, 7
      %v2943 = vrot.slane %v2942, 2
      %v2944 = vrot.slane %v2795, 7
      %v2945 = vrot.slane %v2944, 2
      %v2946 = vrot.slane %v2797, 7
      %v2947 = vrot.slane %v2946, 2
      %v2948 = vrot.slane %v2805, 7
      %v2949 = vrot.slane %v2948, 2
      %v2950 = vrot.slane %v2813, 7
      %v2951 = vrot.slane %v2950, 2
      %v2952 = vrot.slane %v2812, 7
      %v2953 = vrot.slane %v2952, 2
      %v2954 = vrot.slane %v2814, 7
      %v2955 = vrot.slane %v2954, 2
      %v2956 = vrot.slane %v2822, 7
      %v2957 = vrot.slane %v2956, 2
      %v2958 = vrot.slane %v2830, 7
      %v2959 = vrot.slane %v2958, 2
      %v2960 = vrot.slane %v2829, 7
      %v2961 = vrot.slane %v2960, 2
      %v2962 = vrot.slane %v2831, 7
      %v2963 = vrot.slane %v2962, 2
      %v2964 = vrot.slane %v2839, 7
      %v2965 = vrot.slane %v2964, 2
      %v2966 = vrot.slane %v2847, 7
      %v2967 = vrot.slane %v2966, 2
      %v2968 = vrot.slane %v2846, 7
      %v2969 = vrot.slane %v2968, 2
      %v2970 = vrot.slane %v2848, 7
      %v2971 = vrot.slane %v2970, 2
      %v2972 = vrot.slane %v2856, 7
      %v2973 = vrot.slane %v2972, 2
      %v2974 = vrot.slane %v2864, 7
      %v2975 = vrot.slane %v2974, 2
      %v2976 = vrot.slane %v2863, 7
      %v2977 = vrot.slane %v2976, 2
      %v2978 = vrot.slane %v2865, 7
      %v2979 = vrot.slane %v2978, 2
      %v2980 = vrot.slane %v2873, 7
      %v2981 = vrot.slane %v2980, 2
      %v2982 = vrot.slane %v2881, 7
      %v2983 = vrot.slane %v2982, 2
      %v2984 = vrot.slane %v2880, 7
      %v2985 = vrot.slane %v2984, 2
      %v2986 = vrot.slane %v2882, 7
      %v2987 = vrot.slane %v2986, 2
      %v2988 = vrot.slane %v2890, 7
      %v2989 = vrot.slane %v2988, 2
      %v2990 = vrot.slane %v2898, 7
      %v2991 = vrot.slane %v2990, 2
      %v2992 = vrot.slane %v2897, 7
      %v2993 = vrot.slane %v2992, 2
      %v2994 = vrot.slane %v2899, 7
      %v2995 = vrot.slane %v2994, 2
      %v3028 = vmax.f32 %v2771, %v2933
      %v3029 = vmax.f32 %v2779, %v2935
      %v3030 = vmax.f32 %v2778, %v2937
      %v3031 = vmax.f32 %v2780, %v2939
      %v3032 = vmax.f32 %v2788, %v2941
      %v3033 = vmax.f32 %v2796, %v2943
      %v3034 = vmax.f32 %v2795, %v2945
      %v3035 = vmax.f32 %v2797, %v2947
      %v3036 = vmax.f32 %v2805, %v2949
      %v3037 = vmax.f32 %v2813, %v2951
      %v3038 = vmax.f32 %v2812, %v2953
      %v3039 = vmax.f32 %v2814, %v2955
      %v3040 = vmax.f32 %v2822, %v2957
      %v3041 = vmax.f32 %v2830, %v2959
      %v3042 = vmax.f32 %v2829, %v2961
      %v3043 = vmax.f32 %v2831, %v2963
      %v3044 = vmax.f32 %v2839, %v2965
      %v3045 = vmax.f32 %v2847, %v2967
      %v3046 = vmax.f32 %v2846, %v2969
      %v3047 = vmax.f32 %v2848, %v2971
      %v3048 = vmax.f32 %v2856, %v2973
      %v3049 = vmax.f32 %v2864, %v2975
      %v3050 = vmax.f32 %v2863, %v2977
      %v3051 = vmax.f32 %v2865, %v2979
      %v3052 = vmax.f32 %v2873, %v2981
      %v3053 = vmax.f32 %v2881, %v2983
      %v3054 = vmax.f32 %v2880, %v2985
      %v3055 = vmax.f32 %v2882, %v2987
      %v3056 = vmax.f32 %v2890, %v2989
      %v3057 = vmax.f32 %v2898, %v2991
      %v3058 = vmax.f32 %v2897, %v2993
      %v3059 = vmax.f32 %v2899, %v2995
      %v3060 = vld [vmem:[%s458] sm:$0xf]
      %v3061 = vld [vmem:[%s6] sm:$0xf]
      %v3062 = vld [vmem:[%s7] sm:$0x1]
      %v3064 = vlaneseq
      %v3065 = vshrl.u32 %v3064, 7
      %v3066 = vsub.s32 0, %v3065
      %v3067 = vrot.slane %v3062, %v3066
      %v3070 = vsel %vm1087, %v3060, 0
      %v3073 = vsel %vm803, %v3061, 0
      %3075 = vmatprep.subr.bf16.mxu0 0
      %3076 = vmatpush1.bf16.msra.mxu0 0
      %3077 = vmatprep.subr.bf16.mxu0 0
      %3078 = vmatpush1.bf16.msra.mxu0 0
      %3079 = vmatprep.subr.bf16.mxu0 0
      %3080 = vmatpush1.bf16.msra.mxu0 0
      %3081 = vmatprep.subr.bf16.mxu0 0
      %3082 = vmatpush1.bf16.msra.mxu0 0
      %3083 = vmatprep.subr.bf16.mxu0 0
      %3084 = vmatpush1.bf16.msra.mxu0 0
      %3085 = vmatprep.subr.bf16.mxu0 0
      %3086 = vmatpush1.bf16.msra.mxu0 0
      %3087 = vmatprep.subr.bf16.mxu0 0
      %3088 = vmatpush1.bf16.msra.mxu0 0
      %3089 = vmatprep.subr.bf16.mxu0 0
      %3090 = vmatpush1.bf16.msra.mxu0 %v3073
      %3091 = vmatprep.subr.bf16.mxu0 0
      %3092 = vmatpush2.bf16.msra.mxu0 0
      %3093 = vmatprep.subr.bf16.mxu0 0
      %3094 = vmatpush2.bf16.msra.mxu0 0
      %3095 = vmatprep.subr.bf16.mxu0 0
      %3096 = vmatpush2.bf16.msra.mxu0 0
      %3097 = vmatprep.subr.bf16.mxu0 0
      %3098 = vmatpush2.bf16.msra.mxu0 0
      %3099 = vmatprep.subr.bf16.mxu0 0
      %3100 = vmatpush2.bf16.msra.mxu0 0
      %3101 = vmatprep.subr.bf16.mxu0 0
      %3102 = vmatpush2.bf16.msra.mxu0 0
      %3103 = vmatprep.subr.bf16.mxu0 0
      %3104 = vmatpush2.bf16.msra.mxu0 0
      %3105 = vmatprep.subr.bf16.mxu0 0
      %3106 = vmatpush2.bf16.msra.mxu0 0
      %3107 = vmatprep.mubr.bf16.mxu0 0
      %3108 = vmatmul.mubr.bf16.gmra.mxu0 %v3070
      %v3109 = vpop.f32.mrf.mxu0
      %v3110 = vadd.f32 %v3067, %v3109
      %v3111 = vpop.f32.mrf.mxu0
      %v3112 = vpop.f32.mrf.mxu0
      %v3113 = vpop.f32.mrf.mxu0
      %3114 = vdwg.mxu0
      %v3115 = vmax.f32 %v3110, 0.0
      %v3148 = vsel %vm2273, %v3028, %v3028
      %v3149 = vsel %vm2277, %v3028, %v3148
      %v3150 = vrot.slane %v3029, 7
      %v3151 = vsel %vm2281, %v3150, %v3149
      %v3152 = vsel %vm2271, %v3150, %v3151
      %v3153 = vsel %vm2275, %v3150, %v3152
      %v3154 = vsel %vm2279, %v3150, %v3153
      %v3155 = vsel %vm2273, %v3030, %v3030
      %v3156 = vsel %vm2277, %v3030, %v3155
      %v3157 = vrot.slane %v3031, 7
      %v3158 = vsel %vm2281, %v3157, %v3156
      %v3159 = vsel %vm2271, %v3157, %v3158
      %v3160 = vsel %vm2275, %v3157, %v3159
      %v3161 = vsel %vm2279, %v3157, %v3160
      %v3162 = vsel %vm2273, %v3032, %v3032
      %v3163 = vsel %vm2277, %v3032, %v3162
      %v3164 = vrot.slane %v3033, 7
      %v3165 = vsel %vm2281, %v3164, %v3163
      %v3166 = vsel %vm2271, %v3164, %v3165
      %v3167 = vsel %vm2275, %v3164, %v3166
      %v3168 = vsel %vm2279, %v3164, %v3167
      %v3169 = vsel %vm2273, %v3034, %v3034
      %v3170 = vsel %vm2277, %v3034, %v3169
      %v3171 = vrot.slane %v3035, 7
      %v3172 = vsel %vm2281, %v3171, %v3170
      %v3173 = vsel %vm2271, %v3171, %v3172
      %v3174 = vsel %vm2275, %v3171, %v3173
      %v3175 = vsel %vm2279, %v3171, %v3174
      %v3176 = vsel %vm2273, %v3036, %v3036
      %v3177 = vsel %vm2277, %v3036, %v3176
      %v3178 = vrot.slane %v3037, 7
      %v3179 = vsel %vm2281, %v3178, %v3177
      %v3180 = vsel %vm2271, %v3178, %v3179
      %v3181 = vsel %vm2275, %v3178, %v3180
      %v3182 = vsel %vm2279, %v3178, %v3181
      %v3183 = vsel %vm2273, %v3038, %v3038
      %v3184 = vsel %vm2277, %v3038, %v3183
      %v3185 = vrot.slane %v3039, 7
      %v3186 = vsel %vm2281, %v3185, %v3184
      %v3187 = vsel %vm2271, %v3185, %v3186
      %v3188 = vsel %vm2275, %v3185, %v3187
      %v3189 = vsel %vm2279, %v3185, %v3188
      %v3190 = vsel %vm2273, %v3040, %v3040
      %v3191 = vsel %vm2277, %v3040, %v3190
      %v3192 = vrot.slane %v3041, 7
      %v3193 = vsel %vm2281, %v3192, %v3191
      %v3194 = vsel %vm2271, %v3192, %v3193
      %v3195 = vsel %vm2275, %v3192, %v3194
      %v3196 = vsel %vm2279, %v3192, %v3195
      %v3197 = vsel %vm2273, %v3042, %v3042
      %v3198 = vsel %vm2277, %v3042, %v3197
      %v3199 = vrot.slane %v3043, 7
      %v3200 = vsel %vm2281, %v3199, %v3198
      %v3201 = vsel %vm2271, %v3199, %v3200
      %v3202 = vsel %vm2275, %v3199, %v3201
      %v3203 = vsel %vm2279, %v3199, %v3202
      %v3204 = vsel %vm2273, %v3044, %v3044
      %v3205 = vsel %vm2277, %v3044, %v3204
      %v3206 = vrot.slane %v3045, 7
      %v3207 = vsel %vm2281, %v3206, %v3205
      %v3208 = vsel %vm2271, %v3206, %v3207
      %v3209 = vsel %vm2275, %v3206, %v3208
      %v3210 = vsel %vm2279, %v3206, %v3209
      %v3211 = vsel %vm2273, %v3046, %v3046
      %v3212 = vsel %vm2277, %v3046, %v3211
      %v3213 = vrot.slane %v3047, 7
      %v3214 = vsel %vm2281, %v3213, %v3212
      %v3215 = vsel %vm2271, %v3213, %v3214
      %v3216 = vsel %vm2275, %v3213, %v3215
      %v3217 = vsel %vm2279, %v3213, %v3216
      %v3218 = vsel %vm2273, %v3048, %v3048
      %v3219 = vsel %vm2277, %v3048, %v3218
      %v3220 = vrot.slane %v3049, 7
      %v3221 = vsel %vm2281, %v3220, %v3219
      %v3222 = vsel %vm2271, %v3220, %v3221
      %v3223 = vsel %vm2275, %v3220, %v3222
      %v3224 = vsel %vm2279, %v3220, %v3223
      %v3225 = vsel %vm2273, %v3050, %v3050
      %v3226 = vsel %vm2277, %v3050, %v3225
      %v3227 = vrot.slane %v3051, 7
      %v3228 = vsel %vm2281, %v3227, %v3226
      %v3229 = vsel %vm2271, %v3227, %v3228
      %v3230 = vsel %vm2275, %v3227, %v3229
      %v3231 = vsel %vm2279, %v3227, %v3230
      %v3232 = vsel %vm2273, %v3052, %v3052
      %v3233 = vsel %vm2277, %v3052, %v3232
      %v3234 = vrot.slane %v3053, 7
      %v3235 = vsel %vm2281, %v3234, %v3233
      %v3236 = vsel %vm2271, %v3234, %v3235
      %v3237 = vsel %vm2275, %v3234, %v3236
      %v3238 = vsel %vm2279, %v3234, %v3237
      %v3239 = vsel %vm2273, %v3054, %v3054
      %v3240 = vsel %vm2277, %v3054, %v3239
      %v3241 = vrot.slane %v3055, 7
      %v3242 = vsel %vm2281, %v3241, %v3240
      %v3243 = vsel %vm2271, %v3241, %v3242
      %v3244 = vsel %vm2275, %v3241, %v3243
      %v3245 = vsel %vm2279, %v3241, %v3244
      %v3246 = vsel %vm2273, %v3056, %v3056
      %v3247 = vsel %vm2277, %v3056, %v3246
      %v3248 = vrot.slane %v3057, 7
      %v3249 = vsel %vm2281, %v3248, %v3247
      %v3250 = vsel %vm2271, %v3248, %v3249
      %v3251 = vsel %vm2275, %v3248, %v3250
      %v3252 = vsel %vm2279, %v3248, %v3251
      %v3253 = vsel %vm2273, %v3058, %v3058
      %v3254 = vsel %vm2277, %v3058, %v3253
      %v3255 = vrot.slane %v3059, 7
      %v3256 = vsel %vm2281, %v3255, %v3254
      %v3257 = vsel %vm2271, %v3255, %v3256
      %v3258 = vsel %vm2275, %v3255, %v3257
      %v3259 = vsel %vm2279, %v3255, %v3258
      %v3276 = vcombine.low %v3154, %v3168
      %v3278 = vunpack.c.l.s4 1934713408
      %v3279 = vunpack.c.0.s8 %v3278
      %v3280 = vlaneseq
      %v3281 = vshrl.u32 %v3280, 7
      %v3282 = vsub.s32 %v3279, %v3281
      %v3283 = vrot.slane %v3276, %v3282
      %v3284 = vcombine.high %v3283, 0.0
      %v3285 = vcombine.low %v3182, %v3196
      %v3287 = vunpack.c.l.s4 1934713408
      %v3288 = vunpack.c.0.s8 %v3287
      %v3289 = vlaneseq
      %v3290 = vshrl.u32 %v3289, 7
      %v3291 = vsub.s32 %v3288, %v3290
      %v3292 = vrot.slane %v3285, %v3291
      %v3293 = vcombine.high %v3292, 0.0
      %v3294 = vcombine.low %v3210, %v3224
      %v3296 = vunpack.c.l.s4 1934713408
      %v3297 = vunpack.c.0.s8 %v3296
      %v3298 = vlaneseq
      %v3299 = vshrl.u32 %v3298, 7
      %v3300 = vsub.s32 %v3297, %v3299
      %v3301 = vrot.slane %v3294, %v3300
      %v3302 = vcombine.high %v3301, 0.0
      %v3303 = vcombine.low %v3238, %v3252
      %v3305 = vunpack.c.l.s4 1934713408
      %v3306 = vunpack.c.0.s8 %v3305
      %v3307 = vlaneseq
      %v3308 = vshrl.u32 %v3307, 7
      %v3309 = vsub.s32 %v3306, %v3308
      %v3310 = vrot.slane %v3303, %v3309
      %v3311 = vcombine.high %v3310, 0.0
      %v3312 = vcombine.low %v3161, %v3175
      %v3314 = vunpack.c.l.s4 1934713408
      %v3315 = vunpack.c.0.s8 %v3314
      %v3316 = vlaneseq
      %v3317 = vshrl.u32 %v3316, 7
      %v3318 = vsub.s32 %v3315, %v3317
      %v3319 = vrot.slane %v3312, %v3318
      %v3320 = vcombine.high %v3319, 0.0
      %v3321 = vcombine.low %v3189, %v3203
      %v3323 = vunpack.c.l.s4 1934713408
      %v3324 = vunpack.c.0.s8 %v3323
      %v3325 = vlaneseq
      %v3326 = vshrl.u32 %v3325, 7
      %v3327 = vsub.s32 %v3324, %v3326
      %v3328 = vrot.slane %v3321, %v3327
      %v3329 = vcombine.high %v3328, 0.0
      %v3330 = vcombine.low %v3217, %v3231
      %v3332 = vunpack.c.l.s4 1934713408
      %v3333 = vunpack.c.0.s8 %v3332
      %v3334 = vlaneseq
      %v3335 = vshrl.u32 %v3334, 7
      %v3336 = vsub.s32 %v3333, %v3335
      %v3337 = vrot.slane %v3330, %v3336
      %v3338 = vcombine.high %v3337, 0.0
      %v3339 = vcombine.low %v3245, %v3259
      %v3341 = vunpack.c.l.s4 1934713408
      %v3342 = vunpack.c.0.s8 %v3341
      %v3343 = vlaneseq
      %v3344 = vshrl.u32 %v3343, 7
      %v3345 = vsub.s32 %v3342, %v3344
      %v3346 = vrot.slane %v3339, %v3345
      %v3347 = vcombine.high %v3346, 0.0
      %v3352 = vcombine.low %v3283, %v3292
      %v3353 = vcombine.low %v3301, %v3310
      %v3355 = vunpack.c.l.s4 1983009808
      %v3356 = vunpack.c.0.s8 %v3355
      %v3357 = vlaneseq
      %v3358 = vshrl.u32 %v3357, 7
      %v3359 = vsub.s32 %v3356, %v3358
      %v3360 = vrot.slane %v3352, %v3359
      %v3362 = vunpack.c.l.s4 1983009808
      %v3363 = vunpack.c.0.s8 %v3362
      %v3364 = vlaneseq
      %v3365 = vshrl.u32 %v3364, 7
      %v3366 = vsub.s32 %v3363, %v3365
      %v3367 = vrot.slane %v3353, %v3366
      %v3368 = vcombine.low %v3360, %v3367
      %v3374 = vcombine.low %v3284, %v3293
      %v3375 = vcombine.low %v3302, %v3311
      %v3377 = vunpack.c.l.s4 1983009808
      %v3378 = vunpack.c.0.s8 %v3377
      %v3379 = vlaneseq
      %v3380 = vshrl.u32 %v3379, 7
      %v3381 = vsub.s32 %v3378, %v3380
      %v3382 = vrot.slane %v3374, %v3381
      %v3384 = vunpack.c.l.s4 1983009808
      %v3385 = vunpack.c.0.s8 %v3384
      %v3386 = vlaneseq
      %v3387 = vshrl.u32 %v3386, 7
      %v3388 = vsub.s32 %v3385, %v3387
      %v3389 = vrot.slane %v3375, %v3388
      %v3390 = vcombine.low %v3382, %v3389
      %3391 = vrot.lane.b32.xlu0 %v3390, 64
      %v3392 = vpop.permute.xlu0 %3391
      %v3398 = vcombine.low %v3319, %v3328
      %v3399 = vcombine.low %v3337, %v3346
      %v3401 = vunpack.c.l.s4 1983009808
      %v3402 = vunpack.c.0.s8 %v3401
      %v3403 = vlaneseq
      %v3404 = vshrl.u32 %v3403, 7
      %v3405 = vsub.s32 %v3402, %v3404
      %v3406 = vrot.slane %v3398, %v3405
      %v3408 = vunpack.c.l.s4 1983009808
      %v3409 = vunpack.c.0.s8 %v3408
      %v3410 = vlaneseq
      %v3411 = vshrl.u32 %v3410, 7
      %v3412 = vsub.s32 %v3409, %v3411
      %v3413 = vrot.slane %v3399, %v3412
      %v3414 = vcombine.low %v3406, %v3413
      %v3420 = vcombine.low %v3320, %v3329
      %v3421 = vcombine.low %v3338, %v3347
      %v3423 = vunpack.c.l.s4 1983009808
      %v3424 = vunpack.c.0.s8 %v3423
      %v3425 = vlaneseq
      %v3426 = vshrl.u32 %v3425, 7
      %v3427 = vsub.s32 %v3424, %v3426
      %v3428 = vrot.slane %v3420, %v3427
      %v3430 = vunpack.c.l.s4 1983009808
      %v3431 = vunpack.c.0.s8 %v3430
      %v3432 = vlaneseq
      %v3433 = vshrl.u32 %v3432, 7
      %v3434 = vsub.s32 %v3431, %v3433
      %v3435 = vrot.slane %v3421, %v3434
      %v3436 = vcombine.low %v3428, %v3435
      %3437 = vrot.lane.b32.xlu0 %v3436, 64
      %v3438 = vpop.permute.xlu0 %3437
      %v3440 = vsel %vm2558, %v3368, %v3392
      %v3441 = vsel %vm2558, %v3414, %v3438
      %v3442 = vpack.c.bf16 %v3440, %v3440
      %v3443 = vpack.c.bf16 %v3441, %v3441
      %v3444 = vld [vmem:[%s8] sm:$0xf]
      %v3445 = vld [vmem:[%s8 + $0x4] sm:$0xf]
      %v3446 = vld [vmem:[%s8 + $0x8] sm:$0xf]
      %v3447 = vld [vmem:[%s8 + $0xc] sm:$0xf]
      %v3448 = vld [vmem:[%s8 + $0x10] sm:$0xf]
      %v3449 = vld [vmem:[%s8 + $0x14] sm:$0xf]
      %v3450 = vld [vmem:[%s8 + $0x18] sm:$0xf]
      %v3451 = vld [vmem:[%s8 + $0x1c] sm:$0xf]
      %v3452 = vld [vmem:[%s8 + $0x20] sm:$0xf]
      %v3453 = vld [vmem:[%s8 + $0x24] sm:$0xf]
      %v3454 = vld [vmem:[%s8 + $0x28] sm:$0xf]
      %v3455 = vld [vmem:[%s8 + $0x2c] sm:$0xf]
      %v3456 = vld [vmem:[%s8 + $0x30] sm:$0xf]
      %v3457 = vld [vmem:[%s8 + $0x34] sm:$0xf]
      %v3458 = vld [vmem:[%s8 + $0x38] sm:$0xf]
      %v3459 = vld [vmem:[%s8 + $0x3c] sm:$0xf]
      %v3460 = vld [vmem:[%s8 + $0x40] sm:$0xf]
      %v3461 = vld [vmem:[%s8 + $0x44] sm:$0xf]
      %v3462 = vld [vmem:[%s8 + $0x48] sm:$0xf]
      %v3463 = vld [vmem:[%s8 + $0x4c] sm:$0xf]
      %v3464 = vld [vmem:[%s8 + $0x50] sm:$0xf]
      %v3465 = vld [vmem:[%s8 + $0x54] sm:$0xf]
      %v3466 = vld [vmem:[%s8 + $0x58] sm:$0xf]
      %v3467 = vld [vmem:[%s8 + $0x5c] sm:$0xf]
      %v3468 = vld [vmem:[%s8 + $0x60] sm:$0xf]
      %v3469 = vld [vmem:[%s8 + $0x64] sm:$0xf]
      %v3470 = vld [vmem:[%s8 + $0x68] sm:$0xf]
      %v3471 = vld [vmem:[%s8 + $0x6c] sm:$0xf]
      %v3472 = vld [vmem:[%s8 + $0x70] sm:$0xf]
      %v3473 = vld [vmem:[%s8 + $0x74] sm:$0xf]
      %v3474 = vld [vmem:[%s8 + $0x78] sm:$0xf]
      %v3475 = vld [vmem:[%s8 + $0x7c] sm:$0xf]
      %v3476 = vpack.c.bf16 %v3115, %v3115
      %v3477 = vld [vmem:[%s9] sm:$0xf]
      %v3478 = vld [vmem:[%s9 + $0x4] sm:$0xf]
      %v3479 = vld [vmem:[%s9 + $0x8] sm:$0xf]
      %v3480 = vld [vmem:[%s9 + $0xc] sm:$0xf]
      %v3485 = vunpack.c.l.b16 %v3477
      %v3486 = vunpack.c.l.b16 %v3478
      %v3487 = vunpack.c.l.b16 %v3479
      %v3488 = vunpack.c.l.b16 %v3480
      %v3489 = vpack.c.b16 %v3486, %v3485
      %v3490 = vpack.c.b16 %v3488, %v3487
      %v3494 = vsel %vm2549, %v3476, 0
      %3496 = vmatprep.subr.bf16.mxu0 0
      %3497 = vmatpush1.bf16.msra.mxu0 0
      %3498 = vmatprep.subr.bf16.mxu0 0
      %3499 = vmatpush1.bf16.msra.mxu0 0
      %3500 = vmatprep.subr.bf16.mxu0 0
      %3501 = vmatpush1.bf16.msra.mxu0 0
      %3502 = vmatprep.subr.bf16.mxu0 0
      %3503 = vmatpush1.bf16.msra.mxu0 0
      %3504 = vmatprep.subr.bf16.mxu0 0
      %3505 = vmatpush1.bf16.msra.mxu0 0
      %3506 = vmatprep.subr.bf16.mxu0 0
      %3507 = vmatpush1.bf16.msra.mxu0 0
      %3508 = vmatprep.subr.bf16.mxu0 0
      %3509 = vmatpush1.bf16.msra.mxu0 %v3490
      %3510 = vmatprep.subr.bf16.mxu0 0
      %3511 = vmatpush1.bf16.msra.mxu0 %v3489
      %3512 = vmatprep.subr.bf16.mxu0 0
      %3513 = vmatpush2.bf16.msra.mxu0 0
      %3514 = vmatprep.subr.bf16.mxu0 0
      %3515 = vmatpush2.bf16.msra.mxu0 0
      %3516 = vmatprep.subr.bf16.mxu0 0
      %3517 = vmatpush2.bf16.msra.mxu0 0
      %3518 = vmatprep.subr.bf16.mxu0 0
      %3519 = vmatpush2.bf16.msra.mxu0 0
      %3520 = vmatprep.subr.bf16.mxu0 0
      %3521 = vmatpush2.bf16.msra.mxu0 0
      %3522 = vmatprep.subr.bf16.mxu0 0
      %3523 = vmatpush2.bf16.msra.mxu0 0
      %3524 = vmatprep.subr.bf16.mxu0 0
      %3525 = vmatpush2.bf16.msra.mxu0 0
      %3526 = vmatprep.subr.bf16.mxu0 0
      %3527 = vmatpush2.bf16.msra.mxu0 0
      %3528 = vmatprep.mubr.bf16.mxu0 0
      %3529 = vmatmul.mubr.bf16.gmra.mxu0 %v3494
      %v3530 = vpop.f32.mrf.mxu0
      %v3531 = vadd.f32 0.0, %v3530
      %v3532 = vpop.f32.mrf.mxu0
      %v3533 = vpop.f32.mrf.mxu0
      %v3534 = vpop.f32.mrf.mxu0
      %3535 = vdwg.mxu0
      %v3568 = vunpack.c.l.b16 %v3444
      %v3569 = vunpack.c.l.b16 %v3445
      %v3570 = vunpack.c.l.b16 %v3446
      %v3571 = vunpack.c.l.b16 %v3447
      %v3572 = vunpack.c.l.b16 %v3448
      %v3573 = vunpack.c.l.b16 %v3449
      %v3574 = vunpack.c.l.b16 %v3450
      %v3575 = vunpack.c.l.b16 %v3451
      %v3576 = vunpack.c.l.b16 %v3452
      %v3577 = vunpack.c.l.b16 %v3453
      %v3578 = vunpack.c.l.b16 %v3454
      %v3579 = vunpack.c.l.b16 %v3455
      %v3580 = vunpack.c.l.b16 %v3456
      %v3581 = vunpack.c.l.b16 %v3457
      %v3582 = vunpack.c.l.b16 %v3458
      %v3583 = vunpack.c.l.b16 %v3459
      %v3584 = vunpack.c.l.b16 %v3460
      %v3585 = vunpack.c.l.b16 %v3461
      %v3586 = vunpack.c.l.b16 %v3462
      %v3587 = vunpack.c.l.b16 %v3463
      %v3588 = vunpack.c.l.b16 %v3464
      %v3589 = vunpack.c.l.b16 %v3465
      %v3590 = vunpack.c.l.b16 %v3466
      %v3591 = vunpack.c.l.b16 %v3467
      %v3592 = vunpack.c.l.b16 %v3468
      %v3593 = vunpack.c.l.b16 %v3469
      %v3594 = vunpack.c.l.b16 %v3470
      %v3595 = vunpack.c.l.b16 %v3471
      %v3596 = vunpack.c.l.b16 %v3472
      %v3597 = vunpack.c.l.b16 %v3473
      %v3598 = vunpack.c.l.b16 %v3474
      %v3599 = vunpack.c.l.b16 %v3475
      %v3600 = vpack.c.b16 %v3569, %v3568
      %v3601 = vpack.c.b16 %v3571, %v3570
      %v3602 = vpack.c.b16 %v3573, %v3572
      %v3603 = vpack.c.b16 %v3575, %v3574
      %v3604 = vpack.c.b16 %v3577, %v3576
      %v3605 = vpack.c.b16 %v3579, %v3578
      %v3606 = vpack.c.b16 %v3581, %v3580
      %v3607 = vpack.c.b16 %v3583, %v3582
      %v3608 = vpack.c.b16 %v3585, %v3584
      %v3609 = vpack.c.b16 %v3587, %v3586
      %v3610 = vpack.c.b16 %v3589, %v3588
      %v3611 = vpack.c.b16 %v3591, %v3590
      %v3612 = vpack.c.b16 %v3593, %v3592
      %v3613 = vpack.c.b16 %v3595, %v3594
      %v3614 = vpack.c.b16 %v3597, %v3596
      %v3615 = vpack.c.b16 %v3599, %v3598
      %3632 = vmatprep.subr.bf16.mxu0 0
      %3633 = vmatpush1.bf16.msra.mxu0 %v3607
      %3634 = vmatprep.subr.bf16.mxu0 0
      %3635 = vmatpush1.bf16.msra.mxu0 %v3606
      %3636 = vmatprep.subr.bf16.mxu0 0
      %3637 = vmatpush1.bf16.msra.mxu0 %v3605
      %3638 = vmatprep.subr.bf16.mxu0 0
      %3639 = vmatpush1.bf16.msra.mxu0 %v3604
      %3640 = vmatprep.subr.bf16.mxu0 0
      %3641 = vmatpush1.bf16.msra.mxu0 %v3603
      %3642 = vmatprep.subr.bf16.mxu0 0
      %3643 = vmatpush1.bf16.msra.mxu0 %v3602
      %3644 = vmatprep.subr.bf16.mxu0 0
      %3645 = vmatpush1.bf16.msra.mxu0 %v3601
      %3646 = vmatprep.subr.bf16.mxu0 0
      %3647 = vmatpush1.bf16.msra.mxu0 %v3600
      %3648 = vmatprep.subr.bf16.mxu0 0
      %3649 = vmatpush2.bf16.msra.mxu0 %v3615
      %3650 = vmatprep.subr.bf16.mxu0 0
      %3651 = vmatpush2.bf16.msra.mxu0 %v3614
      %3652 = vmatprep.subr.bf16.mxu0 0
      %3653 = vmatpush2.bf16.msra.mxu0 %v3613
      %3654 = vmatprep.subr.bf16.mxu0 0
      %3655 = vmatpush2.bf16.msra.mxu0 %v3612
      %3656 = vmatprep.subr.bf16.mxu0 0
      %3657 = vmatpush2.bf16.msra.mxu0 %v3611
      %3658 = vmatprep.subr.bf16.mxu0 0
      %3659 = vmatpush2.bf16.msra.mxu0 %v3610
      %3660 = vmatprep.subr.bf16.mxu0 0
      %3661 = vmatpush2.bf16.msra.mxu0 %v3609
      %3662 = vmatprep.subr.bf16.mxu0 0
      %3663 = vmatpush2.bf16.msra.mxu0 %v3608
      %3664 = vmatprep.mubr.bf16.mxu0 %v3443
      %3665 = vmatmul.mubr.bf16.gmra.mxu0 %v3442
      %v3666 = vpop.f32.mrf.mxu0
      %v3667 = vadd.f32 %v3531, %v3666
      %v3668 = vpop.f32.mrf.mxu0
      %v3669 = vpop.f32.mrf.mxu0
      %v3670 = vpop.f32.mrf.mxu0
      %3671 = vdwg.mxu0
      %v3672 = vld [vmem:[%s10] sm:$0x1]
      %v3674 = vlaneseq
      %v3675 = vshrl.u32 %v3674, 7
      %v3676 = vsub.s32 0, %v3675
      %v3677 = vrot.slane %v3672, %v3676
      %v3679 = vadd.f32 %v3667, %v3677
      %v3680 = vmax.f32 %v3679, 0.0
      %v3681 = vpack.c.bf16 %v3680, %v3680
      %v3682 = vld [vmem:[%s11] sm:$0xf]
      %v3683 = vld [vmem:[%s11 + $0x4] sm:$0xf]
      %v3684 = vld [vmem:[%s11 + $0x8] sm:$0xf]
      %v3685 = vld [vmem:[%s11 + $0xc] sm:$0xf]
      %v3686 = vld [vmem:[%s11 + $0x10] sm:$0xf]
      %v3687 = vld [vmem:[%s11 + $0x14] sm:$0xf]
      %v3688 = vld [vmem:[%s11 + $0x18] sm:$0xf]
      %v3689 = vld [vmem:[%s11 + $0x1c] sm:$0xf]
      %v3690 = vld [vmem:[#allocation2] sm:$0x1]
      %v3692 = vlaneseq
      %v3693 = vshrl.u32 %v3692, 7
      %v3694 = vsub.s32 0, %v3693
      %v3695 = vrot.slane %v3690, %v3694
      %v3705 = vunpack.c.l.b16 %v3682
      %v3706 = vunpack.c.l.b16 %v3683
      %v3707 = vunpack.c.l.b16 %v3684
      %v3708 = vunpack.c.l.b16 %v3685
      %v3709 = vunpack.c.l.b16 %v3686
      %v3710 = vunpack.c.l.b16 %v3687
      %v3711 = vunpack.c.l.b16 %v3688
      %v3712 = vunpack.c.l.b16 %v3689
      %v3713 = vpack.c.b16 %v3706, %v3705
      %v3714 = vpack.c.b16 %v3708, %v3707
      %v3715 = vpack.c.b16 %v3710, %v3709
      %v3716 = vpack.c.b16 %v3712, %v3711
      %v3722 = vsel %vm2558, %v3681, 0
      %3724 = vmatprep.subr.bf16.mxu0 0
      %3725 = vmatpush1.bf16.msra.mxu0 0
      %3726 = vmatprep.subr.bf16.mxu0 0
      %3727 = vmatpush1.bf16.msra.mxu0 0
      %3728 = vmatprep.subr.bf16.mxu0 0
      %3729 = vmatpush1.bf16.msra.mxu0 0
      %3730 = vmatprep.subr.bf16.mxu0 0
      %3731 = vmatpush1.bf16.msra.mxu0 0
      %3732 = vmatprep.subr.bf16.mxu0 0
      %3733 = vmatpush1.bf16.msra.mxu0 %v3716
      %3734 = vmatprep.subr.bf16.mxu0 0
      %3735 = vmatpush1.bf16.msra.mxu0 %v3715
      %3736 = vmatprep.subr.bf16.mxu0 0
      %3737 = vmatpush1.bf16.msra.mxu0 %v3714
      %3738 = vmatprep.subr.bf16.mxu0 0
      %3739 = vmatpush1.bf16.msra.mxu0 %v3713
      %3740 = vmatprep.subr.bf16.mxu0 0
      %3741 = vmatpush2.bf16.msra.mxu0 0
      %3742 = vmatprep.subr.bf16.mxu0 0
      %3743 = vmatpush2.bf16.msra.mxu0 0
      %3744 = vmatprep.subr.bf16.mxu0 0
      %3745 = vmatpush2.bf16.msra.mxu0 0
      %3746 = vmatprep.subr.bf16.mxu0 0
      %3747 = vmatpush2.bf16.msra.mxu0 0
      %3748 = vmatprep.subr.bf16.mxu0 0
      %3749 = vmatpush2.bf16.msra.mxu0 0
      %3750 = vmatprep.subr.bf16.mxu0 0
      %3751 = vmatpush2.bf16.msra.mxu0 0
      %3752 = vmatprep.subr.bf16.mxu0 0
      %3753 = vmatpush2.bf16.msra.mxu0 0
      %3754 = vmatprep.subr.bf16.mxu0 0
      %3755 = vmatpush2.bf16.msra.mxu0 0
      %3756 = vmatprep.mubr.bf16.mxu0 0
      %3757 = vmatmul.mubr.bf16.gmra.mxu0 %v3722
      %v3758 = vpop.f32.mrf.mxu0
      %v3759 = vadd.f32 %v3695, %v3758
      %v3760 = vpop.f32.mrf.mxu0
      %v3761 = vpop.f32.mrf.mxu0
      %v3762 = vpop.f32.mrf.mxu0
      %3763 = vdwg.mxu0
      %v3764 = vsub.f32 0.0, %v3759
      %v3765 = vmul.f32 %v3764, 1.442695
      %v3766 = vpow.pop %v3765
      %v3767 = vadd.f32 %v3766, 1.0
      %v3768 = vrcp.pop %v3767
      %v3769 = vmul.f32 1.0, %v3768
      %vm3770 = vcmask 7168
      %3771 = vst.msk [vmem:[%s462] sm:$0xff] %vm3770, %v3769
      %p3772 = scmp.lt.s32.totalorder %s26, 1
      %s3773 = scalar_select %p3772, %s26, 1
      %s3774 = smul.addr %s3773, 8
      %s3775 = scalar_lea.vmem %s13, %s3774
      // Predicated region
      $region73: #{tpu_custom_call.1} parent=71 // pred_check
        %p3776 = pneg %p327
      $region74: #{tpu_custom_call.1} parent=71 // pred_check_branch
        %3778 = sbr.rel (%p3776) target = $region76
      $region75: #{tpu_custom_call.1} parent=71 // pred_region
        _
      $region76: #{tpu_custom_call.1} parent=71 // pred_fallthru
        _
    $region72: #{tpu_custom_call.1} parent=5 // pred_fallthru
      _
    %p3779 = scmp.le.s32.totalorder 2, %s21
    // Predicated region
    $region77: #{tpu_custom_call.1} parent=5 // pred_check
      %p3780 = pneg %p3779
    $region78: #{tpu_custom_call.1} parent=5 // pred_check_branch
      %3782 = sbr.rel (%p3780) target = $region80
    $region79: #{tpu_custom_call.1} parent=5 // pred_region
      %s3783 = ssub.s32 %s21, 2
      // Predicated region
      $region81: #{tpu_custom_call.1} parent=79 // pred_check
        %p3784 = pneg %p333
      $region82: #{tpu_custom_call.1} parent=79 // pred_check_branch
        %3786 = sbr.rel (%p3784) target = $region84
      $region83: #{tpu_custom_call.1} parent=79 // pred_region
        %p3787 = scmp.lt.s32.totalorder %s27, 1
        %s3788 = scalar_select %p3787, %s27, 1
        %s3789 = smul.addr %s3788, 8
        %s3790 = scalar_lea.vmem %s13, %s3789
      $region84: #{tpu_custom_call.1} parent=79 // pred_fallthru
        _
    $region80: #{tpu_custom_call.1} parent=5 // pred_fallthru
      _
  $region6: #{tpu_custom_call.1} parent=0 // loop_footer
    %s25 = sadd.s32 1, %s21
  $region7: #{tpu_custom_call.1} parent=0 // loop_footer_branch
    %20 = sbr.rel target = $region3
  $region8: #{tpu_custom_call.1} parent=0 // loop_exit
    _

// kernel: tpu_custom_call.1
$region0: #{tpu_custom_call.1}
  #allocation0 [shape = 'u32[]', space=smem, size = 0x4, offset = 0x4, fixed_abs, tag = 'smem constant byte address 0x4 - core index']
  #allocation1 [shape = 'u32[144,128]{1,0:T(1,128)}', space=vmem, size = 0x12000, scoped, tag = 'internal scratch']
  #allocation2 [shape = 'f32[1,1]{1,0:T(1,128)S(1)}', space=vmem, size = 0x200, scoped, tag = 'scoped memory for tpu_custom_call.1']
  %s0 = inlined_call_operand.vmem [shape: bf16[16,22,4], index: 0, kind: input, shape index: {}]
  %s1 = inlined_call_operand.vmem [shape: bf16[16,8], index: 1, kind: input, shape index: {}]
  %s2 = inlined_call_operand.vmem [shape: bf16[28,32], index: 2, kind: input, shape index: {}]
  %s3 = inlined_call_operand.vmem [shape: f32[1,32], index: 3, kind: input, shape index: {}]
  %s4 = inlined_call_operand.vmem [shape: bf16[160,64], index: 4, kind: input, shape index: {}]
  %s5 = inlined_call_operand.vmem [shape: f32[1,64], index: 5, kind: input, shape index: {}]
  %s6 = inlined_call_operand.vmem [shape: bf16[8,32], index: 6, kind: input, shape index: {}]
  %s7 = inlined_call_operand.vmem [shape: f32[1,32], index: 7, kind: input, shape index: {}]
  %s8 = inlined_call_operand.vmem [shape: bf16[256,64], index: 8, kind: input, shape index: {}]
  %s9 = inlined_call_operand.vmem [shape: bf16[32,64], index: 9, kind: input, shape index: {}]
  %s10 = inlined_call_operand.vmem [shape: f32[1,64], index: 10, kind: input, shape index: {}]
  %s11 = inlined_call_operand.vmem [shape: bf16[64,1], index: 11, kind: input, shape index: {}]
  %s12 = inlined_call_operand.<no memory space> [shape: f32[1,1], index: 12, kind: input, shape index: {}]
  %s13 = inlined_call_operand.vmem [shape: f32[16,1], index: 13, kind: output, shape index: {}]
  %s14 = sld [smem:[#allocation0]]
  $region85: #{tpu_custom_call.1} parent=0
    _
  %s16 = ssub.s32 1, %s14
  %s17 = scalar_select 0, %s16, %s14
  %v18 = vstv %s12
  %19 = vst [vmem:[#allocation2] sm:$0x1] %v18
  loop: start=0, step=1, limit=4
  $region2: #{tpu_custom_call.1} parent=0 // loop_pre_header
    _
  $region3: #{tpu_custom_call.1} parent=0 // loop_header
    %s21 = sphi 0, %s25
    %p22 = scmp.ge.s32.totalorder %s21, 4
    %s31 = sphi 0, %s33
    %s34 = sphi 0, %s31
    %s35 = sphi 0, %s34
    %s51 = sphi 0, %s35
    %s57 = sphi 0, %s59
    %s60 = sphi 0, %s57
    %s61 = sphi 0, %s60
    %s77 = sphi 0, %s61
    %s81 = sphi 0, %s81
    %s83 = sphi 0, %s81
    %s84 = sphi 0, %s83
    %s98 = sphi 0, %s84
    %s102 = sphi 0, %s102
    %s104 = sphi 0, %s102
    %s105 = sphi 0, %s104
    %s119 = sphi 0, %s105
    %s123 = sphi 0, %s123
    %s125 = sphi 0, %s123
    %s126 = sphi 0, %s125
    %s140 = sphi 0, %s126
    %s144 = sphi 0, %s144
    %s146 = sphi 0, %s144
    %s147 = sphi 0, %s146
    %s161 = sphi 0, %s147
    %s165 = sphi 0, %s165
    %s167 = sphi 0, %s165
    %s168 = sphi 0, %s167
    %s182 = sphi 0, %s168
    %s186 = sphi 0, %s186
    %s188 = sphi 0, %s186
    %s189 = sphi 0, %s188
    %s203 = sphi 0, %s189
    %s207 = sphi 0, %s207
    %s209 = sphi 0, %s207
    %s210 = sphi 0, %s209
    %s224 = sphi 0, %s210
    %s228 = sphi 0, %s228
    %s230 = sphi 0, %s228
    %s231 = sphi 0, %s230
    %s245 = sphi 0, %s231
    %s249 = sphi 0, %s249
    %s251 = sphi 0, %s249
    %s252 = sphi 0, %s251
    %s266 = sphi 0, %s252
    %s270 = sphi 0, %s270
    %s272 = sphi 0, %s270
    %s273 = sphi 0, %s272
    %s287 = sphi 0, %s273
    %s291 = sphi 0, %s291
    %s293 = sphi 0, %s291
    %s294 = sphi 0, %s293
    %s308 = sphi 0, %s294
    %s314 = sphi 0, %s316
    %s317 = sphi 0, %s314
    %s318 = sphi 0, %s317
    %s334 = sphi 0, %s318
  $region4: #{tpu_custom_call.1} parent=0 // loop_header_branch
    %24 = sbr.rel (%p22) target = $region8
  $region5: #{tpu_custom_call.1} parent=0 // loop_body
    %s26 = ssub.s32 %s21, 1
    %s27 = ssub.s32 %s21, 2
    %s28 = sadd.s32 %s21, 1
    %s29 = ssub.s32 %s21, %s28
    %p30 = scmp.eq.s32.totalorder %s29, 0
    %s32 = sadd.s32 %s31, 1
    %s33 = scalar_select %p30, %s31, %s32
    %p36 = pneg %p30
    %p37 = scmp.eq.s32.totalorder %s21, 1
    %p38 = por %p36, %p37
    %p39 = scmp.ne.s32.totalorder %s31, %s34
    %p40 = scmp.eq.s32.totalorder %s21, 0
    %p41 = por %p39, %p40
    %p42 = scmp.ne.s32.totalorder %s31, %s34
    %p43 = scmp.eq.s32.totalorder %s26, 1
    %p44 = por %p42, %p43
    %p45 = scmp.ne.s32.totalorder %s34, %s35
    %p46 = scmp.eq.s32.totalorder %s26, 0
    %p47 = por %p45, %p46
    %p48 = scmp.ne.s32.totalorder %s34, %s35
    %p49 = scmp.eq.s32.totalorder %s27, 1
    %p50 = por %p48, %p49
    %p52 = scmp.ne.s32.totalorder %s35, %s51
    %p53 = scmp.eq.s32.totalorder %s27, 0
    %p54 = por %p52, %p53
    %s55 = ssub.s32 %s21, %s28
    %p56 = scmp.eq.s32.totalorder %s55, 0
    %s58 = sadd.s32 %s57, 1
    %s59 = scalar_select %p56, %s57, %s58
    %p62 = pneg %p56
    %p63 = scmp.eq.s32.totalorder %s21, 1
    %p64 = por %p62, %p63
    %p65 = scmp.ne.s32.totalorder %s57, %s60
    %p66 = scmp.eq.s32.totalorder %s21, 0
    %p67 = por %p65, %p66
    %p68 = scmp.ne.s32.totalorder %s57, %s60
    %p69 = scmp.eq.s32.totalorder %s26, 1
    %p70 = por %p68, %p69
    %p71 = scmp.ne.s32.totalorder %s60, %s61
    %p72 = scmp.eq.s32.totalorder %s26, 0
    %p73 = por %p71, %p72
    %p74 = scmp.ne.s32.totalorder %s60, %s61
    %p75 = scmp.eq.s32.totalorder %s27, 1
    %p76 = por %p74, %p75
    %p78 = scmp.ne.s32.totalorder %s61, %s77
    %p79 = scmp.eq.s32.totalorder %s27, 0
    %p80 = por %p78, %p79
    %s82 = sadd.s32 %s81, 1
    %p85 = scmp.eq.s32.totalorder %s21, 1
    %p86 = scmp.ne.s32.totalorder %s81, %s83
    %p87 = scmp.eq.s32.totalorder %s21, 0
    %p88 = por %p86, %p87
    %p89 = scmp.ne.s32.totalorder %s81, %s83
    %p90 = scmp.eq.s32.totalorder %s26, 1
    %p91 = por %p89, %p90
    %p92 = scmp.ne.s32.totalorder %s83, %s84
    %p93 = scmp.eq.s32.totalorder %s26, 0
    %p94 = por %p92, %p93
    %p95 = scmp.ne.s32.totalorder %s83, %s84
    %p96 = scmp.eq.s32.totalorder %s27, 1
    %p97 = por %p95, %p96
    %p99 = scmp.ne.s32.totalorder %s84, %s98
    %p100 = scmp.eq.s32.totalorder %s27, 0
    %p101 = por %p99, %p100
    %s103 = sadd.s32 %s102, 1
    %p106 = scmp.eq.s32.totalorder %s21, 1
    %p107 = scmp.ne.s32.totalorder %s102, %s104
    %p108 = scmp.eq.s32.totalorder %s21, 0
    %p109 = por %p107, %p108
    %p110 = scmp.ne.s32.totalorder %s102, %s104
    %p111 = scmp.eq.s32.totalorder %s26, 1
    %p112 = por %p110, %p111
    %p113 = scmp.ne.s32.totalorder %s104, %s105
    %p114 = scmp.eq.s32.totalorder %s26, 0
    %p115 = por %p113, %p114
    %p116 = scmp.ne.s32.totalorder %s104, %s105
    %p117 = scmp.eq.s32.totalorder %s27, 1
    %p118 = por %p116, %p117
    %p120 = scmp.ne.s32.totalorder %s105, %s119
    %p121 = scmp.eq.s32.totalorder %s27, 0
    %p122 = por %p120, %p121
    %s124 = sadd.s32 %s123, 1
    %p127 = scmp.eq.s32.totalorder %s21, 1
    %p128 = scmp.ne.s32.totalorder %s123, %s125
    %p129 = scmp.eq.s32.totalorder %s21, 0
    %p130 = por %p128, %p129
    %p131 = scmp.ne.s32.totalorder %s123, %s125
    %p132 = scmp.eq.s32.totalorder %s26, 1
    %p133 = por %p131, %p132
    %p134 = scmp.ne.s32.totalorder %s125, %s126
    %p135 = scmp.eq.s32.totalorder %s26, 0
    %p136 = por %p134, %p135
    %p137 = scmp.ne.s32.totalorder %s125, %s126
    %p138 = scmp.eq.s32.totalorder %s27, 1
    %p139 = por %p137, %p138
    %p141 = scmp.ne.s32.totalorder %s126, %s140
    %p142 = scmp.eq.s32.totalorder %s27, 0
    %p143 = por %p141, %p142
    %s145 = sadd.s32 %s144, 1
    %p148 = scmp.eq.s32.totalorder %s21, 1
    %p149 = scmp.ne.s32.totalorder %s144, %s146
    %p150 = scmp.eq.s32.totalorder %s21, 0
    %p151 = por %p149, %p150
    %p152 = scmp.ne.s32.totalorder %s144, %s146
    %p153 = scmp.eq.s32.totalorder %s26, 1
    %p154 = por %p152, %p153
    %p155 = scmp.ne.s32.totalorder %s146, %s147
    %p156 = scmp.eq.s32.totalorder %s26, 0
    %p157 = por %p155, %p156
    %p158 = scmp.ne.s32.totalorder %s146, %s147
    %p159 = scmp.eq.s32.totalorder %s27, 1
    %p160 = por %p158, %p159
    %p162 = scmp.ne.s32.totalorder %s147, %s161
    %p163 = scmp.eq.s32.totalorder %s27, 0
    %p164 = por %p162, %p163
    %s166 = sadd.s32 %s165, 1
    %p169 = scmp.eq.s32.totalorder %s21, 1
    %p170 = scmp.ne.s32.totalorder %s165, %s167
    %p171 = scmp.eq.s32.totalorder %s21, 0
    %p172 = por %p170, %p171
    %p173 = scmp.ne.s32.totalorder %s165, %s167
    %p174 = scmp.eq.s32.totalorder %s26, 1
    %p175 = por %p173, %p174
    %p176 = scmp.ne.s32.totalorder %s167, %s168
    %p177 = scmp.eq.s32.totalorder %s26, 0
    %p178 = por %p176, %p177
    %p179 = scmp.ne.s32.totalorder %s167, %s168
    %p180 = scmp.eq.s32.totalorder %s27, 1
    %p181 = por %p179, %p180
    %p183 = scmp.ne.s32.totalorder %s168, %s182
    %p184 = scmp.eq.s32.totalorder %s27, 0
    %p185 = por %p183, %p184
    %s187 = sadd.s32 %s186, 1
    %p190 = scmp.eq.s32.totalorder %s21, 1
    %p191 = scmp.ne.s32.totalorder %s186, %s188
    %p192 = scmp.eq.s32.totalorder %s21, 0
    %p193 = por %p191, %p192
    %p194 = scmp.ne.s32.totalorder %s186, %s188
    %p195 = scmp.eq.s32.totalorder %s26, 1
    %p196 = por %p194, %p195
    %p197 = scmp.ne.s32.totalorder %s188, %s189
    %p198 = scmp.eq.s32.totalorder %s26, 0
    %p199 = por %p197, %p198
    %p200 = scmp.ne.s32.totalorder %s188, %s189
    %p201 = scmp.eq.s32.totalorder %s27, 1
    %p202 = por %p200, %p201
    %p204 = scmp.ne.s32.totalorder %s189, %s203
    %p205 = scmp.eq.s32.totalorder %s27, 0
    %p206 = por %p204, %p205
    %s208 = sadd.s32 %s207, 1
    %p211 = scmp.eq.s32.totalorder %s21, 1
    %p212 = scmp.ne.s32.totalorder %s207, %s209
    %p213 = scmp.eq.s32.totalorder %s21, 0
    %p214 = por %p212, %p213
    %p215 = scmp.ne.s32.totalorder %s207, %s209
    %p216 = scmp.eq.s32.totalorder %s26, 1
    %p217 = por %p215, %p216
    %p218 = scmp.ne.s32.totalorder %s209, %s210
    %p219 = scmp.eq.s32.totalorder %s26, 0
    %p220 = por %p218, %p219
    %p221 = scmp.ne.s32.totalorder %s209, %s210
    %p222 = scmp.eq.s32.totalorder %s27, 1
    %p223 = por %p221, %p222
    %p225 = scmp.ne.s32.totalorder %s210, %s224
    %p226 = scmp.eq.s32.totalorder %s27, 0
    %p227 = por %p225, %p226
    %s229 = sadd.s32 %s228, 1
    %p232 = scmp.eq.s32.totalorder %s21, 1
    %p233 = scmp.ne.s32.totalorder %s228, %s230
    %p234 = scmp.eq.s32.totalorder %s21, 0
    %p235 = por %p233, %p234
    %p236 = scmp.ne.s32.totalorder %s228, %s230
    %p237 = scmp.eq.s32.totalorder %s26, 1
    %p238 = por %p236, %p237
    %p239 = scmp.ne.s32.totalorder %s230, %s231
    %p240 = scmp.eq.s32.totalorder %s26, 0
    %p241 = por %p239, %p240
    %p242 = scmp.ne.s32.totalorder %s230, %s231
    %p243 = scmp.eq.s32.totalorder %s27, 1
    %p244 = por %p242, %p243
    %p246 = scmp.ne.s32.totalorder %s231, %s245
    %p247 = scmp.eq.s32.totalorder %s27, 0
    %p248 = por %p246, %p247
    %s250 = sadd.s32 %s249, 1
    %p253 = scmp.eq.s32.totalorder %s21, 1
    %p254 = scmp.ne.s32.totalorder %s249, %s251
    %p255 = scmp.eq.s32.totalorder %s21, 0
    %p256 = por %p254, %p255
    %p257 = scmp.ne.s32.totalorder %s249, %s251
    %p258 = scmp.eq.s32.totalorder %s26, 1
    %p259 = por %p257, %p258
    %p260 = scmp.ne.s32.totalorder %s251, %s252
    %p261 = scmp.eq.s32.totalorder %s26, 0
    %p262 = por %p260, %p261
    %p263 = scmp.ne.s32.totalorder %s251, %s252
    %p264 = scmp.eq.s32.totalorder %s27, 1
    %p265 = por %p263, %p264
    %p267 = scmp.ne.s32.totalorder %s252, %s266
    %p268 = scmp.eq.s32.totalorder %s27, 0
    %p269 = por %p267, %p268
    %s271 = sadd.s32 %s270, 1
    %p274 = scmp.eq.s32.totalorder %s21, 1
    %p275 = scmp.ne.s32.totalorder %s270, %s272
    %p276 = scmp.eq.s32.totalorder %s21, 0
    %p277 = por %p275, %p276
    %p278 = scmp.ne.s32.totalorder %s270, %s272
    %p279 = scmp.eq.s32.totalorder %s26, 1
    %p280 = por %p278, %p279
    %p281 = scmp.ne.s32.totalorder %s272, %s273
    %p282 = scmp.eq.s32.totalorder %s26, 0
    %p283 = por %p281, %p282
    %p284 = scmp.ne.s32.totalorder %s272, %s273
    %p285 = scmp.eq.s32.totalorder %s27, 1
    %p286 = por %p284, %p285
    %p288 = scmp.ne.s32.totalorder %s273, %s287
    %p289 = scmp.eq.s32.totalorder %s27, 0
    %p290 = por %p288, %p289
    %s292 = sadd.s32 %s291, 1
    %p295 = scmp.eq.s32.totalorder %s21, 1
    %p296 = scmp.ne.s32.totalorder %s291, %s293
    %p297 = scmp.eq.s32.totalorder %s21, 0
    %p298 = por %p296, %p297
    %p299 = scmp.ne.s32.totalorder %s291, %s293
    %p300 = scmp.eq.s32.totalorder %s26, 1
    %p301 = por %p299, %p300
    %p302 = scmp.ne.s32.totalorder %s293, %s294
    %p303 = scmp.eq.s32.totalorder %s26, 0
    %p304 = por %p302, %p303
    %p305 = scmp.ne.s32.totalorder %s293, %s294
    %p306 = scmp.eq.s32.totalorder %s27, 1
    %p307 = por %p305, %p306
    %p309 = scmp.ne.s32.totalorder %s294, %s308
    %p310 = scmp.eq.s32.totalorder %s27, 0
    %p311 = por %p309, %p310
    %s312 = ssub.s32 %s21, %s28
    %p313 = scmp.eq.s32.totalorder %s312, 0
    %s315 = sadd.s32 %s314, 1
    %s316 = scalar_select %p313, %s314, %s315
    %p319 = pneg %p313
    %p320 = scmp.eq.s32.totalorder %s21, 1
    %p321 = por %p319, %p320
    %p322 = scmp.ne.s32.totalorder %s314, %s317
    %p323 = scmp.eq.s32.totalorder %s21, 0
    %p324 = por %p322, %p323
    %p325 = scmp.ne.s32.totalorder %s314, %s317
    %p326 = scmp.eq.s32.totalorder %s26, 1
    %p327 = por %p325, %p326
    %p328 = scmp.ne.s32.totalorder %s317, %s318
    %p329 = scmp.eq.s32.totalorder %s26, 0
    %p330 = por %p328, %p329
    %p331 = scmp.ne.s32.totalorder %s317, %s318
    %p332 = scmp.eq.s32.totalorder %s27, 1
    %p333 = por %p331, %p332
    %p335 = scmp.ne.s32.totalorder %s318, %s334
    %p336 = scmp.eq.s32.totalorder %s27, 0
    %p337 = por %p335, %p336
    %p338 = scmp.le.s32.totalorder 1, %s21
    %p339 = scmp.lt.s32.totalorder %s21, 3
    %p340 = pnand %p338, %p339
    %p341 = pneg %p340
    // Predicated region
    $region9: #{tpu_custom_call.1} parent=5 // pred_check
      _
    $region10: #{tpu_custom_call.1} parent=5 // pred_check_branch
      %343 = sbr.rel (%p340) target = $region12
    $region11: #{tpu_custom_call.1} parent=5 // pred_region
      %s344 = ssub.s32 %s21, 1
      // Predicated region
      $region13: #{tpu_custom_call.1} parent=11 // pred_check
        %p345 = pneg %p94
      $region14: #{tpu_custom_call.1} parent=11 // pred_check_branch
        %347 = sbr.rel (%p345) target = $region16
      $region15: #{tpu_custom_call.1} parent=11 // pred_region
        _
      $region16: #{tpu_custom_call.1} parent=11 // pred_fallthru
        _
      // Predicated region
      $region17: #{tpu_custom_call.1} parent=11 // pred_check
        %p348 = pneg %p115
      $region18: #{tpu_custom_call.1} parent=11 // pred_check_branch
        %350 = sbr.rel (%p348) target = $region20
      $region19: #{tpu_custom_call.1} parent=11 // pred_region
        _
      $region20: #{tpu_custom_call.1} parent=11 // pred_fallthru
        _
      // Predicated region
      $region21: #{tpu_custom_call.1} parent=11 // pred_check
        %p351 = pneg %p136
      $region22: #{tpu_custom_call.1} parent=11 // pred_check_branch
        %353 = sbr.rel (%p351) target = $region24
      $region23: #{tpu_custom_call.1} parent=11 // pred_region
        _
      $region24: #{tpu_custom_call.1} parent=11 // pred_fallthru
        _
      // Predicated region
      $region25: #{tpu_custom_call.1} parent=11 // pred_check
        %p354 = pneg %p157
      $region26: #{tpu_custom_call.1} parent=11 // pred_check_branch
        %356 = sbr.rel (%p354) target = $region28
      $region27: #{tpu_custom_call.1} parent=11 // pred_region
        _
      $region28: #{tpu_custom_call.1} parent=11 // pred_fallthru
        _
      // Predicated region
      $region29: #{tpu_custom_call.1} parent=11 // pred_check
        %p357 = pneg %p178
      $region30: #{tpu_custom_call.1} parent=11 // pred_check_branch
        %359 = sbr.rel (%p357) target = $region32
      $region31: #{tpu_custom_call.1} parent=11 // pred_region
        _
      $region32: #{tpu_custom_call.1} parent=11 // pred_fallthru
        _
      // Predicated region
      $region33: #{tpu_custom_call.1} parent=11 // pred_check
        %p360 = pneg %p199
      $region34: #{tpu_custom_call.1} parent=11 // pred_check_branch
        %362 = sbr.rel (%p360) target = $region36
      $region35: #{tpu_custom_call.1} parent=11 // pred_region
        _
      $region36: #{tpu_custom_call.1} parent=11 // pred_fallthru
        _
      // Predicated region
      $region37: #{tpu_custom_call.1} parent=11 // pred_check
        %p363 = pneg %p220
      $region38: #{tpu_custom_call.1} parent=11 // pred_check_branch
        %365 = sbr.rel (%p363) target = $region40
      $region39: #{tpu_custom_call.1} parent=11 // pred_region
        _
      $region40: #{tpu_custom_call.1} parent=11 // pred_fallthru
        _
      // Predicated region
      $region41: #{tpu_custom_call.1} parent=11 // pred_check
        %p366 = pneg %p241
      $region42: #{tpu_custom_call.1} parent=11 // pred_check_branch
        %368 = sbr.rel (%p366) target = $region44
      $region43: #{tpu_custom_call.1} parent=11 // pred_region
        _
      $region44: #{tpu_custom_call.1} parent=11 // pred_fallthru
        _
      // Predicated region
      $region45: #{tpu_custom_call.1} parent=11 // pred_check
        %p369 = pneg %p262
      $region46: #{tpu_custom_call.1} parent=11 // pred_check_branch
        %371 = sbr.rel (%p369) target = $region48
      $region47: #{tpu_custom_call.1} parent=11 // pred_region
        _
      $region48: #{tpu_custom_call.1} parent=11 // pred_fallthru
        _
      // Predicated region
      $region49: #{tpu_custom_call.1} parent=11 // pred_check
        %p372 = pneg %p283
      $region50: #{tpu_custom_call.1} parent=11 // pred_check_branch
        %374 = sbr.rel (%p372) target = $region52
      $region51: #{tpu_custom_call.1} parent=11 // pred_region
        _
      $region52: #{tpu_custom_call.1} parent=11 // pred_fallthru
        _
      // Predicated region
      $region53: #{tpu_custom_call.1} parent=11 // pred_check
        %p375 = pneg %p304
      $region54: #{tpu_custom_call.1} parent=11 // pred_check_branch
        %377 = sbr.rel (%p375) target = $region56
      $region55: #{tpu_custom_call.1} parent=11 // pred_region
        _
      $region56: #{tpu_custom_call.1} parent=11 // pred_fallthru
        _
    $region12: #{tpu_custom_call.1} parent=5 // pred_fallthru
      _
    %p378 = scmp.lt.s32.totalorder %s21, 2
    // Predicated region
    $region57: #{tpu_custom_call.1} parent=5 // pred_check
      %p379 = pneg %p378
    $region58: #{tpu_custom_call.1} parent=5 // pred_check_branch
      %381 = sbr.rel (%p379) target = $region60
    $region59: #{tpu_custom_call.1} parent=5 // pred_region
      // Predicated region
      $region61: #{tpu_custom_call.1} parent=59 // pred_check
        %p382 = pneg %p41
      $region62: #{tpu_custom_call.1} parent=59 // pred_check_branch
        %384 = sbr.rel (%p382) target = $region64
      $region63: #{tpu_custom_call.1} parent=59 // pred_region
        %s385 = smul.u32 8, %s21
        %p386 = scmp.lt.s32.totalorder %s385, 15
        %s387 = scalar_select %p386, %s385, 15
        %s388 = smul.addr %s387, 3
        %s389 = smul.addr %s388, 4
        %s390 = scalar_lea.vmem %s0, %s389
        %s391 = smul.u32 8, %s21
      $region64: #{tpu_custom_call.1} parent=59 // pred_fallthru
        _
      // Predicated region
      $region65: #{tpu_custom_call.1} parent=59 // pred_check
        %p392 = pneg %p67
      $region66: #{tpu_custom_call.1} parent=59 // pred_check_branch
        %394 = sbr.rel (%p392) target = $region68
      $region67: #{tpu_custom_call.1} parent=59 // pred_region
        %p395 = scmp.lt.s32.totalorder %s21, 1
        %s396 = scalar_select %p395, %s21, 1
        %s397 = smul.addr %s396, 4
        %s398 = scalar_lea.vmem %s1, %s397
      $region68: #{tpu_custom_call.1} parent=59 // pred_fallthru
        _
    $region60: #{tpu_custom_call.1} parent=5 // pred_fallthru
      _
    %p399 = scmp.le.s32.totalorder 1, %s21
    %p400 = scmp.lt.s32.totalorder %s21, 3
    %p401 = pnand %p399, %p400
    %p402 = pneg %p401
    // Predicated region
    $region69: #{tpu_custom_call.1} parent=5 // pred_check
      _
    $region70: #{tpu_custom_call.1} parent=5 // pred_check_branch
      %404 = sbr.rel (%p401) target = $region72
    $region71: #{tpu_custom_call.1} parent=5 // pred_region
      %s405 = ssub.s32 %s21, 1
      %s406 = smul.u32 8, %s26
      %p407 = scmp.lt.s32.totalorder %s406, 15
      %s408 = scalar_select %p407, %s406, 15
      %s409 = smul.addr %s408, 3
      %s410 = smul.addr %s409, 4
      %s411 = scalar_lea.vmem %s0, %s410
      %p412 = pneg %p47
      %p413 = pneg %p44
      %p414 = scmp.lt.s32.totalorder %s26, 1
      %s415 = scalar_select %p414, %s26, 1
      %s416 = smul.addr %s415, 4
      %s417 = scalar_lea.vmem %s1, %s416
      %p418 = pneg %p73
      %p419 = pneg %p70
      %p420 = pneg %p94
      %p421 = pneg %p91
      %p422 = pneg %p115
      %p423 = pneg %p112
      %p424 = pneg %p136
      %p425 = pneg %p133
      %p426 = pneg %p157
      %p427 = pneg %p154
      %p428 = pneg %p178
      %p429 = pneg %p175
      %p430 = pneg %p199
      %p431 = pneg %p196
      %p432 = pneg %p220
      %p433 = pneg %p217
      %p434 = pneg %p241
      %p435 = pneg %p238
      %p436 = pneg %p262
      %p437 = pneg %p259
      %p438 = pneg %p283
      %p439 = pneg %p280
      %p440 = pneg %p304
      %p441 = pneg %p301
      %p442 = pneg %p330
      %p443 = pneg %p327
      %p444 = scmp.lt.s32.totalorder %s26, 1
      %s445 = scalar_select %p444, %s26, 1
      %s446 = smul.addr %s445, 8
      %s447 = scalar_lea.vmem %s13, %s446
      %s448 = smul.u32 8, %s26
      %p449 = scmp.lt.s32.totalorder %s448, 15
      %s450 = scalar_select %p449, %s448, 15
      %s451 = smul.addr %s450, 3
      %s452 = smul.addr %s451, 4
      %s453 = scalar_lea.vmem %s0, %s452
      %s454 = smul.u32 8, %s26
      %p455 = scmp.lt.s32.totalorder %s26, 1
      %s456 = scalar_select %p455, %s26, 1
      %s457 = smul.addr %s456, 4
      %s458 = scalar_lea.vmem %s1, %s457
      %p459 = scmp.lt.s32.totalorder %s26, 1
      %s460 = scalar_select %p459, %s26, 1
      %s461 = smul.addr %s460, 8
      %s462 = scalar_lea.vmem %s13, %s461
      %v464 = vld [vmem:[%s453] sm:$0xf]
      %v465 = vld [vmem:[%s453 + $0x4] sm:$0xf]
      %v466 = vld [vmem:[%s453 + $0x8] sm:$0x7]
      %v467 = vld [vmem:[%s453 + $0xc] sm:$0xf]
      %v468 = vld [vmem:[%s453 + $0x10] sm:$0xf]
      %v469 = vld [vmem:[%s453 + $0x14] sm:$0x7]
      %v470 = vld [vmem:[%s453 + $0x18] sm:$0xf]
      %v471 = vld [vmem:[%s453 + $0x1c] sm:$0xf]
      %v472 = vld [vmem:[%s453 + $0x20] sm:$0x7]
      %v473 = vld [vmem:[%s453 + $0x24] sm:$0xf]
      %v474 = vld [vmem:[%s453 + $0x28] sm:$0xf]
      %v475 = vld [vmem:[%s453 + $0x2c] sm:$0x7]
      %v476 = vld [vmem:[%s453 + $0x30] sm:$0xf]
      %v477 = vld [vmem:[%s453 + $0x34] sm:$0xf]
      %v478 = vld [vmem:[%s453 + $0x38] sm:$0x7]
      %v479 = vld [vmem:[%s453 + $0x3c] sm:$0xf]
      %v480 = vld [vmem:[%s453 + $0x40] sm:$0xf]
      %v481 = vld [vmem:[%s453 + $0x44] sm:$0x7]
      %v482 = vld [vmem:[%s453 + $0x48] sm:$0xf]
      %v483 = vld [vmem:[%s453 + $0x4c] sm:$0xf]
      %v484 = vld [vmem:[%s453 + $0x50] sm:$0x7]
      %v485 = vld [vmem:[%s453 + $0x54] sm:$0xf]
      %v486 = vld [vmem:[%s453 + $0x58] sm:$0xf]
      %v487 = vld [vmem:[%s453 + $0x5c] sm:$0x7]
      %v488 = vunpack.c.l.bf16 %v464
      %v489 = vunpack.c.l.bf16 %v465
      %v490 = vunpack.c.l.bf16 %v466
      %v491 = vunpack.c.l.bf16 %v467
      %v492 = vunpack.c.l.bf16 %v468
      %v493 = vunpack.c.l.bf16 %v469
      %v494 = vunpack.c.l.bf16 %v470
      %v495 = vunpack.c.l.bf16 %v471
      %v496 = vunpack.c.l.bf16 %v472
      %v497 = vunpack.c.l.bf16 %v473
      %v498 = vunpack.c.l.bf16 %v474
      %v499 = vunpack.c.l.bf16 %v475
      %v500 = vunpack.c.l.bf16 %v476
      %v501 = vunpack.c.l.bf16 %v477
      %v502 = vunpack.c.l.bf16 %v478
      %v503 = vunpack.c.l.bf16 %v479
      %v504 = vunpack.c.l.bf16 %v480
      %v505 = vunpack.c.l.bf16 %v481
      %v506 = vunpack.c.l.bf16 %v482
      %v507 = vunpack.c.l.bf16 %v483
      %v508 = vunpack.c.l.bf16 %v484
      %v509 = vunpack.c.l.bf16 %v485
      %v510 = vunpack.c.l.bf16 %v486
      %v511 = vunpack.c.l.bf16 %v487
      %vm536 = vcmask 1046528
      %v537 = vrot.slane %v488, 1
      %v538 = vrot.slane %v489, 1
      %v539 = vsel %vm536, %v537, %v538
      %v540 = vrot.slane %v490, 1
      %v541 = vsel %vm536, %v538, %v540
      %v542 = vrot.slane %v491, 1
      %v543 = vrot.slane %v492, 1
      %v544 = vsel %vm536, %v542, %v543
      %v545 = vrot.slane %v493, 1
      %v546 = vsel %vm536, %v543, %v545
      %v547 = vrot.slane %v494, 1
      %v548 = vrot.slane %v495, 1
      %v549 = vsel %vm536, %v547, %v548
      %v550 = vrot.slane %v496, 1
      %v551 = vsel %vm536, %v548, %v550
      %v552 = vrot.slane %v497, 1
      %v553 = vrot.slane %v498, 1
      %v554 = vsel %vm536, %v552, %v553
      %v555 = vrot.slane %v499, 1
      %v556 = vsel %vm536, %v553, %v555
      %v557 = vrot.slane %v500, 1
      %v558 = vrot.slane %v501, 1
      %v559 = vsel %vm536, %v557, %v558
      %v560 = vrot.slane %v502, 1
      %v561 = vsel %vm536, %v558, %v560
      %v562 = vrot.slane %v503, 1
      %v563 = vrot.slane %v504, 1
      %v564 = vsel %vm536, %v562, %v563
      %v565 = vrot.slane %v505, 1
      %v566 = vsel %vm536, %v563, %v565
      %v567 = vrot.slane %v506, 1
      %v568 = vrot.slane %v507, 1
      %v569 = vsel %vm536, %v567, %v568
      %v570 = vrot.slane %v508, 1
      %v571 = vsel %vm536, %v568, %v570
      %v572 = vrot.slane %v509, 1
      %v573 = vrot.slane %v510, 1
      %v574 = vsel %vm536, %v572, %v573
      %v575 = vrot.slane %v511, 1
      %v576 = vsel %vm536, %v573, %v575
      %577 = vrot.lane.b32.xlu0 %v539, 4
      %v578 = vpop.permute.xlu0 %577
      %579 = vrot.lane.b32.xlu0 %v541, 4
      %v580 = vpop.permute.xlu0 %579
      %581 = vrot.lane.b32.xlu0 %v544, 4
      %v582 = vpop.permute.xlu0 %581
      %583 = vrot.lane.b32.xlu0 %v546, 4
      %v584 = vpop.permute.xlu0 %583
      %585 = vrot.lane.b32.xlu0 %v549, 4
      %v586 = vpop.permute.xlu0 %585
      %587 = vrot.lane.b32.xlu0 %v551, 4
      %v588 = vpop.permute.xlu0 %587
      %589 = vrot.lane.b32.xlu0 %v554, 4
      %v590 = vpop.permute.xlu0 %589
      %591 = vrot.lane.b32.xlu0 %v556, 4
      %v592 = vpop.permute.xlu0 %591
      %593 = vrot.lane.b32.xlu0 %v559, 4
      %v594 = vpop.permute.xlu0 %593
      %595 = vrot.lane.b32.xlu0 %v561, 4
      %v596 = vpop.permute.xlu0 %595
      %597 = vrot.lane.b32.xlu0 %v564, 4
      %v598 = vpop.permute.xlu0 %597
      %599 = vrot.lane.b32.xlu0 %v566, 4
      %v600 = vpop.permute.xlu0 %599
      %601 = vrot.lane.b32.xlu0 %v569, 4
      %v602 = vpop.permute.xlu0 %601
      %603 = vrot.lane.b32.xlu0 %v571, 4
      %v604 = vpop.permute.xlu0 %603
      %605 = vrot.lane.b32.xlu0 %v574, 4
      %v606 = vpop.permute.xlu0 %605
      %607 = vrot.lane.b32.xlu0 %v576, 4
      %v608 = vpop.permute.xlu0 %607
      %vm625 = vcmask 1045504
      %v626 = vrot.slane %v488, 2
      %v627 = vrot.slane %v489, 2
      %v628 = vsel %vm625, %v626, %v627
      %v629 = vrot.slane %v490, 2
      %v630 = vsel %vm625, %v627, %v629
      %v631 = vrot.slane %v491, 2
      %v632 = vrot.slane %v492, 2
      %v633 = vsel %vm625, %v631, %v632
      %v634 = vrot.slane %v493, 2
      %v635 = vsel %vm625, %v632, %v634
      %v636 = vrot.slane %v494, 2
      %v637 = vrot.slane %v495, 2
      %v638 = vsel %vm625, %v636, %v637
      %v639 = vrot.slane %v496, 2
      %v640 = vsel %vm625, %v637, %v639
      %v641 = vrot.slane %v497, 2
      %v642 = vrot.slane %v498, 2
      %v643 = vsel %vm625, %v641, %v642
      %v644 = vrot.slane %v499, 2
      %v645 = vsel %vm625, %v642, %v644
      %v646 = vrot.slane %v500, 2
      %v647 = vrot.slane %v501, 2
      %v648 = vsel %vm625, %v646, %v647
      %v649 = vrot.slane %v502, 2
      %v650 = vsel %vm625, %v647, %v649
      %v651 = vrot.slane %v503, 2
      %v652 = vrot.slane %v504, 2
      %v653 = vsel %vm625, %v651, %v652
      %v654 = vrot.slane %v505, 2
      %v655 = vsel %vm625, %v652, %v654
      %v656 = vrot.slane %v506, 2
      %v657 = vrot.slane %v507, 2
      %v658 = vsel %vm625, %v656, %v657
      %v659 = vrot.slane %v508, 2
      %v660 = vsel %vm625, %v657, %v659
      %v661 = vrot.slane %v509, 2
      %v662 = vrot.slane %v510, 2
      %v663 = vsel %vm625, %v661, %v662
      %v664 = vrot.slane %v511, 2
      %v665 = vsel %vm625, %v662, %v664
      %666 = vrot.lane.b32.xlu0 %v628, 8
      %v667 = vpop.permute.xlu0 %666
      %668 = vrot.lane.b32.xlu0 %v630, 8
      %v669 = vpop.permute.xlu0 %668
      %670 = vrot.lane.b32.xlu0 %v633, 8
      %v671 = vpop.permute.xlu0 %670
      %672 = vrot.lane.b32.xlu0 %v635, 8
      %v673 = vpop.permute.xlu0 %672
      %674 = vrot.lane.b32.xlu0 %v638, 8
      %v675 = vpop.permute.xlu0 %674
      %676 = vrot.lane.b32.xlu0 %v640, 8
      %v677 = vpop.permute.xlu0 %676
      %678 = vrot.lane.b32.xlu0 %v643, 8
      %v679 = vpop.permute.xlu0 %678
      %680 = vrot.lane.b32.xlu0 %v645, 8
      %v681 = vpop.permute.xlu0 %680
      %682 = vrot.lane.b32.xlu0 %v648, 8
      %v683 = vpop.permute.xlu0 %682
      %684 = vrot.lane.b32.xlu0 %v650, 8
      %v685 = vpop.permute.xlu0 %684
      %686 = vrot.lane.b32.xlu0 %v653, 8
      %v687 = vpop.permute.xlu0 %686
      %688 = vrot.lane.b32.xlu0 %v655, 8
      %v689 = vpop.permute.xlu0 %688
      %690 = vrot.lane.b32.xlu0 %v658, 8
      %v691 = vpop.permute.xlu0 %690
      %692 = vrot.lane.b32.xlu0 %v660, 8
      %v693 = vpop.permute.xlu0 %692
      %694 = vrot.lane.b32.xlu0 %v663, 8
      %v695 = vpop.permute.xlu0 %694
      %696 = vrot.lane.b32.xlu0 %v665, 8
      %v697 = vpop.permute.xlu0 %696
      %vm714 = vcmask 1044480
      %v715 = vrot.slane %v488, 3
      %v716 = vrot.slane %v489, 3
      %v717 = vsel %vm714, %v715, %v716
      %v718 = vrot.slane %v490, 3
      %v719 = vsel %vm714, %v716, %v718
      %v720 = vrot.slane %v491, 3
      %v721 = vrot.slane %v492, 3
      %v722 = vsel %vm714, %v720, %v721
      %v723 = vrot.slane %v493, 3
      %v724 = vsel %vm714, %v721, %v723
      %v725 = vrot.slane %v494, 3
      %v726 = vrot.slane %v495, 3
      %v727 = vsel %vm714, %v725, %v726
      %v728 = vrot.slane %v496, 3
      %v729 = vsel %vm714, %v726, %v728
      %v730 = vrot.slane %v497, 3
      %v731 = vrot.slane %v498, 3
      %v732 = vsel %vm714, %v730, %v731
      %v733 = vrot.slane %v499, 3
      %v734 = vsel %vm714, %v731, %v733
      %v735 = vrot.slane %v500, 3
      %v736 = vrot.slane %v501, 3
      %v737 = vsel %vm714, %v735, %v736
      %v738 = vrot.slane %v502, 3
      %v739 = vsel %vm714, %v736, %v738
      %v740 = vrot.slane %v503, 3
      %v741 = vrot.slane %v504, 3
      %v742 = vsel %vm714, %v740, %v741
      %v743 = vrot.slane %v505, 3
      %v744 = vsel %vm714, %v741, %v743
      %v745 = vrot.slane %v506, 3
      %v746 = vrot.slane %v507, 3
      %v747 = vsel %vm714, %v745, %v746
      %v748 = vrot.slane %v508, 3
      %v749 = vsel %vm714, %v746, %v748
      %v750 = vrot.slane %v509, 3
      %v751 = vrot.slane %v510, 3
      %v752 = vsel %vm714, %v750, %v751
      %v753 = vrot.slane %v511, 3
      %v754 = vsel %vm714, %v751, %v753
      %755 = vrot.lane.b32.xlu0 %v717, 12
      %v756 = vpop.permute.xlu0 %755
      %757 = vrot.lane.b32.xlu0 %v719, 12
      %v758 = vpop.permute.xlu0 %757
      %759 = vrot.lane.b32.xlu0 %v722, 12
      %v760 = vpop.permute.xlu0 %759
      %761 = vrot.lane.b32.xlu0 %v724, 12
      %v762 = vpop.permute.xlu0 %761
      %763 = vrot.lane.b32.xlu0 %v727, 12
      %v764 = vpop.permute.xlu0 %763
      %765 = vrot.lane.b32.xlu0 %v729, 12
      %v766 = vpop.permute.xlu0 %765
      %767 = vrot.lane.b32.xlu0 %v732, 12
      %v768 = vpop.permute.xlu0 %767
      %769 = vrot.lane.b32.xlu0 %v734, 12
      %v770 = vpop.permute.xlu0 %769
      %771 = vrot.lane.b32.xlu0 %v737, 12
      %v772 = vpop.permute.xlu0 %771
      %773 = vrot.lane.b32.xlu0 %v739, 12
      %v774 = vpop.permute.xlu0 %773
      %775 = vrot.lane.b32.xlu0 %v742, 12
      %v776 = vpop.permute.xlu0 %775
      %777 = vrot.lane.b32.xlu0 %v744, 12
      %v778 = vpop.permute.xlu0 %777
      %779 = vrot.lane.b32.xlu0 %v747, 12
      %v780 = vpop.permute.xlu0 %779
      %781 = vrot.lane.b32.xlu0 %v749, 12
      %v782 = vpop.permute.xlu0 %781
      %783 = vrot.lane.b32.xlu0 %v752, 12
      %v784 = vpop.permute.xlu0 %783
      %785 = vrot.lane.b32.xlu0 %v754, 12
      %v786 = vpop.permute.xlu0 %785
      %vm803 = vcmask 1043456
      %v804 = vrot.slane %v488, 4
      %v805 = vrot.slane %v489, 4
      %v806 = vsel %vm803, %v804, %v805
      %v807 = vrot.slane %v490, 4
      %v808 = vsel %vm803, %v805, %v807
      %v809 = vrot.slane %v491, 4
      %v810 = vrot.slane %v492, 4
      %v811 = vsel %vm803, %v809, %v810
      %v812 = vrot.slane %v493, 4
      %v813 = vsel %vm803, %v810, %v812
      %v814 = vrot.slane %v494, 4
      %v815 = vrot.slane %v495, 4
      %v816 = vsel %vm803, %v814, %v815
      %v817 = vrot.slane %v496, 4
      %v818 = vsel %vm803, %v815, %v817
      %v819 = vrot.slane %v497, 4
      %v820 = vrot.slane %v498, 4
      %v821 = vsel %vm803, %v819, %v820
      %v822 = vrot.slane %v499, 4
      %v823 = vsel %vm803, %v820, %v822
      %v824 = vrot.slane %v500, 4
      %v825 = vrot.slane %v501, 4
      %v826 = vsel %vm803, %v824, %v825
      %v827 = vrot.slane %v502, 4
      %v828 = vsel %vm803, %v825, %v827
      %v829 = vrot.slane %v503, 4
      %v830 = vrot.slane %v504, 4
      %v831 = vsel %vm803, %v829, %v830
      %v832 = vrot.slane %v505, 4
      %v833 = vsel %vm803, %v830, %v832
      %v834 = vrot.slane %v506, 4
      %v835 = vrot.slane %v507, 4
      %v836 = vsel %vm803, %v834, %v835
      %v837 = vrot.slane %v508, 4
      %v838 = vsel %vm803, %v835, %v837
      %v839 = vrot.slane %v509, 4
      %v840 = vrot.slane %v510, 4
      %v841 = vsel %vm803, %v839, %v840
      %v842 = vrot.slane %v511, 4
      %v843 = vsel %vm803, %v840, %v842
      %844 = vrot.lane.b32.xlu0 %v806, 16
      %v845 = vpop.permute.xlu0 %844
      %846 = vrot.lane.b32.xlu0 %v808, 16
      %v847 = vpop.permute.xlu0 %846
      %848 = vrot.lane.b32.xlu0 %v811, 16
      %v849 = vpop.permute.xlu0 %848
      %850 = vrot.lane.b32.xlu0 %v813, 16
      %v851 = vpop.permute.xlu0 %850
      %852 = vrot.lane.b32.xlu0 %v816, 16
      %v853 = vpop.permute.xlu0 %852
      %854 = vrot.lane.b32.xlu0 %v818, 16
      %v855 = vpop.permute.xlu0 %854
      %856 = vrot.lane.b32.xlu0 %v821, 16
      %v857 = vpop.permute.xlu0 %856
      %858 = vrot.lane.b32.xlu0 %v823, 16
      %v859 = vpop.permute.xlu0 %858
      %860 = vrot.lane.b32.xlu0 %v826, 16
      %v861 = vpop.permute.xlu0 %860
      %862 = vrot.lane.b32.xlu0 %v828, 16
      %v863 = vpop.permute.xlu0 %862
      %864 = vrot.lane.b32.xlu0 %v831, 16
      %v865 = vpop.permute.xlu0 %864
      %866 = vrot.lane.b32.xlu0 %v833, 16
      %v867 = vpop.permute.xlu0 %866
      %868 = vrot.lane.b32.xlu0 %v836, 16
      %v869 = vpop.permute.xlu0 %868
      %870 = vrot.lane.b32.xlu0 %v838, 16
      %v871 = vpop.permute.xlu0 %870
      %872 = vrot.lane.b32.xlu0 %v841, 16
      %v873 = vpop.permute.xlu0 %872
      %874 = vrot.lane.b32.xlu0 %v843, 16
      %v875 = vpop.permute.xlu0 %874
      %vm892 = vcmask 1042432
      %v893 = vrot.slane %v488, 5
      %v894 = vrot.slane %v489, 5
      %v895 = vsel %vm892, %v893, %v894
      %v896 = vrot.slane %v490, 5
      %v897 = vsel %vm892, %v894, %v896
      %v898 = vrot.slane %v491, 5
      %v899 = vrot.slane %v492, 5
      %v900 = vsel %vm892, %v898, %v899
      %v901 = vrot.slane %v493, 5
      %v902 = vsel %vm892, %v899, %v901
      %v903 = vrot.slane %v494, 5
      %v904 = vrot.slane %v495, 5
      %v905 = vsel %vm892, %v903, %v904
      %v906 = vrot.slane %v496, 5
      %v907 = vsel %vm892, %v904, %v906
      %v908 = vrot.slane %v497, 5
      %v909 = vrot.slane %v498, 5
      %v910 = vsel %vm892, %v908, %v909
      %v911 = vrot.slane %v499, 5
      %v912 = vsel %vm892, %v909, %v911
      %v913 = vrot.slane %v500, 5
      %v914 = vrot.slane %v501, 5
      %v915 = vsel %vm892, %v913, %v914
      %v916 = vrot.slane %v502, 5
      %v917 = vsel %vm892, %v914, %v916
      %v918 = vrot.slane %v503, 5
      %v919 = vrot.slane %v504, 5
      %v920 = vsel %vm892, %v918, %v919
      %v921 = vrot.slane %v505, 5
      %v922 = vsel %vm892, %v919, %v921
      %v923 = vrot.slane %v506, 5
      %v924 = vrot.slane %v507, 5
      %v925 = vsel %vm892, %v923, %v924
      %v926 = vrot.slane %v508, 5
      %v927 = vsel %vm892, %v924, %v926
      %v928 = vrot.slane %v509, 5
      %v929 = vrot.slane %v510, 5
      %v930 = vsel %vm892, %v928, %v929
      %v931 = vrot.slane %v511, 5
      %v932 = vsel %vm892, %v929, %v931
      %933 = vrot.lane.b32.xlu0 %v895, 20
      %v934 = vpop.permute.xlu0 %933
      %935 = vrot.lane.b32.xlu0 %v897, 20
      %v936 = vpop.permute.xlu0 %935
      %937 = vrot.lane.b32.xlu0 %v900, 20
      %v938 = vpop.permute.xlu0 %937
      %939 = vrot.lane.b32.xlu0 %v902, 20
      %v940 = vpop.permute.xlu0 %939
      %941 = vrot.lane.b32.xlu0 %v905, 20
      %v942 = vpop.permute.xlu0 %941
      %943 = vrot.lane.b32.xlu0 %v907, 20
      %v944 = vpop.permute.xlu0 %943
      %945 = vrot.lane.b32.xlu0 %v910, 20
      %v946 = vpop.permute.xlu0 %945
      %947 = vrot.lane.b32.xlu0 %v912, 20
      %v948 = vpop.permute.xlu0 %947
      %949 = vrot.lane.b32.xlu0 %v915, 20
      %v950 = vpop.permute.xlu0 %949
      %951 = vrot.lane.b32.xlu0 %v917, 20
      %v952 = vpop.permute.xlu0 %951
      %953 = vrot.lane.b32.xlu0 %v920, 20
      %v954 = vpop.permute.xlu0 %953
      %955 = vrot.lane.b32.xlu0 %v922, 20
      %v956 = vpop.permute.xlu0 %955
      %957 = vrot.lane.b32.xlu0 %v925, 20
      %v958 = vpop.permute.xlu0 %957
      %959 = vrot.lane.b32.xlu0 %v927, 20
      %v960 = vpop.permute.xlu0 %959
      %961 = vrot.lane.b32.xlu0 %v930, 20
      %v962 = vpop.permute.xlu0 %961
      %963 = vrot.lane.b32.xlu0 %v932, 20
      %v964 = vpop.permute.xlu0 %963
      %vm981 = vcmask 1041408
      %v982 = vrot.slane %v488, 6
      %v983 = vrot.slane %v489, 6
      %v984 = vsel %vm981, %v982, %v983
      %v985 = vrot.slane %v490, 6
      %v986 = vsel %vm981, %v983, %v985
      %v987 = vrot.slane %v491, 6
      %v988 = vrot.slane %v492, 6
      %v989 = vsel %vm981, %v987, %v988
      %v990 = vrot.slane %v493, 6
      %v991 = vsel %vm981, %v988, %v990
      %v992 = vrot.slane %v494, 6
      %v993 = vrot.slane %v495, 6
      %v994 = vsel %vm981, %v992, %v993
      %v995 = vrot.slane %v496, 6
      %v996 = vsel %vm981, %v993, %v995
      %v997 = vrot.slane %v497, 6
      %v998 = vrot.slane %v498, 6
      %v999 = vsel %vm981, %v997, %v998
      %v1000 = vrot.slane %v499, 6
      %v1001 = vsel %vm981, %v998, %v1000
      %v1002 = vrot.slane %v500, 6
      %v1003 = vrot.slane %v501, 6
      %v1004 = vsel %vm981, %v1002, %v1003
      %v1005 = vrot.slane %v502, 6
      %v1006 = vsel %vm981, %v1003, %v1005
      %v1007 = vrot.slane %v503, 6
      %v1008 = vrot.slane %v504, 6
      %v1009 = vsel %vm981, %v1007, %v1008
      %v1010 = vrot.slane %v505, 6
      %v1011 = vsel %vm981, %v1008, %v1010
      %v1012 = vrot.slane %v506, 6
      %v1013 = vrot.slane %v507, 6
      %v1014 = vsel %vm981, %v1012, %v1013
      %v1015 = vrot.slane %v508, 6
      %v1016 = vsel %vm981, %v1013, %v1015
      %v1017 = vrot.slane %v509, 6
      %v1018 = vrot.slane %v510, 6
      %v1019 = vsel %vm981, %v1017, %v1018
      %v1020 = vrot.slane %v511, 6
      %v1021 = vsel %vm981, %v1018, %v1020
      %1022 = vrot.lane.b32.xlu0 %v984, 24
      %v1023 = vpop.permute.xlu0 %1022
      %1024 = vrot.lane.b32.xlu0 %v986, 24
      %v1025 = vpop.permute.xlu0 %1024
      %1026 = vrot.lane.b32.xlu0 %v989, 24
      %v1027 = vpop.permute.xlu0 %1026
      %1028 = vrot.lane.b32.xlu0 %v991, 24
      %v1029 = vpop.permute.xlu0 %1028
      %1030 = vrot.lane.b32.xlu0 %v994, 24
      %v1031 = vpop.permute.xlu0 %1030
      %1032 = vrot.lane.b32.xlu0 %v996, 24
      %v1033 = vpop.permute.xlu0 %1032
      %1034 = vrot.lane.b32.xlu0 %v999, 24
      %v1035 = vpop.permute.xlu0 %1034
      %1036 = vrot.lane.b32.xlu0 %v1001, 24
      %v1037 = vpop.permute.xlu0 %1036
      %1038 = vrot.lane.b32.xlu0 %v1004, 24
      %v1039 = vpop.permute.xlu0 %1038
      %1040 = vrot.lane.b32.xlu0 %v1006, 24
      %v1041 = vpop.permute.xlu0 %1040
      %1042 = vrot.lane.b32.xlu0 %v1009, 24
      %v1043 = vpop.permute.xlu0 %1042
      %1044 = vrot.lane.b32.xlu0 %v1011, 24
      %v1045 = vpop.permute.xlu0 %1044
      %1046 = vrot.lane.b32.xlu0 %v1014, 24
      %v1047 = vpop.permute.xlu0 %1046
      %1048 = vrot.lane.b32.xlu0 %v1016, 24
      %v1049 = vpop.permute.xlu0 %1048
      %1050 = vrot.lane.b32.xlu0 %v1019, 24
      %v1051 = vpop.permute.xlu0 %1050
      %1052 = vrot.lane.b32.xlu0 %v1021, 24
      %v1053 = vpop.permute.xlu0 %1052
      %vm1070 = vcmask 31744
      %v1071 = vsel %vm1070, %v488, %v578
      %v1072 = vsel %vm1070, %v489, %v580
      %v1073 = vsel %vm1070, %v491, %v582
      %v1074 = vsel %vm1070, %v492, %v584
      %v1075 = vsel %vm1070, %v494, %v586
      %v1076 = vsel %vm1070, %v495, %v588
      %v1077 = vsel %vm1070, %v497, %v590
      %v1078 = vsel %vm1070, %v498, %v592
      %v1079 = vsel %vm1070, %v500, %v594
      %v1080 = vsel %vm1070, %v501, %v596
      %v1081 = vsel %vm1070, %v503, %v598
      %v1082 = vsel %vm1070, %v504, %v600
      %v1083 = vsel %vm1070, %v506, %v602
      %v1084 = vsel %vm1070, %v507, %v604
      %v1085 = vsel %vm1070, %v509, %v606
      %v1086 = vsel %vm1070, %v510, %v608
      %vm1087 = vcmask 64512
      %v1088 = vsel %vm1087, %v1071, %v667
      %v1089 = vsel %vm1087, %v1072, %v669
      %v1090 = vsel %vm1087, %v1073, %v671
      %v1091 = vsel %vm1087, %v1074, %v673
      %v1092 = vsel %vm1087, %v1075, %v675
      %v1093 = vsel %vm1087, %v1076, %v677
      %v1094 = vsel %vm1087, %v1077, %v679
      %v1095 = vsel %vm1087, %v1078, %v681
      %v1096 = vsel %vm1087, %v1079, %v683
      %v1097 = vsel %vm1087, %v1080, %v685
      %v1098 = vsel %vm1087, %v1081, %v687
      %v1099 = vsel %vm1087, %v1082, %v689
      %v1100 = vsel %vm1087, %v1083, %v691
      %v1101 = vsel %vm1087, %v1084, %v693
      %v1102 = vsel %vm1087, %v1085, %v695
      %v1103 = vsel %vm1087, %v1086, %v697
      %vm1104 = vcmask 97280
      %v1105 = vsel %vm1104, %v1088, %v756
      %v1106 = vsel %vm1104, %v1089, %v758
      %v1107 = vsel %vm1104, %v1090, %v760
      %v1108 = vsel %vm1104, %v1091, %v762
      %v1109 = vsel %vm1104, %v1092, %v764
      %v1110 = vsel %vm1104, %v1093, %v766
      %v1111 = vsel %vm1104, %v1094, %v768
      %v1112 = vsel %vm1104, %v1095, %v770
      %v1113 = vsel %vm1104, %v1096, %v772
      %v1114 = vsel %vm1104, %v1097, %v774
      %v1115 = vsel %vm1104, %v1098, %v776
      %v1116 = vsel %vm1104, %v1099, %v778
      %v1117 = vsel %vm1104, %v1100, %v780
      %v1118 = vsel %vm1104, %v1101, %v782
      %v1119 = vsel %vm1104, %v1102, %v784
      %v1120 = vsel %vm1104, %v1103, %v786
      %vm1121 = vcmask 130048
      %v1122 = vsel %vm1121, %v1105, %v845
      %v1123 = vsel %vm1121, %v1106, %v847
      %v1124 = vsel %vm1121, %v1107, %v849
      %v1125 = vsel %vm1121, %v1108, %v851
      %v1126 = vsel %vm1121, %v1109, %v853
      %v1127 = vsel %vm1121, %v1110, %v855
      %v1128 = vsel %vm1121, %v1111, %v857
      %v1129 = vsel %vm1121, %v1112, %v859
      %v1130 = vsel %vm1121, %v1113, %v861
      %v1131 = vsel %vm1121, %v1114, %v863
      %v1132 = vsel %vm1121, %v1115, %v865
      %v1133 = vsel %vm1121, %v1116, %v867
      %v1134 = vsel %vm1121, %v1117, %v869
      %v1135 = vsel %vm1121, %v1118, %v871
      %v1136 = vsel %vm1121, %v1119, %v873
      %v1137 = vsel %vm1121, %v1120, %v875
      %vm1138 = vcmask 162816
      %v1139 = vsel %vm1138, %v1122, %v934
      %v1140 = vsel %vm1138, %v1123, %v936
      %v1141 = vsel %vm1138, %v1124, %v938
      %v1142 = vsel %vm1138, %v1125, %v940
      %v1143 = vsel %vm1138, %v1126, %v942
      %v1144 = vsel %vm1138, %v1127, %v944
      %v1145 = vsel %vm1138, %v1128, %v946
      %v1146 = vsel %vm1138, %v1129, %v948
      %v1147 = vsel %vm1138, %v1130, %v950
      %v1148 = vsel %vm1138, %v1131, %v952
      %v1149 = vsel %vm1138, %v1132, %v954
      %v1150 = vsel %vm1138, %v1133, %v956
      %v1151 = vsel %vm1138, %v1134, %v958
      %v1152 = vsel %vm1138, %v1135, %v960
      %v1153 = vsel %vm1138, %v1136, %v962
      %v1154 = vsel %vm1138, %v1137, %v964
      %vm1155 = vcmask 195584
      %v1156 = vsel %vm1155, %v1139, %v1023
      %v1157 = vsel %vm1155, %v1140, %v1025
      %v1158 = vsel %vm1155, %v1141, %v1027
      %v1159 = vsel %vm1155, %v1142, %v1029
      %v1160 = vsel %vm1155, %v1143, %v1031
      %v1161 = vsel %vm1155, %v1144, %v1033
      %v1162 = vsel %vm1155, %v1145, %v1035
      %v1163 = vsel %vm1155, %v1146, %v1037
      %v1164 = vsel %vm1155, %v1147, %v1039
      %v1165 = vsel %vm1155, %v1148, %v1041
      %v1166 = vsel %vm1155, %v1149, %v1043
      %v1167 = vsel %vm1155, %v1150, %v1045
      %v1168 = vsel %vm1155, %v1151, %v1047
      %v1169 = vsel %vm1155, %v1152, %v1049
      %v1170 = vsel %vm1155, %v1153, %v1051
      %v1171 = vsel %vm1155, %v1154, %v1053
      %v1172 = vpack.c.bf16 %v1157, %v1156
      %v1173 = vpack.c.bf16 %v1159, %v1158
      %v1174 = vpack.c.bf16 %v1161, %v1160
      %v1175 = vpack.c.bf16 %v1163, %v1162
      %v1176 = vpack.c.bf16 %v1165, %v1164
      %v1177 = vpack.c.bf16 %v1167, %v1166
      %v1178 = vpack.c.bf16 %v1169, %v1168
      %v1179 = vpack.c.bf16 %v1171, %v1170
      %v1180 = vld [vmem:[%s2] sm:$0xf]
      %v1181 = vld [vmem:[%s2 + $0x4] sm:$0xf]
      %v1182 = vld [vmem:[%s2 + $0x8] sm:$0xf]
      %v1183 = vld [vmem:[%s2 + $0xc] sm:$0x3]
      %v1184 = vld [vmem:[%s3] sm:$0x1]
      %v1186 = vlaneseq
      %v1187 = vshrl.u32 %v1186, 7
      %v1188 = vsub.s32 0, %v1187
      %v1189 = vrot.slane %v1184, %v1188
      %v1195 = vunpack.c.l.b16 %v1180
      %v1196 = vunpack.c.l.b16 %v1181
      %v1197 = vunpack.c.l.b16 %v1182
      %v1198 = vunpack.c.l.b16 %v1183
      %v1199 = vpack.c.b16 %v1196, %v1195
      %v1200 = vpack.c.b16 %v1198, %v1197
      %vm1202 = vcmask 228352
      %v1204 = vsel %vm1202, %v1172, 0
      %v1207 = vsel %vm1202, %v1173, 0
      %v1210 = vsel %vm1202, %v1174, 0
      %v1213 = vsel %vm1202, %v1175, 0
      %v1216 = vsel %vm1202, %v1176, 0
      %v1219 = vsel %vm1202, %v1177, 0
      %v1222 = vsel %vm1202, %v1178, 0
      %v1225 = vsel %vm1202, %v1179, 0
      %v1228 = vsel %vm625, %v1200, 0
      %1230 = vmatprep.subr.bf16.mxu0 0
      %1231 = vmatpush1.bf16.msra.mxu0 0
      %1232 = vmatprep.subr.bf16.mxu0 0
      %1233 = vmatpush1.bf16.msra.mxu0 0
      %1234 = vmatprep.subr.bf16.mxu0 0
      %1235 = vmatpush1.bf16.msra.mxu0 0
      %1236 = vmatprep.subr.bf16.mxu0 0
      %1237 = vmatpush1.bf16.msra.mxu0 0
      %1238 = vmatprep.subr.bf16.mxu0 0
      %1239 = vmatpush1.bf16.msra.mxu0 0
      %1240 = vmatprep.subr.bf16.mxu0 0
      %1241 = vmatpush1.bf16.msra.mxu0 0
      %1242 = vmatprep.subr.bf16.mxu0 0
      %1243 = vmatpush1.bf16.msra.mxu0 %v1228
      %1244 = vmatprep.subr.bf16.mxu0 0
      %1245 = vmatpush1.bf16.msra.mxu0 %v1199
      %1246 = vmatprep.subr.bf16.mxu0 0
      %1247 = vmatpush2.bf16.msra.mxu0 0
      %1248 = vmatprep.subr.bf16.mxu0 0
      %1249 = vmatpush2.bf16.msra.mxu0 0
      %1250 = vmatprep.subr.bf16.mxu0 0
      %1251 = vmatpush2.bf16.msra.mxu0 0
      %1252 = vmatprep.subr.bf16.mxu0 0
      %1253 = vmatpush2.bf16.msra.mxu0 0
      %1254 = vmatprep.subr.bf16.mxu0 0
      %1255 = vmatpush2.bf16.msra.mxu0 0
      %1256 = vmatprep.subr.bf16.mxu0 0
      %1257 = vmatpush2.bf16.msra.mxu0 0
      %1258 = vmatprep.subr.bf16.mxu0 0
      %1259 = vmatpush2.bf16.msra.mxu0 0
      %1260 = vmatprep.subr.bf16.mxu0 0
      %1261 = vmatpush2.bf16.msra.mxu0 0
      %1262 = vmatprep.mubr.bf16.mxu0 0
      %1263 = vmatmul.mubr.bf16.gmra.mxu0 %v1204
      %v1264 = vpop.f32.mrf.mxu0
      %v1265 = vadd.f32 %v1189, %v1264
      %v1266 = vpop.f32.mrf.mxu0
      %v1267 = vpop.f32.mrf.mxu0
      %v1268 = vadd.f32 %v1189, %v1267
      %v1269 = vpop.f32.mrf.mxu0
      %1270 = vmatprep.mubr.bf16.mxu0 0
      %1271 = vmatmul.mubr.bf16.gmra.mxu0 %v1207
      %v1272 = vpop.f32.mrf.mxu0
      %v1273 = vadd.f32 %v1189, %v1272
      %v1274 = vpop.f32.mrf.mxu0
      %v1275 = vpop.f32.mrf.mxu0
      %v1276 = vadd.f32 %v1189, %v1275
      %v1277 = vpop.f32.mrf.mxu0
      %1278 = vmatprep.mubr.bf16.mxu0 0
      %1279 = vmatmul.mubr.bf16.gmra.mxu0 %v1210
      %v1280 = vpop.f32.mrf.mxu0
      %v1281 = vadd.f32 %v1189, %v1280
      %v1282 = vpop.f32.mrf.mxu0
      %v1283 = vpop.f32.mrf.mxu0
      %v1284 = vadd.f32 %v1189, %v1283
      %v1285 = vpop.f32.mrf.mxu0
      %1286 = vmatprep.mubr.bf16.mxu0 0
      %1287 = vmatmul.mubr.bf16.gmra.mxu0 %v1213
      %v1288 = vpop.f32.mrf.mxu0
      %v1289 = vadd.f32 %v1189, %v1288
      %v1290 = vpop.f32.mrf.mxu0
      %v1291 = vpop.f32.mrf.mxu0
      %v1292 = vadd.f32 %v1189, %v1291
      %v1293 = vpop.f32.mrf.mxu0
      %1294 = vmatprep.mubr.bf16.mxu0 0
      %1295 = vmatmul.mubr.bf16.gmra.mxu0 %v1216
      %v1296 = vpop.f32.mrf.mxu0
      %v1297 = vadd.f32 %v1189, %v1296
      %v1298 = vpop.f32.mrf.mxu0
      %v1299 = vpop.f32.mrf.mxu0
      %v1300 = vadd.f32 %v1189, %v1299
      %v1301 = vpop.f32.mrf.mxu0
      %1302 = vmatprep.mubr.bf16.mxu0 0
      %1303 = vmatmul.mubr.bf16.gmra.mxu0 %v1219
      %v1304 = vpop.f32.mrf.mxu0
      %v1305 = vadd.f32 %v1189, %v1304
      %v1306 = vpop.f32.mrf.mxu0
      %v1307 = vpop.f32.mrf.mxu0
      %v1308 = vadd.f32 %v1189, %v1307
      %v1309 = vpop.f32.mrf.mxu0
      %1310 = vmatprep.mubr.bf16.mxu0 0
      %1311 = vmatmul.mubr.bf16.gmra.mxu0 %v1222
      %v1312 = vpop.f32.mrf.mxu0
      %v1313 = vadd.f32 %v1189, %v1312
      %v1314 = vpop.f32.mrf.mxu0
      %v1315 = vpop.f32.mrf.mxu0
      %v1316 = vadd.f32 %v1189, %v1315
      %v1317 = vpop.f32.mrf.mxu0
      %1318 = vmatprep.mubr.bf16.mxu0 0
      %1319 = vmatmul.mubr.bf16.gmra.mxu0 %v1225
      %v1320 = vpop.f32.mrf.mxu0
      %v1321 = vadd.f32 %v1189, %v1320
      %v1322 = vpop.f32.mrf.mxu0
      %v1323 = vpop.f32.mrf.mxu0
      %v1324 = vadd.f32 %v1189, %v1323
      %v1325 = vpop.f32.mrf.mxu0
      %1326 = vdwg.mxu0
      %v1327 = vmax.f32 %v1265, 0.0
      %v1328 = vmax.f32 %v1268, 0.0
      %v1329 = vmax.f32 %v1273, 0.0
      %v1330 = vmax.f32 %v1276, 0.0
      %v1331 = vmax.f32 %v1281, 0.0
      %v1332 = vmax.f32 %v1284, 0.0
      %v1333 = vmax.f32 %v1289, 0.0
      %v1334 = vmax.f32 %v1292, 0.0
      %v1335 = vmax.f32 %v1297, 0.0
      %v1336 = vmax.f32 %v1300, 0.0
      %v1337 = vmax.f32 %v1305, 0.0
      %v1338 = vmax.f32 %v1308, 0.0
      %v1339 = vmax.f32 %v1313, 0.0
      %v1340 = vmax.f32 %v1316, 0.0
      %v1341 = vmax.f32 %v1321, 0.0
      %v1342 = vmax.f32 %v1324, 0.0
      %v1359 = vcombine.high %v1327, %v1327
      %v1361 = vunpack.c.l.s4 1983009808
      %v1362 = vunpack.c.0.s8 %v1361
      %v1363 = vlaneseq
      %v1364 = vshrl.u32 %v1363, 7
      %v1365 = vsub.s32 %v1362, %v1364
      %v1366 = vrot.slane %v1327, %v1365
      %v1368 = vunpack.c.l.s4 1983009808
      %v1369 = vunpack.c.0.s8 %v1368
      %v1370 = vlaneseq
      %v1371 = vshrl.u32 %v1370, 7
      %v1372 = vsub.s32 %v1369, %v1371
      %v1373 = vrot.slane %v1359, %v1372
      %v1374 = vcombine.high %v1366, %v1366
      %v1375 = vcombine.high %v1373, %v1373
      %v1376 = vcombine.high %v1328, %v1328
      %v1378 = vunpack.c.l.s4 1983009808
      %v1379 = vunpack.c.0.s8 %v1378
      %v1380 = vlaneseq
      %v1381 = vshrl.u32 %v1380, 7
      %v1382 = vsub.s32 %v1379, %v1381
      %v1383 = vrot.slane %v1328, %v1382
      %v1385 = vunpack.c.l.s4 1983009808
      %v1386 = vunpack.c.0.s8 %v1385
      %v1387 = vlaneseq
      %v1388 = vshrl.u32 %v1387, 7
      %v1389 = vsub.s32 %v1386, %v1388
      %v1390 = vrot.slane %v1376, %v1389
      %v1391 = vcombine.high %v1383, %v1383
      %v1392 = vcombine.high %v1390, %v1390
      %v1393 = vcombine.high %v1329, %v1329
      %v1395 = vunpack.c.l.s4 1983009808
      %v1396 = vunpack.c.0.s8 %v1395
      %v1397 = vlaneseq
      %v1398 = vshrl.u32 %v1397, 7
      %v1399 = vsub.s32 %v1396, %v1398
      %v1400 = vrot.slane %v1329, %v1399
      %v1402 = vunpack.c.l.s4 1983009808
      %v1403 = vunpack.c.0.s8 %v1402
      %v1404 = vlaneseq
      %v1405 = vshrl.u32 %v1404, 7
      %v1406 = vsub.s32 %v1403, %v1405
      %v1407 = vrot.slane %v1393, %v1406
      %v1408 = vcombine.high %v1400, %v1400
      %v1409 = vcombine.high %v1407, %v1407
      %v1410 = vcombine.high %v1330, %v1330
      %v1412 = vunpack.c.l.s4 1983009808
      %v1413 = vunpack.c.0.s8 %v1412
      %v1414 = vlaneseq
      %v1415 = vshrl.u32 %v1414, 7
      %v1416 = vsub.s32 %v1413, %v1415
      %v1417 = vrot.slane %v1330, %v1416
      %v1419 = vunpack.c.l.s4 1983009808
      %v1420 = vunpack.c.0.s8 %v1419
      %v1421 = vlaneseq
      %v1422 = vshrl.u32 %v1421, 7
      %v1423 = vsub.s32 %v1420, %v1422
      %v1424 = vrot.slane %v1410, %v1423
      %v1425 = vcombine.high %v1417, %v1417
      %v1426 = vcombine.high %v1424, %v1424
      %v1427 = vcombine.high %v1331, %v1331
      %v1429 = vunpack.c.l.s4 1983009808
      %v1430 = vunpack.c.0.s8 %v1429
      %v1431 = vlaneseq
      %v1432 = vshrl.u32 %v1431, 7
      %v1433 = vsub.s32 %v1430, %v1432
      %v1434 = vrot.slane %v1331, %v1433
      %v1436 = vunpack.c.l.s4 1983009808
      %v1437 = vunpack.c.0.s8 %v1436
      %v1438 = vlaneseq
      %v1439 = vshrl.u32 %v1438, 7
      %v1440 = vsub.s32 %v1437, %v1439
      %v1441 = vrot.slane %v1427, %v1440
      %v1442 = vcombine.high %v1434, %v1434
      %v1443 = vcombine.high %v1441, %v1441
      %v1444 = vcombine.high %v1332, %v1332
      %v1446 = vunpack.c.l.s4 1983009808
      %v1447 = vunpack.c.0.s8 %v1446
      %v1448 = vlaneseq
      %v1449 = vshrl.u32 %v1448, 7
      %v1450 = vsub.s32 %v1447, %v1449
      %v1451 = vrot.slane %v1332, %v1450
      %v1453 = vunpack.c.l.s4 1983009808
      %v1454 = vunpack.c.0.s8 %v1453
      %v1455 = vlaneseq
      %v1456 = vshrl.u32 %v1455, 7
      %v1457 = vsub.s32 %v1454, %v1456
      %v1458 = vrot.slane %v1444, %v1457
      %v1459 = vcombine.high %v1451, %v1451
      %v1460 = vcombine.high %v1458, %v1458
      %v1461 = vcombine.high %v1333, %v1333
      %v1463 = vunpack.c.l.s4 1983009808
      %v1464 = vunpack.c.0.s8 %v1463
      %v1465 = vlaneseq
      %v1466 = vshrl.u32 %v1465, 7
      %v1467 = vsub.s32 %v1464, %v1466
      %v1468 = vrot.slane %v1333, %v1467
      %v1470 = vunpack.c.l.s4 1983009808
      %v1471 = vunpack.c.0.s8 %v1470
      %v1472 = vlaneseq
      %v1473 = vshrl.u32 %v1472, 7
      %v1474 = vsub.s32 %v1471, %v1473
      %v1475 = vrot.slane %v1461, %v1474
      %v1476 = vcombine.high %v1468, %v1468
      %v1477 = vcombine.high %v1475, %v1475
      %v1478 = vcombine.high %v1334, %v1334
      %v1480 = vunpack.c.l.s4 1983009808
      %v1481 = vunpack.c.0.s8 %v1480
      %v1482 = vlaneseq
      %v1483 = vshrl.u32 %v1482, 7
      %v1484 = vsub.s32 %v1481, %v1483
      %v1485 = vrot.slane %v1334, %v1484
      %v1487 = vunpack.c.l.s4 1983009808
      %v1488 = vunpack.c.0.s8 %v1487
      %v1489 = vlaneseq
      %v1490 = vshrl.u32 %v1489, 7
      %v1491 = vsub.s32 %v1488, %v1490
      %v1492 = vrot.slane %v1478, %v1491
      %v1493 = vcombine.high %v1485, %v1485
      %v1494 = vcombine.high %v1492, %v1492
      %v1495 = vcombine.high %v1335, %v1335
      %v1497 = vunpack.c.l.s4 1983009808
      %v1498 = vunpack.c.0.s8 %v1497
      %v1499 = vlaneseq
      %v1500 = vshrl.u32 %v1499, 7
      %v1501 = vsub.s32 %v1498, %v1500
      %v1502 = vrot.slane %v1335, %v1501
      %v1504 = vunpack.c.l.s4 1983009808
      %v1505 = vunpack.c.0.s8 %v1504
      %v1506 = vlaneseq
      %v1507 = vshrl.u32 %v1506, 7
      %v1508 = vsub.s32 %v1505, %v1507
      %v1509 = vrot.slane %v1495, %v1508
      %v1510 = vcombine.high %v1502, %v1502
      %v1511 = vcombine.high %v1509, %v1509
      %v1512 = vcombine.high %v1336, %v1336
      %v1514 = vunpack.c.l.s4 1983009808
      %v1515 = vunpack.c.0.s8 %v1514
      %v1516 = vlaneseq
      %v1517 = vshrl.u32 %v1516, 7
      %v1518 = vsub.s32 %v1515, %v1517
      %v1519 = vrot.slane %v1336, %v1518
      %v1521 = vunpack.c.l.s4 1983009808
      %v1522 = vunpack.c.0.s8 %v1521
      %v1523 = vlaneseq
      %v1524 = vshrl.u32 %v1523, 7
      %v1525 = vsub.s32 %v1522, %v1524
      %v1526 = vrot.slane %v1512, %v1525
      %v1527 = vcombine.high %v1519, %v1519
      %v1528 = vcombine.high %v1526, %v1526
      %v1529 = vcombine.high %v1337, %v1337
      %v1531 = vunpack.c.l.s4 1983009808
      %v1532 = vunpack.c.0.s8 %v1531
      %v1533 = vlaneseq
      %v1534 = vshrl.u32 %v1533, 7
      %v1535 = vsub.s32 %v1532, %v1534
      %v1536 = vrot.slane %v1337, %v1535
      %v1538 = vunpack.c.l.s4 1983009808
      %v1539 = vunpack.c.0.s8 %v1538
      %v1540 = vlaneseq
      %v1541 = vshrl.u32 %v1540, 7
      %v1542 = vsub.s32 %v1539, %v1541
      %v1543 = vrot.slane %v1529, %v1542
      %v1544 = vcombine.high %v1536, %v1536
      %v1545 = vcombine.high %v1543, %v1543
      %v1546 = vcombine.high %v1338, %v1338
      %v1548 = vunpack.c.l.s4 1983009808
      %v1549 = vunpack.c.0.s8 %v1548
      %v1550 = vlaneseq
      %v1551 = vshrl.u32 %v1550, 7
      %v1552 = vsub.s32 %v1549, %v1551
      %v1553 = vrot.slane %v1338, %v1552
      %v1555 = vunpack.c.l.s4 1983009808
      %v1556 = vunpack.c.0.s8 %v1555
      %v1557 = vlaneseq
      %v1558 = vshrl.u32 %v1557, 7
      %v1559 = vsub.s32 %v1556, %v1558
      %v1560 = vrot.slane %v1546, %v1559
      %v1561 = vcombine.high %v1553, %v1553
      %v1562 = vcombine.high %v1560, %v1560
      %v1563 = vcombine.high %v1339, %v1339
      %v1565 = vunpack.c.l.s4 1983009808
      %v1566 = vunpack.c.0.s8 %v1565
      %v1567 = vlaneseq
      %v1568 = vshrl.u32 %v1567, 7
      %v1569 = vsub.s32 %v1566, %v1568
      %v1570 = vrot.slane %v1339, %v1569
      %v1572 = vunpack.c.l.s4 1983009808
      %v1573 = vunpack.c.0.s8 %v1572
      %v1574 = vlaneseq
      %v1575 = vshrl.u32 %v1574, 7
      %v1576 = vsub.s32 %v1573, %v1575
      %v1577 = vrot.slane %v1563, %v1576
      %v1578 = vcombine.high %v1570, %v1570
      %v1579 = vcombine.high %v1577, %v1577
      %v1580 = vcombine.high %v1340, %v1340
      %v1582 = vunpack.c.l.s4 1983009808
      %v1583 = vunpack.c.0.s8 %v1582
      %v1584 = vlaneseq
      %v1585 = vshrl.u32 %v1584, 7
      %v1586 = vsub.s32 %v1583, %v1585
      %v1587 = vrot.slane %v1340, %v1586
      %v1589 = vunpack.c.l.s4 1983009808
      %v1590 = vunpack.c.0.s8 %v1589
      %v1591 = vlaneseq
      %v1592 = vshrl.u32 %v1591, 7
      %v1593 = vsub.s32 %v1590, %v1592
      %v1594 = vrot.slane %v1580, %v1593
      %v1595 = vcombine.high %v1587, %v1587
      %v1596 = vcombine.high %v1594, %v1594
      %v1597 = vcombine.high %v1341, %v1341
      %v1599 = vunpack.c.l.s4 1983009808
      %v1600 = vunpack.c.0.s8 %v1599
      %v1601 = vlaneseq
      %v1602 = vshrl.u32 %v1601, 7
      %v1603 = vsub.s32 %v1600, %v1602
      %v1604 = vrot.slane %v1341, %v1603
      %v1606 = vunpack.c.l.s4 1983009808
      %v1607 = vunpack.c.0.s8 %v1606
      %v1608 = vlaneseq
      %v1609 = vshrl.u32 %v1608, 7
      %v1610 = vsub.s32 %v1607, %v1609
      %v1611 = vrot.slane %v1597, %v1610
      %v1612 = vcombine.high %v1604, %v1604
      %v1613 = vcombine.high %v1611, %v1611
      %v1614 = vcombine.high %v1342, %v1342
      %v1616 = vunpack.c.l.s4 1983009808
      %v1617 = vunpack.c.0.s8 %v1616
      %v1618 = vlaneseq
      %v1619 = vshrl.u32 %v1618, 7
      %v1620 = vsub.s32 %v1617, %v1619
      %v1621 = vrot.slane %v1342, %v1620
      %v1623 = vunpack.c.l.s4 1983009808
      %v1624 = vunpack.c.0.s8 %v1623
      %v1625 = vlaneseq
      %v1626 = vshrl.u32 %v1625, 7
      %v1627 = vsub.s32 %v1624, %v1626
      %v1628 = vrot.slane %v1614, %v1627
      %v1629 = vcombine.high %v1621, %v1621
      %v1630 = vcombine.high %v1628, %v1628
      %v1695 = vrot.slane %v1366, 7
      %v1696 = vrot.slane %v1695, 2
      %v1697 = vrot.slane %v1374, 7
      %v1698 = vrot.slane %v1697, 2
      %v1699 = vrot.slane %v1373, 7
      %v1700 = vrot.slane %v1699, 2
      %v1701 = vrot.slane %v1375, 7
      %v1702 = vrot.slane %v1701, 2
      %v1703 = vrot.slane %v1383, 7
      %v1704 = vrot.slane %v1703, 2
      %v1705 = vrot.slane %v1391, 7
      %v1706 = vrot.slane %v1705, 2
      %v1707 = vrot.slane %v1390, 7
      %v1708 = vrot.slane %v1707, 2
      %v1709 = vrot.slane %v1392, 7
      %v1710 = vrot.slane %v1709, 2
      %v1711 = vrot.slane %v1400, 7
      %v1712 = vrot.slane %v1711, 2
      %v1713 = vrot.slane %v1408, 7
      %v1714 = vrot.slane %v1713, 2
      %v1715 = vrot.slane %v1407, 7
      %v1716 = vrot.slane %v1715, 2
      %v1717 = vrot.slane %v1409, 7
      %v1718 = vrot.slane %v1717, 2
      %v1719 = vrot.slane %v1417, 7
      %v1720 = vrot.slane %v1719, 2
      %v1721 = vrot.slane %v1425, 7
      %v1722 = vrot.slane %v1721, 2
      %v1723 = vrot.slane %v1424, 7
      %v1724 = vrot.slane %v1723, 2
      %v1725 = vrot.slane %v1426, 7
      %v1726 = vrot.slane %v1725, 2
      %v1727 = vrot.slane %v1434, 7
      %v1728 = vrot.slane %v1727, 2
      %v1729 = vrot.slane %v1442, 7
      %v1730 = vrot.slane %v1729, 2
      %v1731 = vrot.slane %v1441, 7
      %v1732 = vrot.slane %v1731, 2
      %v1733 = vrot.slane %v1443, 7
      %v1734 = vrot.slane %v1733, 2
      %v1735 = vrot.slane %v1451, 7
      %v1736 = vrot.slane %v1735, 2
      %v1737 = vrot.slane %v1459, 7
      %v1738 = vrot.slane %v1737, 2
      %v1739 = vrot.slane %v1458, 7
      %v1740 = vrot.slane %v1739, 2
      %v1741 = vrot.slane %v1460, 7
      %v1742 = vrot.slane %v1741, 2
      %v1743 = vrot.slane %v1468, 7
      %v1744 = vrot.slane %v1743, 2
      %v1745 = vrot.slane %v1476, 7
      %v1746 = vrot.slane %v1745, 2
      %v1747 = vrot.slane %v1475, 7
      %v1748 = vrot.slane %v1747, 2
      %v1749 = vrot.slane %v1477, 7
      %v1750 = vrot.slane %v1749, 2
      %v1751 = vrot.slane %v1485, 7
      %v1752 = vrot.slane %v1751, 2
      %v1753 = vrot.slane %v1493, 7
      %v1754 = vrot.slane %v1753, 2
      %v1755 = vrot.slane %v1492, 7
      %v1756 = vrot.slane %v1755, 2
      %v1757 = vrot.slane %v1494, 7
      %v1758 = vrot.slane %v1757, 2
      %v1759 = vrot.slane %v1502, 7
      %v1760 = vrot.slane %v1759, 2
      %v1761 = vrot.slane %v1510, 7
      %v1762 = vrot.slane %v1761, 2
      %v1763 = vrot.slane %v1509, 7
      %v1764 = vrot.slane %v1763, 2
      %v1765 = vrot.slane %v1511, 7
      %v1766 = vrot.slane %v1765, 2
      %v1767 = vrot.slane %v1519, 7
      %v1768 = vrot.slane %v1767, 2
      %v1769 = vrot.slane %v1527, 7
      %v1770 = vrot.slane %v1769, 2
      %v1771 = vrot.slane %v1526, 7
      %v1772 = vrot.slane %v1771, 2
      %v1773 = vrot.slane %v1528, 7
      %v1774 = vrot.slane %v1773, 2
      %v1775 = vrot.slane %v1536, 7
      %v1776 = vrot.slane %v1775, 2
      %v1777 = vrot.slane %v1544, 7
      %v1778 = vrot.slane %v1777, 2
      %v1779 = vrot.slane %v1543, 7
      %v1780 = vrot.slane %v1779, 2
      %v1781 = vrot.slane %v1545, 7
      %v1782 = vrot.slane %v1781, 2
      %v1783 = vrot.slane %v1553, 7
      %v1784 = vrot.slane %v1783, 2
      %v1785 = vrot.slane %v1561, 7
      %v1786 = vrot.slane %v1785, 2
      %v1787 = vrot.slane %v1560, 7
      %v1788 = vrot.slane %v1787, 2
      %v1789 = vrot.slane %v1562, 7
      %v1790 = vrot.slane %v1789, 2
      %v1791 = vrot.slane %v1570, 7
      %v1792 = vrot.slane %v1791, 2
      %v1793 = vrot.slane %v1578, 7
      %v1794 = vrot.slane %v1793, 2
      %v1795 = vrot.slane %v1577, 7
      %v1796 = vrot.slane %v1795, 2
      %v1797 = vrot.slane %v1579, 7
      %v1798 = vrot.slane %v1797, 2
      %v1799 = vrot.slane %v1587, 7
      %v1800 = vrot.slane %v1799, 2
      %v1801 = vrot.slane %v1595, 7
      %v1802 = vrot.slane %v1801, 2
      %v1803 = vrot.slane %v1594, 7
      %v1804 = vrot.slane %v1803, 2
      %v1805 = vrot.slane %v1596, 7
      %v1806 = vrot.slane %v1805, 2
      %v1807 = vrot.slane %v1604, 7
      %v1808 = vrot.slane %v1807, 2
      %v1809 = vrot.slane %v1612, 7
      %v1810 = vrot.slane %v1809, 2
      %v1811 = vrot.slane %v1611, 7
      %v1812 = vrot.slane %v1811, 2
      %v1813 = vrot.slane %v1613, 7
      %v1814 = vrot.slane %v1813, 2
      %v1815 = vrot.slane %v1621, 7
      %v1816 = vrot.slane %v1815, 2
      %v1817 = vrot.slane %v1629, 7
      %v1818 = vrot.slane %v1817, 2
      %v1819 = vrot.slane %v1628, 7
      %v1820 = vrot.slane %v1819, 2
      %v1821 = vrot.slane %v1630, 7
      %v1822 = vrot.slane %v1821, 2
      %v1887 = vmax.f32 %v1366, %v1696
      %v1888 = vmax.f32 %v1374, %v1698
      %v1889 = vmax.f32 %v1373, %v1700
      %v1890 = vmax.f32 %v1375, %v1702
      %v1891 = vmax.f32 %v1383, %v1704
      %v1892 = vmax.f32 %v1391, %v1706
      %v1893 = vmax.f32 %v1390, %v1708
      %v1894 = vmax.f32 %v1392, %v1710
      %v1895 = vmax.f32 %v1400, %v1712
      %v1896 = vmax.f32 %v1408, %v1714
      %v1897 = vmax.f32 %v1407, %v1716
      %v1898 = vmax.f32 %v1409, %v1718
      %v1899 = vmax.f32 %v1417, %v1720
      %v1900 = vmax.f32 %v1425, %v1722
      %v1901 = vmax.f32 %v1424, %v1724
      %v1902 = vmax.f32 %v1426, %v1726
      %v1903 = vmax.f32 %v1434, %v1728
      %v1904 = vmax.f32 %v1442, %v1730
      %v1905 = vmax.f32 %v1441, %v1732
      %v1906 = vmax.f32 %v1443, %v1734
      %v1907 = vmax.f32 %v1451, %v1736
      %v1908 = vmax.f32 %v1459, %v1738
      %v1909 = vmax.f32 %v1458, %v1740
      %v1910 = vmax.f32 %v1460, %v1742
      %v1911 = vmax.f32 %v1468, %v1744
      %v1912 = vmax.f32 %v1476, %v1746
      %v1913 = vmax.f32 %v1475, %v1748
      %v1914 = vmax.f32 %v1477, %v1750
      %v1915 = vmax.f32 %v1485, %v1752
      %v1916 = vmax.f32 %v1493, %v1754
      %v1917 = vmax.f32 %v1492, %v1756
      %v1918 = vmax.f32 %v1494, %v1758
      %v1919 = vmax.f32 %v1502, %v1760
      %v1920 = vmax.f32 %v1510, %v1762
      %v1921 = vmax.f32 %v1509, %v1764
      %v1922 = vmax.f32 %v1511, %v1766
      %v1923 = vmax.f32 %v1519, %v1768
      %v1924 = vmax.f32 %v1527, %v1770
      %v1925 = vmax.f32 %v1526, %v1772
      %v1926 = vmax.f32 %v1528, %v1774
      %v1927 = vmax.f32 %v1536, %v1776
      %v1928 = vmax.f32 %v1544, %v1778
      %v1929 = vmax.f32 %v1543, %v1780
      %v1930 = vmax.f32 %v1545, %v1782
      %v1931 = vmax.f32 %v1553, %v1784
      %v1932 = vmax.f32 %v1561, %v1786
      %v1933 = vmax.f32 %v1560, %v1788
      %v1934 = vmax.f32 %v1562, %v1790
      %v1935 = vmax.f32 %v1570, %v1792
      %v1936 = vmax.f32 %v1578, %v1794
      %v1937 = vmax.f32 %v1577, %v1796
      %v1938 = vmax.f32 %v1579, %v1798
      %v1939 = vmax.f32 %v1587, %v1800
      %v1940 = vmax.f32 %v1595, %v1802
      %v1941 = vmax.f32 %v1594, %v1804
      %v1942 = vmax.f32 %v1596, %v1806
      %v1943 = vmax.f32 %v1604, %v1808
      %v1944 = vmax.f32 %v1612, %v1810
      %v1945 = vmax.f32 %v1611, %v1812
      %v1946 = vmax.f32 %v1613, %v1814
      %v1947 = vmax.f32 %v1621, %v1816
      %v1948 = vmax.f32 %v1629, %v1818
      %v1949 = vmax.f32 %v1628, %v1820
      %v1950 = vmax.f32 %v1630, %v1822
      %v2015 = vlaneseq
      %v2016 = vshrl.u32 %v2015, 7
      %v2017 = vsub.s32 0, %v2016
      %v2018 = vrot.slane %v1887, %v2017
      %v2019 = vlaneseq
      %v2020 = vshrl.u32 %v2019, 7
      %v2021 = vsub.s32 0, %v2020
      %v2022 = vrot.slane %v1888, %v2021
      %v2023 = vlaneseq
      %v2024 = vshrl.u32 %v2023, 7
      %v2025 = vsub.s32 0, %v2024
      %v2026 = vrot.slane %v1889, %v2025
      %v2027 = vlaneseq
      %v2028 = vshrl.u32 %v2027, 7
      %v2029 = vsub.s32 0, %v2028
      %v2030 = vrot.slane %v1890, %v2029
      %v2031 = vlaneseq
      %v2032 = vshrl.u32 %v2031, 7
      %v2033 = vsub.s32 0, %v2032
      %v2034 = vrot.slane %v1891, %v2033
      %v2035 = vlaneseq
      %v2036 = vshrl.u32 %v2035, 7
      %v2037 = vsub.s32 0, %v2036
      %v2038 = vrot.slane %v1892, %v2037
      %v2039 = vlaneseq
      %v2040 = vshrl.u32 %v2039, 7
      %v2041 = vsub.s32 0, %v2040
      %v2042 = vrot.slane %v1893, %v2041
      %v2043 = vlaneseq
      %v2044 = vshrl.u32 %v2043, 7
      %v2045 = vsub.s32 0, %v2044
      %v2046 = vrot.slane %v1894, %v2045
      %v2047 = vlaneseq
      %v2048 = vshrl.u32 %v2047, 7
      %v2049 = vsub.s32 0, %v2048
      %v2050 = vrot.slane %v1895, %v2049
      %v2051 = vlaneseq
      %v2052 = vshrl.u32 %v2051, 7
      %v2053 = vsub.s32 0, %v2052
      %v2054 = vrot.slane %v1896, %v2053
      %v2055 = vlaneseq
      %v2056 = vshrl.u32 %v2055, 7
      %v2057 = vsub.s32 0, %v2056
      %v2058 = vrot.slane %v1897, %v2057
      %v2059 = vlaneseq
      %v2060 = vshrl.u32 %v2059, 7
      %v2061 = vsub.s32 0, %v2060
      %v2062 = vrot.slane %v1898, %v2061
      %v2063 = vlaneseq
      %v2064 = vshrl.u32 %v2063, 7
      %v2065 = vsub.s32 0, %v2064
      %v2066 = vrot.slane %v1899, %v2065
      %v2067 = vlaneseq
      %v2068 = vshrl.u32 %v2067, 7
      %v2069 = vsub.s32 0, %v2068
      %v2070 = vrot.slane %v1900, %v2069
      %v2071 = vlaneseq
      %v2072 = vshrl.u32 %v2071, 7
      %v2073 = vsub.s32 0, %v2072
      %v2074 = vrot.slane %v1901, %v2073
      %v2075 = vlaneseq
      %v2076 = vshrl.u32 %v2075, 7
      %v2077 = vsub.s32 0, %v2076
      %v2078 = vrot.slane %v1902, %v2077
      %v2079 = vlaneseq
      %v2080 = vshrl.u32 %v2079, 7
      %v2081 = vsub.s32 0, %v2080
      %v2082 = vrot.slane %v1903, %v2081
      %v2083 = vlaneseq
      %v2084 = vshrl.u32 %v2083, 7
      %v2085 = vsub.s32 0, %v2084
      %v2086 = vrot.slane %v1904, %v2085
      %v2087 = vlaneseq
      %v2088 = vshrl.u32 %v2087, 7
      %v2089 = vsub.s32 0, %v2088
      %v2090 = vrot.slane %v1905, %v2089
      %v2091 = vlaneseq
      %v2092 = vshrl.u32 %v2091, 7
      %v2093 = vsub.s32 0, %v2092
      %v2094 = vrot.slane %v1906, %v2093
      %v2095 = vlaneseq
      %v2096 = vshrl.u32 %v2095, 7
      %v2097 = vsub.s32 0, %v2096
      %v2098 = vrot.slane %v1907, %v2097
      %v2099 = vlaneseq
      %v2100 = vshrl.u32 %v2099, 7
      %v2101 = vsub.s32 0, %v2100
      %v2102 = vrot.slane %v1908, %v2101
      %v2103 = vlaneseq
      %v2104 = vshrl.u32 %v2103, 7
      %v2105 = vsub.s32 0, %v2104
      %v2106 = vrot.slane %v1909, %v2105
      %v2107 = vlaneseq
      %v2108 = vshrl.u32 %v2107, 7
      %v2109 = vsub.s32 0, %v2108
      %v2110 = vrot.slane %v1910, %v2109
      %v2111 = vlaneseq
      %v2112 = vshrl.u32 %v2111, 7
      %v2113 = vsub.s32 0, %v2112
      %v2114 = vrot.slane %v1911, %v2113
      %v2115 = vlaneseq
      %v2116 = vshrl.u32 %v2115, 7
      %v2117 = vsub.s32 0, %v2116
      %v2118 = vrot.slane %v1912, %v2117
      %v2119 = vlaneseq
      %v2120 = vshrl.u32 %v2119, 7
      %v2121 = vsub.s32 0, %v2120
      %v2122 = vrot.slane %v1913, %v2121
      %v2123 = vlaneseq
      %v2124 = vshrl.u32 %v2123, 7
      %v2125 = vsub.s32 0, %v2124
      %v2126 = vrot.slane %v1914, %v2125
      %v2127 = vlaneseq
      %v2128 = vshrl.u32 %v2127, 7
      %v2129 = vsub.s32 0, %v2128
      %v2130 = vrot.slane %v1915, %v2129
      %v2131 = vlaneseq
      %v2132 = vshrl.u32 %v2131, 7
      %v2133 = vsub.s32 0, %v2132
      %v2134 = vrot.slane %v1916, %v2133
      %v2135 = vlaneseq
      %v2136 = vshrl.u32 %v2135, 7
      %v2137 = vsub.s32 0, %v2136
      %v2138 = vrot.slane %v1917, %v2137
      %v2139 = vlaneseq
      %v2140 = vshrl.u32 %v2139, 7
      %v2141 = vsub.s32 0, %v2140
      %v2142 = vrot.slane %v1918, %v2141
      %v2143 = vlaneseq
      %v2144 = vshrl.u32 %v2143, 7
      %v2145 = vsub.s32 0, %v2144
      %v2146 = vrot.slane %v1919, %v2145
      %v2147 = vlaneseq
      %v2148 = vshrl.u32 %v2147, 7
      %v2149 = vsub.s32 0, %v2148
      %v2150 = vrot.slane %v1920, %v2149
      %v2151 = vlaneseq
      %v2152 = vshrl.u32 %v2151, 7
      %v2153 = vsub.s32 0, %v2152
      %v2154 = vrot.slane %v1921, %v2153
      %v2155 = vlaneseq
      %v2156 = vshrl.u32 %v2155, 7
      %v2157 = vsub.s32 0, %v2156
      %v2158 = vrot.slane %v1922, %v2157
      %v2159 = vlaneseq
      %v2160 = vshrl.u32 %v2159, 7
      %v2161 = vsub.s32 0, %v2160
      %v2162 = vrot.slane %v1923, %v2161
      %v2163 = vlaneseq
      %v2164 = vshrl.u32 %v2163, 7
      %v2165 = vsub.s32 0, %v2164
      %v2166 = vrot.slane %v1924, %v2165
      %v2167 = vlaneseq
      %v2168 = vshrl.u32 %v2167, 7
      %v2169 = vsub.s32 0, %v2168
      %v2170 = vrot.slane %v1925, %v2169
      %v2171 = vlaneseq
      %v2172 = vshrl.u32 %v2171, 7
      %v2173 = vsub.s32 0, %v2172
      %v2174 = vrot.slane %v1926, %v2173
      %v2175 = vlaneseq
      %v2176 = vshrl.u32 %v2175, 7
      %v2177 = vsub.s32 0, %v2176
      %v2178 = vrot.slane %v1927, %v2177
      %v2179 = vlaneseq
      %v2180 = vshrl.u32 %v2179, 7
      %v2181 = vsub.s32 0, %v2180
      %v2182 = vrot.slane %v1928, %v2181
      %v2183 = vlaneseq
      %v2184 = vshrl.u32 %v2183, 7
      %v2185 = vsub.s32 0, %v2184
      %v2186 = vrot.slane %v1929, %v2185
      %v2187 = vlaneseq
      %v2188 = vshrl.u32 %v2187, 7
      %v2189 = vsub.s32 0, %v2188
      %v2190 = vrot.slane %v1930, %v2189
      %v2191 = vlaneseq
      %v2192 = vshrl.u32 %v2191, 7
      %v2193 = vsub.s32 0, %v2192
      %v2194 = vrot.slane %v1931, %v2193
      %v2195 = vlaneseq
      %v2196 = vshrl.u32 %v2195, 7
      %v2197 = vsub.s32 0, %v2196
      %v2198 = vrot.slane %v1932, %v2197
      %v2199 = vlaneseq
      %v2200 = vshrl.u32 %v2199, 7
      %v2201 = vsub.s32 0, %v2200
      %v2202 = vrot.slane %v1933, %v2201
      %v2203 = vlaneseq
      %v2204 = vshrl.u32 %v2203, 7
      %v2205 = vsub.s32 0, %v2204
      %v2206 = vrot.slane %v1934, %v2205
      %v2207 = vlaneseq
      %v2208 = vshrl.u32 %v2207, 7
      %v2209 = vsub.s32 0, %v2208
      %v2210 = vrot.slane %v1935, %v2209
      %v2211 = vlaneseq
      %v2212 = vshrl.u32 %v2211, 7
      %v2213 = vsub.s32 0, %v2212
      %v2214 = vrot.slane %v1936, %v2213
      %v2215 = vlaneseq
      %v2216 = vshrl.u32 %v2215, 7
      %v2217 = vsub.s32 0, %v2216
      %v2218 = vrot.slane %v1937, %v2217
      %v2219 = vlaneseq
      %v2220 = vshrl.u32 %v2219, 7
      %v2221 = vsub.s32 0, %v2220
      %v2222 = vrot.slane %v1938, %v2221
      %v2223 = vlaneseq
      %v2224 = vshrl.u32 %v2223, 7
      %v2225 = vsub.s32 0, %v2224
      %v2226 = vrot.slane %v1939, %v2225
      %v2227 = vlaneseq
      %v2228 = vshrl.u32 %v2227, 7
      %v2229 = vsub.s32 0, %v2228
      %v2230 = vrot.slane %v1940, %v2229
      %v2231 = vlaneseq
      %v2232 = vshrl.u32 %v2231, 7
      %v2233 = vsub.s32 0, %v2232
      %v2234 = vrot.slane %v1941, %v2233
      %v2235 = vlaneseq
      %v2236 = vshrl.u32 %v2235, 7
      %v2237 = vsub.s32 0, %v2236
      %v2238 = vrot.slane %v1942, %v2237
      %v2239 = vlaneseq
      %v2240 = vshrl.u32 %v2239, 7
      %v2241 = vsub.s32 0, %v2240
      %v2242 = vrot.slane %v1943, %v2241
      %v2243 = vlaneseq
      %v2244 = vshrl.u32 %v2243, 7
      %v2245 = vsub.s32 0, %v2244
      %v2246 = vrot.slane %v1944, %v2245
      %v2247 = vlaneseq
      %v2248 = vshrl.u32 %v2247, 7
      %v2249 = vsub.s32 0, %v2248
      %v2250 = vrot.slane %v1945, %v2249
      %v2251 = vlaneseq
      %v2252 = vshrl.u32 %v2251, 7
      %v2253 = vsub.s32 0, %v2252
      %v2254 = vrot.slane %v1946, %v2253
      %v2255 = vlaneseq
      %v2256 = vshrl.u32 %v2255, 7
      %v2257 = vsub.s32 0, %v2256
      %v2258 = vrot.slane %v1947, %v2257
      %v2259 = vlaneseq
      %v2260 = vshrl.u32 %v2259, 7
      %v2261 = vsub.s32 0, %v2260
      %v2262 = vrot.slane %v1948, %v2261
      %v2263 = vlaneseq
      %v2264 = vshrl.u32 %v2263, 7
      %v2265 = vsub.s32 0, %v2264
      %v2266 = vrot.slane %v1949, %v2265
      %v2267 = vlaneseq
      %v2268 = vshrl.u32 %v2267, 7
      %v2269 = vsub.s32 0, %v2268
      %v2270 = vrot.slane %v1950, %v2269
      %vm2271 = vcmask 1043459
      %v2272 = vsel %vm2271, %v2022, %v2018
      %vm2273 = vcmask 1044484
      %v2274 = vsel %vm2273, %v2026, %v2272
      %vm2275 = vcmask 1045509
      %v2276 = vsel %vm2275, %v2030, %v2274
      %vm2277 = vcmask 1046534
      %v2278 = vsel %vm2277, %v2034, %v2276
      %vm2279 = vcmask 1047559
      %v2280 = vsel %vm2279, %v2038, %v2278
      %vm2281 = vcmask 1041409
      %v2282 = vsel %vm2281, %v2046, %v2042
      %v2283 = vsel %vm2271, %v2054, %v2050
      %v2284 = vsel %vm2273, %v2058, %v2283
      %v2285 = vsel %vm2275, %v2062, %v2284
      %v2286 = vsel %vm2277, %v2066, %v2285
      %v2287 = vsel %vm2279, %v2070, %v2286
      %v2288 = vsel %vm2281, %v2078, %v2074
      %v2289 = vsel %vm2271, %v2086, %v2082
      %v2290 = vsel %vm2273, %v2090, %v2289
      %v2291 = vsel %vm2275, %v2094, %v2290
      %v2292 = vsel %vm2277, %v2098, %v2291
      %v2293 = vsel %vm2279, %v2102, %v2292
      %v2294 = vsel %vm2281, %v2110, %v2106
      %v2295 = vsel %vm2271, %v2118, %v2114
      %v2296 = vsel %vm2273, %v2122, %v2295
      %v2297 = vsel %vm2275, %v2126, %v2296
      %v2298 = vsel %vm2277, %v2130, %v2297
      %v2299 = vsel %vm2279, %v2134, %v2298
      %v2300 = vsel %vm2281, %v2142, %v2138
      %v2301 = vsel %vm2271, %v2150, %v2146
      %v2302 = vsel %vm2273, %v2154, %v2301
      %v2303 = vsel %vm2275, %v2158, %v2302
      %v2304 = vsel %vm2277, %v2162, %v2303
      %v2305 = vsel %vm2279, %v2166, %v2304
      %v2306 = vsel %vm2281, %v2174, %v2170
      %v2307 = vsel %vm2271, %v2182, %v2178
      %v2308 = vsel %vm2273, %v2186, %v2307
      %v2309 = vsel %vm2275, %v2190, %v2308
      %v2310 = vsel %vm2277, %v2194, %v2309
      %v2311 = vsel %vm2279, %v2198, %v2310
      %v2312 = vsel %vm2281, %v2206, %v2202
      %v2313 = vsel %vm2271, %v2214, %v2210
      %v2314 = vsel %vm2273, %v2218, %v2313
      %v2315 = vsel %vm2275, %v2222, %v2314
      %v2316 = vsel %vm2277, %v2226, %v2315
      %v2317 = vsel %vm2279, %v2230, %v2316
      %v2318 = vsel %vm2281, %v2238, %v2234
      %v2319 = vsel %vm2271, %v2246, %v2242
      %v2320 = vsel %vm2273, %v2250, %v2319
      %v2321 = vsel %vm2275, %v2254, %v2320
      %v2322 = vsel %vm2277, %v2258, %v2321
      %v2323 = vsel %vm2279, %v2262, %v2322
      %v2324 = vsel %vm2281, %v2270, %v2266
      %v2341 = vsel %vm981, 0.0, %v2280
      %v2342 = vsel %vm981, 0.0, %v2287
      %v2343 = vsel %vm981, 0.0, %v2293
      %v2344 = vsel %vm981, 0.0, %v2299
      %v2345 = vsel %vm981, 0.0, %v2305
      %v2346 = vsel %vm981, 0.0, %v2311
      %v2347 = vsel %vm981, 0.0, %v2317
      %v2348 = vsel %vm981, 0.0, %v2323
      %v2349 = vsel %vm981, %v2282, 0.0
      %v2350 = vsel %vm981, %v2288, 0.0
      %v2351 = vsel %vm981, %v2294, 0.0
      %v2352 = vsel %vm981, %v2300, 0.0
      %v2353 = vsel %vm981, %v2306, 0.0
      %v2354 = vsel %vm981, %v2312, 0.0
      %v2355 = vsel %vm981, %v2318, 0.0
      %v2356 = vsel %vm981, %v2324, 0.0
      %v2373 = vrot.slane %v2341, 1
      %v2374 = vrot.slane %v2349, 1
      %v2375 = vsel %vm536, %v2373, %v2374
      %v2376 = vrot.slane %v2342, 1
      %v2377 = vrot.slane %v2350, 1
      %v2378 = vsel %vm536, %v2376, %v2377
      %v2379 = vrot.slane %v2343, 1
      %v2380 = vrot.slane %v2351, 1
      %v2381 = vsel %vm536, %v2379, %v2380
      %v2382 = vrot.slane %v2344, 1
      %v2383 = vrot.slane %v2352, 1
      %v2384 = vsel %vm536, %v2382, %v2383
      %v2385 = vrot.slane %v2345, 1
      %v2386 = vrot.slane %v2353, 1
      %v2387 = vsel %vm536, %v2385, %v2386
      %v2388 = vrot.slane %v2346, 1
      %v2389 = vrot.slane %v2354, 1
      %v2390 = vsel %vm536, %v2388, %v2389
      %v2391 = vrot.slane %v2347, 1
      %v2392 = vrot.slane %v2355, 1
      %v2393 = vsel %vm536, %v2391, %v2392
      %v2394 = vrot.slane %v2348, 1
      %v2395 = vrot.slane %v2356, 1
      %v2396 = vsel %vm536, %v2394, %v2395
      %2397 = vrot.lane.b32.xlu0 %v2375, 32
      %v2398 = vpop.permute.xlu0 %2397
      %2399 = vrot.lane.b32.xlu0 %v2378, 32
      %v2400 = vpop.permute.xlu0 %2399
      %2401 = vrot.lane.b32.xlu0 %v2381, 32
      %v2402 = vpop.permute.xlu0 %2401
      %2403 = vrot.lane.b32.xlu0 %v2384, 32
      %v2404 = vpop.permute.xlu0 %2403
      %2405 = vrot.lane.b32.xlu0 %v2387, 32
      %v2406 = vpop.permute.xlu0 %2405
      %2407 = vrot.lane.b32.xlu0 %v2390, 32
      %v2408 = vpop.permute.xlu0 %2407
      %2409 = vrot.lane.b32.xlu0 %v2393, 32
      %v2410 = vpop.permute.xlu0 %2409
      %2411 = vrot.lane.b32.xlu0 %v2396, 32
      %v2412 = vpop.permute.xlu0 %2411
      %v2421 = vrot.slane %v2341, 2
      %v2422 = vrot.slane %v2349, 2
      %v2423 = vsel %vm625, %v2421, %v2422
      %v2424 = vrot.slane %v2342, 2
      %v2425 = vrot.slane %v2350, 2
      %v2426 = vsel %vm625, %v2424, %v2425
      %v2427 = vrot.slane %v2343, 2
      %v2428 = vrot.slane %v2351, 2
      %v2429 = vsel %vm625, %v2427, %v2428
      %v2430 = vrot.slane %v2344, 2
      %v2431 = vrot.slane %v2352, 2
      %v2432 = vsel %vm625, %v2430, %v2431
      %v2433 = vrot.slane %v2345, 2
      %v2434 = vrot.slane %v2353, 2
      %v2435 = vsel %vm625, %v2433, %v2434
      %v2436 = vrot.slane %v2346, 2
      %v2437 = vrot.slane %v2354, 2
      %v2438 = vsel %vm625, %v2436, %v2437
      %v2439 = vrot.slane %v2347, 2
      %v2440 = vrot.slane %v2355, 2
      %v2441 = vsel %vm625, %v2439, %v2440
      %v2442 = vrot.slane %v2348, 2
      %v2443 = vrot.slane %v2356, 2
      %v2444 = vsel %vm625, %v2442, %v2443
      %2445 = vrot.lane.b32.xlu0 %v2423, 64
      %v2446 = vpop.permute.xlu0 %2445
      %2447 = vrot.lane.b32.xlu0 %v2426, 64
      %v2448 = vpop.permute.xlu0 %2447
      %2449 = vrot.lane.b32.xlu0 %v2429, 64
      %v2450 = vpop.permute.xlu0 %2449
      %2451 = vrot.lane.b32.xlu0 %v2432, 64
      %v2452 = vpop.permute.xlu0 %2451
      %2453 = vrot.lane.b32.xlu0 %v2435, 64
      %v2454 = vpop.permute.xlu0 %2453
      %2455 = vrot.lane.b32.xlu0 %v2438, 64
      %v2456 = vpop.permute.xlu0 %2455
      %2457 = vrot.lane.b32.xlu0 %v2441, 64
      %v2458 = vpop.permute.xlu0 %2457
      %2459 = vrot.lane.b32.xlu0 %v2444, 64
      %v2460 = vpop.permute.xlu0 %2459
      %v2469 = vrot.slane %v2341, 3
      %v2470 = vrot.slane %v2349, 3
      %v2471 = vsel %vm714, %v2469, %v2470
      %v2472 = vrot.slane %v2342, 3
      %v2473 = vrot.slane %v2350, 3
      %v2474 = vsel %vm714, %v2472, %v2473
      %v2475 = vrot.slane %v2343, 3
      %v2476 = vrot.slane %v2351, 3
      %v2477 = vsel %vm714, %v2475, %v2476
      %v2478 = vrot.slane %v2344, 3
      %v2479 = vrot.slane %v2352, 3
      %v2480 = vsel %vm714, %v2478, %v2479
      %v2481 = vrot.slane %v2345, 3
      %v2482 = vrot.slane %v2353, 3
      %v2483 = vsel %vm714, %v2481, %v2482
      %v2484 = vrot.slane %v2346, 3
      %v2485 = vrot.slane %v2354, 3
      %v2486 = vsel %vm714, %v2484, %v2485
      %v2487 = vrot.slane %v2347, 3
      %v2488 = vrot.slane %v2355, 3
      %v2489 = vsel %vm714, %v2487, %v2488
      %v2490 = vrot.slane %v2348, 3
      %v2491 = vrot.slane %v2356, 3
      %v2492 = vsel %vm714, %v2490, %v2491
      %2493 = vrot.lane.b32.xlu0 %v2471, 96
      %v2494 = vpop.permute.xlu0 %2493
      %2495 = vrot.lane.b32.xlu0 %v2474, 96
      %v2496 = vpop.permute.xlu0 %2495
      %2497 = vrot.lane.b32.xlu0 %v2477, 96
      %v2498 = vpop.permute.xlu0 %2497
      %2499 = vrot.lane.b32.xlu0 %v2480, 96
      %v2500 = vpop.permute.xlu0 %2499
      %2501 = vrot.lane.b32.xlu0 %v2483, 96
      %v2502 = vpop.permute.xlu0 %2501
      %2503 = vrot.lane.b32.xlu0 %v2486, 96
      %v2504 = vpop.permute.xlu0 %2503
      %2505 = vrot.lane.b32.xlu0 %v2489, 96
      %v2506 = vpop.permute.xlu0 %2505
      %2507 = vrot.lane.b32.xlu0 %v2492, 96
      %v2508 = vpop.permute.xlu0 %2507
      %v2517 = vrot.slane %v2341, 4
      %v2518 = vrot.slane %v2349, 4
      %v2519 = vsel %vm803, %v2517, %v2518
      %v2520 = vrot.slane %v2342, 4
      %v2521 = vrot.slane %v2350, 4
      %v2522 = vsel %vm803, %v2520, %v2521
      %v2523 = vrot.slane %v2343, 4
      %v2524 = vrot.slane %v2351, 4
      %v2525 = vsel %vm803, %v2523, %v2524
      %v2526 = vrot.slane %v2344, 4
      %v2527 = vrot.slane %v2352, 4
      %v2528 = vsel %vm803, %v2526, %v2527
      %v2529 = vrot.slane %v2345, 4
      %v2530 = vrot.slane %v2353, 4
      %v2531 = vsel %vm803, %v2529, %v2530
      %v2532 = vrot.slane %v2346, 4
      %v2533 = vrot.slane %v2354, 4
      %v2534 = vsel %vm803, %v2532, %v2533
      %v2535 = vrot.slane %v2347, 4
      %v2536 = vrot.slane %v2355, 4
      %v2537 = vsel %vm803, %v2535, %v2536
      %v2538 = vrot.slane %v2348, 4
      %v2539 = vrot.slane %v2356, 4
      %v2540 = vsel %vm803, %v2538, %v2539
      %vm2549 = vcmask 261120
      %v2550 = vsel %vm2549, %v2341, %v2398
      %v2551 = vsel %vm2549, %v2342, %v2400
      %v2552 = vsel %vm2549, %v2343, %v2402
      %v2553 = vsel %vm2549, %v2344, %v2404
      %v2554 = vsel %vm2549, %v2345, %v2406
      %v2555 = vsel %vm2549, %v2346, %v2408
      %v2556 = vsel %vm2549, %v2347, %v2410
      %v2557 = vsel %vm2549, %v2348, %v2412
      %vm2558 = vcmask 523264
      %v2559 = vsel %vm2558, %v2550, %v2446
      %v2560 = vsel %vm2558, %v2551, %v2448
      %v2561 = vsel %vm2558, %v2552, %v2450
      %v2562 = vsel %vm2558, %v2553, %v2452
      %v2563 = vsel %vm2558, %v2554, %v2454
      %v2564 = vsel %vm2558, %v2555, %v2456
      %v2565 = vsel %vm2558, %v2556, %v2458
      %v2566 = vsel %vm2558, %v2557, %v2460
      %vm2567 = vcmask 785408
      %v2568 = vsel %vm2567, %v2559, %v2494
      %v2569 = vsel %vm2567, %v2560, %v2496
      %v2570 = vsel %vm2567, %v2561, %v2498
      %v2571 = vsel %vm2567, %v2562, %v2500
      %v2572 = vsel %vm2567, %v2563, %v2502
      %v2573 = vsel %vm2567, %v2564, %v2504
      %v2574 = vsel %vm2567, %v2565, %v2506
      %v2575 = vsel %vm2567, %v2566, %v2508
      %v2576 = vpack.c.bf16 %v2569, %v2568
      %v2577 = vpack.c.bf16 %v2522, %v2519
      %v2578 = vpack.c.bf16 %v2571, %v2570
      %v2579 = vpack.c.bf16 %v2528, %v2525
      %v2580 = vpack.c.bf16 %v2573, %v2572
      %v2581 = vpack.c.bf16 %v2534, %v2531
      %v2582 = vpack.c.bf16 %v2575, %v2574
      %v2583 = vpack.c.bf16 %v2540, %v2537
      %v2584 = vld [vmem:[%s4] sm:$0xf]
      %v2585 = vld [vmem:[%s4 + $0x4] sm:$0xf]
      %v2586 = vld [vmem:[%s4 + $0x8] sm:$0xf]
      %v2587 = vld [vmem:[%s4 + $0xc] sm:$0xf]
      %v2588 = vld [vmem:[%s4 + $0x10] sm:$0xf]
      %v2589 = vld [vmem:[%s4 + $0x14] sm:$0xf]
      %v2590 = vld [vmem:[%s4 + $0x18] sm:$0xf]
      %v2591 = vld [vmem:[%s4 + $0x1c] sm:$0xf]
      %v2592 = vld [vmem:[%s4 + $0x20] sm:$0xf]
      %v2593 = vld [vmem:[%s4 + $0x24] sm:$0xf]
      %v2594 = vld [vmem:[%s4 + $0x28] sm:$0xf]
      %v2595 = vld [vmem:[%s4 + $0x2c] sm:$0xf]
      %v2596 = vld [vmem:[%s4 + $0x30] sm:$0xf]
      %v2597 = vld [vmem:[%s4 + $0x34] sm:$0xf]
      %v2598 = vld [vmem:[%s4 + $0x38] sm:$0xf]
      %v2599 = vld [vmem:[%s4 + $0x3c] sm:$0xf]
      %v2600 = vld [vmem:[%s4 + $0x40] sm:$0xf]
      %v2601 = vld [vmem:[%s4 + $0x44] sm:$0xf]
      %v2602 = vld [vmem:[%s4 + $0x48] sm:$0xf]
      %v2603 = vld [vmem:[%s4 + $0x4c] sm:$0xf]
      %v2604 = vld [vmem:[%s5] sm:$0x1]
      %v2606 = vlaneseq
      %v2607 = vshrl.u32 %v2606, 7
      %v2608 = vsub.s32 0, %v2607
      %v2609 = vrot.slane %v2604, %v2608
      %v2631 = vunpack.c.l.b16 %v2584
      %v2632 = vunpack.c.l.b16 %v2585
      %v2633 = vunpack.c.l.b16 %v2586
      %v2634 = vunpack.c.l.b16 %v2587
      %v2635 = vunpack.c.l.b16 %v2588
      %v2636 = vunpack.c.l.b16 %v2589
      %v2637 = vunpack.c.l.b16 %v2590
      %v2638 = vunpack.c.l.b16 %v2591
      %v2639 = vunpack.c.l.b16 %v2592
      %v2640 = vunpack.c.l.b16 %v2593
      %v2641 = vunpack.c.l.b16 %v2594
      %v2642 = vunpack.c.l.b16 %v2595
      %v2643 = vunpack.c.l.b16 %v2596
      %v2644 = vunpack.c.l.b16 %v2597
      %v2645 = vunpack.c.l.b16 %v2598
      %v2646 = vunpack.c.l.b16 %v2599
      %v2647 = vunpack.c.l.b16 %v2600
      %v2648 = vunpack.c.l.b16 %v2601
      %v2649 = vunpack.c.l.b16 %v2602
      %v2650 = vunpack.c.l.b16 %v2603
      %v2651 = vpack.c.b16 %v2632, %v2631
      %v2652 = vpack.c.b16 %v2634, %v2633
      %v2653 = vpack.c.b16 %v2636, %v2635
      %v2654 = vpack.c.b16 %v2638, %v2637
      %v2655 = vpack.c.b16 %v2640, %v2639
      %v2656 = vpack.c.b16 %v2642, %v2641
      %v2657 = vpack.c.b16 %v2644, %v2643
      %v2658 = vpack.c.b16 %v2646, %v2645
      %v2659 = vpack.c.b16 %v2648, %v2647
      %v2660 = vpack.c.b16 %v2650, %v2649
      %v2672 = vsel %vm2549, %v2577, 0
      %v2675 = vsel %vm2549, %v2579, 0
      %v2678 = vsel %vm2549, %v2581, 0
      %v2681 = vsel %vm2549, %v2583, 0
      %2683 = vmatprep.subr.bf16.mxu0 0
      %2684 = vmatpush1.bf16.msra.mxu0 %v2658
      %2685 = vmatprep.subr.bf16.mxu0 0
      %2686 = vmatpush1.bf16.msra.mxu0 %v2657
      %2687 = vmatprep.subr.bf16.mxu0 0
      %2688 = vmatpush1.bf16.msra.mxu0 %v2656
      %2689 = vmatprep.subr.bf16.mxu0 0
      %2690 = vmatpush1.bf16.msra.mxu0 %v2655
      %2691 = vmatprep.subr.bf16.mxu0 0
      %2692 = vmatpush1.bf16.msra.mxu0 %v2654
      %2693 = vmatprep.subr.bf16.mxu0 0
      %2694 = vmatpush1.bf16.msra.mxu0 %v2653
      %2695 = vmatprep.subr.bf16.mxu0 0
      %2696 = vmatpush1.bf16.msra.mxu0 %v2652
      %2697 = vmatprep.subr.bf16.mxu0 0
      %2698 = vmatpush1.bf16.msra.mxu0 %v2651
      %2699 = vmatprep.subr.bf16.mxu0 0
      %2700 = vmatpush2.bf16.msra.mxu0 0
      %2701 = vmatprep.subr.bf16.mxu0 0
      %2702 = vmatpush2.bf16.msra.mxu0 0
      %2703 = vmatprep.subr.bf16.mxu0 0
      %2704 = vmatpush2.bf16.msra.mxu0 0
      %2705 = vmatprep.subr.bf16.mxu0 0
      %2706 = vmatpush2.bf16.msra.mxu0 0
      %2707 = vmatprep.subr.bf16.mxu0 0
      %2708 = vmatpush2.bf16.msra.mxu0 0
      %2709 = vmatprep.subr.bf16.mxu0 0
      %2710 = vmatpush2.bf16.msra.mxu0 0
      %2711 = vmatprep.subr.bf16.mxu0 0
      %2712 = vmatpush2.bf16.msra.mxu0 %v2660
      %2713 = vmatprep.subr.bf16.mxu0 0
      %2714 = vmatpush2.bf16.msra.mxu0 %v2659
      %2715 = vmatprep.mubr.bf16.mxu0 %v2672
      %2716 = vmatmul.mubr.bf16.gmra.mxu0 %v2576
      %v2717 = vpop.f32.mrf.mxu0
      %v2718 = vadd.f32 %v2609, %v2717
      %v2719 = vpop.f32.mrf.mxu0
      %v2720 = vpop.f32.mrf.mxu0
      %v2721 = vadd.f32 %v2609, %v2720
      %v2722 = vpop.f32.mrf.mxu0
      %2723 = vmatprep.mubr.bf16.mxu0 %v2675
      %2724 = vmatmul.mubr.bf16.gmra.mxu0 %v2578
      %v2725 = vpop.f32.mrf.mxu0
      %v2726 = vadd.f32 %v2609, %v2725
      %v2727 = vpop.f32.mrf.mxu0
      %v2728 = vpop.f32.mrf.mxu0
      %v2729 = vadd.f32 %v2609, %v2728
      %v2730 = vpop.f32.mrf.mxu0
      %2731 = vmatprep.mubr.bf16.mxu0 %v2678
      %2732 = vmatmul.mubr.bf16.gmra.mxu0 %v2580
      %v2733 = vpop.f32.mrf.mxu0
      %v2734 = vadd.f32 %v2609, %v2733
      %v2735 = vpop.f32.mrf.mxu0
      %v2736 = vpop.f32.mrf.mxu0
      %v2737 = vadd.f32 %v2609, %v2736
      %v2738 = vpop.f32.mrf.mxu0
      %2739 = vmatprep.mubr.bf16.mxu0 %v2681
      %2740 = vmatmul.mubr.bf16.gmra.mxu0 %v2582
      %v2741 = vpop.f32.mrf.mxu0
      %v2742 = vadd.f32 %v2609, %v2741
      %v2743 = vpop.f32.mrf.mxu0
      %v2744 = vpop.f32.mrf.mxu0
      %v2745 = vadd.f32 %v2609, %v2744
      %v2746 = vpop.f32.mrf.mxu0
      %2747 = vdwg.mxu0
      %v2748 = vmax.f32 %v2718, 0.0
      %v2749 = vmax.f32 %v2721, 0.0
      %v2750 = vmax.f32 %v2726, 0.0
      %v2751 = vmax.f32 %v2729, 0.0
      %v2752 = vmax.f32 %v2734, 0.0
      %v2753 = vmax.f32 %v2737, 0.0
      %v2754 = vmax.f32 %v2742, 0.0
      %v2755 = vmax.f32 %v2745, 0.0
      %v2764 = vcombine.high %v2748, %v2748
      %v2766 = vunpack.c.l.s4 1983009808
      %v2767 = vunpack.c.0.s8 %v2766
      %v2768 = vlaneseq
      %v2769 = vshrl.u32 %v2768, 7
      %v2770 = vsub.s32 %v2767, %v2769
      %v2771 = vrot.slane %v2748, %v2770
      %v2773 = vunpack.c.l.s4 1983009808
      %v2774 = vunpack.c.0.s8 %v2773
      %v2775 = vlaneseq
      %v2776 = vshrl.u32 %v2775, 7
      %v2777 = vsub.s32 %v2774, %v2776
      %v2778 = vrot.slane %v2764, %v2777
      %v2779 = vcombine.high %v2771, %v2771
      %v2780 = vcombine.high %v2778, %v2778
      %v2781 = vcombine.high %v2749, %v2749
      %v2783 = vunpack.c.l.s4 1983009808
      %v2784 = vunpack.c.0.s8 %v2783
      %v2785 = vlaneseq
      %v2786 = vshrl.u32 %v2785, 7
      %v2787 = vsub.s32 %v2784, %v2786
      %v2788 = vrot.slane %v2749, %v2787
      %v2790 = vunpack.c.l.s4 1983009808
      %v2791 = vunpack.c.0.s8 %v2790
      %v2792 = vlaneseq
      %v2793 = vshrl.u32 %v2792, 7
      %v2794 = vsub.s32 %v2791, %v2793
      %v2795 = vrot.slane %v2781, %v2794
      %v2796 = vcombine.high %v2788, %v2788
      %v2797 = vcombine.high %v2795, %v2795
      %v2798 = vcombine.high %v2750, %v2750
      %v2800 = vunpack.c.l.s4 1983009808
      %v2801 = vunpack.c.0.s8 %v2800
      %v2802 = vlaneseq
      %v2803 = vshrl.u32 %v2802, 7
      %v2804 = vsub.s32 %v2801, %v2803
      %v2805 = vrot.slane %v2750, %v2804
      %v2807 = vunpack.c.l.s4 1983009808
      %v2808 = vunpack.c.0.s8 %v2807
      %v2809 = vlaneseq
      %v2810 = vshrl.u32 %v2809, 7
      %v2811 = vsub.s32 %v2808, %v2810
      %v2812 = vrot.slane %v2798, %v2811
      %v2813 = vcombine.high %v2805, %v2805
      %v2814 = vcombine.high %v2812, %v2812
      %v2815 = vcombine.high %v2751, %v2751
      %v2817 = vunpack.c.l.s4 1983009808
      %v2818 = vunpack.c.0.s8 %v2817
      %v2819 = vlaneseq
      %v2820 = vshrl.u32 %v2819, 7
      %v2821 = vsub.s32 %v2818, %v2820
      %v2822 = vrot.slane %v2751, %v2821
      %v2824 = vunpack.c.l.s4 1983009808
      %v2825 = vunpack.c.0.s8 %v2824
      %v2826 = vlaneseq
      %v2827 = vshrl.u32 %v2826, 7
      %v2828 = vsub.s32 %v2825, %v2827
      %v2829 = vrot.slane %v2815, %v2828
      %v2830 = vcombine.high %v2822, %v2822
      %v2831 = vcombine.high %v2829, %v2829
      %v2832 = vcombine.high %v2752, %v2752
      %v2834 = vunpack.c.l.s4 1983009808
      %v2835 = vunpack.c.0.s8 %v2834
      %v2836 = vlaneseq
      %v2837 = vshrl.u32 %v2836, 7
      %v2838 = vsub.s32 %v2835, %v2837
      %v2839 = vrot.slane %v2752, %v2838
      %v2841 = vunpack.c.l.s4 1983009808
      %v2842 = vunpack.c.0.s8 %v2841
      %v2843 = vlaneseq
      %v2844 = vshrl.u32 %v2843, 7
      %v2845 = vsub.s32 %v2842, %v2844
      %v2846 = vrot.slane %v2832, %v2845
      %v2847 = vcombine.high %v2839, %v2839
      %v2848 = vcombine.high %v2846, %v2846
      %v2849 = vcombine.high %v2753, %v2753
      %v2851 = vunpack.c.l.s4 1983009808
      %v2852 = vunpack.c.0.s8 %v2851
      %v2853 = vlaneseq
      %v2854 = vshrl.u32 %v2853, 7
      %v2855 = vsub.s32 %v2852, %v2854
      %v2856 = vrot.slane %v2753, %v2855
      %v2858 = vunpack.c.l.s4 1983009808
      %v2859 = vunpack.c.0.s8 %v2858
      %v2860 = vlaneseq
      %v2861 = vshrl.u32 %v2860, 7
      %v2862 = vsub.s32 %v2859, %v2861
      %v2863 = vrot.slane %v2849, %v2862
      %v2864 = vcombine.high %v2856, %v2856
      %v2865 = vcombine.high %v2863, %v2863
      %v2866 = vcombine.high %v2754, %v2754
      %v2868 = vunpack.c.l.s4 1983009808
      %v2869 = vunpack.c.0.s8 %v2868
      %v2870 = vlaneseq
      %v2871 = vshrl.u32 %v2870, 7
      %v2872 = vsub.s32 %v2869, %v2871
      %v2873 = vrot.slane %v2754, %v2872
      %v2875 = vunpack.c.l.s4 1983009808
      %v2876 = vunpack.c.0.s8 %v2875
      %v2877 = vlaneseq
      %v2878 = vshrl.u32 %v2877, 7
      %v2879 = vsub.s32 %v2876, %v2878
      %v2880 = vrot.slane %v2866, %v2879
      %v2881 = vcombine.high %v2873, %v2873
      %v2882 = vcombine.high %v2880, %v2880
      %v2883 = vcombine.high %v2755, %v2755
      %v2885 = vunpack.c.l.s4 1983009808
      %v2886 = vunpack.c.0.s8 %v2885
      %v2887 = vlaneseq
      %v2888 = vshrl.u32 %v2887, 7
      %v2889 = vsub.s32 %v2886, %v2888
      %v2890 = vrot.slane %v2755, %v2889
      %v2892 = vunpack.c.l.s4 1983009808
      %v2893 = vunpack.c.0.s8 %v2892
      %v2894 = vlaneseq
      %v2895 = vshrl.u32 %v2894, 7
      %v2896 = vsub.s32 %v2893, %v2895
      %v2897 = vrot.slane %v2883, %v2896
      %v2898 = vcombine.high %v2890, %v2890
      %v2899 = vcombine.high %v2897, %v2897
      %v2932 = vrot.slane %v2771, 7
      %v2933 = vrot.slane %v2932, 2
      %v2934 = vrot.slane %v2779, 7
      %v2935 = vrot.slane %v2934, 2
      %v2936 = vrot.slane %v2778, 7
      %v2937 = vrot.slane %v2936, 2
      %v2938 = vrot.slane %v2780, 7
      %v2939 = vrot.slane %v2938, 2
      %v2940 = vrot.slane %v2788, 7
      %v2941 = vrot.slane %v2940, 2
      %v2942 = vrot.slane %v2796, 7
      %v2943 = vrot.slane %v2942, 2
      %v2944 = vrot.slane %v2795, 7
      %v2945 = vrot.slane %v2944, 2
      %v2946 = vrot.slane %v2797, 7
      %v2947 = vrot.slane %v2946, 2
      %v2948 = vrot.slane %v2805, 7
      %v2949 = vrot.slane %v2948, 2
      %v2950 = vrot.slane %v2813, 7
      %v2951 = vrot.slane %v2950, 2
      %v2952 = vrot.slane %v2812, 7
      %v2953 = vrot.slane %v2952, 2
      %v2954 = vrot.slane %v2814, 7
      %v2955 = vrot.slane %v2954, 2
      %v2956 = vrot.slane %v2822, 7
      %v2957 = vrot.slane %v2956, 2
      %v2958 = vrot.slane %v2830, 7
      %v2959 = vrot.slane %v2958, 2
      %v2960 = vrot.slane %v2829, 7
      %v2961 = vrot.slane %v2960, 2
      %v2962 = vrot.slane %v2831, 7
      %v2963 = vrot.slane %v2962, 2
      %v2964 = vrot.slane %v2839, 7
      %v2965 = vrot.slane %v2964, 2
      %v2966 = vrot.slane %v2847, 7
      %v2967 = vrot.slane %v2966, 2
      %v2968 = vrot.slane %v2846, 7
      %v2969 = vrot.slane %v2968, 2
      %v2970 = vrot.slane %v2848, 7
      %v2971 = vrot.slane %v2970, 2
      %v2972 = vrot.slane %v2856, 7
      %v2973 = vrot.slane %v2972, 2
      %v2974 = vrot.slane %v2864, 7
      %v2975 = vrot.slane %v2974, 2
      %v2976 = vrot.slane %v2863, 7
      %v2977 = vrot.slane %v2976, 2
      %v2978 = vrot.slane %v2865, 7
      %v2979 = vrot.slane %v2978, 2
      %v2980 = vrot.slane %v2873, 7
      %v2981 = vrot.slane %v2980, 2
      %v2982 = vrot.slane %v2881, 7
      %v2983 = vrot.slane %v2982, 2
      %v2984 = vrot.slane %v2880, 7
      %v2985 = vrot.slane %v2984, 2
      %v2986 = vrot.slane %v2882, 7
      %v2987 = vrot.slane %v2986, 2
      %v2988 = vrot.slane %v2890, 7
      %v2989 = vrot.slane %v2988, 2
      %v2990 = vrot.slane %v2898, 7
      %v2991 = vrot.slane %v2990, 2
      %v2992 = vrot.slane %v2897, 7
      %v2993 = vrot.slane %v2992, 2
      %v2994 = vrot.slane %v2899, 7
      %v2995 = vrot.slane %v2994, 2
      %v3028 = vmax.f32 %v2771, %v2933
      %v3029 = vmax.f32 %v2779, %v2935
      %v3030 = vmax.f32 %v2778, %v2937
      %v3031 = vmax.f32 %v2780, %v2939
      %v3032 = vmax.f32 %v2788, %v2941
      %v3033 = vmax.f32 %v2796, %v2943
      %v3034 = vmax.f32 %v2795, %v2945
      %v3035 = vmax.f32 %v2797, %v2947
      %v3036 = vmax.f32 %v2805, %v2949
      %v3037 = vmax.f32 %v2813, %v2951
      %v3038 = vmax.f32 %v2812, %v2953
      %v3039 = vmax.f32 %v2814, %v2955
      %v3040 = vmax.f32 %v2822, %v2957
      %v3041 = vmax.f32 %v2830, %v2959
      %v3042 = vmax.f32 %v2829, %v2961
      %v3043 = vmax.f32 %v2831, %v2963
      %v3044 = vmax.f32 %v2839, %v2965
      %v3045 = vmax.f32 %v2847, %v2967
      %v3046 = vmax.f32 %v2846, %v2969
      %v3047 = vmax.f32 %v2848, %v2971
      %v3048 = vmax.f32 %v2856, %v2973
      %v3049 = vmax.f32 %v2864, %v2975
      %v3050 = vmax.f32 %v2863, %v2977
      %v3051 = vmax.f32 %v2865, %v2979
      %v3052 = vmax.f32 %v2873, %v2981
      %v3053 = vmax.f32 %v2881, %v2983
      %v3054 = vmax.f32 %v2880, %v2985
      %v3055 = vmax.f32 %v2882, %v2987
      %v3056 = vmax.f32 %v2890, %v2989
      %v3057 = vmax.f32 %v2898, %v2991
      %v3058 = vmax.f32 %v2897, %v2993
      %v3059 = vmax.f32 %v2899, %v2995
      %v3060 = vld [vmem:[%s458] sm:$0xf]
      %v3061 = vld [vmem:[%s6] sm:$0xf]
      %v3062 = vld [vmem:[%s7] sm:$0x1]
      %v3064 = vlaneseq
      %v3065 = vshrl.u32 %v3064, 7
      %v3066 = vsub.s32 0, %v3065
      %v3067 = vrot.slane %v3062, %v3066
      %v3070 = vsel %vm1087, %v3060, 0
      %v3073 = vsel %vm803, %v3061, 0
      %3075 = vmatprep.subr.bf16.mxu0 0
      %3076 = vmatpush1.bf16.msra.mxu0 0
      %3077 = vmatprep.subr.bf16.mxu0 0
      %3078 = vmatpush1.bf16.msra.mxu0 0
      %3079 = vmatprep.subr.bf16.mxu0 0
      %3080 = vmatpush1.bf16.msra.mxu0 0
      %3081 = vmatprep.subr.bf16.mxu0 0
      %3082 = vmatpush1.bf16.msra.mxu0 0
      %3083 = vmatprep.subr.bf16.mxu0 0
      %3084 = vmatpush1.bf16.msra.mxu0 0
      %3085 = vmatprep.subr.bf16.mxu0 0
      %3086 = vmatpush1.bf16.msra.mxu0 0
      %3087 = vmatprep.subr.bf16.mxu0 0
      %3088 = vmatpush1.bf16.msra.mxu0 0
      %3089 = vmatprep.subr.bf16.mxu0 0
      %3090 = vmatpush1.bf16.msra.mxu0 %v3073
      %3091 = vmatprep.subr.bf16.mxu0 0
      %3092 = vmatpush2.bf16.msra.mxu0 0
      %3093 = vmatprep.subr.bf16.mxu0 0
      %3094 = vmatpush2.bf16.msra.mxu0 0
      %3095 = vmatprep.subr.bf16.mxu0 0
      %3096 = vmatpush2.bf16.msra.mxu0 0
      %3097 = vmatprep.subr.bf16.mxu0 0
      %3098 = vmatpush2.bf16.msra.mxu0 0
      %3099 = vmatprep.subr.bf16.mxu0 0
      %3100 = vmatpush2.bf16.msra.mxu0 0
      %3101 = vmatprep.subr.bf16.mxu0 0
      %3102 = vmatpush2.bf16.msra.mxu0 0
      %3103 = vmatprep.subr.bf16.mxu0 0
      %3104 = vmatpush2.bf16.msra.mxu0 0
      %3105 = vmatprep.subr.bf16.mxu0 0
      %3106 = vmatpush2.bf16.msra.mxu0 0
      %3107 = vmatprep.mubr.bf16.mxu0 0
      %3108 = vmatmul.mubr.bf16.gmra.mxu0 %v3070
      %v3109 = vpop.f32.mrf.mxu0
      %v3110 = vadd.f32 %v3067, %v3109
      %v3111 = vpop.f32.mrf.mxu0
      %v3112 = vpop.f32.mrf.mxu0
      %v3113 = vpop.f32.mrf.mxu0
      %3114 = vdwg.mxu0
      %v3115 = vmax.f32 %v3110, 0.0
      %v3148 = vsel %vm2273, %v3028, %v3028
      %v3149 = vsel %vm2277, %v3028, %v3148
      %v3150 = vrot.slane %v3029, 7
      %v3151 = vsel %vm2281, %v3150, %v3149
      %v3152 = vsel %vm2271, %v3150, %v3151
      %v3153 = vsel %vm2275, %v3150, %v3152
      %v3154 = vsel %vm2279, %v3150, %v3153
      %v3155 = vsel %vm2273, %v3030, %v3030
      %v3156 = vsel %vm2277, %v3030, %v3155
      %v3157 = vrot.slane %v3031, 7
      %v3158 = vsel %vm2281, %v3157, %v3156
      %v3159 = vsel %vm2271, %v3157, %v3158
      %v3160 = vsel %vm2275, %v3157, %v3159
      %v3161 = vsel %vm2279, %v3157, %v3160
      %v3162 = vsel %vm2273, %v3032, %v3032
      %v3163 = vsel %vm2277, %v3032, %v3162
      %v3164 = vrot.slane %v3033, 7
      %v3165 = vsel %vm2281, %v3164, %v3163
      %v3166 = vsel %vm2271, %v3164, %v3165
      %v3167 = vsel %vm2275, %v3164, %v3166
      %v3168 = vsel %vm2279, %v3164, %v3167
      %v3169 = vsel %vm2273, %v3034, %v3034
      %v3170 = vsel %vm2277, %v3034, %v3169
      %v3171 = vrot.slane %v3035, 7
      %v3172 = vsel %vm2281, %v3171, %v3170
      %v3173 = vsel %vm2271, %v3171, %v3172
      %v3174 = vsel %vm2275, %v3171, %v3173
      %v3175 = vsel %vm2279, %v3171, %v3174
      %v3176 = vsel %vm2273, %v3036, %v3036
      %v3177 = vsel %vm2277, %v3036, %v3176
      %v3178 = vrot.slane %v3037, 7
      %v3179 = vsel %vm2281, %v3178, %v3177
      %v3180 = vsel %vm2271, %v3178, %v3179
      %v3181 = vsel %vm2275, %v3178, %v3180
      %v3182 = vsel %vm2279, %v3178, %v3181
      %v3183 = vsel %vm2273, %v3038, %v3038
      %v3184 = vsel %vm2277, %v3038, %v3183
      %v3185 = vrot.slane %v3039, 7
      %v3186 = vsel %vm2281, %v3185, %v3184
      %v3187 = vsel %vm2271, %v3185, %v3186
      %v3188 = vsel %vm2275, %v3185, %v3187
      %v3189 = vsel %vm2279, %v3185, %v3188
      %v3190 = vsel %vm2273, %v3040, %v3040
      %v3191 = vsel %vm2277, %v3040, %v3190
      %v3192 = vrot.slane %v3041, 7
      %v3193 = vsel %vm2281, %v3192, %v3191
      %v3194 = vsel %vm2271, %v3192, %v3193
      %v3195 = vsel %vm2275, %v3192, %v3194
      %v3196 = vsel %vm2279, %v3192, %v3195
      %v3197 = vsel %vm2273, %v3042, %v3042
      %v3198 = vsel %vm2277, %v3042, %v3197
      %v3199 = vrot.slane %v3043, 7
      %v3200 = vsel %vm2281, %v3199, %v3198
      %v3201 = vsel %vm2271, %v3199, %v3200
      %v3202 = vsel %vm2275, %v3199, %v3201
      %v3203 = vsel %vm2279, %v3199, %v3202
      %v3204 = vsel %vm2273, %v3044, %v3044
      %v3205 = vsel %vm2277, %v3044, %v3204
      %v3206 = vrot.slane %v3045, 7
      %v3207 = vsel %vm2281, %v3206, %v3205
      %v3208 = vsel %vm2271, %v3206, %v3207
      %v3209 = vsel %vm2275, %v3206, %v3208
      %v3210 = vsel %vm2279, %v3206, %v3209
      %v3211 = vsel %vm2273, %v3046, %v3046
      %v3212 = vsel %vm2277, %v3046, %v3211
      %v3213 = vrot.slane %v3047, 7
      %v3214 = vsel %vm2281, %v3213, %v3212
      %v3215 = vsel %vm2271, %v3213, %v3214
      %v3216 = vsel %vm2275, %v3213, %v3215
      %v3217 = vsel %vm2279, %v3213, %v3216
      %v3218 = vsel %vm2273, %v3048, %v3048
      %v3219 = vsel %vm2277, %v3048, %v3218
      %v3220 = vrot.slane %v3049, 7
      %v3221 = vsel %vm2281, %v3220, %v3219
      %v3222 = vsel %vm2271, %v3220, %v3221
      %v3223 = vsel %vm2275, %v3220, %v3222
      %v3224 = vsel %vm2279, %v3220, %v3223
      %v3225 = vsel %vm2273, %v3050, %v3050
      %v3226 = vsel %vm2277, %v3050, %v3225
      %v3227 = vrot.slane %v3051, 7
      %v3228 = vsel %vm2281, %v3227, %v3226
      %v3229 = vsel %vm2271, %v3227, %v3228
      %v3230 = vsel %vm2275, %v3227, %v3229
      %v3231 = vsel %vm2279, %v3227, %v3230
      %v3232 = vsel %vm2273, %v3052, %v3052
      %v3233 = vsel %vm2277, %v3052, %v3232
      %v3234 = vrot.slane %v3053, 7
      %v3235 = vsel %vm2281, %v3234, %v3233
      %v3236 = vsel %vm2271, %v3234, %v3235
      %v3237 = vsel %vm2275, %v3234, %v3236
      %v3238 = vsel %vm2279, %v3234, %v3237
      %v3239 = vsel %vm2273, %v3054, %v3054
      %v3240 = vsel %vm2277, %v3054, %v3239
      %v3241 = vrot.slane %v3055, 7
      %v3242 = vsel %vm2281, %v3241, %v3240
      %v3243 = vsel %vm2271, %v3241, %v3242
      %v3244 = vsel %vm2275, %v3241, %v3243
      %v3245 = vsel %vm2279, %v3241, %v3244
      %v3246 = vsel %vm2273, %v3056, %v3056
      %v3247 = vsel %vm2277, %v3056, %v3246
      %v3248 = vrot.slane %v3057, 7
      %v3249 = vsel %vm2281, %v3248, %v3247
      %v3250 = vsel %vm2271, %v3248, %v3249
      %v3251 = vsel %vm2275, %v3248, %v3250
      %v3252 = vsel %vm2279, %v3248, %v3251
      %v3253 = vsel %vm2273, %v3058, %v3058
      %v3254 = vsel %vm2277, %v3058, %v3253
      %v3255 = vrot.slane %v3059, 7
      %v3256 = vsel %vm2281, %v3255, %v3254
      %v3257 = vsel %vm2271, %v3255, %v3256
      %v3258 = vsel %vm2275, %v3255, %v3257
      %v3259 = vsel %vm2279, %v3255, %v3258
      %v3276 = vcombine.low %v3154, %v3168
      %v3278 = vunpack.c.l.s4 1934713408
      %v3279 = vunpack.c.0.s8 %v3278
      %v3280 = vlaneseq
      %v3281 = vshrl.u32 %v3280, 7
      %v3282 = vsub.s32 %v3279, %v3281
      %v3283 = vrot.slane %v3276, %v3282
      %v3284 = vcombine.high %v3283, 0.0
      %v3285 = vcombine.low %v3182, %v3196
      %v3287 = vunpack.c.l.s4 1934713408
      %v3288 = vunpack.c.0.s8 %v3287
      %v3289 = vlaneseq
      %v3290 = vshrl.u32 %v3289, 7
      %v3291 = vsub.s32 %v3288, %v3290
      %v3292 = vrot.slane %v3285, %v3291
      %v3293 = vcombine.high %v3292, 0.0
      %v3294 = vcombine.low %v3210, %v3224
      %v3296 = vunpack.c.l.s4 1934713408
      %v3297 = vunpack.c.0.s8 %v3296
      %v3298 = vlaneseq
      %v3299 = vshrl.u32 %v3298, 7
      %v3300 = vsub.s32 %v3297, %v3299
      %v3301 = vrot.slane %v3294, %v3300
      %v3302 = vcombine.high %v3301, 0.0
      %v3303 = vcombine.low %v3238, %v3252
      %v3305 = vunpack.c.l.s4 1934713408
      %v3306 = vunpack.c.0.s8 %v3305
      %v3307 = vlaneseq
      %v3308 = vshrl.u32 %v3307, 7
      %v3309 = vsub.s32 %v3306, %v3308
      %v3310 = vrot.slane %v3303, %v3309
      %v3311 = vcombine.high %v3310, 0.0
      %v3312 = vcombine.low %v3161, %v3175
      %v3314 = vunpack.c.l.s4 1934713408
      %v3315 = vunpack.c.0.s8 %v3314
      %v3316 = vlaneseq
      %v3317 = vshrl.u32 %v3316, 7
      %v3318 = vsub.s32 %v3315, %v3317
      %v3319 = vrot.slane %v3312, %v3318
      %v3320 = vcombine.high %v3319, 0.0
      %v3321 = vcombine.low %v3189, %v3203
      %v3323 = vunpack.c.l.s4 1934713408
      %v3324 = vunpack.c.0.s8 %v3323
      %v3325 = vlaneseq
      %v3326 = vshrl.u32 %v3325, 7
      %v3327 = vsub.s32 %v3324, %v3326
      %v3328 = vrot.slane %v3321, %v3327
      %v3329 = vcombine.high %v3328, 0.0
      %v3330 = vcombine.low %v3217, %v3231
      %v3332 = vunpack.c.l.s4 1934713408
      %v3333 = vunpack.c.0.s8 %v3332
      %v3334 = vlaneseq
      %v3335 = vshrl.u32 %v3334, 7
      %v3336 = vsub.s32 %v3333, %v3335
      %v3337 = vrot.slane %v3330, %v3336
      %v3338 = vcombine.high %v3337, 0.0
      %v3339 = vcombine.low %v3245, %v3259
      %v3341 = vunpack.c.l.s4 1934713408
      %v3342 = vunpack.c.0.s8 %v3341
      %v3343 = vlaneseq
      %v3344 = vshrl.u32 %v3343, 7
      %v3345 = vsub.s32 %v3342, %v3344
      %v3346 = vrot.slane %v3339, %v3345
      %v3347 = vcombine.high %v3346, 0.0
      %v3352 = vcombine.low %v3283, %v3292
      %v3353 = vcombine.low %v3301, %v3310
      %v3355 = vunpack.c.l.s4 1983009808
      %v3356 = vunpack.c.0.s8 %v3355
      %v3357 = vlaneseq
      %v3358 = vshrl.u32 %v3357, 7
      %v3359 = vsub.s32 %v3356, %v3358
      %v3360 = vrot.slane %v3352, %v3359
      %v3362 = vunpack.c.l.s4 1983009808
      %v3363 = vunpack.c.0.s8 %v3362
      %v3364 = vlaneseq
      %v3365 = vshrl.u32 %v3364, 7
      %v3366 = vsub.s32 %v3363, %v3365
      %v3367 = vrot.slane %v3353, %v3366
      %v3368 = vcombine.low %v3360, %v3367
      %v3374 = vcombine.low %v3284, %v3293
      %v3375 = vcombine.low %v3302, %v3311
      %v3377 = vunpack.c.l.s4 1983009808
      %v3378 = vunpack.c.0.s8 %v3377
      %v3379 = vlaneseq
      %v3380 = vshrl.u32 %v3379, 7
      %v3381 = vsub.s32 %v3378, %v3380
      %v3382 = vrot.slane %v3374, %v3381
      %v3384 = vunpack.c.l.s4 1983009808
      %v3385 = vunpack.c.0.s8 %v3384
      %v3386 = vlaneseq
      %v3387 = vshrl.u32 %v3386, 7
      %v3388 = vsub.s32 %v3385, %v3387
      %v3389 = vrot.slane %v3375, %v3388
      %v3390 = vcombine.low %v3382, %v3389
      %3391 = vrot.lane.b32.xlu0 %v3390, 64
      %v3392 = vpop.permute.xlu0 %3391
      %v3398 = vcombine.low %v3319, %v3328
      %v3399 = vcombine.low %v3337, %v3346
      %v3401 = vunpack.c.l.s4 1983009808
      %v3402 = vunpack.c.0.s8 %v3401
      %v3403 = vlaneseq
      %v3404 = vshrl.u32 %v3403, 7
      %v3405 = vsub.s32 %v3402, %v3404
      %v3406 = vrot.slane %v3398, %v3405
      %v3408 = vunpack.c.l.s4 1983009808
      %v3409 = vunpack.c.0.s8 %v3408
      %v3410 = vlaneseq
      %v3411 = vshrl.u32 %v3410, 7
      %v3412 = vsub.s32 %v3409, %v3411
      %v3413 = vrot.slane %v3399, %v3412
      %v3414 = vcombine.low %v3406, %v3413
      %v3420 = vcombine.low %v3320, %v3329
      %v3421 = vcombine.low %v3338, %v3347
      %v3423 = vunpack.c.l.s4 1983009808
      %v3424 = vunpack.c.0.s8 %v3423
      %v3425 = vlaneseq
      %v3426 = vshrl.u32 %v3425, 7
      %v3427 = vsub.s32 %v3424, %v3426
      %v3428 = vrot.slane %v3420, %v3427
      %v3430 = vunpack.c.l.s4 1983009808
      %v3431 = vunpack.c.0.s8 %v3430
      %v3432 = vlaneseq
      %v3433 = vshrl.u32 %v3432, 7
      %v3434 = vsub.s32 %v3431, %v3433
      %v3435 = vrot.slane %v3421, %v3434
      %v3436 = vcombine.low %v3428, %v3435
      %3437 = vrot.lane.b32.xlu0 %v3436, 64
      %v3438 = vpop.permute.xlu0 %3437
      %v3440 = vsel %vm2558, %v3368, %v3392
      %v3441 = vsel %vm2558, %v3414, %v3438
      %v3442 = vpack.c.bf16 %v3440, %v3440
      %v3443 = vpack.c.bf16 %v3441, %v3441
      %v3444 = vld [vmem:[%s8] sm:$0xf]
      %v3445 = vld [vmem:[%s8 + $0x4] sm:$0xf]
      %v3446 = vld [vmem:[%s8 + $0x8] sm:$0xf]
      %v3447 = vld [vmem:[%s8 + $0xc] sm:$0xf]
      %v3448 = vld [vmem:[%s8 + $0x10] sm:$0xf]
      %v3449 = vld [vmem:[%s8 + $0x14] sm:$0xf]
      %v3450 = vld [vmem:[%s8 + $0x18] sm:$0xf]
      %v3451 = vld [vmem:[%s8 + $0x1c] sm:$0xf]
      %v3452 = vld [vmem:[%s8 + $0x20] sm:$0xf]
      %v3453 = vld [vmem:[%s8 + $0x24] sm:$0xf]
      %v3454 = vld [vmem:[%s8 + $0x28] sm:$0xf]
      %v3455 = vld [vmem:[%s8 + $0x2c] sm:$0xf]
      %v3456 = vld [vmem:[%s8 + $0x30] sm:$0xf]
      %v3457 = vld [vmem:[%s8 + $0x34] sm:$0xf]
      %v3458 = vld [vmem:[%s8 + $0x38] sm:$0xf]
      %v3459 = vld [vmem:[%s8 + $0x3c] sm:$0xf]
      %v3460 = vld [vmem:[%s8 + $0x40] sm:$0xf]
      %v3461 = vld [vmem:[%s8 + $0x44] sm:$0xf]
      %v3462 = vld [vmem:[%s8 + $0x48] sm:$0xf]
      %v3463 = vld [vmem:[%s8 + $0x4c] sm:$0xf]
      %v3464 = vld [vmem:[%s8 + $0x50] sm:$0xf]
      %v3465 = vld [vmem:[%s8 + $0x54] sm:$0xf]
      %v3466 = vld [vmem:[%s8 + $0x58] sm:$0xf]
      %v3467 = vld [vmem:[%s8 + $0x5c] sm:$0xf]
      %v3468 = vld [vmem:[%s8 + $0x60] sm:$0xf]
      %v3469 = vld [vmem:[%s8 + $0x64] sm:$0xf]
      %v3470 = vld [vmem:[%s8 + $0x68] sm:$0xf]
      %v3471 = vld [vmem:[%s8 + $0x6c] sm:$0xf]
      %v3472 = vld [vmem:[%s8 + $0x70] sm:$0xf]
      %v3473 = vld [vmem:[%s8 + $0x74] sm:$0xf]
      %v3474 = vld [vmem:[%s8 + $0x78] sm:$0xf]
      %v3475 = vld [vmem:[%s8 + $0x7c] sm:$0xf]
      %v3476 = vpack.c.bf16 %v3115, %v3115
      %v3477 = vld [vmem:[%s9] sm:$0xf]
      %v3478 = vld [vmem:[%s9 + $0x4] sm:$0xf]
      %v3479 = vld [vmem:[%s9 + $0x8] sm:$0xf]
      %v3480 = vld [vmem:[%s9 + $0xc] sm:$0xf]
      %v3485 = vunpack.c.l.b16 %v3477
      %v3486 = vunpack.c.l.b16 %v3478
      %v3487 = vunpack.c.l.b16 %v3479
      %v3488 = vunpack.c.l.b16 %v3480
      %v3489 = vpack.c.b16 %v3486, %v3485
      %v3490 = vpack.c.b16 %v3488, %v3487
      %v3494 = vsel %vm2549, %v3476, 0
      %3496 = vmatprep.subr.bf16.mxu0 0
      %3497 = vmatpush1.bf16.msra.mxu0 0
      %3498 = vmatprep.subr.bf16.mxu0 0
      %3499 = vmatpush1.bf16.msra.mxu0 0
      %3500 = vmatprep.subr.bf16.mxu0 0
      %3501 = vmatpush1.bf16.msra.mxu0 0
      %3502 = vmatprep.subr.bf16.mxu0 0
      %3503 = vmatpush1.bf16.msra.mxu0 0
      %3504 = vmatprep.subr.bf16.mxu0 0
      %3505 = vmatpush1.bf16.msra.mxu0 0
      %3506 = vmatprep.subr.bf16.mxu0 0
      %3507 = vmatpush1.bf16.msra.mxu0 0
      %3508 = vmatprep.subr.bf16.mxu0 0
      %3509 = vmatpush1.bf16.msra.mxu0 %v3490
      %3510 = vmatprep.subr.bf16.mxu0 0
      %3511 = vmatpush1.bf16.msra.mxu0 %v3489
      %3512 = vmatprep.subr.bf16.mxu0 0
      %3513 = vmatpush2.bf16.msra.mxu0 0
      %3514 = vmatprep.subr.bf16.mxu0 0
      %3515 = vmatpush2.bf16.msra.mxu0 0
      %3516 = vmatprep.subr.bf16.mxu0 0
      %3517 = vmatpush2.bf16.msra.mxu0 0
      %3518 = vmatprep.subr.bf16.mxu0 0
      %3519 = vmatpush2.bf16.msra.mxu0 0
      %3520 = vmatprep.subr.bf16.mxu0 0
      %3521 = vmatpush2.bf16.msra.mxu0 0
      %3522 = vmatprep.subr.bf16.mxu0 0
      %3523 = vmatpush2.bf16.msra.mxu0 0
      %3524 = vmatprep.subr.bf16.mxu0 0
      %3525 = vmatpush2.bf16.msra.mxu0 0
      %3526 = vmatprep.subr.bf16.mxu0 0
      %3527 = vmatpush2.bf16.msra.mxu0 0
      %3528 = vmatprep.mubr.bf16.mxu0 0
      %3529 = vmatmul.mubr.bf16.gmra.mxu0 %v3494
      %v3530 = vpop.f32.mrf.mxu0
      %v3531 = vadd.f32 0.0, %v3530
      %v3532 = vpop.f32.mrf.mxu0
      %v3533 = vpop.f32.mrf.mxu0
      %v3534 = vpop.f32.mrf.mxu0
      %3535 = vdwg.mxu0
      %v3568 = vunpack.c.l.b16 %v3444
      %v3569 = vunpack.c.l.b16 %v3445
      %v3570 = vunpack.c.l.b16 %v3446
      %v3571 = vunpack.c.l.b16 %v3447
      %v3572 = vunpack.c.l.b16 %v3448
      %v3573 = vunpack.c.l.b16 %v3449
      %v3574 = vunpack.c.l.b16 %v3450
      %v3575 = vunpack.c.l.b16 %v3451
      %v3576 = vunpack.c.l.b16 %v3452
      %v3577 = vunpack.c.l.b16 %v3453
      %v3578 = vunpack.c.l.b16 %v3454
      %v3579 = vunpack.c.l.b16 %v3455
      %v3580 = vunpack.c.l.b16 %v3456
      %v3581 = vunpack.c.l.b16 %v3457
      %v3582 = vunpack.c.l.b16 %v3458
      %v3583 = vunpack.c.l.b16 %v3459
      %v3584 = vunpack.c.l.b16 %v3460
      %v3585 = vunpack.c.l.b16 %v3461
      %v3586 = vunpack.c.l.b16 %v3462
      %v3587 = vunpack.c.l.b16 %v3463
      %v3588 = vunpack.c.l.b16 %v3464
      %v3589 = vunpack.c.l.b16 %v3465
      %v3590 = vunpack.c.l.b16 %v3466
      %v3591 = vunpack.c.l.b16 %v3467
      %v3592 = vunpack.c.l.b16 %v3468
      %v3593 = vunpack.c.l.b16 %v3469
      %v3594 = vunpack.c.l.b16 %v3470
      %v3595 = vunpack.c.l.b16 %v3471
      %v3596 = vunpack.c.l.b16 %v3472
      %v3597 = vunpack.c.l.b16 %v3473
      %v3598 = vunpack.c.l.b16 %v3474
      %v3599 = vunpack.c.l.b16 %v3475
      %v3600 = vpack.c.b16 %v3569, %v3568
      %v3601 = vpack.c.b16 %v3571, %v3570
      %v3602 = vpack.c.b16 %v3573, %v3572
      %v3603 = vpack.c.b16 %v3575, %v3574
      %v3604 = vpack.c.b16 %v3577, %v3576
      %v3605 = vpack.c.b16 %v3579, %v3578
      %v3606 = vpack.c.b16 %v3581, %v3580
      %v3607 = vpack.c.b16 %v3583, %v3582
      %v3608 = vpack.c.b16 %v3585, %v3584
      %v3609 = vpack.c.b16 %v3587, %v3586
      %v3610 = vpack.c.b16 %v3589, %v3588
      %v3611 = vpack.c.b16 %v3591, %v3590
      %v3612 = vpack.c.b16 %v3593, %v3592
      %v3613 = vpack.c.b16 %v3595, %v3594
      %v3614 = vpack.c.b16 %v3597, %v3596
      %v3615 = vpack.c.b16 %v3599, %v3598
      %3632 = vmatprep.subr.bf16.mxu0 0
      %3633 = vmatpush1.bf16.msra.mxu0 %v3607
      %3634 = vmatprep.subr.bf16.mxu0 0
      %3635 = vmatpush1.bf16.msra.mxu0 %v3606
      %3636 = vmatprep.subr.bf16.mxu0 0
      %3637 = vmatpush1.bf16.msra.mxu0 %v3605
      %3638 = vmatprep.subr.bf16.mxu0 0
      %3639 = vmatpush1.bf16.msra.mxu0 %v3604
      %3640 = vmatprep.subr.bf16.mxu0 0
      %3641 = vmatpush1.bf16.msra.mxu0 %v3603
      %3642 = vmatprep.subr.bf16.mxu0 0
      %3643 = vmatpush1.bf16.msra.mxu0 %v3602
      %3644 = vmatprep.subr.bf16.mxu0 0
      %3645 = vmatpush1.bf16.msra.mxu0 %v3601
      %3646 = vmatprep.subr.bf16.mxu0 0
      %3647 = vmatpush1.bf16.msra.mxu0 %v3600
      %3648 = vmatprep.subr.bf16.mxu0 0
      %3649 = vmatpush2.bf16.msra.mxu0 %v3615
      %3650 = vmatprep.subr.bf16.mxu0 0
      %3651 = vmatpush2.bf16.msra.mxu0 %v3614
      %3652 = vmatprep.subr.bf16.mxu0 0
      %3653 = vmatpush2.bf16.msra.mxu0 %v3613
      %3654 = vmatprep.subr.bf16.mxu0 0
      %3655 = vmatpush2.bf16.msra.mxu0 %v3612
      %3656 = vmatprep.subr.bf16.mxu0 0
      %3657 = vmatpush2.bf16.msra.mxu0 %v3611
      %3658 = vmatprep.subr.bf16.mxu0 0
      %3659 = vmatpush2.bf16.msra.mxu0 %v3610
      %3660 = vmatprep.subr.bf16.mxu0 0
      %3661 = vmatpush2.bf16.msra.mxu0 %v3609
      %3662 = vmatprep.subr.bf16.mxu0 0
      %3663 = vmatpush2.bf16.msra.mxu0 %v3608
      %3664 = vmatprep.mubr.bf16.mxu0 %v3443
      %3665 = vmatmul.mubr.bf16.gmra.mxu0 %v3442
      %v3666 = vpop.f32.mrf.mxu0
      %v3667 = vadd.f32 %v3531, %v3666
      %v3668 = vpop.f32.mrf.mxu0
      %v3669 = vpop.f32.mrf.mxu0
      %v3670 = vpop.f32.mrf.mxu0
      %3671 = vdwg.mxu0
      %v3672 = vld [vmem:[%s10] sm:$0x1]
      %v3674 = vlaneseq
      %v3675 = vshrl.u32 %v3674, 7
      %v3676 = vsub.s32 0, %v3675
      %v3677 = vrot.slane %v3672, %v3676
      %v3679 = vadd.f32 %v3667, %v3677
      %v3680 = vmax.f32 %v3679, 0.0
      %v3681 = vpack.c.bf16 %v3680, %v3680
      %v3682 = vld [vmem:[%s11] sm:$0xf]
      %v3683 = vld [vmem:[%s11 + $0x4] sm:$0xf]
      %v3684 = vld [vmem:[%s11 + $0x8] sm:$0xf]
      %v3685 = vld [vmem:[%s11 + $0xc] sm:$0xf]
      %v3686 = vld [vmem:[%s11 + $0x10] sm:$0xf]
      %v3687 = vld [vmem:[%s11 + $0x14] sm:$0xf]
      %v3688 = vld [vmem:[%s11 + $0x18] sm:$0xf]
      %v3689 = vld [vmem:[%s11 + $0x1c] sm:$0xf]
      %v3690 = vld [vmem:[#allocation2] sm:$0x1]
      %v3692 = vlaneseq
      %v3693 = vshrl.u32 %v3692, 7
      %v3694 = vsub.s32 0, %v3693
      %v3695 = vrot.slane %v3690, %v3694
      %v3705 = vunpack.c.l.b16 %v3682
      %v3706 = vunpack.c.l.b16 %v3683
      %v3707 = vunpack.c.l.b16 %v3684
      %v3708 = vunpack.c.l.b16 %v3685
      %v3709 = vunpack.c.l.b16 %v3686
      %v3710 = vunpack.c.l.b16 %v3687
      %v3711 = vunpack.c.l.b16 %v3688
      %v3712 = vunpack.c.l.b16 %v3689
      %v3713 = vpack.c.b16 %v3706, %v3705
      %v3714 = vpack.c.b16 %v3708, %v3707
      %v3715 = vpack.c.b16 %v3710, %v3709
      %v3716 = vpack.c.b16 %v3712, %v3711
      %v3722 = vsel %vm2558, %v3681, 0
      %3724 = vmatprep.subr.bf16.mxu0 0
      %3725 = vmatpush1.bf16.msra.mxu0 0
      %3726 = vmatprep.subr.bf16.mxu0 0
      %3727 = vmatpush1.bf16.msra.mxu0 0
      %3728 = vmatprep.subr.bf16.mxu0 0
      %3729 = vmatpush1.bf16.msra.mxu0 0
      %3730 = vmatprep.subr.bf16.mxu0 0
      %3731 = vmatpush1.bf16.msra.mxu0 0
      %3732 = vmatprep.subr.bf16.mxu0 0
      %3733 = vmatpush1.bf16.msra.mxu0 %v3716
      %3734 = vmatprep.subr.bf16.mxu0 0
      %3735 = vmatpush1.bf16.msra.mxu0 %v3715
      %3736 = vmatprep.subr.bf16.mxu0 0
      %3737 = vmatpush1.bf16.msra.mxu0 %v3714
      %3738 = vmatprep.subr.bf16.mxu0 0
      %3739 = vmatpush1.bf16.msra.mxu0 %v3713
      %3740 = vmatprep.subr.bf16.mxu0 0
      %3741 = vmatpush2.bf16.msra.mxu0 0
      %3742 = vmatprep.subr.bf16.mxu0 0
      %3743 = vmatpush2.bf16.msra.mxu0 0
      %3744 = vmatprep.subr.bf16.mxu0 0
      %3745 = vmatpush2.bf16.msra.mxu0 0
      %3746 = vmatprep.subr.bf16.mxu0 0
      %3747 = vmatpush2.bf16.msra.mxu0 0
      %3748 = vmatprep.subr.bf16.mxu0 0
      %3749 = vmatpush2.bf16.msra.mxu0 0
      %3750 = vmatprep.subr.bf16.mxu0 0
      %3751 = vmatpush2.bf16.msra.mxu0 0
      %3752 = vmatprep.subr.bf16.mxu0 0
      %3753 = vmatpush2.bf16.msra.mxu0 0
      %3754 = vmatprep.subr.bf16.mxu0 0
      %3755 = vmatpush2.bf16.msra.mxu0 0
      %3756 = vmatprep.mubr.bf16.mxu0 0
      %3757 = vmatmul.mubr.bf16.gmra.mxu0 %v3722
      %v3758 = vpop.f32.mrf.mxu0
      %v3759 = vadd.f32 %v3695, %v3758
      %v3760 = vpop.f32.mrf.mxu0
      %v3761 = vpop.f32.mrf.mxu0
      %v3762 = vpop.f32.mrf.mxu0
      %3763 = vdwg.mxu0
      %v3764 = vsub.f32 0.0, %v3759
      %v3765 = vmul.f32 %v3764, 1.442695
      %v3766 = vpow.pop %v3765
      %v3767 = vadd.f32 %v3766, 1.0
      %v3768 = vrcp.pop %v3767
      %v3769 = vmul.f32 1.0, %v3768
      %vm3770 = vcmask 7168
      %3771 = vst.msk [vmem:[%s462] sm:$0xff] %vm3770, %v3769
      %p3772 = scmp.lt.s32.totalorder %s26, 1
      %s3773 = scalar_select %p3772, %s26, 1
      %s3774 = smul.addr %s3773, 8
      %s3775 = scalar_lea.vmem %s13, %s3774
      // Predicated region
      $region73: #{tpu_custom_call.1} parent=71 // pred_check
        %p3776 = pneg %p327
      $region74: #{tpu_custom_call.1} parent=71 // pred_check_branch
        %3778 = sbr.rel (%p3776) target = $region76
      $region75: #{tpu_custom_call.1} parent=71 // pred_region
        _
      $region76: #{tpu_custom_call.1} parent=71 // pred_fallthru
        _
    $region72: #{tpu_custom_call.1} parent=5 // pred_fallthru
      _
    %p3779 = scmp.le.s32.totalorder 2, %s21
    // Predicated region
    $region77: #{tpu_custom_call.1} parent=5 // pred_check
      %p3780 = pneg %p3779
    $region78: #{tpu_custom_call.1} parent=5 // pred_check_branch
      %3782 = sbr.rel (%p3780) target = $region80
    $region79: #{tpu_custom_call.1} parent=5 // pred_region
      %s3783 = ssub.s32 %s21, 2
      // Predicated region
      $region81: #{tpu_custom_call.1} parent=79 // pred_check
        %p3784 = pneg %p333
      $region82: #{tpu_custom_call.1} parent=79 // pred_check_branch
        %3786 = sbr.rel (%p3784) target = $region84
      $region83: #{tpu_custom_call.1} parent=79 // pred_region
        %p3787 = scmp.lt.s32.totalorder %s27, 1
        %s3788 = scalar_select %p3787, %s27, 1
        %s3789 = smul.addr %s3788, 8
        %s3790 = scalar_lea.vmem %s13, %s3789
      $region84: #{tpu_custom_call.1} parent=79 // pred_fallthru
        _
    $region80: #{tpu_custom_call.1} parent=5 // pred_fallthru
      _
  $region6: #{tpu_custom_call.1} parent=0 // loop_footer
    %s25 = sadd.s32 1, %s21
  $region7: #{tpu_custom_call.1} parent=0 // loop_footer_branch
    %20 = sbr.rel target = $region3
  $region8: #{tpu_custom_call.1} parent=0 // loop_exit
    _

</llo_original>
